<compile_context>
chip_gen: v6e
topology: v6e:2x2x1
jax: 0.10.0
libtpu: 0.0.40
codegen_flags: <defaults>
</compile_context>

<pallas_src>
import functools

import jax
import jax.numpy as jnp
from jax import lax
from jax.experimental import pallas as pl
from jax.experimental.pallas import tpu as pltpu


# ----------------------------------------------------------------------------
# Math helpers
# ----------------------------------------------------------------------------
def _chsh(x, order):
    if order == 2:
        return 2.0 * x * x - 1.0
    elif order == 3:
        return 4.0 * x * x * x - 3.0 * x
    raise ValueError("order must be 2 or 3")


def _sigmoid_via_tanh(x):
    # sigma(x) = 0.5 * tanh(0.5 x) + 0.5  -- a single EUP push per vreg.
    return 0.5 * jnp.tanh(0.5 * x) + 0.5


# ----------------------------------------------------------------------------
# Pallas kernels
# ----------------------------------------------------------------------------
def _stage1_kernel(order, nh, th,
                   xp_ref, hrow_ref, mrow_ref, cm_ref,
                   wx_ref, wh_ref, wm_ref, bx_ref, bh_ref, bm_ref, corr_ref,
                   cm_out_ref, mem_out_ref, oxh_out_ref):
    """conv_x/conv_h/conv_m (as matmuls) + ChSh + LSTM gate math.

    Band layout of the packed 8*nh gate lanes:
      slab A (lanes 0..4nh)   = [i, i', f, f']   -> one sigmoid
      slab B (lanes 4nh..8nh) = [g, g', o, pad]  -> one tanh (o passes through)
    corr_ref holds the post-ChSh correction (cancels the single ChSh(0) junk
    conv per band and folds in the forget bias on the f / f' bands).
    """
    W = xp_ref.shape[2]
    R = th * W
    ks = wh_ref.shape[0]
    h0 = pl.program_id(1) * th

    xp = xp_ref[0].reshape(R, xp_ref.shape[-1])                 # (R, Kx) bf16
    xacc = jnp.dot(xp, wx_ref[...],
                   preferred_element_type=jnp.float32) + bx_ref[...]

    def row_conv(rows_ref, w_ref, b_ref):
        # kh taps accumulated from per-batch resident padded row patches:
        # rows_ref is (1, H+2p, W, ks*C); tap di uses rows [h0+di, h0+di+th).
        k = rows_ref.shape[-1]
        acc = None
        for di in range(ks):
            patch = rows_ref[0, pl.ds(h0 + di, th), :, :].reshape(R, k)
            part = jnp.dot(patch, w_ref[di],
                           preferred_element_type=jnp.float32)
            acc = part if acc is None else acc + part
        return acc + b_ref[...]

    hacc = row_conv(hrow_ref, wh_ref, bh_ref)                   # (R, 8nh) f32
    macc = row_conv(mrow_ref, wm_ref, bm_ref)                   # (R, 8nh) f32

    s = (_chsh(xacc, order) + _chsh(hacc, order) + _chsh(macc, order)
         + corr_ref[...])

    a = s[:, :4 * nh]                      # [i, i', f, f']
    bv = s[:, 4 * nh:]                     # [g, g', o, pad]
    sg = _sigmoid_via_tanh(a)              # one full-width sigmoid
    tb = jnp.tanh(bv)                      # one full-width tanh

    cm_in = cm_ref[0].reshape(R, 2 * nh)   # [c | m] f32
    # [c_new | m_new] = [f, f'] * [c, m] + [i, i'] * [g, g']
    cm_new = sg[:, 2 * nh:] * cm_in + sg[:, :2 * nh] * tb[:, :2 * nh]

    cm_out_ref[...] = cm_new.reshape(1, th, W, 2 * nh)
    mem_out_ref[...] = cm_new.astype(mem_out_ref.dtype).reshape(1, th, W, 2 * nh)
    oxh_out_ref[...] = bv[:, 2 * nh:3 * nh].reshape(1, th, W, nh)


def _stage2_kernel(nh, th, memrow_ref, oxh_ref, w2_ref, b2_ref, h_out_ref):
    """Fused conv_o(mem) + conv_last(mem) (one matmul per kh tap) + out gate."""
    W = oxh_ref.shape[2]
    R = th * W
    ks = w2_ref.shape[0]
    h0 = pl.program_id(1) * th

    k = memrow_ref.shape[-1]
    acc = None
    for di in range(ks):
        patch = memrow_ref[0, pl.ds(h0 + di, th), :, :].reshape(R, k)
        part = jnp.dot(patch, w2_ref[di], preferred_element_type=jnp.float32)
        acc = part if acc is None else acc + part
    r = acc + b2_ref[...]                  # bands: [conv_o, conv_last, 0, 0]

    oxh = oxh_ref[0].reshape(R, nh)
    o_t = _sigmoid_via_tanh(oxh + r[:, :nh])
    h_new = o_t * jnp.tanh(r[:, nh:2 * nh])
    h_out_ref[...] = h_new.reshape(1, th, W, nh)


# ----------------------------------------------------------------------------
# Host glue: NHWC im2col helpers, tile choice, pallas_call wrapper
# ----------------------------------------------------------------------------
def im2col_full(img, ks, pad):
    """(B,H,W,C) -> (B,H,W,ks*ks*C); patch ordering (kh, kw, c)-major."""
    B, H, W, C = img.shape
    xp = jnp.pad(img, ((0, 0), (pad, pad), (pad, pad), (0, 0)))
    cols = [xp[:, i:i + H, j:j + W, :] for i in range(ks) for j in range(ks)]
    return jnp.concatenate(cols, axis=-1)


def im2col_rows(img, ks, pad):
    """Width-only row patches: (B,H,W,C) -> (B,H+2p,W,ks*C); (kw, c)-major."""
    B, H, W, C = img.shape
    xp = jnp.pad(img, ((0, 0), (pad, pad), (pad, pad), (0, 0)))
    cols = [xp[:, :, j:j + W, :] for j in range(ks)]
    return jnp.concatenate(cols, axis=-1)


def _pick_th(B, H, W):
    # Largest divisor of H giving >=4 grid steps (>=2 per v7x TensorCore)
    # while keeping <= ~2048 rows per tile; fall back to 1-row tiles.
    for d in range(H, 0, -1):
        if H % d == 0 and B * (H // d) >= 4 and d * W <= 2048:
            return d
    return 1


def _nbytes(arrs):
    return int(sum(int(a.size) * a.dtype.itemsize for a in arrs))


def st_lstm_cell_poly(packed, x_t, h_t, c_t, m_t, *, order, filter_size):
    B, _, H, W = x_t.shape
    nh = c_t.shape[1]
    ks = filter_size
    pad = ks // 2
    assert (8 * nh) % 128 == 0, "num_hidden must be a multiple of 16"
    assert W % 8 == 0, "width must be a multiple of 8"

    th = _pick_th(B, H, W)
    grid = (B, H // th)
    rows = B * H * W

    nhwc = lambda a: jnp.transpose(a, (0, 2, 3, 1))
    x_nhwc, h_nhwc, c_nhwc, m_nhwc = nhwc(x_t), nhwc(h_t), nhwc(c_t), nhwc(m_t)

    # conv_x path: full host im2col (tiny: C_in is small), K padded to 128.
    xp = im2col_full(x_nhwc.astype(jnp.bfloat16), ks, pad)
    kx = xp.shape[-1]
    kxp = packed["wx"].shape[0]
    xp = jnp.pad(xp, ((0, 0), (0, 0), (0, 0), (0, kxp - kx)))

    # conv_h / conv_m paths: width-only row patches; kh handled in-kernel.
    hrow = im2col_rows(h_nhwc.astype(jnp.bfloat16), ks, pad)
    mrow = im2col_rows(m_nhwc.astype(jnp.bfloat16), ks, pad)

    cm = jnp.concatenate([c_nhwc, m_nhwc], axis=-1)           # (B,H,W,2nh) f32

    wx, wh, wm = packed["wx"], packed["wh"], packed["wm"]
    bx, bh, bm, corr = packed["bx"], packed["bh"], packed["bm"], packed["corr"]
    w2, b2 = packed["w2"], packed["b2"]

    def tile_spec(lanes):
        return pl.BlockSpec((1, th, W, lanes), lambda b, t: (b, t, 0, 0))

    def batch_spec(arr):
        return pl.BlockSpec((1,) + arr.shape[1:], lambda b, t: (b, 0, 0, 0))

    def full_spec(arr):
        nd = arr.ndim
        return pl.BlockSpec(arr.shape, lambda b, t, _n=nd: (0,) * _n)

    cost1 = pl.CostEstimate(
        flops=int(2 * rows * (kxp + 2 * ks * ks * nh) * 8 * nh
                  + 40 * rows * 8 * nh),
        transcendentals=int(2 * rows * 4 * nh),
        bytes_accessed=_nbytes([xp, hrow, mrow, cm, wx, wh, wm, bx, bh, bm,
                                corr])
                       + rows * (2 * nh * 4 + 2 * nh * 2 + nh * 4))

    cm_new, mem_bf16, oxh = pl.pallas_call(
        functools.partial(_stage1_kernel, order, nh, th),
        out_shape=(jax.ShapeDtypeStruct((B, H, W, 2 * nh), jnp.float32),
                   jax.ShapeDtypeStruct((B, H, W, 2 * nh), jnp.bfloat16),
                   jax.ShapeDtypeStruct((B, H, W, nh), jnp.float32)),
        grid_spec=pltpu.PrefetchScalarGridSpec(
            num_scalar_prefetch=0, grid=grid,
            in_specs=[tile_spec(kxp), batch_spec(hrow), batch_spec(mrow),
                      tile_spec(2 * nh),
                      full_spec(wx), full_spec(wh), full_spec(wm),
                      full_spec(bx), full_spec(bh), full_spec(bm),
                      full_spec(corr)],
            out_specs=[tile_spec(2 * nh), tile_spec(2 * nh), tile_spec(nh)]),
        compiler_params=pltpu.CompilerParams(
            dimension_semantics=("parallel", "parallel")),
        cost_estimate=cost1,
    )(xp, hrow, mrow, cm, wx, wh, wm, bx, bh, bm, corr)

    # mem = [c_new | m_new] in bf16 straight from stage 1; only the cheap
    # width-direction row-patch build happens in XLA before stage 2.
    memrow = im2col_rows(mem_bf16, ks, pad)          # (B, H+2p, W, ks*2nh)

    cost2 = pl.CostEstimate(
        flops=int(2 * rows * ks * ks * 2 * nh * w2.shape[-1] + 10 * rows * nh),
        transcendentals=int(2 * rows * nh),
        bytes_accessed=_nbytes([memrow, oxh, w2, b2]) + rows * nh * 4)

    h_nhwc_new = pl.pallas_call(
        functools.partial(_stage2_kernel, nh, th),
        out_shape=jax.ShapeDtypeStruct((B, H, W, nh), jnp.float32),
        grid_spec=pltpu.PrefetchScalarGridSpec(
            num_scalar_prefetch=0, grid=grid,
            in_specs=[batch_spec(memrow), tile_spec(nh),
                      full_spec(w2), full_spec(b2)],
            out_specs=tile_spec(nh)),
        compiler_params=pltpu.CompilerParams(
            dimension_semantics=("parallel", "parallel")),
        cost_estimate=cost2,
    )(memrow, oxh, w2, b2)

    nchw = lambda a: jnp.transpose(a, (0, 3, 1, 2))
    h_new = nchw(h_nhwc_new)
    c_new = nchw(cm_new[..., :nh])
    m_new = nchw(cm_new[..., nh:])
    return h_new, c_new, m_new


# ----------------------------------------------------------------------------
# Deterministic parameter construction (mirrors nn.Conv2d shapes in __init__)
# ----------------------------------------------------------------------------
def init_raw_params(key, in_channel, num_hidden, filter_size):
    ks = filter_size

    def conv(k, cin, cout, kk):
        k1, k2 = jax.random.split(k)
        fan_in = cin * kk * kk
        w = jax.random.normal(k1, (cout, cin, kk, kk), jnp.float32) / jnp.sqrt(fan_in)
        b = 0.01 * jax.random.normal(k2, (cout,), jnp.float32)
        return w, b

    keys = iter(jax.random.split(key, 16))
    return {
        "conv_x": [conv(next(keys), in_channel, num_hidden, ks) for _ in range(7)],
        "conv_h": [conv(next(keys), num_hidden, num_hidden, ks) for _ in range(4)],
        "conv_m": [conv(next(keys), num_hidden, num_hidden, ks) for _ in range(3)],
        "conv_o": conv(next(keys), 2 * num_hidden, num_hidden, ks),
        "conv_last": conv(next(keys), 2 * num_hidden, num_hidden, 1),
    }


def pack_params(raw, num_hidden, filter_size, order):
    nh, ks = num_hidden, filter_size
    pad = ks // 2
    zv = -1.0 if order == 2 else 0.0           # ChSh(0)
    forget_bias = 1.0

    def wflat(w):   # (out, cin, kh, kw) -> (kh*kw*cin, out)
        return w.transpose(2, 3, 1, 0).reshape(-1, w.shape[0])

    def wrows(w):   # (out, cin, kh, kw) -> (kh, kw*cin, out)
        return w.transpose(2, 3, 1, 0).reshape(
            w.shape[2], w.shape[3] * w.shape[1], w.shape[0])

    xw, xb = zip(*raw["conv_x"])   # module order [i, f, g, i', f', g', o]
    hw, hb = zip(*raw["conv_h"])   # [i, f, g, o]
    mw, mb = zip(*raw["conv_m"])   # [i, f, g]

    # band order: A = [i, i', f, f'] ; B = [g, g', o, pad]
    x_src = (0, 3, 1, 4, 2, 5, 6, None)
    h_src = (0, None, 1, None, 2, None, 3, None)
    m_src = (None, 0, None, 1, None, 2, None, None)

    cin_x = xw[0].shape[1]
    kx = ks * ks * cin_x
    kxp = -(-kx // 128) * 128

    def pack_full(ws, bs, src, krows):
        wcols, bcols = [], []
        for s in src:
            if s is None:
                wcols.append(jnp.zeros((krows, nh), jnp.float32))
                bcols.append(jnp.zeros((nh,), jnp.float32))
            else:
                wcols.append(wflat(ws[s]))
                bcols.append(bs[s])
        return jnp.concatenate(wcols, axis=1), jnp.concatenate(bcols)[None, :]

    def pack_rows(ws, bs, src, cin):
        wcols, bcols = [], []
        for s in src:
            if s is None:
                wcols.append(jnp.zeros((ks, ks * cin, nh), jnp.float32))
                bcols.append(jnp.zeros((nh,), jnp.float32))
            else:
                wcols.append(wrows(ws[s]))
                bcols.append(bs[s])
        return jnp.concatenate(wcols, axis=-1), jnp.concatenate(bcols)[None, :]

    wx, bx = pack_full(xw, xb, x_src, kx)
    wx = jnp.pad(wx, ((0, kxp - kx), (0, 0)))          # K padded to 128
    wh, bh = pack_rows(hw, hb, h_src, nh)
    wm, bm = pack_rows(mw, mb, m_src, nh)

    # Post-ChSh correction: each used band has exactly one zero-weight conv
    # contributing ChSh(0); cancel it and add the forget bias on f / f'.
    corr = []
    for band in range(8):
        v = 0.0 if band == 7 else -zv
        if band in (2, 3):
            v += forget_bias
        corr.append(jnp.full((nh,), v, jnp.float32))
    corr = jnp.concatenate(corr)[None, :]

    # Stage 2: conv_o (5x5 over mem) fused with conv_last (1x1 == centre tap),
    # output lanes padded to a multiple of 128: [conv_o | conv_last | 0...].
    wo_w, wo_b = raw["conv_o"]
    wl_w, wl_b = raw["conv_last"]
    np2 = -(-2 * nh // 128) * 128
    wo = wrows(wo_w)                                    # (ks, ks*2nh, nh)
    wl = jnp.zeros((ks, ks * 2 * nh, nh), jnp.float32)
    wl = wl.at[pad, pad * 2 * nh:(pad + 1) * 2 * nh, :].set(
        wl_w.reshape(nh, 2 * nh).T)
    w2 = jnp.concatenate(
        [wo, wl, jnp.zeros((ks, ks * 2 * nh, np2 - 2 * nh), jnp.float32)],
        axis=-1)
    b2 = jnp.concatenate(
        [wo_b, wl_b, jnp.zeros((np2 - 2 * nh,), jnp.float32)])[None, :]

    bf16 = lambda a: a.astype(jnp.bfloat16)
    return dict(wx=bf16(wx), wh=bf16(wh), wm=bf16(wm),
                bx=bx, bh=bh, bm=bm, corr=corr,
                w2=bf16(w2), b2=b2)


# ----------------------------------------------------------------------------
# Pure-JAX reference (mirrors the PyTorch forward) for correctness checking
# ----------------------------------------------------------------------------
def reference_forward(raw, x_t, h_t, c_t, m_t, *, order, filter_size):
    pad = filter_size // 2

    def conv2d(x, w, b, p):
        out = lax.conv_general_dilated(
            x, w, (1, 1), [(p, p), (p, p)],
            dimension_numbers=("NCHW", "OIHW", "NCHW"),
            precision=lax.Precision.HIGHEST)
        return out + b[None, :, None, None]

    ch = lambda z: _chsh(z, order)
    gx = [ch(conv2d(x_t, w, b, pad)) for (w, b) in raw["conv_x"]]
    gh = [ch(conv2d(h_t, w, b, pad)) for (w, b) in raw["conv_h"]]
    gm = [ch(conv2d(m_t, w, b, pad)) for (w, b) in raw["conv_m"]]
    i_x, f_x, g_x, i_xp, f_xp, g_xp, o_x = gx
    i_h, f_h, g_h, o_h = gh
    i_m, f_m, g_m = gm

    i_t = jax.nn.sigmoid(i_x + i_h)
    f_t = jax.nn.sigmoid(f_x + f_h + 1.0)
    g_t = jnp.tanh(g_x + g_h)
    c_new = f_t * c_t + i_t * g_t

    i_tp = jax.nn.sigmoid(i_xp + i_m)
    f_tp = jax.nn.sigmoid(f_xp + f_m + 1.0)
    g_tp = jnp.tanh(g_xp + g_m)
    m_new = f_tp * m_t + i_tp * g_tp

    mem = jnp.concatenate([c_new, m_new], axis=1)
    o_t = jax.nn.sigmoid(o_x + o_h + conv2d(mem, *raw["conv_o"], pad))
    h_new = o_t * jnp.tanh(conv2d(mem, *raw["conv_last"], 0))
    return h_new, c_new, m_new


# ----------------------------------------------------------------------------
if __name__ == "__main__":
    B, C_IN, H, W = 2, 4, 16, 16
    NUM_HIDDEN = 32
    FILTER_SIZE = 5
    ORDER = 2          # ChSh order (2 -> 2x^2 - 1)

    key = jax.random.PRNGKey(0)
    k_param, kx, kh, kc, km = jax.random.split(key, 5)

    raw = init_raw_params(k_param, C_IN, NUM_HIDDEN, FILTER_SIZE)
    packed = pack_params(raw, NUM_HIDDEN, FILTER_SIZE, ORDER)

    x_t = 0.5 * jax.random.normal(kx, (B, C_IN, H, W), jnp.float32)
    h_t = 0.5 * jax.random.normal(kh, (B, NUM_HIDDEN, H, W), jnp.float32)
    c_t = 0.5 * jax.random.normal(kc, (B, NUM_HIDDEN, H, W), jnp.float32)
    m_t = 0.5 * jax.random.normal(km, (B, NUM_HIDDEN, H, W), jnp.float32)

    cell = jax.jit(functools.partial(st_lstm_cell_poly,
                                     order=ORDER, filter_size=FILTER_SIZE))
    h_new, c_new, m_new = jax.block_until_ready(cell(packed, x_t, h_t, c_t, m_t))

    # Sanity check against the pure-JAX/XLA f32 reference of the PyTorch forward.
    h_ref, c_ref, m_ref = jax.block_until_ready(
        reference_forward(raw, x_t, h_t, c_t, m_t,
                          order=ORDER, filter_size=FILTER_SIZE))

    assert h_new.shape == (B, NUM_HIDDEN, H, W)
    # bf16 matmul operands (f32 accumulation) vs the pure-f32 reference:
    # slightly loose tolerance, still tight enough to catch packing/gate bugs.
    for got, ref in ((h_new, h_ref), (c_new, c_ref), (m_new, m_ref)):
        err = float(jnp.max(jnp.abs(got - ref)))
        assert jnp.allclose(got, ref, atol=2e-2, rtol=2e-2), err

    print("KERNEL_OK")
</pallas_src>

<mosaic_0001>
module attributes {stable_mosaic.version = 11 : i64} {
  func.func @_stage1_kernel(%arg0: i32, %arg1: i32, %arg2: memref<1x8x16x128xbf16, #tpu.memory_space<vmem>>, %arg3: memref<1x20x16x160xbf16, #tpu.memory_space<vmem>>, %arg4: memref<1x20x16x160xbf16, #tpu.memory_space<vmem>>, %arg5: memref<1x8x16x64xf32, #tpu.memory_space<vmem>>, %arg6: memref<128x256xbf16, #tpu.memory_space<vmem>>, %arg7: memref<5x160x256xbf16, #tpu.memory_space<vmem>>, %arg8: memref<5x160x256xbf16, #tpu.memory_space<vmem>>, %arg9: memref<1x256xf32, #tpu.memory_space<vmem>>, %arg10: memref<1x256xf32, #tpu.memory_space<vmem>>, %arg11: memref<1x256xf32, #tpu.memory_space<vmem>>, %arg12: memref<1x256xf32, #tpu.memory_space<vmem>>, %arg13: memref<1x8x16x64xf32, #tpu.memory_space<vmem>>, %arg14: memref<1x8x16x64xbf16, #tpu.memory_space<vmem>>, %arg15: memref<1x8x16x32xf32, #tpu.memory_space<vmem>>) attributes {dimension_semantics = [#tpu.dimension_semantics<parallel>, #tpu.dimension_semantics<parallel>], iteration_bounds = array<i64: 2, 2>, scalar_prefetch = 0 : i64, scratch_operands = 0 : i64, tpu.core_type = #tpu.core_type<tc>, window_params = [{transform_indices = @transform_0, window_bounds = array<i64: 1, 8, 16, 128>}, {transform_indices = @transform_1, window_bounds = array<i64: 1, 20, 16, 160>}, {transform_indices = @transform_2, window_bounds = array<i64: 1, 20, 16, 160>}, {transform_indices = @transform_3, window_bounds = array<i64: 1, 8, 16, 64>}, {pipeline_mode = #tpu.pipeline_mode<synchronous>, transform_indices = @transform_4, window_bounds = array<i64: 128, 256>}, {pipeline_mode = #tpu.pipeline_mode<synchronous>, transform_indices = @transform_5, window_bounds = array<i64: 5, 160, 256>}, {pipeline_mode = #tpu.pipeline_mode<synchronous>, transform_indices = @transform_6, window_bounds = array<i64: 5, 160, 256>}, {pipeline_mode = #tpu.pipeline_mode<synchronous>, transform_indices = @transform_7, window_bounds = array<i64: 1, 256>}, {pipeline_mode = #tpu.pipeline_mode<synchronous>, transform_indices = @transform_8, window_bounds = array<i64: 1, 256>}, {pipeline_mode = #tpu.pipeline_mode<synchronous>, transform_indices = @transform_9, window_bounds = array<i64: 1, 256>}, {pipeline_mode = #tpu.pipeline_mode<synchronous>, transform_indices = @transform_10, window_bounds = array<i64: 1, 256>}, {transform_indices = @transform_11, window_bounds = array<i64: 1, 8, 16, 64>}, {transform_indices = @transform_12, window_bounds = array<i64: 1, 8, 16, 64>}, {transform_indices = @transform_13, window_bounds = array<i64: 1, 8, 16, 32>}]} {
    %c8_i32 = arith.constant 8 : i32
    %0 = arith.muli %arg1, %c8_i32 : i32
    %c0 = arith.constant 0 : index
    %c0_0 = arith.constant 0 : index
    %c0_1 = arith.constant 0 : index
    %c0_2 = arith.constant 0 : index
    %1 = vector.load %arg2[%c0, %c0_0, %c0_1, %c0_2] : memref<1x8x16x128xbf16, #tpu.memory_space<vmem>>, vector<1x8x16x128xbf16>
    %2 = vector.shape_cast %1 : vector<1x8x16x128xbf16> to vector<8x16x128xbf16>
    %3 = vector.shape_cast %2 : vector<8x16x128xbf16> to vector<128x128xbf16>
    %c0_3 = arith.constant 0 : index
    %c0_4 = arith.constant 0 : index
    %4 = vector.load %arg6[%c0_3, %c0_4] : memref<128x256xbf16, #tpu.memory_space<vmem>>, vector<128x256xbf16>
    %cst = arith.constant dense<0.000000e+00> : vector<128x256xf32>
    %5 = tpu.matmul %3, %4, %cst {dimension_numbers = #tpu.dot_dimension_numbers<[1], [0], [0], [1], [0, 0, 1, 1], [], []>} : vector<128x128xbf16>, vector<128x256xbf16>, vector<128x256xf32> -> vector<128x256xf32>
    %c0_5 = arith.constant 0 : index
    %c0_6 = arith.constant 0 : index
    %6 = vector.load %arg9[%c0_5, %c0_6] : memref<1x256xf32, #tpu.memory_space<vmem>>, vector<1x256xf32>
    %7 = vector.broadcast %6 : vector<1x256xf32> to vector<128x256xf32>
    %8 = arith.addf %5, %7 : vector<128x256xf32>
    %c0_i32 = arith.constant 0 : i32
    %9 = arith.addi %0, %c0_i32 : i32
    %c0_7 = arith.constant 0 : index
    %10 = arith.index_cast %9 : i32 to index
    %c0_8 = arith.constant 0 : index
    %c0_9 = arith.constant 0 : index
    %11 = vector.load %arg3[%c0_7, %10, %c0_8, %c0_9] : memref<1x20x16x160xbf16, #tpu.memory_space<vmem>>, vector<1x8x16x160xbf16>
    %12 = vector.shape_cast %11 : vector<1x8x16x160xbf16> to vector<8x16x160xbf16>
    %13 = vector.shape_cast %12 : vector<8x16x160xbf16> to vector<128x160xbf16>
    %c0_10 = arith.constant 0 : index
    %c0_11 = arith.constant 0 : index
    %c0_12 = arith.constant 0 : index
    %14 = vector.load %arg7[%c0_10, %c0_11, %c0_12] : memref<5x160x256xbf16, #tpu.memory_space<vmem>>, vector<1x160x256xbf16>
    %15 = vector.shape_cast %14 : vector<1x160x256xbf16> to vector<160x256xbf16>
    %cst_13 = arith.constant dense<0.000000e+00> : vector<128x256xf32>
    %16 = tpu.matmul %13, %15, %cst_13 {dimension_numbers = #tpu.dot_dimension_numbers<[1], [0], [0], [1], [0, 0, 1, 1], [], []>} : vector<128x160xbf16>, vector<160x256xbf16>, vector<128x256xf32> -> vector<128x256xf32>
    %c1_i32 = arith.constant 1 : i32
    %17 = arith.addi %0, %c1_i32 : i32
    %c0_14 = arith.constant 0 : index
    %18 = arith.index_cast %17 : i32 to index
    %c0_15 = arith.constant 0 : index
    %c0_16 = arith.constant 0 : index
    %19 = vector.load %arg3[%c0_14, %18, %c0_15, %c0_16] : memref<1x20x16x160xbf16, #tpu.memory_space<vmem>>, vector<1x8x16x160xbf16>
    %20 = vector.shape_cast %19 : vector<1x8x16x160xbf16> to vector<8x16x160xbf16>
    %21 = vector.shape_cast %20 : vector<8x16x160xbf16> to vector<128x160xbf16>
    %c1 = arith.constant 1 : index
    %c0_17 = arith.constant 0 : index
    %c0_18 = arith.constant 0 : index
    %22 = vector.load %arg7[%c1, %c0_17, %c0_18] : memref<5x160x256xbf16, #tpu.memory_space<vmem>>, vector<1x160x256xbf16>
    %23 = vector.shape_cast %22 : vector<1x160x256xbf16> to vector<160x256xbf16>
    %cst_19 = arith.constant dense<0.000000e+00> : vector<128x256xf32>
    %24 = tpu.matmul %21, %23, %cst_19 {dimension_numbers = #tpu.dot_dimension_numbers<[1], [0], [0], [1], [0, 0, 1, 1], [], []>} : vector<128x160xbf16>, vector<160x256xbf16>, vector<128x256xf32> -> vector<128x256xf32>
    %25 = arith.addf %16, %24 : vector<128x256xf32>
    %c2_i32 = arith.constant 2 : i32
    %26 = arith.addi %0, %c2_i32 : i32
    %c0_20 = arith.constant 0 : index
    %27 = arith.index_cast %26 : i32 to index
    %c0_21 = arith.constant 0 : index
    %c0_22 = arith.constant 0 : index
    %28 = vector.load %arg3[%c0_20, %27, %c0_21, %c0_22] : memref<1x20x16x160xbf16, #tpu.memory_space<vmem>>, vector<1x8x16x160xbf16>
    %29 = vector.shape_cast %28 : vector<1x8x16x160xbf16> to vector<8x16x160xbf16>
    %30 = vector.shape_cast %29 : vector<8x16x160xbf16> to vector<128x160xbf16>
    %c2 = arith.constant 2 : index
    %c0_23 = arith.constant 0 : index
    %c0_24 = arith.constant 0 : index
    %31 = vector.load %arg7[%c2, %c0_23, %c0_24] : memref<5x160x256xbf16, #tpu.memory_space<vmem>>, vector<1x160x256xbf16>
    %32 = vector.shape_cast %31 : vector<1x160x256xbf16> to vector<160x256xbf16>
    %cst_25 = arith.constant dense<0.000000e+00> : vector<128x256xf32>
    %33 = tpu.matmul %30, %32, %cst_25 {dimension_numbers = #tpu.dot_dimension_numbers<[1], [0], [0], [1], [0, 0, 1, 1], [], []>} : vector<128x160xbf16>, vector<160x256xbf16>, vector<128x256xf32> -> vector<128x256xf32>
    %34 = arith.addf %25, %33 : vector<128x256xf32>
    %c3_i32 = arith.constant 3 : i32
    %35 = arith.addi %0, %c3_i32 : i32
    %c0_26 = arith.constant 0 : index
    %36 = arith.index_cast %35 : i32 to index
    %c0_27 = arith.constant 0 : index
    %c0_28 = arith.constant 0 : index
    %37 = vector.load %arg3[%c0_26, %36, %c0_27, %c0_28] : memref<1x20x16x160xbf16, #tpu.memory_space<vmem>>, vector<1x8x16x160xbf16>
    %38 = vector.shape_cast %37 : vector<1x8x16x160xbf16> to vector<8x16x160xbf16>
    %39 = vector.shape_cast %38 : vector<8x16x160xbf16> to vector<128x160xbf16>
    %c3 = arith.constant 3 : index
    %c0_29 = arith.constant 0 : index
    %c0_30 = arith.constant 0 : index
    %40 = vector.load %arg7[%c3, %c0_29, %c0_30] : memref<5x160x256xbf16, #tpu.memory_space<vmem>>, vector<1x160x256xbf16>
    %41 = vector.shape_cast %40 : vector<1x160x256xbf16> to vector<160x256xbf16>
    %cst_31 = arith.constant dense<0.000000e+00> : vector<128x256xf32>
    %42 = tpu.matmul %39, %41, %cst_31 {dimension_numbers = #tpu.dot_dimension_numbers<[1], [0], [0], [1], [0, 0, 1, 1], [], []>} : vector<128x160xbf16>, vector<160x256xbf16>, vector<128x256xf32> -> vector<128x256xf32>
    %43 = arith.addf %34, %42 : vector<128x256xf32>
    %c4_i32 = arith.constant 4 : i32
    %44 = arith.addi %0, %c4_i32 : i32
    %c0_32 = arith.constant 0 : index
    %45 = arith.index_cast %44 : i32 to index
    %c0_33 = arith.constant 0 : index
    %c0_34 = arith.constant 0 : index
    %46 = vector.load %arg3[%c0_32, %45, %c0_33, %c0_34] : memref<1x20x16x160xbf16, #tpu.memory_space<vmem>>, vector<1x8x16x160xbf16>
    %47 = vector.shape_cast %46 : vector<1x8x16x160xbf16> to vector<8x16x160xbf16>
    %48 = vector.shape_cast %47 : vector<8x16x160xbf16> to vector<128x160xbf16>
    %c4 = arith.constant 4 : index
    %c0_35 = arith.constant 0 : index
    %c0_36 = arith.constant 0 : index
    %49 = vector.load %arg7[%c4, %c0_35, %c0_36] : memref<5x160x256xbf16, #tpu.memory_space<vmem>>, vector<1x160x256xbf16>
    %50 = vector.shape_cast %49 : vector<1x160x256xbf16> to vector<160x256xbf16>
    %cst_37 = arith.constant dense<0.000000e+00> : vector<128x256xf32>
    %51 = tpu.matmul %48, %50, %cst_37 {dimension_numbers = #tpu.dot_dimension_numbers<[1], [0], [0], [1], [0, 0, 1, 1], [], []>} : vector<128x160xbf16>, vector<160x256xbf16>, vector<128x256xf32> -> vector<128x256xf32>
    %52 = arith.addf %43, %51 : vector<128x256xf32>
    %c0_38 = arith.constant 0 : index
    %c0_39 = arith.constant 0 : index
    %53 = vector.load %arg10[%c0_38, %c0_39] : memref<1x256xf32, #tpu.memory_space<vmem>>, vector<1x256xf32>
    %54 = vector.broadcast %53 : vector<1x256xf32> to vector<128x256xf32>
    %55 = arith.addf %52, %54 : vector<128x256xf32>
    %c0_i32_40 = arith.constant 0 : i32
    %56 = arith.addi %0, %c0_i32_40 : i32
    %c0_41 = arith.constant 0 : index
    %57 = arith.index_cast %56 : i32 to index
    %c0_42 = arith.constant 0 : index
    %c0_43 = arith.constant 0 : index
    %58 = vector.load %arg4[%c0_41, %57, %c0_42, %c0_43] : memref<1x20x16x160xbf16, #tpu.memory_space<vmem>>, vector<1x8x16x160xbf16>
    %59 = vector.shape_cast %58 : vector<1x8x16x160xbf16> to vector<8x16x160xbf16>
    %60 = vector.shape_cast %59 : vector<8x16x160xbf16> to vector<128x160xbf16>
    %c0_44 = arith.constant 0 : index
    %c0_45 = arith.constant 0 : index
    %c0_46 = arith.constant 0 : index
    %61 = vector.load %arg8[%c0_44, %c0_45, %c0_46] : memref<5x160x256xbf16, #tpu.memory_space<vmem>>, vector<1x160x256xbf16>
    %62 = vector.shape_cast %61 : vector<1x160x256xbf16> to vector<160x256xbf16>
    %cst_47 = arith.constant dense<0.000000e+00> : vector<128x256xf32>
    %63 = tpu.matmul %60, %62, %cst_47 {dimension_numbers = #tpu.dot_dimension_numbers<[1], [0], [0], [1], [0, 0, 1, 1], [], []>} : vector<128x160xbf16>, vector<160x256xbf16>, vector<128x256xf32> -> vector<128x256xf32>
    %c1_i32_48 = arith.constant 1 : i32
    %64 = arith.addi %0, %c1_i32_48 : i32
    %c0_49 = arith.constant 0 : index
    %65 = arith.index_cast %64 : i32 to index
    %c0_50 = arith.constant 0 : index
    %c0_51 = arith.constant 0 : index
    %66 = vector.load %arg4[%c0_49, %65, %c0_50, %c0_51] : memref<1x20x16x160xbf16, #tpu.memory_space<vmem>>, vector<1x8x16x160xbf16>
    %67 = vector.shape_cast %66 : vector<1x8x16x160xbf16> to vector<8x16x160xbf16>
    %68 = vector.shape_cast %67 : vector<8x16x160xbf16> to vector<128x160xbf16>
    %c1_52 = arith.constant 1 : index
    %c0_53 = arith.constant 0 : index
    %c0_54 = arith.constant 0 : index
    %69 = vector.load %arg8[%c1_52, %c0_53, %c0_54] : memref<5x160x256xbf16, #tpu.memory_space<vmem>>, vector<1x160x256xbf16>
    %70 = vector.shape_cast %69 : vector<1x160x256xbf16> to vector<160x256xbf16>
    %cst_55 = arith.constant dense<0.000000e+00> : vector<128x256xf32>
    %71 = tpu.matmul %68, %70, %cst_55 {dimension_numbers = #tpu.dot_dimension_numbers<[1], [0], [0], [1], [0, 0, 1, 1], [], []>} : vector<128x160xbf16>, vector<160x256xbf16>, vector<128x256xf32> -> vector<128x256xf32>
    %72 = arith.addf %63, %71 : vector<128x256xf32>
    %c2_i32_56 = arith.constant 2 : i32
    %73 = arith.addi %0, %c2_i32_56 : i32
    %c0_57 = arith.constant 0 : index
    %74 = arith.index_cast %73 : i32 to index
    %c0_58 = arith.constant 0 : index
    %c0_59 = arith.constant 0 : index
    %75 = vector.load %arg4[%c0_57, %74, %c0_58, %c0_59] : memref<1x20x16x160xbf16, #tpu.memory_space<vmem>>, vector<1x8x16x160xbf16>
    %76 = vector.shape_cast %75 : vector<1x8x16x160xbf16> to vector<8x16x160xbf16>
    %77 = vector.shape_cast %76 : vector<8x16x160xbf16> to vector<128x160xbf16>
    %c2_60 = arith.constant 2 : index
    %c0_61 = arith.constant 0 : index
    %c0_62 = arith.constant 0 : index
    %78 = vector.load %arg8[%c2_60, %c0_61, %c0_62] : memref<5x160x256xbf16, #tpu.memory_space<vmem>>, vector<1x160x256xbf16>
    %79 = vector.shape_cast %78 : vector<1x160x256xbf16> to vector<160x256xbf16>
    %cst_63 = arith.constant dense<0.000000e+00> : vector<128x256xf32>
    %80 = tpu.matmul %77, %79, %cst_63 {dimension_numbers = #tpu.dot_dimension_numbers<[1], [0], [0], [1], [0, 0, 1, 1], [], []>} : vector<128x160xbf16>, vector<160x256xbf16>, vector<128x256xf32> -> vector<128x256xf32>
    %81 = arith.addf %72, %80 : vector<128x256xf32>
    %c3_i32_64 = arith.constant 3 : i32
    %82 = arith.addi %0, %c3_i32_64 : i32
    %c0_65 = arith.constant 0 : index
    %83 = arith.index_cast %82 : i32 to index
    %c0_66 = arith.constant 0 : index
    %c0_67 = arith.constant 0 : index
    %84 = vector.load %arg4[%c0_65, %83, %c0_66, %c0_67] : memref<1x20x16x160xbf16, #tpu.memory_space<vmem>>, vector<1x8x16x160xbf16>
    %85 = vector.shape_cast %84 : vector<1x8x16x160xbf16> to vector<8x16x160xbf16>
    %86 = vector.shape_cast %85 : vector<8x16x160xbf16> to vector<128x160xbf16>
    %c3_68 = arith.constant 3 : index
    %c0_69 = arith.constant 0 : index
    %c0_70 = arith.constant 0 : index
    %87 = vector.load %arg8[%c3_68, %c0_69, %c0_70] : memref<5x160x256xbf16, #tpu.memory_space<vmem>>, vector<1x160x256xbf16>
    %88 = vector.shape_cast %87 : vector<1x160x256xbf16> to vector<160x256xbf16>
    %cst_71 = arith.constant dense<0.000000e+00> : vector<128x256xf32>
    %89 = tpu.matmul %86, %88, %cst_71 {dimension_numbers = #tpu.dot_dimension_numbers<[1], [0], [0], [1], [0, 0, 1, 1], [], []>} : vector<128x160xbf16>, vector<160x256xbf16>, vector<128x256xf32> -> vector<128x256xf32>
    %90 = arith.addf %81, %89 : vector<128x256xf32>
    %c4_i32_72 = arith.constant 4 : i32
    %91 = arith.addi %0, %c4_i32_72 : i32
    %c0_73 = arith.constant 0 : index
    %92 = arith.index_cast %91 : i32 to index
    %c0_74 = arith.constant 0 : index
    %c0_75 = arith.constant 0 : index
    %93 = vector.load %arg4[%c0_73, %92, %c0_74, %c0_75] : memref<1x20x16x160xbf16, #tpu.memory_space<vmem>>, vector<1x8x16x160xbf16>
    %94 = vector.shape_cast %93 : vector<1x8x16x160xbf16> to vector<8x16x160xbf16>
    %95 = vector.shape_cast %94 : vector<8x16x160xbf16> to vector<128x160xbf16>
    %c4_76 = arith.constant 4 : index
    %c0_77 = arith.constant 0 : index
    %c0_78 = arith.constant 0 : index
    %96 = vector.load %arg8[%c4_76, %c0_77, %c0_78] : memref<5x160x256xbf16, #tpu.memory_space<vmem>>, vector<1x160x256xbf16>
    %97 = vector.shape_cast %96 : vector<1x160x256xbf16> to vector<160x256xbf16>
    %cst_79 = arith.constant dense<0.000000e+00> : vector<128x256xf32>
    %98 = tpu.matmul %95, %97, %cst_79 {dimension_numbers = #tpu.dot_dimension_numbers<[1], [0], [0], [1], [0, 0, 1, 1], [], []>} : vector<128x160xbf16>, vector<160x256xbf16>, vector<128x256xf32> -> vector<128x256xf32>
    %99 = arith.addf %90, %98 : vector<128x256xf32>
    %c0_80 = arith.constant 0 : index
    %c0_81 = arith.constant 0 : index
    %100 = vector.load %arg11[%c0_80, %c0_81] : memref<1x256xf32, #tpu.memory_space<vmem>>, vector<1x256xf32>
    %101 = vector.broadcast %100 : vector<1x256xf32> to vector<128x256xf32>
    %102 = arith.addf %99, %101 : vector<128x256xf32>
    %cst_82 = arith.constant 2.000000e+00 : f32
    %103 = vector.broadcast %cst_82 : f32 to vector<128x256xf32>
    %104 = arith.mulf %103, %8 : vector<128x256xf32>
    %105 = arith.mulf %104, %8 : vector<128x256xf32>
    %cst_83 = arith.constant 1.000000e+00 : f32
    %106 = vector.broadcast %cst_83 : f32 to vector<128x256xf32>
    %107 = arith.subf %105, %106 : vector<128x256xf32>
    %cst_84 = arith.constant 2.000000e+00 : f32
    %108 = vector.broadcast %cst_84 : f32 to vector<128x256xf32>
    %109 = arith.mulf %108, %55 : vector<128x256xf32>
    %110 = arith.mulf %109, %55 : vector<128x256xf32>
    %cst_85 = arith.constant 1.000000e+00 : f32
    %111 = vector.broadcast %cst_85 : f32 to vector<128x256xf32>
    %112 = arith.subf %110, %111 : vector<128x256xf32>
    %113 = arith.addf %107, %112 : vector<128x256xf32>
    %cst_86 = arith.constant 2.000000e+00 : f32
    %114 = vector.broadcast %cst_86 : f32 to vector<128x256xf32>
    %115 = arith.mulf %114, %102 : vector<128x256xf32>
    %116 = arith.mulf %115, %102 : vector<128x256xf32>
    %cst_87 = arith.constant 1.000000e+00 : f32
    %117 = vector.broadcast %cst_87 : f32 to vector<128x256xf32>
    %118 = arith.subf %116, %117 : vector<128x256xf32>
    %119 = arith.addf %113, %118 : vector<128x256xf32>
    %c0_88 = arith.constant 0 : index
    %c0_89 = arith.constant 0 : index
    %120 = vector.load %arg12[%c0_88, %c0_89] : memref<1x256xf32, #tpu.memory_space<vmem>>, vector<1x256xf32>
    %121 = vector.broadcast %120 : vector<1x256xf32> to vector<128x256xf32>
    %122 = arith.addf %119, %121 : vector<128x256xf32>
    %123 = vector.extract_strided_slice %122 {offsets = [0, 0], sizes = [128, 128], strides = [1, 1]} : vector<128x256xf32> to vector<128x128xf32>
    %124 = vector.extract_strided_slice %122 {offsets = [0, 128], sizes = [128, 128], strides = [1, 1]} : vector<128x256xf32> to vector<128x128xf32>
    %cst_90 = arith.constant 5.000000e-01 : f32
    %125 = vector.broadcast %cst_90 : f32 to vector<128x128xf32>
    %126 = arith.mulf %125, %123 : vector<128x128xf32>
    %127 = math.tanh %126 : vector<128x128xf32>
    %cst_91 = arith.constant 5.000000e-01 : f32
    %128 = vector.broadcast %cst_91 : f32 to vector<128x128xf32>
    %129 = arith.mulf %128, %127 : vector<128x128xf32>
    %cst_92 = arith.constant 5.000000e-01 : f32
    %130 = vector.broadcast %cst_92 : f32 to vector<128x128xf32>
    %131 = arith.addf %129, %130 : vector<128x128xf32>
    %132 = math.tanh %124 : vector<128x128xf32>
    %c0_93 = arith.constant 0 : index
    %c0_94 = arith.constant 0 : index
    %c0_95 = arith.constant 0 : index
    %c0_96 = arith.constant 0 : index
    %133 = vector.load %arg5[%c0_93, %c0_94, %c0_95, %c0_96] : memref<1x8x16x64xf32, #tpu.memory_space<vmem>>, vector<1x8x16x64xf32>
    %134 = vector.shape_cast %133 : vector<1x8x16x64xf32> to vector<8x16x64xf32>
    %135 = vector.shape_cast %134 : vector<8x16x64xf32> to vector<128x64xf32>
    %136 = vector.extract_strided_slice %131 {offsets = [0, 64], sizes = [128, 64], strides = [1, 1]} : vector<128x128xf32> to vector<128x64xf32>
    %137 = arith.mulf %136, %135 : vector<128x64xf32>
    %138 = vector.extract_strided_slice %131 {offsets = [0, 0], sizes = [128, 64], strides = [1, 1]} : vector<128x128xf32> to vector<128x64xf32>
    %139 = vector.extract_strided_slice %132 {offsets = [0, 0], sizes = [128, 64], strides = [1, 1]} : vector<128x128xf32> to vector<128x64xf32>
    %140 = arith.mulf %138, %139 : vector<128x64xf32>
    %141 = arith.addf %137, %140 : vector<128x64xf32>
    %142 = vector.shape_cast %141 : vector<128x64xf32> to vector<1x8x16x64xf32>
    %c0_97 = arith.constant 0 : index
    %c0_98 = arith.constant 0 : index
    %c0_99 = arith.constant 0 : index
    %c0_100 = arith.constant 0 : index
    %143 = vector.load %arg13[%c0_97, %c0_98, %c0_99, %c0_100] : memref<1x8x16x64xf32, #tpu.memory_space<vmem>>, vector<1x8x16x64xf32>
    tpu.vector_store %arg13[%c0_97, %c0_98, %c0_99, %c0_100], %142 {strides = array<i32>} : memref<1x8x16x64xf32, #tpu.memory_space<vmem>>, vector<1x8x16x64xf32>,
    %144 = arith.truncf %141 : vector<128x64xf32> to vector<128x64xbf16>
    %145 = vector.shape_cast %144 : vector<128x64xbf16> to vector<1x8x16x64xbf16>
    %c0_101 = arith.constant 0 : index
    %c0_102 = arith.constant 0 : index
    %c0_103 = arith.constant 0 : index
    %c0_104 = arith.constant 0 : index
    %146 = vector.load %arg14[%c0_101, %c0_102, %c0_103, %c0_104] : memref<1x8x16x64xbf16, #tpu.memory_space<vmem>>, vector<1x8x16x64xbf16>
    tpu.vector_store %arg14[%c0_101, %c0_102, %c0_103, %c0_104], %145 {strides = array<i32>} : memref<1x8x16x64xbf16, #tpu.memory_space<vmem>>, vector<1x8x16x64xbf16>,
    %147 = vector.extract_strided_slice %124 {offsets = [0, 64], sizes = [128, 32], strides = [1, 1]} : vector<128x128xf32> to vector<128x32xf32>
    %148 = vector.shape_cast %147 : vector<128x32xf32> to vector<1x8x16x32xf32>
    %c0_105 = arith.constant 0 : index
    %c0_106 = arith.constant 0 : index
    %c0_107 = arith.constant 0 : index
    %c0_108 = arith.constant 0 : index
    %149 = vector.load %arg15[%c0_105, %c0_106, %c0_107, %c0_108] : memref<1x8x16x32xf32, #tpu.memory_space<vmem>>, vector<1x8x16x32xf32>
    tpu.vector_store %arg15[%c0_105, %c0_106, %c0_107, %c0_108], %148 {strides = array<i32>} : memref<1x8x16x32xf32, #tpu.memory_space<vmem>>, vector<1x8x16x32xf32>,
    return
  }
  func.func @transform_0(%arg0: i32, %arg1: i32) -> (i32, i32, i32, i32) {
    %c0_i32 = arith.constant 0 : i32
    %c0_i32_0 = arith.constant 0 : i32
    %c0_i32_1 = arith.constant 0 : i32
    return %arg0, %arg1, %c0_i32, %c0_i32_0 : i32, i32, i32, i32
  }
  func.func @transform_1(%arg0: i32, %arg1: i32) -> (i32, i32, i32, i32) {
    %c0_i32 = arith.constant 0 : i32
    %c0_i32_0 = arith.constant 0 : i32
    %c0_i32_1 = arith.constant 0 : i32
    %c0_i32_2 = arith.constant 0 : i32
    return %arg0, %c0_i32, %c0_i32_0, %c0_i32_1 : i32, i32, i32, i32
  }
  func.func @transform_2(%arg0: i32, %arg1: i32) -> (i32, i32, i32, i32) {
    %c0_i32 = arith.constant 0 : i32
    %c0_i32_0 = arith.constant 0 : i32
    %c0_i32_1 = arith.constant 0 : i32
    %c0_i32_2 = arith.constant 0 : i32
    return %arg0, %c0_i32, %c0_i32_0, %c0_i32_1 : i32, i32, i32, i32
  }
  func.func @transform_3(%arg0: i32, %arg1: i32) -> (i32, i32, i32, i32) {
    %c0_i32 = arith.constant 0 : i32
    %c0_i32_0 = arith.constant 0 : i32
    %c0_i32_1 = arith.constant 0 : i32
    return %arg0, %arg1, %c0_i32, %c0_i32_0 : i32, i32, i32, i32
  }
  func.func @transform_4(%arg0: i32, %arg1: i32) -> (i32, i32) {
    %c0_i32 = arith.constant 0 : i32
    %c0_i32_0 = arith.constant 0 : i32
    %c0_i32_1 = arith.constant 0 : i32
    return %c0_i32, %c0_i32_0 : i32, i32
  }
  func.func @transform_5(%arg0: i32, %arg1: i32) -> (i32, i32, i32) {
    %c0_i32 = arith.constant 0 : i32
    %c0_i32_0 = arith.constant 0 : i32
    %c0_i32_1 = arith.constant 0 : i32
    %c0_i32_2 = arith.constant 0 : i32
    return %c0_i32, %c0_i32_0, %c0_i32_1 : i32, i32, i32
  }
  func.func @transform_6(%arg0: i32, %arg1: i32) -> (i32, i32, i32) {
    %c0_i32 = arith.constant 0 : i32
    %c0_i32_0 = arith.constant 0 : i32
    %c0_i32_1 = arith.constant 0 : i32
    %c0_i32_2 = arith.constant 0 : i32
    return %c0_i32, %c0_i32_0, %c0_i32_1 : i32, i32, i32
  }
  func.func @transform_7(%arg0: i32, %arg1: i32) -> (i32, i32) {
    %c0_i32 = arith.constant 0 : i32
    %c0_i32_0 = arith.constant 0 : i32
    %c0_i32_1 = arith.constant 0 : i32
    return %c0_i32, %c0_i32_0 : i32, i32
  }
  func.func @transform_8(%arg0: i32, %arg1: i32) -> (i32, i32) {
    %c0_i32 = arith.constant 0 : i32
    %c0_i32_0 = arith.constant 0 : i32
    %c0_i32_1 = arith.constant 0 : i32
    return %c0_i32, %c0_i32_0 : i32, i32
  }
  func.func @transform_9(%arg0: i32, %arg1: i32) -> (i32, i32) {
    %c0_i32 = arith.constant 0 : i32
    %c0_i32_0 = arith.constant 0 : i32
    %c0_i32_1 = arith.constant 0 : i32
    return %c0_i32, %c0_i32_0 : i32, i32
  }
  func.func @transform_10(%arg0: i32, %arg1: i32) -> (i32, i32) {
    %c0_i32 = arith.constant 0 : i32
    %c0_i32_0 = arith.constant 0 : i32
    %c0_i32_1 = arith.constant 0 : i32
    return %c0_i32, %c0_i32_0 : i32, i32
  }
  func.func @transform_11(%arg0: i32, %arg1: i32) -> (i32, i32, i32, i32) {
    %c0_i32 = arith.constant 0 : i32
    %c0_i32_0 = arith.constant 0 : i32
    %c0_i32_1 = arith.constant 0 : i32
    return %arg0, %arg1, %c0_i32, %c0_i32_0 : i32, i32, i32, i32
  }
  func.func @transform_12(%arg0: i32, %arg1: i32) -> (i32, i32, i32, i32) {
    %c0_i32 = arith.constant 0 : i32
    %c0_i32_0 = arith.constant 0 : i32
    %c0_i32_1 = arith.constant 0 : i32
    return %arg0, %arg1, %c0_i32, %c0_i32_0 : i32, i32, i32, i32
  }
  func.func @transform_13(%arg0: i32, %arg1: i32) -> (i32, i32, i32, i32) {
    %c0_i32 = arith.constant 0 : i32
    %c0_i32_0 = arith.constant 0 : i32
    %c0_i32_1 = arith.constant 0 : i32
    return %arg0, %arg1, %c0_i32, %c0_i32_0 : i32, i32, i32, i32
  }
}

module attributes {stable_mosaic.version = 11 : i64} {
  func.func @_stage2_kernel(%arg0: i32, %arg1: i32, %arg2: memref<1x20x16x320xbf16, #tpu.memory_space<vmem>>, %arg3: memref<1x8x16x32xf32, #tpu.memory_space<vmem>>, %arg4: memref<5x320x128xbf16, #tpu.memory_space<vmem>>, %arg5: memref<1x128xf32, #tpu.memory_space<vmem>>, %arg6: memref<1x8x16x32xf32, #tpu.memory_space<vmem>>) attributes {dimension_semantics = [#tpu.dimension_semantics<parallel>, #tpu.dimension_semantics<parallel>], iteration_bounds = array<i64: 2, 2>, scalar_prefetch = 0 : i64, scratch_operands = 0 : i64, tpu.core_type = #tpu.core_type<tc>, window_params = [{transform_indices = @transform_0, window_bounds = array<i64: 1, 20, 16, 320>}, {transform_indices = @transform_1, window_bounds = array<i64: 1, 8, 16, 32>}, {pipeline_mode = #tpu.pipeline_mode<synchronous>, transform_indices = @transform_2, window_bounds = array<i64: 5, 320, 128>}, {pipeline_mode = #tpu.pipeline_mode<synchronous>, transform_indices = @transform_3, window_bounds = array<i64: 1, 128>}, {transform_indices = @transform_4, window_bounds = array<i64: 1, 8, 16, 32>}]} {
    %c8_i32 = arith.constant 8 : i32
    %0 = arith.muli %arg1, %c8_i32 : i32
    %c0_i32 = arith.constant 0 : i32
    %1 = arith.addi %0, %c0_i32 : i32
    %c0 = arith.constant 0 : index
    %2 = arith.index_cast %1 : i32 to index
    %c0_0 = arith.constant 0 : index
    %c0_1 = arith.constant 0 : index
    %3 = vector.load %arg2[%c0, %2, %c0_0, %c0_1] : memref<1x20x16x320xbf16, #tpu.memory_space<vmem>>, vector<1x8x16x320xbf16>
    %4 = vector.shape_cast %3 : vector<1x8x16x320xbf16> to vector<8x16x320xbf16>
    %5 = vector.shape_cast %4 : vector<8x16x320xbf16> to vector<128x320xbf16>
    %c0_2 = arith.constant 0 : index
    %c0_3 = arith.constant 0 : index
    %c0_4 = arith.constant 0 : index
    %6 = vector.load %arg4[%c0_2, %c0_3, %c0_4] : memref<5x320x128xbf16, #tpu.memory_space<vmem>>, vector<1x320x128xbf16>
    %7 = vector.shape_cast %6 : vector<1x320x128xbf16> to vector<320x128xbf16>
    %cst = arith.constant dense<0.000000e+00> : vector<128x128xf32>
    %8 = tpu.matmul %5, %7, %cst {dimension_numbers = #tpu.dot_dimension_numbers<[1], [0], [0], [1], [0, 0, 1, 1], [], []>} : vector<128x320xbf16>, vector<320x128xbf16>, vector<128x128xf32> -> vector<128x128xf32>
    %c1_i32 = arith.constant 1 : i32
    %9 = arith.addi %0, %c1_i32 : i32
    %c0_5 = arith.constant 0 : index
    %10 = arith.index_cast %9 : i32 to index
    %c0_6 = arith.constant 0 : index
    %c0_7 = arith.constant 0 : index
    %11 = vector.load %arg2[%c0_5, %10, %c0_6, %c0_7] : memref<1x20x16x320xbf16, #tpu.memory_space<vmem>>, vector<1x8x16x320xbf16>
    %12 = vector.shape_cast %11 : vector<1x8x16x320xbf16> to vector<8x16x320xbf16>
    %13 = vector.shape_cast %12 : vector<8x16x320xbf16> to vector<128x320xbf16>
    %c1 = arith.constant 1 : index
    %c0_8 = arith.constant 0 : index
    %c0_9 = arith.constant 0 : index
    %14 = vector.load %arg4[%c1, %c0_8, %c0_9] : memref<5x320x128xbf16, #tpu.memory_space<vmem>>, vector<1x320x128xbf16>
    %15 = vector.shape_cast %14 : vector<1x320x128xbf16> to vector<320x128xbf16>
    %cst_10 = arith.constant dense<0.000000e+00> : vector<128x128xf32>
    %16 = tpu.matmul %13, %15, %cst_10 {dimension_numbers = #tpu.dot_dimension_numbers<[1], [0], [0], [1], [0, 0, 1, 1], [], []>} : vector<128x320xbf16>, vector<320x128xbf16>, vector<128x128xf32> -> vector<128x128xf32>
    %17 = arith.addf %8, %16 : vector<128x128xf32>
    %c2_i32 = arith.constant 2 : i32
    %18 = arith.addi %0, %c2_i32 : i32
    %c0_11 = arith.constant 0 : index
    %19 = arith.index_cast %18 : i32 to index
    %c0_12 = arith.constant 0 : index
    %c0_13 = arith.constant 0 : index
    %20 = vector.load %arg2[%c0_11, %19, %c0_12, %c0_13] : memref<1x20x16x320xbf16, #tpu.memory_space<vmem>>, vector<1x8x16x320xbf16>
    %21 = vector.shape_cast %20 : vector<1x8x16x320xbf16> to vector<8x16x320xbf16>
    %22 = vector.shape_cast %21 : vector<8x16x320xbf16> to vector<128x320xbf16>
    %c2 = arith.constant 2 : index
    %c0_14 = arith.constant 0 : index
    %c0_15 = arith.constant 0 : index
    %23 = vector.load %arg4[%c2, %c0_14, %c0_15] : memref<5x320x128xbf16, #tpu.memory_space<vmem>>, vector<1x320x128xbf16>
    %24 = vector.shape_cast %23 : vector<1x320x128xbf16> to vector<320x128xbf16>
    %cst_16 = arith.constant dense<0.000000e+00> : vector<128x128xf32>
    %25 = tpu.matmul %22, %24, %cst_16 {dimension_numbers = #tpu.dot_dimension_numbers<[1], [0], [0], [1], [0, 0, 1, 1], [], []>} : vector<128x320xbf16>, vector<320x128xbf16>, vector<128x128xf32> -> vector<128x128xf32>
    %26 = arith.addf %17, %25 : vector<128x128xf32>
    %c3_i32 = arith.constant 3 : i32
    %27 = arith.addi %0, %c3_i32 : i32
    %c0_17 = arith.constant 0 : index
    %28 = arith.index_cast %27 : i32 to index
    %c0_18 = arith.constant 0 : index
    %c0_19 = arith.constant 0 : index
    %29 = vector.load %arg2[%c0_17, %28, %c0_18, %c0_19] : memref<1x20x16x320xbf16, #tpu.memory_space<vmem>>, vector<1x8x16x320xbf16>
    %30 = vector.shape_cast %29 : vector<1x8x16x320xbf16> to vector<8x16x320xbf16>
    %31 = vector.shape_cast %30 : vector<8x16x320xbf16> to vector<128x320xbf16>
    %c3 = arith.constant 3 : index
    %c0_20 = arith.constant 0 : index
    %c0_21 = arith.constant 0 : index
    %32 = vector.load %arg4[%c3, %c0_20, %c0_21] : memref<5x320x128xbf16, #tpu.memory_space<vmem>>, vector<1x320x128xbf16>
    %33 = vector.shape_cast %32 : vector<1x320x128xbf16> to vector<320x128xbf16>
    %cst_22 = arith.constant dense<0.000000e+00> : vector<128x128xf32>
    %34 = tpu.matmul %31, %33, %cst_22 {dimension_numbers = #tpu.dot_dimension_numbers<[1], [0], [0], [1], [0, 0, 1, 1], [], []>} : vector<128x320xbf16>, vector<320x128xbf16>, vector<128x128xf32> -> vector<128x128xf32>
    %35 = arith.addf %26, %34 : vector<128x128xf32>
    %c4_i32 = arith.constant 4 : i32
    %36 = arith.addi %0, %c4_i32 : i32
    %c0_23 = arith.constant 0 : index
    %37 = arith.index_cast %36 : i32 to index
    %c0_24 = arith.constant 0 : index
    %c0_25 = arith.constant 0 : index
    %38 = vector.load %arg2[%c0_23, %37, %c0_24, %c0_25] : memref<1x20x16x320xbf16, #tpu.memory_space<vmem>>, vector<1x8x16x320xbf16>
    %39 = vector.shape_cast %38 : vector<1x8x16x320xbf16> to vector<8x16x320xbf16>
    %40 = vector.shape_cast %39 : vector<8x16x320xbf16> to vector<128x320xbf16>
    %c4 = arith.constant 4 : index
    %c0_26 = arith.constant 0 : index
    %c0_27 = arith.constant 0 : index
    %41 = vector.load %arg4[%c4, %c0_26, %c0_27] : memref<5x320x128xbf16, #tpu.memory_space<vmem>>, vector<1x320x128xbf16>
    %42 = vector.shape_cast %41 : vector<1x320x128xbf16> to vector<320x128xbf16>
    %cst_28 = arith.constant dense<0.000000e+00> : vector<128x128xf32>
    %43 = tpu.matmul %40, %42, %cst_28 {dimension_numbers = #tpu.dot_dimension_numbers<[1], [0], [0], [1], [0, 0, 1, 1], [], []>} : vector<128x320xbf16>, vector<320x128xbf16>, vector<128x128xf32> -> vector<128x128xf32>
    %44 = arith.addf %35, %43 : vector<128x128xf32>
    %c0_29 = arith.constant 0 : index
    %c0_30 = arith.constant 0 : index
    %45 = vector.load %arg5[%c0_29, %c0_30] : memref<1x128xf32, #tpu.memory_space<vmem>>, vector<1x128xf32>
    %46 = vector.broadcast %45 : vector<1x128xf32> to vector<128x128xf32>
    %47 = arith.addf %44, %46 : vector<128x128xf32>
    %c0_31 = arith.constant 0 : index
    %c0_32 = arith.constant 0 : index
    %c0_33 = arith.constant 0 : index
    %c0_34 = arith.constant 0 : index
    %48 = vector.load %arg3[%c0_31, %c0_32, %c0_33, %c0_34] : memref<1x8x16x32xf32, #tpu.memory_space<vmem>>, vector<1x8x16x32xf32>
    %49 = vector.shape_cast %48 : vector<1x8x16x32xf32> to vector<8x16x32xf32>
    %50 = vector.shape_cast %49 : vector<8x16x32xf32> to vector<128x32xf32>
    %51 = vector.extract_strided_slice %47 {offsets = [0, 0], sizes = [128, 32], strides = [1, 1]} : vector<128x128xf32> to vector<128x32xf32>
    %52 = arith.addf %50, %51 : vector<128x32xf32>
    %cst_35 = arith.constant 5.000000e-01 : f32
    %53 = vector.broadcast %cst_35 : f32 to vector<128x32xf32>
    %54 = arith.mulf %53, %52 : vector<128x32xf32>
    %55 = math.tanh %54 : vector<128x32xf32>
    %cst_36 = arith.constant 5.000000e-01 : f32
    %56 = vector.broadcast %cst_36 : f32 to vector<128x32xf32>
    %57 = arith.mulf %56, %55 : vector<128x32xf32>
    %cst_37 = arith.constant 5.000000e-01 : f32
    %58 = vector.broadcast %cst_37 : f32 to vector<128x32xf32>
    %59 = arith.addf %57, %58 : vector<128x32xf32>
    %60 = vector.extract_strided_slice %47 {offsets = [0, 32], sizes = [128, 32], strides = [1, 1]} : vector<128x128xf32> to vector<128x32xf32>
    %61 = math.tanh %60 : vector<128x32xf32>
    %62 = arith.mulf %59, %61 : vector<128x32xf32>
    %63 = vector.shape_cast %62 : vector<128x32xf32> to vector<1x8x16x32xf32>
    %c0_38 = arith.constant 0 : index
    %c0_39 = arith.constant 0 : index
    %c0_40 = arith.constant 0 : index
    %c0_41 = arith.constant 0 : index
    %64 = vector.load %arg6[%c0_38, %c0_39, %c0_40, %c0_41] : memref<1x8x16x32xf32, #tpu.memory_space<vmem>>, vector<1x8x16x32xf32>
    tpu.vector_store %arg6[%c0_38, %c0_39, %c0_40, %c0_41], %63 {strides = array<i32>} : memref<1x8x16x32xf32, #tpu.memory_space<vmem>>, vector<1x8x16x32xf32>,
    return
  }
  func.func @transform_0(%arg0: i32, %arg1: i32) -> (i32, i32, i32, i32) {
    %c0_i32 = arith.constant 0 : i32
    %c0_i32_0 = arith.constant 0 : i32
    %c0_i32_1 = arith.constant 0 : i32
    %c0_i32_2 = arith.constant 0 : i32
    return %arg0, %c0_i32, %c0_i32_0, %c0_i32_1 : i32, i32, i32, i32
  }
  func.func @transform_1(%arg0: i32, %arg1: i32) -> (i32, i32, i32, i32) {
    %c0_i32 = arith.constant 0 : i32
    %c0_i32_0 = arith.constant 0 : i32
    %c0_i32_1 = arith.constant 0 : i32
    return %arg0, %arg1, %c0_i32, %c0_i32_0 : i32, i32, i32, i32
  }
  func.func @transform_2(%arg0: i32, %arg1: i32) -> (i32, i32, i32) {
    %c0_i32 = arith.constant 0 : i32
    %c0_i32_0 = arith.constant 0 : i32
    %c0_i32_1 = arith.constant 0 : i32
    %c0_i32_2 = arith.constant 0 : i32
    return %c0_i32, %c0_i32_0, %c0_i32_1 : i32, i32, i32
  }
  func.func @transform_3(%arg0: i32, %arg1: i32) -> (i32, i32) {
    %c0_i32 = arith.constant 0 : i32
    %c0_i32_0 = arith.constant 0 : i32
    %c0_i32_1 = arith.constant 0 : i32
    return %c0_i32, %c0_i32_0 : i32, i32
  }
  func.func @transform_4(%arg0: i32, %arg1: i32) -> (i32, i32, i32, i32) {
    %c0_i32 = arith.constant 0 : i32
    %c0_i32_0 = arith.constant 0 : i32
    %c0_i32_1 = arith.constant 0 : i32
    return %arg0, %arg1, %c0_i32, %c0_i32_0 : i32, i32, i32, i32
  }
}

</mosaic_0001>

<llo_original>
// kernel: st_lstm_cell_poly.2
$region0: #{st_lstm_cell_poly.2}
  #allocation0 [shape = 'u32[]', space=smem, size = 0x4, offset = 0x4, fixed_abs, tag = 'smem constant byte address 0x4 - core index']
  #allocation1 [shape = 'u32[144,128]{1,0:T(1,128)}', space=vmem, size = 0x12000, scoped, tag = 'internal scratch']
  %s0 = inlined_call_operand.vmem [shape: bf16[2,16,16,128], index: 0, kind: input, shape index: {}]
  %s1 = inlined_call_operand.vmem [shape: bf16[2,20,16,160], index: 1, kind: input, shape index: {}]
  %s2 = inlined_call_operand.vmem [shape: bf16[2,20,16,160], index: 2, kind: input, shape index: {}]
  %s3 = inlined_call_operand.vmem [shape: f32[2,16,16,64], index: 3, kind: input, shape index: {}]
  %s4 = inlined_call_operand.vmem [shape: bf16[128,256], index: 4, kind: input, shape index: {}]
  %s5 = inlined_call_operand.vmem [shape: bf16[5,160,256], index: 5, kind: input, shape index: {}]
  %s6 = inlined_call_operand.vmem [shape: bf16[5,160,256], index: 6, kind: input, shape index: {}]
  %s7 = inlined_call_operand.vmem [shape: f32[1,256], index: 7, kind: input, shape index: {}]
  %s8 = inlined_call_operand.vmem [shape: f32[1,256], index: 8, kind: input, shape index: {}]
  %s9 = inlined_call_operand.vmem [shape: f32[1,256], index: 9, kind: input, shape index: {}]
  %s10 = inlined_call_operand.vmem [shape: f32[1,256], index: 10, kind: input, shape index: {}]
  %s11 = inlined_call_operand.vmem [shape: f32[2,16,16,64], index: 11, kind: output, shape index: {0}]
  %s12 = inlined_call_operand.vmem [shape: bf16[2,16,16,64], index: 12, kind: output, shape index: {1}]
  %s13 = inlined_call_operand.vmem [shape: f32[2,16,16,32], index: 13, kind: output, shape index: {2}]
  %14 = xla_tuple %s11, %s12, %s13
  %s15 = sld [smem:[#allocation0]]
  $region93: #{st_lstm_cell_poly.2} parent=0
    _
  %s17 = ssub.s32 1, %s15
  %s18 = scalar_select 0, %s17, %s15
  loop: start=0, step=1, limit=6
  $region2: #{st_lstm_cell_poly.2} parent=0 // loop_pre_header
    _
  $region3: #{st_lstm_cell_poly.2} parent=0 // loop_header
    %s20 = sphi 0, %s24
    %p21 = scmp.ge.s32.totalorder %s20, 6
    %s27 = sphi 0, %s39
    %s28 = sphi 0, %s35
    %s29 = sphi 0, %s27
    %s30 = sphi 0, %s28
    %s31 = sphi 0, %s29
    %s32 = sphi 0, %s30
    %s44 = sphi 0, %s46
    %s47 = sphi 0, %s44
    %s48 = sphi 0, %s47
    %s64 = sphi 0, %s48
    %s70 = sphi 0, %s72
    %s73 = sphi 0, %s70
    %s74 = sphi 0, %s73
    %s90 = sphi 0, %s74
    %s96 = sphi 0, %s98
    %s99 = sphi 0, %s96
    %s100 = sphi 0, %s99
    %s116 = sphi 0, %s100
    %s124 = sphi 0, %s126
    %s127 = sphi 0, %s124
    %s128 = sphi 0, %s127
    %s144 = sphi 0, %s128
    %s148 = sphi 0, %s148
    %s150 = sphi 0, %s148
    %s151 = sphi 0, %s150
    %s165 = sphi 0, %s151
    %s169 = sphi 0, %s169
    %s171 = sphi 0, %s169
    %s172 = sphi 0, %s171
    %s186 = sphi 0, %s172
    %s190 = sphi 0, %s190
    %s192 = sphi 0, %s190
    %s193 = sphi 0, %s192
    %s207 = sphi 0, %s193
    %s211 = sphi 0, %s211
    %s213 = sphi 0, %s211
    %s214 = sphi 0, %s213
    %s228 = sphi 0, %s214
    %s232 = sphi 0, %s232
    %s234 = sphi 0, %s232
    %s235 = sphi 0, %s234
    %s249 = sphi 0, %s235
    %s253 = sphi 0, %s253
    %s255 = sphi 0, %s253
    %s256 = sphi 0, %s255
    %s270 = sphi 0, %s256
    %s274 = sphi 0, %s274
    %s276 = sphi 0, %s274
    %s277 = sphi 0, %s276
    %s291 = sphi 0, %s277
    %s299 = sphi 0, %s301
    %s302 = sphi 0, %s299
    %s303 = sphi 0, %s302
    %s319 = sphi 0, %s303
    %s327 = sphi 0, %s329
    %s330 = sphi 0, %s327
    %s331 = sphi 0, %s330
    %s347 = sphi 0, %s331
    %s355 = sphi 0, %s357
    %s358 = sphi 0, %s355
    %s359 = sphi 0, %s358
    %s375 = sphi 0, %s359
  $region4: #{st_lstm_cell_poly.2} parent=0 // loop_header_branch
    %23 = sbr.rel (%p21) target = $region8
  $region5: #{st_lstm_cell_poly.2} parent=0 // loop_body
    %s25 = ssub.s32 %s20, 1
    %s26 = ssub.s32 %s20, 2
    %s33 = sadd.s32 1, %s28
    %p34 = scmp.ge.s32.totalorder %s33, 2
    %s35 = scalar_select %p34, 0, %s33
    %s36 = sadd.s32 1, %s27
    %s37 = scalar_select %p34, %s36, %s27
    %p38 = scmp.ge.s32.totalorder %s37, 2
    %s39 = scalar_select %p38, 0, %s37
    %s40 = ssub.s32 %s27, %s39
    %s41 = ssub.s32 %s28, %s35
    %s42 = sor.u32 %s40, %s41
    %p43 = scmp.eq.s32.totalorder %s42, 0
    %s45 = sadd.s32 %s44, 1
    %s46 = scalar_select %p43, %s44, %s45
    %p49 = pneg %p43
    %p50 = scmp.eq.s32.totalorder %s20, 3
    %p51 = por %p49, %p50
    %p52 = scmp.ne.s32.totalorder %s44, %s47
    %p53 = scmp.eq.s32.totalorder %s20, 0
    %p54 = por %p52, %p53
    %p55 = scmp.ne.s32.totalorder %s44, %s47
    %p56 = scmp.eq.s32.totalorder %s25, 3
    %p57 = por %p55, %p56
    %p58 = scmp.ne.s32.totalorder %s47, %s48
    %p59 = scmp.eq.s32.totalorder %s25, 0
    %p60 = por %p58, %p59
    %p61 = scmp.ne.s32.totalorder %s47, %s48
    %p62 = scmp.eq.s32.totalorder %s26, 3
    %p63 = por %p61, %p62
    %p65 = scmp.ne.s32.totalorder %s48, %s64
    %p66 = scmp.eq.s32.totalorder %s26, 0
    %p67 = por %p65, %p66
    %s68 = ssub.s32 %s27, %s39
    %p69 = scmp.eq.s32.totalorder %s68, 0
    %s71 = sadd.s32 %s70, 1
    %s72 = scalar_select %p69, %s70, %s71
    %p75 = pneg %p69
    %p76 = scmp.eq.s32.totalorder %s20, 3
    %p77 = por %p75, %p76
    %p78 = scmp.ne.s32.totalorder %s70, %s73
    %p79 = scmp.eq.s32.totalorder %s20, 0
    %p80 = por %p78, %p79
    %p81 = scmp.ne.s32.totalorder %s70, %s73
    %p82 = scmp.eq.s32.totalorder %s25, 3
    %p83 = por %p81, %p82
    %p84 = scmp.ne.s32.totalorder %s73, %s74
    %p85 = scmp.eq.s32.totalorder %s25, 0
    %p86 = por %p84, %p85
    %p87 = scmp.ne.s32.totalorder %s73, %s74
    %p88 = scmp.eq.s32.totalorder %s26, 3
    %p89 = por %p87, %p88
    %p91 = scmp.ne.s32.totalorder %s74, %s90
    %p92 = scmp.eq.s32.totalorder %s26, 0
    %p93 = por %p91, %p92
    %s94 = ssub.s32 %s27, %s39
    %p95 = scmp.eq.s32.totalorder %s94, 0
    %s97 = sadd.s32 %s96, 1
    %s98 = scalar_select %p95, %s96, %s97
    %p101 = pneg %p95
    %p102 = scmp.eq.s32.totalorder %s20, 3
    %p103 = por %p101, %p102
    %p104 = scmp.ne.s32.totalorder %s96, %s99
    %p105 = scmp.eq.s32.totalorder %s20, 0
    %p106 = por %p104, %p105
    %p107 = scmp.ne.s32.totalorder %s96, %s99
    %p108 = scmp.eq.s32.totalorder %s25, 3
    %p109 = por %p107, %p108
    %p110 = scmp.ne.s32.totalorder %s99, %s100
    %p111 = scmp.eq.s32.totalorder %s25, 0
    %p112 = por %p110, %p111
    %p113 = scmp.ne.s32.totalorder %s99, %s100
    %p114 = scmp.eq.s32.totalorder %s26, 3
    %p115 = por %p113, %p114
    %p117 = scmp.ne.s32.totalorder %s100, %s116
    %p118 = scmp.eq.s32.totalorder %s26, 0
    %p119 = por %p117, %p118
    %s120 = ssub.s32 %s27, %s39
    %s121 = ssub.s32 %s28, %s35
    %s122 = sor.u32 %s120, %s121
    %p123 = scmp.eq.s32.totalorder %s122, 0
    %s125 = sadd.s32 %s124, 1
    %s126 = scalar_select %p123, %s124, %s125
    %p129 = pneg %p123
    %p130 = scmp.eq.s32.totalorder %s20, 3
    %p131 = por %p129, %p130
    %p132 = scmp.ne.s32.totalorder %s124, %s127
    %p133 = scmp.eq.s32.totalorder %s20, 0
    %p134 = por %p132, %p133
    %p135 = scmp.ne.s32.totalorder %s124, %s127
    %p136 = scmp.eq.s32.totalorder %s25, 3
    %p137 = por %p135, %p136
    %p138 = scmp.ne.s32.totalorder %s127, %s128
    %p139 = scmp.eq.s32.totalorder %s25, 0
    %p140 = por %p138, %p139
    %p141 = scmp.ne.s32.totalorder %s127, %s128
    %p142 = scmp.eq.s32.totalorder %s26, 3
    %p143 = por %p141, %p142
    %p145 = scmp.ne.s32.totalorder %s128, %s144
    %p146 = scmp.eq.s32.totalorder %s26, 0
    %p147 = por %p145, %p146
    %s149 = sadd.s32 %s148, 1
    %p152 = scmp.eq.s32.totalorder %s20, 3
    %p153 = scmp.ne.s32.totalorder %s148, %s150
    %p154 = scmp.eq.s32.totalorder %s20, 0
    %p155 = por %p153, %p154
    %p156 = scmp.ne.s32.totalorder %s148, %s150
    %p157 = scmp.eq.s32.totalorder %s25, 3
    %p158 = por %p156, %p157
    %p159 = scmp.ne.s32.totalorder %s150, %s151
    %p160 = scmp.eq.s32.totalorder %s25, 0
    %p161 = por %p159, %p160
    %p162 = scmp.ne.s32.totalorder %s150, %s151
    %p163 = scmp.eq.s32.totalorder %s26, 3
    %p164 = por %p162, %p163
    %p166 = scmp.ne.s32.totalorder %s151, %s165
    %p167 = scmp.eq.s32.totalorder %s26, 0
    %p168 = por %p166, %p167
    %s170 = sadd.s32 %s169, 1
    %p173 = scmp.eq.s32.totalorder %s20, 3
    %p174 = scmp.ne.s32.totalorder %s169, %s171
    %p175 = scmp.eq.s32.totalorder %s20, 0
    %p176 = por %p174, %p175
    %p177 = scmp.ne.s32.totalorder %s169, %s171
    %p178 = scmp.eq.s32.totalorder %s25, 3
    %p179 = por %p177, %p178
    %p180 = scmp.ne.s32.totalorder %s171, %s172
    %p181 = scmp.eq.s32.totalorder %s25, 0
    %p182 = por %p180, %p181
    %p183 = scmp.ne.s32.totalorder %s171, %s172
    %p184 = scmp.eq.s32.totalorder %s26, 3
    %p185 = por %p183, %p184
    %p187 = scmp.ne.s32.totalorder %s172, %s186
    %p188 = scmp.eq.s32.totalorder %s26, 0
    %p189 = por %p187, %p188
    %s191 = sadd.s32 %s190, 1
    %p194 = scmp.eq.s32.totalorder %s20, 3
    %p195 = scmp.ne.s32.totalorder %s190, %s192
    %p196 = scmp.eq.s32.totalorder %s20, 0
    %p197 = por %p195, %p196
    %p198 = scmp.ne.s32.totalorder %s190, %s192
    %p199 = scmp.eq.s32.totalorder %s25, 3
    %p200 = por %p198, %p199
    %p201 = scmp.ne.s32.totalorder %s192, %s193
    %p202 = scmp.eq.s32.totalorder %s25, 0
    %p203 = por %p201, %p202
    %p204 = scmp.ne.s32.totalorder %s192, %s193
    %p205 = scmp.eq.s32.totalorder %s26, 3
    %p206 = por %p204, %p205
    %p208 = scmp.ne.s32.totalorder %s193, %s207
    %p209 = scmp.eq.s32.totalorder %s26, 0
    %p210 = por %p208, %p209
    %s212 = sadd.s32 %s211, 1
    %p215 = scmp.eq.s32.totalorder %s20, 3
    %p216 = scmp.ne.s32.totalorder %s211, %s213
    %p217 = scmp.eq.s32.totalorder %s20, 0
    %p218 = por %p216, %p217
    %p219 = scmp.ne.s32.totalorder %s211, %s213
    %p220 = scmp.eq.s32.totalorder %s25, 3
    %p221 = por %p219, %p220
    %p222 = scmp.ne.s32.totalorder %s213, %s214
    %p223 = scmp.eq.s32.totalorder %s25, 0
    %p224 = por %p222, %p223
    %p225 = scmp.ne.s32.totalorder %s213, %s214
    %p226 = scmp.eq.s32.totalorder %s26, 3
    %p227 = por %p225, %p226
    %p229 = scmp.ne.s32.totalorder %s214, %s228
    %p230 = scmp.eq.s32.totalorder %s26, 0
    %p231 = por %p229, %p230
    %s233 = sadd.s32 %s232, 1
    %p236 = scmp.eq.s32.totalorder %s20, 3
    %p237 = scmp.ne.s32.totalorder %s232, %s234
    %p238 = scmp.eq.s32.totalorder %s20, 0
    %p239 = por %p237, %p238
    %p240 = scmp.ne.s32.totalorder %s232, %s234
    %p241 = scmp.eq.s32.totalorder %s25, 3
    %p242 = por %p240, %p241
    %p243 = scmp.ne.s32.totalorder %s234, %s235
    %p244 = scmp.eq.s32.totalorder %s25, 0
    %p245 = por %p243, %p244
    %p246 = scmp.ne.s32.totalorder %s234, %s235
    %p247 = scmp.eq.s32.totalorder %s26, 3
    %p248 = por %p246, %p247
    %p250 = scmp.ne.s32.totalorder %s235, %s249
    %p251 = scmp.eq.s32.totalorder %s26, 0
    %p252 = por %p250, %p251
    %s254 = sadd.s32 %s253, 1
    %p257 = scmp.eq.s32.totalorder %s20, 3
    %p258 = scmp.ne.s32.totalorder %s253, %s255
    %p259 = scmp.eq.s32.totalorder %s20, 0
    %p260 = por %p258, %p259
    %p261 = scmp.ne.s32.totalorder %s253, %s255
    %p262 = scmp.eq.s32.totalorder %s25, 3
    %p263 = por %p261, %p262
    %p264 = scmp.ne.s32.totalorder %s255, %s256
    %p265 = scmp.eq.s32.totalorder %s25, 0
    %p266 = por %p264, %p265
    %p267 = scmp.ne.s32.totalorder %s255, %s256
    %p268 = scmp.eq.s32.totalorder %s26, 3
    %p269 = por %p267, %p268
    %p271 = scmp.ne.s32.totalorder %s256, %s270
    %p272 = scmp.eq.s32.totalorder %s26, 0
    %p273 = por %p271, %p272
    %s275 = sadd.s32 %s274, 1
    %p278 = scmp.eq.s32.totalorder %s20, 3
    %p279 = scmp.ne.s32.totalorder %s274, %s276
    %p280 = scmp.eq.s32.totalorder %s20, 0
    %p281 = por %p279, %p280
    %p282 = scmp.ne.s32.totalorder %s274, %s276
    %p283 = scmp.eq.s32.totalorder %s25, 3
    %p284 = por %p282, %p283
    %p285 = scmp.ne.s32.totalorder %s276, %s277
    %p286 = scmp.eq.s32.totalorder %s25, 0
    %p287 = por %p285, %p286
    %p288 = scmp.ne.s32.totalorder %s276, %s277
    %p289 = scmp.eq.s32.totalorder %s26, 3
    %p290 = por %p288, %p289
    %p292 = scmp.ne.s32.totalorder %s277, %s291
    %p293 = scmp.eq.s32.totalorder %s26, 0
    %p294 = por %p292, %p293
    %s295 = ssub.s32 %s27, %s39
    %s296 = ssub.s32 %s28, %s35
    %s297 = sor.u32 %s295, %s296
    %p298 = scmp.eq.s32.totalorder %s297, 0
    %s300 = sadd.s32 %s299, 1
    %s301 = scalar_select %p298, %s299, %s300
    %p304 = pneg %p298
    %p305 = scmp.eq.s32.totalorder %s20, 3
    %p306 = por %p304, %p305
    %p307 = scmp.ne.s32.totalorder %s299, %s302
    %p308 = scmp.eq.s32.totalorder %s20, 0
    %p309 = por %p307, %p308
    %p310 = scmp.ne.s32.totalorder %s299, %s302
    %p311 = scmp.eq.s32.totalorder %s25, 3
    %p312 = por %p310, %p311
    %p313 = scmp.ne.s32.totalorder %s302, %s303
    %p314 = scmp.eq.s32.totalorder %s25, 0
    %p315 = por %p313, %p314
    %p316 = scmp.ne.s32.totalorder %s302, %s303
    %p317 = scmp.eq.s32.totalorder %s26, 3
    %p318 = por %p316, %p317
    %p320 = scmp.ne.s32.totalorder %s303, %s319
    %p321 = scmp.eq.s32.totalorder %s26, 0
    %p322 = por %p320, %p321
    %s323 = ssub.s32 %s27, %s39
    %s324 = ssub.s32 %s28, %s35
    %s325 = sor.u32 %s323, %s324
    %p326 = scmp.eq.s32.totalorder %s325, 0
    %s328 = sadd.s32 %s327, 1
    %s329 = scalar_select %p326, %s327, %s328
    %p332 = pneg %p326
    %p333 = scmp.eq.s32.totalorder %s20, 3
    %p334 = por %p332, %p333
    %p335 = scmp.ne.s32.totalorder %s327, %s330
    %p336 = scmp.eq.s32.totalorder %s20, 0
    %p337 = por %p335, %p336
    %p338 = scmp.ne.s32.totalorder %s327, %s330
    %p339 = scmp.eq.s32.totalorder %s25, 3
    %p340 = por %p338, %p339
    %p341 = scmp.ne.s32.totalorder %s330, %s331
    %p342 = scmp.eq.s32.totalorder %s25, 0
    %p343 = por %p341, %p342
    %p344 = scmp.ne.s32.totalorder %s330, %s331
    %p345 = scmp.eq.s32.totalorder %s26, 3
    %p346 = por %p344, %p345
    %p348 = scmp.ne.s32.totalorder %s331, %s347
    %p349 = scmp.eq.s32.totalorder %s26, 0
    %p350 = por %p348, %p349
    %s351 = ssub.s32 %s27, %s39
    %s352 = ssub.s32 %s28, %s35
    %s353 = sor.u32 %s351, %s352
    %p354 = scmp.eq.s32.totalorder %s353, 0
    %s356 = sadd.s32 %s355, 1
    %s357 = scalar_select %p354, %s355, %s356
    %p360 = pneg %p354
    %p361 = scmp.eq.s32.totalorder %s20, 3
    %p362 = por %p360, %p361
    %p363 = scmp.ne.s32.totalorder %s355, %s358
    %p364 = scmp.eq.s32.totalorder %s20, 0
    %p365 = por %p363, %p364
    %p366 = scmp.ne.s32.totalorder %s355, %s358
    %p367 = scmp.eq.s32.totalorder %s25, 3
    %p368 = por %p366, %p367
    %p369 = scmp.ne.s32.totalorder %s358, %s359
    %p370 = scmp.eq.s32.totalorder %s25, 0
    %p371 = por %p369, %p370
    %p372 = scmp.ne.s32.totalorder %s358, %s359
    %p373 = scmp.eq.s32.totalorder %s26, 3
    %p374 = por %p372, %p373
    %p376 = scmp.ne.s32.totalorder %s359, %s375
    %p377 = scmp.eq.s32.totalorder %s26, 0
    %p378 = por %p376, %p377
    %p379 = scmp.le.s32.totalorder 1, %s20
    %p380 = scmp.lt.s32.totalorder %s20, 5
    %p381 = pnand %p379, %p380
    %p382 = pneg %p381
    // Predicated region
    $region9: #{st_lstm_cell_poly.2} parent=5 // pred_check
      _
    $region10: #{st_lstm_cell_poly.2} parent=5 // pred_check_branch
      %384 = sbr.rel (%p381) target = $region12
    $region11: #{st_lstm_cell_poly.2} parent=5 // pred_region
      %s385 = ssub.s32 %s20, 1
      // Predicated region
      $region13: #{st_lstm_cell_poly.2} parent=11 // pred_check
        %p386 = pneg %p161
      $region14: #{st_lstm_cell_poly.2} parent=11 // pred_check_branch
        %388 = sbr.rel (%p386) target = $region16
      $region15: #{st_lstm_cell_poly.2} parent=11 // pred_region
        _
      $region16: #{st_lstm_cell_poly.2} parent=11 // pred_fallthru
        _
      // Predicated region
      $region17: #{st_lstm_cell_poly.2} parent=11 // pred_check
        %p389 = pneg %p182
      $region18: #{st_lstm_cell_poly.2} parent=11 // pred_check_branch
        %391 = sbr.rel (%p389) target = $region20
      $region19: #{st_lstm_cell_poly.2} parent=11 // pred_region
        _
      $region20: #{st_lstm_cell_poly.2} parent=11 // pred_fallthru
        _
      // Predicated region
      $region21: #{st_lstm_cell_poly.2} parent=11 // pred_check
        %p392 = pneg %p203
      $region22: #{st_lstm_cell_poly.2} parent=11 // pred_check_branch
        %394 = sbr.rel (%p392) target = $region24
      $region23: #{st_lstm_cell_poly.2} parent=11 // pred_region
        _
      $region24: #{st_lstm_cell_poly.2} parent=11 // pred_fallthru
        _
      // Predicated region
      $region25: #{st_lstm_cell_poly.2} parent=11 // pred_check
        %p395 = pneg %p224
      $region26: #{st_lstm_cell_poly.2} parent=11 // pred_check_branch
        %397 = sbr.rel (%p395) target = $region28
      $region27: #{st_lstm_cell_poly.2} parent=11 // pred_region
        _
      $region28: #{st_lstm_cell_poly.2} parent=11 // pred_fallthru
        _
      // Predicated region
      $region29: #{st_lstm_cell_poly.2} parent=11 // pred_check
        %p398 = pneg %p245
      $region30: #{st_lstm_cell_poly.2} parent=11 // pred_check_branch
        %400 = sbr.rel (%p398) target = $region32
      $region31: #{st_lstm_cell_poly.2} parent=11 // pred_region
        _
      $region32: #{st_lstm_cell_poly.2} parent=11 // pred_fallthru
        _
      // Predicated region
      $region33: #{st_lstm_cell_poly.2} parent=11 // pred_check
        %p401 = pneg %p266
      $region34: #{st_lstm_cell_poly.2} parent=11 // pred_check_branch
        %403 = sbr.rel (%p401) target = $region36
      $region35: #{st_lstm_cell_poly.2} parent=11 // pred_region
        _
      $region36: #{st_lstm_cell_poly.2} parent=11 // pred_fallthru
        _
      // Predicated region
      $region37: #{st_lstm_cell_poly.2} parent=11 // pred_check
        %p404 = pneg %p287
      $region38: #{st_lstm_cell_poly.2} parent=11 // pred_check_branch
        %406 = sbr.rel (%p404) target = $region40
      $region39: #{st_lstm_cell_poly.2} parent=11 // pred_region
        _
      $region40: #{st_lstm_cell_poly.2} parent=11 // pred_fallthru
        _
    $region12: #{st_lstm_cell_poly.2} parent=5 // pred_fallthru
      _
    %p407 = scmp.lt.s32.totalorder %s20, 4
    // Predicated region
    $region41: #{st_lstm_cell_poly.2} parent=5 // pred_check
      %p408 = pneg %p407
    $region42: #{st_lstm_cell_poly.2} parent=5 // pred_check_branch
      %410 = sbr.rel (%p408) target = $region44
    $region43: #{st_lstm_cell_poly.2} parent=5 // pred_region
      // Predicated region
      $region45: #{st_lstm_cell_poly.2} parent=43 // pred_check
        %p411 = pneg %p54
      $region46: #{st_lstm_cell_poly.2} parent=43 // pred_check_branch
        %413 = sbr.rel (%p411) target = $region48
      $region47: #{st_lstm_cell_poly.2} parent=43 // pred_region
        %s414 = smul.u32 8, %s28
        %p415 = scmp.lt.s32.totalorder %s27, 1
        %s416 = scalar_select %p415, %s27, 1
        %p417 = scmp.lt.s32.totalorder %s414, 15
        %s418 = scalar_select %p417, %s414, 15
        %s419 = smul.addr %s418, 2
        %s420 = smul.addr %s416, 32
        %s421 = sadd.s32 %s419, %s420
        %s422 = smul.addr %s421, 4
        %s423 = scalar_lea.vmem %s0, %s422
        %s424 = smul.u32 8, %s28
      $region48: #{st_lstm_cell_poly.2} parent=43 // pred_fallthru
        _
      // Predicated region
      $region49: #{st_lstm_cell_poly.2} parent=43 // pred_check
        %p425 = pneg %p80
      $region50: #{st_lstm_cell_poly.2} parent=43 // pred_check_branch
        %427 = sbr.rel (%p425) target = $region52
      $region51: #{st_lstm_cell_poly.2} parent=43 // pred_region
        %p428 = scmp.lt.s32.totalorder %s27, 1
        %s429 = scalar_select %p428, %s27, 1
        %s430 = smul.addr %s429, 80
        %s431 = smul.addr %s430, 4
        %s432 = scalar_lea.vmem %s1, %s431
      $region52: #{st_lstm_cell_poly.2} parent=43 // pred_fallthru
        _
      // Predicated region
      $region53: #{st_lstm_cell_poly.2} parent=43 // pred_check
        %p433 = pneg %p106
      $region54: #{st_lstm_cell_poly.2} parent=43 // pred_check_branch
        %435 = sbr.rel (%p433) target = $region56
      $region55: #{st_lstm_cell_poly.2} parent=43 // pred_region
        %p436 = scmp.lt.s32.totalorder %s27, 1
        %s437 = scalar_select %p436, %s27, 1
        %s438 = smul.addr %s437, 80
        %s439 = smul.addr %s438, 4
        %s440 = scalar_lea.vmem %s2, %s439
      $region56: #{st_lstm_cell_poly.2} parent=43 // pred_fallthru
        _
      // Predicated region
      $region57: #{st_lstm_cell_poly.2} parent=43 // pred_check
        %p441 = pneg %p134
      $region58: #{st_lstm_cell_poly.2} parent=43 // pred_check_branch
        %443 = sbr.rel (%p441) target = $region60
      $region59: #{st_lstm_cell_poly.2} parent=43 // pred_region
        %s444 = smul.u32 8, %s28
        %p445 = scmp.lt.s32.totalorder %s27, 1
        %s446 = scalar_select %p445, %s27, 1
        %p447 = scmp.lt.s32.totalorder %s444, 15
        %s448 = scalar_select %p447, %s444, 15
        %s449 = smul.addr %s448, 2
        %s450 = smul.addr %s446, 32
        %s451 = sadd.s32 %s449, %s450
        %s452 = smul.addr %s451, 8
        %s453 = scalar_lea.vmem %s3, %s452
        %s454 = smul.u32 8, %s28
      $region60: #{st_lstm_cell_poly.2} parent=43 // pred_fallthru
        _
    $region44: #{st_lstm_cell_poly.2} parent=5 // pred_fallthru
      _
    %p455 = scmp.le.s32.totalorder 1, %s20
    %p456 = scmp.lt.s32.totalorder %s20, 5
    %p457 = pnand %p455, %p456
    %p458 = pneg %p457
    // Predicated region
    $region61: #{st_lstm_cell_poly.2} parent=5 // pred_check
      _
    $region62: #{st_lstm_cell_poly.2} parent=5 // pred_check_branch
      %460 = sbr.rel (%p457) target = $region64
    $region63: #{st_lstm_cell_poly.2} parent=5 // pred_region
      %s461 = ssub.s32 %s20, 1
      %s462 = smul.u32 8, %s30
      %p463 = scmp.lt.s32.totalorder %s29, 1
      %s464 = scalar_select %p463, %s29, 1
      %p465 = scmp.lt.s32.totalorder %s462, 15
      %s466 = scalar_select %p465, %s462, 15
      %s467 = smul.addr %s466, 2
      %s468 = smul.addr %s464, 32
      %s469 = sadd.s32 %s467, %s468
      %s470 = smul.addr %s469, 4
      %s471 = scalar_lea.vmem %s0, %s470
      %p472 = pneg %p60
      %p473 = pneg %p57
      %p474 = scmp.lt.s32.totalorder %s29, 1
      %s475 = scalar_select %p474, %s29, 1
      %s476 = smul.addr %s475, 80
      %s477 = smul.addr %s476, 4
      %s478 = scalar_lea.vmem %s1, %s477
      %p479 = pneg %p86
      %p480 = pneg %p83
      %p481 = scmp.lt.s32.totalorder %s29, 1
      %s482 = scalar_select %p481, %s29, 1
      %s483 = smul.addr %s482, 80
      %s484 = smul.addr %s483, 4
      %s485 = scalar_lea.vmem %s2, %s484
      %p486 = pneg %p112
      %p487 = pneg %p109
      %s488 = smul.u32 8, %s30
      %p489 = scmp.lt.s32.totalorder %s29, 1
      %s490 = scalar_select %p489, %s29, 1
      %p491 = scmp.lt.s32.totalorder %s488, 15
      %s492 = scalar_select %p491, %s488, 15
      %s493 = smul.addr %s492, 2
      %s494 = smul.addr %s490, 32
      %s495 = sadd.s32 %s493, %s494
      %s496 = smul.addr %s495, 8
      %s497 = scalar_lea.vmem %s3, %s496
      %p498 = pneg %p140
      %p499 = pneg %p137
      %p500 = pneg %p161
      %p501 = pneg %p158
      %p502 = pneg %p182
      %p503 = pneg %p179
      %p504 = pneg %p203
      %p505 = pneg %p200
      %p506 = pneg %p224
      %p507 = pneg %p221
      %p508 = pneg %p245
      %p509 = pneg %p242
      %p510 = pneg %p266
      %p511 = pneg %p263
      %p512 = pneg %p287
      %p513 = pneg %p284
      %p514 = pneg %p315
      %p515 = pneg %p312
      %s516 = smul.u32 8, %s30
      %p517 = scmp.lt.s32.totalorder %s29, 1
      %s518 = scalar_select %p517, %s29, 1
      %p519 = scmp.lt.s32.totalorder %s516, 15
      %s520 = scalar_select %p519, %s516, 15
      %s521 = smul.addr %s520, 2
      %s522 = smul.addr %s518, 32
      %s523 = sadd.s32 %s521, %s522
      %s524 = smul.addr %s523, 8
      %s525 = scalar_lea.vmem %s11, %s524
      %p526 = pneg %p343
      %p527 = pneg %p340
      %s528 = smul.u32 8, %s30
      %p529 = scmp.lt.s32.totalorder %s29, 1
      %s530 = scalar_select %p529, %s29, 1
      %p531 = scmp.lt.s32.totalorder %s528, 15
      %s532 = scalar_select %p531, %s528, 15
      %s533 = smul.addr %s532, 2
      %s534 = smul.addr %s530, 32
      %s535 = sadd.s32 %s533, %s534
      %s536 = smul.addr %s535, 4
      %s537 = scalar_lea.vmem %s12, %s536
      %p538 = pneg %p371
      %p539 = pneg %p368
      %s540 = smul.u32 8, %s30
      %p541 = scmp.lt.s32.totalorder %s29, 1
      %s542 = scalar_select %p541, %s29, 1
      %p543 = scmp.lt.s32.totalorder %s540, 15
      %s544 = scalar_select %p543, %s540, 15
      %s545 = smul.addr %s544, 2
      %s546 = smul.addr %s542, 32
      %s547 = sadd.s32 %s545, %s546
      %s548 = smul.addr %s547, 8
      %s549 = scalar_lea.vmem %s13, %s548
      %s550 = smul.u32 8, %s30
      %p551 = scmp.lt.s32.totalorder %s29, 1
      %s552 = scalar_select %p551, %s29, 1
      %p553 = scmp.lt.s32.totalorder %s550, 15
      %s554 = scalar_select %p553, %s550, 15
      %s555 = smul.addr %s554, 2
      %s556 = smul.addr %s552, 32
      %s557 = sadd.s32 %s555, %s556
      %s558 = smul.addr %s557, 4
      %s559 = scalar_lea.vmem %s0, %s558
      %s560 = smul.u32 8, %s30
      %p561 = scmp.lt.s32.totalorder %s29, 1
      %s562 = scalar_select %p561, %s29, 1
      %s563 = smul.addr %s562, 80
      %s564 = smul.addr %s563, 4
      %s565 = scalar_lea.vmem %s1, %s564
      %p566 = scmp.lt.s32.totalorder %s29, 1
      %s567 = scalar_select %p566, %s29, 1
      %s568 = smul.addr %s567, 80
      %s569 = smul.addr %s568, 4
      %s570 = scalar_lea.vmem %s2, %s569
      %s571 = smul.u32 8, %s30
      %p572 = scmp.lt.s32.totalorder %s29, 1
      %s573 = scalar_select %p572, %s29, 1
      %p574 = scmp.lt.s32.totalorder %s571, 15
      %s575 = scalar_select %p574, %s571, 15
      %s576 = smul.addr %s575, 2
      %s577 = smul.addr %s573, 32
      %s578 = sadd.s32 %s576, %s577
      %s579 = smul.addr %s578, 8
      %s580 = scalar_lea.vmem %s3, %s579
      %s581 = smul.u32 8, %s30
      %s582 = smul.u32 8, %s30
      %p583 = scmp.lt.s32.totalorder %s29, 1
      %s584 = scalar_select %p583, %s29, 1
      %p585 = scmp.lt.s32.totalorder %s582, 15
      %s586 = scalar_select %p585, %s582, 15
      %s587 = smul.addr %s586, 2
      %s588 = smul.addr %s584, 32
      %s589 = sadd.s32 %s587, %s588
      %s590 = smul.addr %s589, 8
      %s591 = scalar_lea.vmem %s11, %s590
      %s592 = smul.u32 8, %s30
      %s593 = smul.u32 8, %s30
      %p594 = scmp.lt.s32.totalorder %s29, 1
      %s595 = scalar_select %p594, %s29, 1
      %p596 = scmp.lt.s32.totalorder %s593, 15
      %s597 = scalar_select %p596, %s593, 15
      %s598 = smul.addr %s597, 2
      %s599 = smul.addr %s595, 32
      %s600 = sadd.s32 %s598, %s599
      %s601 = smul.addr %s600, 4
      %s602 = scalar_lea.vmem %s12, %s601
      %s603 = smul.u32 8, %s30
      %s604 = smul.u32 8, %s30
      %p605 = scmp.lt.s32.totalorder %s29, 1
      %s606 = scalar_select %p605, %s29, 1
      %p607 = scmp.lt.s32.totalorder %s604, 15
      %s608 = scalar_select %p607, %s604, 15
      %s609 = smul.addr %s608, 2
      %s610 = smul.addr %s606, 32
      %s611 = sadd.s32 %s609, %s610
      %s612 = smul.addr %s611, 8
      %s613 = scalar_lea.vmem %s13, %s612
      %s614 = smul.u32 8, %s30
      %s616 = smul.u32 %s30, 8
      %v617 = vld [vmem:[%s559] sm:$0xf]
      %v618 = vld [vmem:[%s559 + $0x4] sm:$0xf]
      %v619 = vld [vmem:[%s559 + $0x8] sm:$0xf]
      %v620 = vld [vmem:[%s559 + $0xc] sm:$0xf]
      %v621 = vld [vmem:[%s559 + $0x10] sm:$0xf]
      %v622 = vld [vmem:[%s559 + $0x14] sm:$0xf]
      %v623 = vld [vmem:[%s559 + $0x18] sm:$0xf]
      %v624 = vld [vmem:[%s559 + $0x1c] sm:$0xf]
      %v625 = vld [vmem:[%s559 + $0x20] sm:$0xf]
      %v626 = vld [vmem:[%s559 + $0x24] sm:$0xf]
      %v627 = vld [vmem:[%s559 + $0x28] sm:$0xf]
      %v628 = vld [vmem:[%s559 + $0x2c] sm:$0xf]
      %v629 = vld [vmem:[%s559 + $0x30] sm:$0xf]
      %v630 = vld [vmem:[%s559 + $0x34] sm:$0xf]
      %v631 = vld [vmem:[%s559 + $0x38] sm:$0xf]
      %v632 = vld [vmem:[%s559 + $0x3c] sm:$0xf]
      %v633 = vld [vmem:[%s4] sm:$0xff]
      %v634 = vld [vmem:[%s4 + $0x8] sm:$0xff]
      %v635 = vld [vmem:[%s4 + $0x10] sm:$0xff]
      %v636 = vld [vmem:[%s4 + $0x18] sm:$0xff]
      %v637 = vld [vmem:[%s4 + $0x20] sm:$0xff]
      %v638 = vld [vmem:[%s4 + $0x28] sm:$0xff]
      %v639 = vld [vmem:[%s4 + $0x30] sm:$0xff]
      %v640 = vld [vmem:[%s4 + $0x38] sm:$0xff]
      %v641 = vld [vmem:[%s4 + $0x40] sm:$0xff]
      %v642 = vld [vmem:[%s4 + $0x48] sm:$0xff]
      %v643 = vld [vmem:[%s4 + $0x50] sm:$0xff]
      %v644 = vld [vmem:[%s4 + $0x58] sm:$0xff]
      %v645 = vld [vmem:[%s4 + $0x60] sm:$0xff]
      %v646 = vld [vmem:[%s4 + $0x68] sm:$0xff]
      %v647 = vld [vmem:[%s4 + $0x70] sm:$0xff]
      %v648 = vld [vmem:[%s4 + $0x78] sm:$0xff]
      %v649 = vld [vmem:[%s7] sm:$0x3]
      %v651 = vlaneseq
      %v652 = vshrl.u32 %v651, 7
      %v653 = vsub.s32 0, %v652
      %v654 = vrot.slane %v649, %v653
      %v655 = vlaneseq
      %v656 = vshrl.u32 %v655, 7
      %v657 = vsub.s32 1, %v656
      %v658 = vrot.slane %v649, %v657
      %v677 = vunpack.c.l.b16 %v617
      %v678 = vunpack.c.l.b16 %v618
      %v679 = vunpack.c.l.b16 %v619
      %v680 = vunpack.c.l.b16 %v620
      %v681 = vunpack.c.l.b16 %v621
      %v682 = vunpack.c.l.b16 %v622
      %v683 = vunpack.c.l.b16 %v623
      %v684 = vunpack.c.l.b16 %v624
      %v685 = vunpack.c.l.b16 %v625
      %v686 = vunpack.c.l.b16 %v626
      %v687 = vunpack.c.l.b16 %v627
      %v688 = vunpack.c.l.b16 %v628
      %v689 = vunpack.c.l.b16 %v629
      %v690 = vunpack.c.l.b16 %v630
      %v691 = vunpack.c.l.b16 %v631
      %v692 = vunpack.c.l.b16 %v632
      %v693 = vpack.c.b16 %v678, %v677
      %v694 = vpack.c.b16 %v680, %v679
      %v695 = vpack.c.b16 %v682, %v681
      %v696 = vpack.c.b16 %v684, %v683
      %v697 = vpack.c.b16 %v686, %v685
      %v698 = vpack.c.b16 %v688, %v687
      %v699 = vpack.c.b16 %v690, %v689
      %v700 = vpack.c.b16 %v692, %v691
      %v725 = vunpack.c.l.b16 %v633
      %v726 = vunpack.c.h.b16 %v633
      %v727 = vunpack.c.l.b16 %v634
      %v728 = vunpack.c.h.b16 %v634
      %v729 = vunpack.c.l.b16 %v635
      %v730 = vunpack.c.h.b16 %v635
      %v731 = vunpack.c.l.b16 %v636
      %v732 = vunpack.c.h.b16 %v636
      %v733 = vunpack.c.l.b16 %v637
      %v734 = vunpack.c.h.b16 %v637
      %v735 = vunpack.c.l.b16 %v638
      %v736 = vunpack.c.h.b16 %v638
      %v737 = vunpack.c.l.b16 %v639
      %v738 = vunpack.c.h.b16 %v639
      %v739 = vunpack.c.l.b16 %v640
      %v740 = vunpack.c.h.b16 %v640
      %v741 = vunpack.c.l.b16 %v641
      %v742 = vunpack.c.h.b16 %v641
      %v743 = vunpack.c.l.b16 %v642
      %v744 = vunpack.c.h.b16 %v642
      %v745 = vunpack.c.l.b16 %v643
      %v746 = vunpack.c.h.b16 %v643
      %v747 = vunpack.c.l.b16 %v644
      %v748 = vunpack.c.h.b16 %v644
      %v749 = vunpack.c.l.b16 %v645
      %v750 = vunpack.c.h.b16 %v645
      %v751 = vunpack.c.l.b16 %v646
      %v752 = vunpack.c.h.b16 %v646
      %v753 = vunpack.c.l.b16 %v647
      %v754 = vunpack.c.h.b16 %v647
      %v755 = vunpack.c.l.b16 %v648
      %v756 = vunpack.c.h.b16 %v648
      %v757 = vpack.c.b16 %v727, %v725
      %v758 = vpack.c.b16 %v728, %v726
      %v759 = vpack.c.b16 %v731, %v729
      %v760 = vpack.c.b16 %v732, %v730
      %v761 = vpack.c.b16 %v735, %v733
      %v762 = vpack.c.b16 %v736, %v734
      %v763 = vpack.c.b16 %v739, %v737
      %v764 = vpack.c.b16 %v740, %v738
      %v765 = vpack.c.b16 %v743, %v741
      %v766 = vpack.c.b16 %v744, %v742
      %v767 = vpack.c.b16 %v747, %v745
      %v768 = vpack.c.b16 %v748, %v746
      %v769 = vpack.c.b16 %v751, %v749
      %v770 = vpack.c.b16 %v752, %v750
      %v771 = vpack.c.b16 %v755, %v753
      %v772 = vpack.c.b16 %v756, %v754
      %789 = vmatprep.subr.bf16.mxu0 %v772
      %790 = vmatpush1.bf16.msra.mxu0 %v771
      %791 = vmatprep.subr.bf16.mxu0 %v770
      %792 = vmatpush1.bf16.msra.mxu0 %v769
      %793 = vmatprep.subr.bf16.mxu0 %v768
      %794 = vmatpush1.bf16.msra.mxu0 %v767
      %795 = vmatprep.subr.bf16.mxu0 %v766
      %796 = vmatpush1.bf16.msra.mxu0 %v765
      %797 = vmatprep.subr.bf16.mxu0 %v764
      %798 = vmatpush1.bf16.msra.mxu0 %v763
      %799 = vmatprep.subr.bf16.mxu0 %v762
      %800 = vmatpush1.bf16.msra.mxu0 %v761
      %801 = vmatprep.subr.bf16.mxu0 %v760
      %802 = vmatpush1.bf16.msra.mxu0 %v759
      %803 = vmatprep.subr.bf16.mxu0 %v758
      %804 = vmatpush1.bf16.msra.mxu0 %v757
      %805 = vmatprep.subr.bf16.mxu0 0
      %806 = vmatpush2.bf16.msra.mxu0 0
      %807 = vmatprep.subr.bf16.mxu0 0
      %808 = vmatpush2.bf16.msra.mxu0 0
      %809 = vmatprep.subr.bf16.mxu0 0
      %810 = vmatpush2.bf16.msra.mxu0 0
      %811 = vmatprep.subr.bf16.mxu0 0
      %812 = vmatpush2.bf16.msra.mxu0 0
      %813 = vmatprep.subr.bf16.mxu0 0
      %814 = vmatpush2.bf16.msra.mxu0 0
      %815 = vmatprep.subr.bf16.mxu0 0
      %816 = vmatpush2.bf16.msra.mxu0 0
      %817 = vmatprep.subr.bf16.mxu0 0
      %818 = vmatpush2.bf16.msra.mxu0 0
      %819 = vmatprep.subr.bf16.mxu0 0
      %820 = vmatpush2.bf16.msra.mxu0 0
      %821 = vmatprep.mubr.bf16.mxu0 0
      %822 = vmatmul.mubr.bf16.gmra.mxu0 %v693
      %v823 = vpop.f32.mrf.mxu0
      %v824 = vadd.f32 %v654, %v823
      %v825 = vpop.f32.mrf.mxu0
      %v826 = vadd.f32 %v658, %v825
      %v827 = vpop.f32.mrf.mxu0
      %v828 = vadd.f32 %v654, %v827
      %v829 = vpop.f32.mrf.mxu0
      %v830 = vadd.f32 %v658, %v829
      %831 = vmatprep.mubr.bf16.mxu0 0
      %832 = vmatmul.mubr.bf16.gmra.mxu0 %v694
      %v833 = vpop.f32.mrf.mxu0
      %v834 = vadd.f32 %v654, %v833
      %v835 = vpop.f32.mrf.mxu0
      %v836 = vadd.f32 %v658, %v835
      %v837 = vpop.f32.mrf.mxu0
      %v838 = vadd.f32 %v654, %v837
      %v839 = vpop.f32.mrf.mxu0
      %v840 = vadd.f32 %v658, %v839
      %841 = vmatprep.mubr.bf16.mxu0 0
      %842 = vmatmul.mubr.bf16.gmra.mxu0 %v695
      %v843 = vpop.f32.mrf.mxu0
      %v844 = vadd.f32 %v654, %v843
      %v845 = vpop.f32.mrf.mxu0
      %v846 = vadd.f32 %v658, %v845
      %v847 = vpop.f32.mrf.mxu0
      %v848 = vadd.f32 %v654, %v847
      %v849 = vpop.f32.mrf.mxu0
      %v850 = vadd.f32 %v658, %v849
      %851 = vmatprep.mubr.bf16.mxu0 0
      %852 = vmatmul.mubr.bf16.gmra.mxu0 %v696
      %v853 = vpop.f32.mrf.mxu0
      %v854 = vadd.f32 %v654, %v853
      %v855 = vpop.f32.mrf.mxu0
      %v856 = vadd.f32 %v658, %v855
      %v857 = vpop.f32.mrf.mxu0
      %v858 = vadd.f32 %v654, %v857
      %v859 = vpop.f32.mrf.mxu0
      %v860 = vadd.f32 %v658, %v859
      %861 = vmatprep.mubr.bf16.mxu0 0
      %862 = vmatmul.mubr.bf16.gmra.mxu0 %v697
      %v863 = vpop.f32.mrf.mxu0
      %v864 = vadd.f32 %v654, %v863
      %v865 = vpop.f32.mrf.mxu0
      %v866 = vadd.f32 %v658, %v865
      %v867 = vpop.f32.mrf.mxu0
      %v868 = vadd.f32 %v654, %v867
      %v869 = vpop.f32.mrf.mxu0
      %v870 = vadd.f32 %v658, %v869
      %871 = vmatprep.mubr.bf16.mxu0 0
      %872 = vmatmul.mubr.bf16.gmra.mxu0 %v698
      %v873 = vpop.f32.mrf.mxu0
      %v874 = vadd.f32 %v654, %v873
      %v875 = vpop.f32.mrf.mxu0
      %v876 = vadd.f32 %v658, %v875
      %v877 = vpop.f32.mrf.mxu0
      %v878 = vadd.f32 %v654, %v877
      %v879 = vpop.f32.mrf.mxu0
      %v880 = vadd.f32 %v658, %v879
      %881 = vmatprep.mubr.bf16.mxu0 0
      %882 = vmatmul.mubr.bf16.gmra.mxu0 %v699
      %v883 = vpop.f32.mrf.mxu0
      %v884 = vadd.f32 %v654, %v883
      %v885 = vpop.f32.mrf.mxu0
      %v886 = vadd.f32 %v658, %v885
      %v887 = vpop.f32.mrf.mxu0
      %v888 = vadd.f32 %v654, %v887
      %v889 = vpop.f32.mrf.mxu0
      %v890 = vadd.f32 %v658, %v889
      %891 = vmatprep.mubr.bf16.mxu0 0
      %892 = vmatmul.mubr.bf16.gmra.mxu0 %v700
      %v893 = vpop.f32.mrf.mxu0
      %v894 = vadd.f32 %v654, %v893
      %v895 = vpop.f32.mrf.mxu0
      %v896 = vadd.f32 %v658, %v895
      %v897 = vpop.f32.mrf.mxu0
      %v898 = vadd.f32 %v654, %v897
      %v899 = vpop.f32.mrf.mxu0
      %v900 = vadd.f32 %v658, %v899
      %901 = vdwg.mxu0
      %s902 = smul.u32 %s616, 4
      %s903 = smul.addr %s902, 4
      %s904 = scalar_lea.vmem %s565, %s903
      %v905 = vld [vmem:[%s904] sm:$0xff]
      %v906 = vld [vmem:[%s904 + $0x8] sm:$0xff]
      %v907 = vld [vmem:[%s904 + $0x10] sm:$0xff]
      %v908 = vld [vmem:[%s904 + $0x18] sm:$0xff]
      %v909 = vld [vmem:[%s904 + $0x20] sm:$0xff]
      %v910 = vld [vmem:[%s904 + $0x28] sm:$0xff]
      %v911 = vld [vmem:[%s904 + $0x30] sm:$0xff]
      %v912 = vld [vmem:[%s904 + $0x38] sm:$0xff]
      %v913 = vld [vmem:[%s904 + $0x40] sm:$0xff]
      %v914 = vld [vmem:[%s904 + $0x48] sm:$0xff]
      %v915 = vld [vmem:[%s904 + $0x50] sm:$0xff]
      %v916 = vld [vmem:[%s904 + $0x58] sm:$0xff]
      %v917 = vld [vmem:[%s904 + $0x60] sm:$0xff]
      %v918 = vld [vmem:[%s904 + $0x68] sm:$0xff]
      %v919 = vld [vmem:[%s904 + $0x70] sm:$0xff]
      %v920 = vld [vmem:[%s904 + $0x78] sm:$0xff]
      %v921 = vld [vmem:[%s5] sm:$0xff]
      %v922 = vld [vmem:[%s5 + $0x8] sm:$0xff]
      %v923 = vld [vmem:[%s5 + $0x10] sm:$0xff]
      %v924 = vld [vmem:[%s5 + $0x18] sm:$0xff]
      %v925 = vld [vmem:[%s5 + $0x20] sm:$0xff]
      %v926 = vld [vmem:[%s5 + $0x28] sm:$0xff]
      %v927 = vld [vmem:[%s5 + $0x30] sm:$0xff]
      %v928 = vld [vmem:[%s5 + $0x38] sm:$0xff]
      %v929 = vld [vmem:[%s5 + $0x40] sm:$0xff]
      %v930 = vld [vmem:[%s5 + $0x48] sm:$0xff]
      %v931 = vld [vmem:[%s5 + $0x50] sm:$0xff]
      %v932 = vld [vmem:[%s5 + $0x58] sm:$0xff]
      %v933 = vld [vmem:[%s5 + $0x60] sm:$0xff]
      %v934 = vld [vmem:[%s5 + $0x68] sm:$0xff]
      %v935 = vld [vmem:[%s5 + $0x70] sm:$0xff]
      %v936 = vld [vmem:[%s5 + $0x78] sm:$0xff]
      %v937 = vld [vmem:[%s5 + $0x80] sm:$0xff]
      %v938 = vld [vmem:[%s5 + $0x88] sm:$0xff]
      %v939 = vld [vmem:[%s5 + $0x90] sm:$0xff]
      %v940 = vld [vmem:[%s5 + $0x98] sm:$0xff]
      %s941 = sadd.s32 %s616, 1
      %s942 = smul.u32 %s941, 4
      %s943 = smul.addr %s942, 4
      %s944 = scalar_lea.vmem %s565, %s943
      %v945 = vld [vmem:[%s944] sm:$0xff]
      %v946 = vld [vmem:[%s944 + $0x8] sm:$0xff]
      %v947 = vld [vmem:[%s944 + $0x10] sm:$0xff]
      %v948 = vld [vmem:[%s944 + $0x18] sm:$0xff]
      %v949 = vld [vmem:[%s944 + $0x20] sm:$0xff]
      %v950 = vld [vmem:[%s944 + $0x28] sm:$0xff]
      %v951 = vld [vmem:[%s944 + $0x30] sm:$0xff]
      %v952 = vld [vmem:[%s944 + $0x38] sm:$0xff]
      %v953 = vld [vmem:[%s944 + $0x40] sm:$0xff]
      %v954 = vld [vmem:[%s944 + $0x48] sm:$0xff]
      %v955 = vld [vmem:[%s944 + $0x50] sm:$0xff]
      %v956 = vld [vmem:[%s944 + $0x58] sm:$0xff]
      %v957 = vld [vmem:[%s944 + $0x60] sm:$0xff]
      %v958 = vld [vmem:[%s944 + $0x68] sm:$0xff]
      %v959 = vld [vmem:[%s944 + $0x70] sm:$0xff]
      %v960 = vld [vmem:[%s944 + $0x78] sm:$0xff]
      %s961 = scalar_lea.vmem %s5, 160
      %v962 = vld [vmem:[%s961] sm:$0xff]
      %v963 = vld [vmem:[%s961 + $0x8] sm:$0xff]
      %v964 = vld [vmem:[%s961 + $0x10] sm:$0xff]
      %v965 = vld [vmem:[%s961 + $0x18] sm:$0xff]
      %v966 = vld [vmem:[%s961 + $0x20] sm:$0xff]
      %v967 = vld [vmem:[%s961 + $0x28] sm:$0xff]
      %v968 = vld [vmem:[%s961 + $0x30] sm:$0xff]
      %v969 = vld [vmem:[%s961 + $0x38] sm:$0xff]
      %v970 = vld [vmem:[%s961 + $0x40] sm:$0xff]
      %v971 = vld [vmem:[%s961 + $0x48] sm:$0xff]
      %v972 = vld [vmem:[%s961 + $0x50] sm:$0xff]
      %v973 = vld [vmem:[%s961 + $0x58] sm:$0xff]
      %v974 = vld [vmem:[%s961 + $0x60] sm:$0xff]
      %v975 = vld [vmem:[%s961 + $0x68] sm:$0xff]
      %v976 = vld [vmem:[%s961 + $0x70] sm:$0xff]
      %v977 = vld [vmem:[%s961 + $0x78] sm:$0xff]
      %v978 = vld [vmem:[%s961 + $0x80] sm:$0xff]
      %v979 = vld [vmem:[%s961 + $0x88] sm:$0xff]
      %v980 = vld [vmem:[%s961 + $0x90] sm:$0xff]
      %v981 = vld [vmem:[%s961 + $0x98] sm:$0xff]
      %v998 = vunpack.c.l.b16 %v945
      %v999 = vunpack.c.h.b16 %v945
      %v1000 = vunpack.c.l.b16 %v946
      %v1001 = vunpack.c.h.b16 %v946
      %v1002 = vunpack.c.l.b16 %v947
      %v1003 = vunpack.c.h.b16 %v947
      %v1004 = vunpack.c.l.b16 %v948
      %v1005 = vunpack.c.h.b16 %v948
      %v1006 = vunpack.c.l.b16 %v949
      %v1007 = vunpack.c.h.b16 %v949
      %v1008 = vunpack.c.l.b16 %v950
      %v1009 = vunpack.c.h.b16 %v950
      %v1010 = vunpack.c.l.b16 %v951
      %v1011 = vunpack.c.h.b16 %v951
      %v1012 = vunpack.c.l.b16 %v952
      %v1013 = vunpack.c.h.b16 %v952
      %v1014 = vunpack.c.l.b16 %v953
      %v1015 = vunpack.c.h.b16 %v953
      %v1016 = vunpack.c.l.b16 %v954
      %v1017 = vunpack.c.h.b16 %v954
      %v1018 = vunpack.c.l.b16 %v955
      %v1019 = vunpack.c.h.b16 %v955
      %v1020 = vunpack.c.l.b16 %v956
      %v1021 = vunpack.c.h.b16 %v956
      %v1022 = vunpack.c.l.b16 %v957
      %v1023 = vunpack.c.h.b16 %v957
      %v1024 = vunpack.c.l.b16 %v958
      %v1025 = vunpack.c.h.b16 %v958
      %v1026 = vunpack.c.l.b16 %v959
      %v1027 = vunpack.c.h.b16 %v959
      %v1028 = vunpack.c.l.b16 %v960
      %v1029 = vunpack.c.h.b16 %v960
      %v1030 = vpack.c.b16 %v1000, %v998
      %v1031 = vpack.c.b16 %v1001, %v999
      %v1032 = vpack.c.b16 %v1004, %v1002
      %v1033 = vpack.c.b16 %v1005, %v1003
      %v1034 = vpack.c.b16 %v1008, %v1006
      %v1035 = vpack.c.b16 %v1009, %v1007
      %v1036 = vpack.c.b16 %v1012, %v1010
      %v1037 = vpack.c.b16 %v1013, %v1011
      %v1038 = vpack.c.b16 %v1016, %v1014
      %v1039 = vpack.c.b16 %v1017, %v1015
      %v1040 = vpack.c.b16 %v1020, %v1018
      %v1041 = vpack.c.b16 %v1021, %v1019
      %v1042 = vpack.c.b16 %v1024, %v1022
      %v1043 = vpack.c.b16 %v1025, %v1023
      %v1044 = vpack.c.b16 %v1028, %v1026
      %v1045 = vpack.c.b16 %v1029, %v1027
      %v1074 = vunpack.c.l.b16 %v962
      %v1075 = vunpack.c.h.b16 %v962
      %v1076 = vunpack.c.l.b16 %v963
      %v1077 = vunpack.c.h.b16 %v963
      %v1078 = vunpack.c.l.b16 %v964
      %v1079 = vunpack.c.h.b16 %v964
      %v1080 = vunpack.c.l.b16 %v965
      %v1081 = vunpack.c.h.b16 %v965
      %v1082 = vunpack.c.l.b16 %v966
      %v1083 = vunpack.c.h.b16 %v966
      %v1084 = vunpack.c.l.b16 %v967
      %v1085 = vunpack.c.h.b16 %v967
      %v1086 = vunpack.c.l.b16 %v968
      %v1087 = vunpack.c.h.b16 %v968
      %v1088 = vunpack.c.l.b16 %v969
      %v1089 = vunpack.c.h.b16 %v969
      %v1090 = vunpack.c.l.b16 %v970
      %v1091 = vunpack.c.h.b16 %v970
      %v1092 = vunpack.c.l.b16 %v971
      %v1093 = vunpack.c.h.b16 %v971
      %v1094 = vunpack.c.l.b16 %v972
      %v1095 = vunpack.c.h.b16 %v972
      %v1096 = vunpack.c.l.b16 %v973
      %v1097 = vunpack.c.h.b16 %v973
      %v1098 = vunpack.c.l.b16 %v974
      %v1099 = vunpack.c.h.b16 %v974
      %v1100 = vunpack.c.l.b16 %v975
      %v1101 = vunpack.c.h.b16 %v975
      %v1102 = vunpack.c.l.b16 %v976
      %v1103 = vunpack.c.h.b16 %v976
      %v1104 = vunpack.c.l.b16 %v977
      %v1105 = vunpack.c.h.b16 %v977
      %v1106 = vunpack.c.l.b16 %v978
      %v1107 = vunpack.c.h.b16 %v978
      %v1108 = vunpack.c.l.b16 %v979
      %v1109 = vunpack.c.h.b16 %v979
      %v1110 = vunpack.c.l.b16 %v980
      %v1111 = vunpack.c.h.b16 %v980
      %v1112 = vunpack.c.l.b16 %v981
      %v1113 = vunpack.c.h.b16 %v981
      %v1114 = vpack.c.b16 %v1076, %v1074
      %v1115 = vpack.c.b16 %v1077, %v1075
      %v1116 = vpack.c.b16 %v1080, %v1078
      %v1117 = vpack.c.b16 %v1081, %v1079
      %v1118 = vpack.c.b16 %v1084, %v1082
      %v1119 = vpack.c.b16 %v1085, %v1083
      %v1120 = vpack.c.b16 %v1088, %v1086
      %v1121 = vpack.c.b16 %v1089, %v1087
      %v1122 = vpack.c.b16 %v1092, %v1090
      %v1123 = vpack.c.b16 %v1093, %v1091
      %v1124 = vpack.c.b16 %v1096, %v1094
      %v1125 = vpack.c.b16 %v1097, %v1095
      %v1126 = vpack.c.b16 %v1100, %v1098
      %v1127 = vpack.c.b16 %v1101, %v1099
      %v1128 = vpack.c.b16 %v1104, %v1102
      %v1129 = vpack.c.b16 %v1105, %v1103
      %v1130 = vpack.c.b16 %v1108, %v1106
      %v1131 = vpack.c.b16 %v1109, %v1107
      %v1132 = vpack.c.b16 %v1112, %v1110
      %v1133 = vpack.c.b16 %v1113, %v1111
      %vm1154 = vcmask 261120
      %v1156 = vsel %vm1154, %v1031, 0
      %v1159 = vsel %vm1154, %v1033, 0
      %v1162 = vsel %vm1154, %v1035, 0
      %v1165 = vsel %vm1154, %v1037, 0
      %v1168 = vsel %vm1154, %v1039, 0
      %v1171 = vsel %vm1154, %v1041, 0
      %v1174 = vsel %vm1154, %v1043, 0
      %v1177 = vsel %vm1154, %v1045, 0
      %1179 = vmatprep.subr.bf16.mxu0 %v1129
      %1180 = vmatpush1.bf16.msra.mxu0 %v1128
      %1181 = vmatprep.subr.bf16.mxu0 %v1127
      %1182 = vmatpush1.bf16.msra.mxu0 %v1126
      %1183 = vmatprep.subr.bf16.mxu0 %v1125
      %1184 = vmatpush1.bf16.msra.mxu0 %v1124
      %1185 = vmatprep.subr.bf16.mxu0 %v1123
      %1186 = vmatpush1.bf16.msra.mxu0 %v1122
      %1187 = vmatprep.subr.bf16.mxu0 %v1121
      %1188 = vmatpush1.bf16.msra.mxu0 %v1120
      %1189 = vmatprep.subr.bf16.mxu0 %v1119
      %1190 = vmatpush1.bf16.msra.mxu0 %v1118
      %1191 = vmatprep.subr.bf16.mxu0 %v1117
      %1192 = vmatpush1.bf16.msra.mxu0 %v1116
      %1193 = vmatprep.subr.bf16.mxu0 %v1115
      %1194 = vmatpush1.bf16.msra.mxu0 %v1114
      %1195 = vmatprep.subr.bf16.mxu0 0
      %1196 = vmatpush2.bf16.msra.mxu0 0
      %1197 = vmatprep.subr.bf16.mxu0 0
      %1198 = vmatpush2.bf16.msra.mxu0 0
      %1199 = vmatprep.subr.bf16.mxu0 0
      %1200 = vmatpush2.bf16.msra.mxu0 0
      %1201 = vmatprep.subr.bf16.mxu0 0
      %1202 = vmatpush2.bf16.msra.mxu0 0
      %1203 = vmatprep.subr.bf16.mxu0 0
      %1204 = vmatpush2.bf16.msra.mxu0 0
      %1205 = vmatprep.subr.bf16.mxu0 0
      %1206 = vmatpush2.bf16.msra.mxu0 0
      %1207 = vmatprep.subr.bf16.mxu0 %v1133
      %1208 = vmatpush2.bf16.msra.mxu0 %v1132
      %1209 = vmatprep.subr.bf16.mxu0 %v1131
      %1210 = vmatpush2.bf16.msra.mxu0 %v1130
      %1211 = vmatprep.mubr.bf16.mxu0 %v1156
      %1212 = vmatmul.mubr.bf16.gmra.mxu0 %v1030
      %v1213 = vpop.f32.mrf.mxu0
      %v1214 = vadd.f32 0.0, %v1213
      %v1215 = vpop.f32.mrf.mxu0
      %v1216 = vadd.f32 0.0, %v1215
      %v1217 = vpop.f32.mrf.mxu0
      %v1218 = vadd.f32 0.0, %v1217
      %v1219 = vpop.f32.mrf.mxu0
      %v1220 = vadd.f32 0.0, %v1219
      %1221 = vmatprep.mubr.bf16.mxu0 %v1159
      %1222 = vmatmul.mubr.bf16.gmra.mxu0 %v1032
      %v1223 = vpop.f32.mrf.mxu0
      %v1224 = vadd.f32 0.0, %v1223
      %v1225 = vpop.f32.mrf.mxu0
      %v1226 = vadd.f32 0.0, %v1225
      %v1227 = vpop.f32.mrf.mxu0
      %v1228 = vadd.f32 0.0, %v1227
      %v1229 = vpop.f32.mrf.mxu0
      %v1230 = vadd.f32 0.0, %v1229
      %1231 = vmatprep.mubr.bf16.mxu0 %v1162
      %1232 = vmatmul.mubr.bf16.gmra.mxu0 %v1034
      %v1233 = vpop.f32.mrf.mxu0
      %v1234 = vadd.f32 0.0, %v1233
      %v1235 = vpop.f32.mrf.mxu0
      %v1236 = vadd.f32 0.0, %v1235
      %v1237 = vpop.f32.mrf.mxu0
      %v1238 = vadd.f32 0.0, %v1237
      %v1239 = vpop.f32.mrf.mxu0
      %v1240 = vadd.f32 0.0, %v1239
      %1241 = vmatprep.mubr.bf16.mxu0 %v1165
      %1242 = vmatmul.mubr.bf16.gmra.mxu0 %v1036
      %v1243 = vpop.f32.mrf.mxu0
      %v1244 = vadd.f32 0.0, %v1243
      %v1245 = vpop.f32.mrf.mxu0
      %v1246 = vadd.f32 0.0, %v1245
      %v1247 = vpop.f32.mrf.mxu0
      %v1248 = vadd.f32 0.0, %v1247
      %v1249 = vpop.f32.mrf.mxu0
      %v1250 = vadd.f32 0.0, %v1249
      %1251 = vmatprep.mubr.bf16.mxu0 %v1168
      %1252 = vmatmul.mubr.bf16.gmra.mxu0 %v1038
      %v1253 = vpop.f32.mrf.mxu0
      %v1254 = vadd.f32 0.0, %v1253
      %v1255 = vpop.f32.mrf.mxu0
      %v1256 = vadd.f32 0.0, %v1255
      %v1257 = vpop.f32.mrf.mxu0
      %v1258 = vadd.f32 0.0, %v1257
      %v1259 = vpop.f32.mrf.mxu0
      %v1260 = vadd.f32 0.0, %v1259
      %1261 = vmatprep.mubr.bf16.mxu0 %v1171
      %1262 = vmatmul.mubr.bf16.gmra.mxu0 %v1040
      %v1263 = vpop.f32.mrf.mxu0
      %v1264 = vadd.f32 0.0, %v1263
      %v1265 = vpop.f32.mrf.mxu0
      %v1266 = vadd.f32 0.0, %v1265
      %v1267 = vpop.f32.mrf.mxu0
      %v1268 = vadd.f32 0.0, %v1267
      %v1269 = vpop.f32.mrf.mxu0
      %v1270 = vadd.f32 0.0, %v1269
      %1271 = vmatprep.mubr.bf16.mxu0 %v1174
      %1272 = vmatmul.mubr.bf16.gmra.mxu0 %v1042
      %v1273 = vpop.f32.mrf.mxu0
      %v1274 = vadd.f32 0.0, %v1273
      %v1275 = vpop.f32.mrf.mxu0
      %v1276 = vadd.f32 0.0, %v1275
      %v1277 = vpop.f32.mrf.mxu0
      %v1278 = vadd.f32 0.0, %v1277
      %v1279 = vpop.f32.mrf.mxu0
      %v1280 = vadd.f32 0.0, %v1279
      %1281 = vmatprep.mubr.bf16.mxu0 %v1177
      %1282 = vmatmul.mubr.bf16.gmra.mxu0 %v1044
      %v1283 = vpop.f32.mrf.mxu0
      %v1284 = vadd.f32 0.0, %v1283
      %v1285 = vpop.f32.mrf.mxu0
      %v1286 = vadd.f32 0.0, %v1285
      %v1287 = vpop.f32.mrf.mxu0
      %v1288 = vadd.f32 0.0, %v1287
      %v1289 = vpop.f32.mrf.mxu0
      %v1290 = vadd.f32 0.0, %v1289
      %1291 = vdwg.mxu0
      %v1308 = vunpack.c.l.b16 %v905
      %v1309 = vunpack.c.h.b16 %v905
      %v1310 = vunpack.c.l.b16 %v906
      %v1311 = vunpack.c.h.b16 %v906
      %v1312 = vunpack.c.l.b16 %v907
      %v1313 = vunpack.c.h.b16 %v907
      %v1314 = vunpack.c.l.b16 %v908
      %v1315 = vunpack.c.h.b16 %v908
      %v1316 = vunpack.c.l.b16 %v909
      %v1317 = vunpack.c.h.b16 %v909
      %v1318 = vunpack.c.l.b16 %v910
      %v1319 = vunpack.c.h.b16 %v910
      %v1320 = vunpack.c.l.b16 %v911
      %v1321 = vunpack.c.h.b16 %v911
      %v1322 = vunpack.c.l.b16 %v912
      %v1323 = vunpack.c.h.b16 %v912
      %v1324 = vunpack.c.l.b16 %v913
      %v1325 = vunpack.c.h.b16 %v913
      %v1326 = vunpack.c.l.b16 %v914
      %v1327 = vunpack.c.h.b16 %v914
      %v1328 = vunpack.c.l.b16 %v915
      %v1329 = vunpack.c.h.b16 %v915
      %v1330 = vunpack.c.l.b16 %v916
      %v1331 = vunpack.c.h.b16 %v916
      %v1332 = vunpack.c.l.b16 %v917
      %v1333 = vunpack.c.h.b16 %v917
      %v1334 = vunpack.c.l.b16 %v918
      %v1335 = vunpack.c.h.b16 %v918
      %v1336 = vunpack.c.l.b16 %v919
      %v1337 = vunpack.c.h.b16 %v919
      %v1338 = vunpack.c.l.b16 %v920
      %v1339 = vunpack.c.h.b16 %v920
      %v1340 = vpack.c.b16 %v1310, %v1308
      %v1341 = vpack.c.b16 %v1311, %v1309
      %v1342 = vpack.c.b16 %v1314, %v1312
      %v1343 = vpack.c.b16 %v1315, %v1313
      %v1344 = vpack.c.b16 %v1318, %v1316
      %v1345 = vpack.c.b16 %v1319, %v1317
      %v1346 = vpack.c.b16 %v1322, %v1320
      %v1347 = vpack.c.b16 %v1323, %v1321
      %v1348 = vpack.c.b16 %v1326, %v1324
      %v1349 = vpack.c.b16 %v1327, %v1325
      %v1350 = vpack.c.b16 %v1330, %v1328
      %v1351 = vpack.c.b16 %v1331, %v1329
      %v1352 = vpack.c.b16 %v1334, %v1332
      %v1353 = vpack.c.b16 %v1335, %v1333
      %v1354 = vpack.c.b16 %v1338, %v1336
      %v1355 = vpack.c.b16 %v1339, %v1337
      %v1384 = vunpack.c.l.b16 %v921
      %v1385 = vunpack.c.h.b16 %v921
      %v1386 = vunpack.c.l.b16 %v922
      %v1387 = vunpack.c.h.b16 %v922
      %v1388 = vunpack.c.l.b16 %v923
      %v1389 = vunpack.c.h.b16 %v923
      %v1390 = vunpack.c.l.b16 %v924
      %v1391 = vunpack.c.h.b16 %v924
      %v1392 = vunpack.c.l.b16 %v925
      %v1393 = vunpack.c.h.b16 %v925
      %v1394 = vunpack.c.l.b16 %v926
      %v1395 = vunpack.c.h.b16 %v926
      %v1396 = vunpack.c.l.b16 %v927
      %v1397 = vunpack.c.h.b16 %v927
      %v1398 = vunpack.c.l.b16 %v928
      %v1399 = vunpack.c.h.b16 %v928
      %v1400 = vunpack.c.l.b16 %v929
      %v1401 = vunpack.c.h.b16 %v929
      %v1402 = vunpack.c.l.b16 %v930
      %v1403 = vunpack.c.h.b16 %v930
      %v1404 = vunpack.c.l.b16 %v931
      %v1405 = vunpack.c.h.b16 %v931
      %v1406 = vunpack.c.l.b16 %v932
      %v1407 = vunpack.c.h.b16 %v932
      %v1408 = vunpack.c.l.b16 %v933
      %v1409 = vunpack.c.h.b16 %v933
      %v1410 = vunpack.c.l.b16 %v934
      %v1411 = vunpack.c.h.b16 %v934
      %v1412 = vunpack.c.l.b16 %v935
      %v1413 = vunpack.c.h.b16 %v935
      %v1414 = vunpack.c.l.b16 %v936
      %v1415 = vunpack.c.h.b16 %v936
      %v1416 = vunpack.c.l.b16 %v937
      %v1417 = vunpack.c.h.b16 %v937
      %v1418 = vunpack.c.l.b16 %v938
      %v1419 = vunpack.c.h.b16 %v938
      %v1420 = vunpack.c.l.b16 %v939
      %v1421 = vunpack.c.h.b16 %v939
      %v1422 = vunpack.c.l.b16 %v940
      %v1423 = vunpack.c.h.b16 %v940
      %v1424 = vpack.c.b16 %v1386, %v1384
      %v1425 = vpack.c.b16 %v1387, %v1385
      %v1426 = vpack.c.b16 %v1390, %v1388
      %v1427 = vpack.c.b16 %v1391, %v1389
      %v1428 = vpack.c.b16 %v1394, %v1392
      %v1429 = vpack.c.b16 %v1395, %v1393
      %v1430 = vpack.c.b16 %v1398, %v1396
      %v1431 = vpack.c.b16 %v1399, %v1397
      %v1432 = vpack.c.b16 %v1402, %v1400
      %v1433 = vpack.c.b16 %v1403, %v1401
      %v1434 = vpack.c.b16 %v1406, %v1404
      %v1435 = vpack.c.b16 %v1407, %v1405
      %v1436 = vpack.c.b16 %v1410, %v1408
      %v1437 = vpack.c.b16 %v1411, %v1409
      %v1438 = vpack.c.b16 %v1414, %v1412
      %v1439 = vpack.c.b16 %v1415, %v1413
      %v1440 = vpack.c.b16 %v1418, %v1416
      %v1441 = vpack.c.b16 %v1419, %v1417
      %v1442 = vpack.c.b16 %v1422, %v1420
      %v1443 = vpack.c.b16 %v1423, %v1421
      %v1465 = vsel %vm1154, %v1341, 0
      %v1468 = vsel %vm1154, %v1343, 0
      %v1471 = vsel %vm1154, %v1345, 0
      %v1474 = vsel %vm1154, %v1347, 0
      %v1477 = vsel %vm1154, %v1349, 0
      %v1480 = vsel %vm1154, %v1351, 0
      %v1483 = vsel %vm1154, %v1353, 0
      %v1486 = vsel %vm1154, %v1355, 0
      %1488 = vmatprep.subr.bf16.mxu0 %v1439
      %1489 = vmatpush1.bf16.msra.mxu0 %v1438
      %1490 = vmatprep.subr.bf16.mxu0 %v1437
      %1491 = vmatpush1.bf16.msra.mxu0 %v1436
      %1492 = vmatprep.subr.bf16.mxu0 %v1435
      %1493 = vmatpush1.bf16.msra.mxu0 %v1434
      %1494 = vmatprep.subr.bf16.mxu0 %v1433
      %1495 = vmatpush1.bf16.msra.mxu0 %v1432
      %1496 = vmatprep.subr.bf16.mxu0 %v1431
      %1497 = vmatpush1.bf16.msra.mxu0 %v1430
      %1498 = vmatprep.subr.bf16.mxu0 %v1429
      %1499 = vmatpush1.bf16.msra.mxu0 %v1428
      %1500 = vmatprep.subr.bf16.mxu0 %v1427
      %1501 = vmatpush1.bf16.msra.mxu0 %v1426
      %1502 = vmatprep.subr.bf16.mxu0 %v1425
      %1503 = vmatpush1.bf16.msra.mxu0 %v1424
      %1504 = vmatprep.subr.bf16.mxu0 0
      %1505 = vmatpush2.bf16.msra.mxu0 0
      %1506 = vmatprep.subr.bf16.mxu0 0
      %1507 = vmatpush2.bf16.msra.mxu0 0
      %1508 = vmatprep.subr.bf16.mxu0 0
      %1509 = vmatpush2.bf16.msra.mxu0 0
      %1510 = vmatprep.subr.bf16.mxu0 0
      %1511 = vmatpush2.bf16.msra.mxu0 0
      %1512 = vmatprep.subr.bf16.mxu0 0
      %1513 = vmatpush2.bf16.msra.mxu0 0
      %1514 = vmatprep.subr.bf16.mxu0 0
      %1515 = vmatpush2.bf16.msra.mxu0 0
      %1516 = vmatprep.subr.bf16.mxu0 %v1443
      %1517 = vmatpush2.bf16.msra.mxu0 %v1442
      %1518 = vmatprep.subr.bf16.mxu0 %v1441
      %1519 = vmatpush2.bf16.msra.mxu0 %v1440
      %1520 = vmatprep.mubr.bf16.mxu0 %v1465
      %1521 = vmatmul.mubr.bf16.gmra.mxu0 %v1340
      %v1522 = vpop.f32.mrf.mxu0
      %v1523 = vadd.f32 %v1214, %v1522
      %v1524 = vpop.f32.mrf.mxu0
      %v1525 = vadd.f32 %v1216, %v1524
      %v1526 = vpop.f32.mrf.mxu0
      %v1527 = vadd.f32 %v1218, %v1526
      %v1528 = vpop.f32.mrf.mxu0
      %v1529 = vadd.f32 %v1220, %v1528
      %1530 = vmatprep.mubr.bf16.mxu0 %v1468
      %1531 = vmatmul.mubr.bf16.gmra.mxu0 %v1342
      %v1532 = vpop.f32.mrf.mxu0
      %v1533 = vadd.f32 %v1224, %v1532
      %v1534 = vpop.f32.mrf.mxu0
      %v1535 = vadd.f32 %v1226, %v1534
      %v1536 = vpop.f32.mrf.mxu0
      %v1537 = vadd.f32 %v1228, %v1536
      %v1538 = vpop.f32.mrf.mxu0
      %v1539 = vadd.f32 %v1230, %v1538
      %1540 = vmatprep.mubr.bf16.mxu0 %v1471
      %1541 = vmatmul.mubr.bf16.gmra.mxu0 %v1344
      %v1542 = vpop.f32.mrf.mxu0
      %v1543 = vadd.f32 %v1234, %v1542
      %v1544 = vpop.f32.mrf.mxu0
      %v1545 = vadd.f32 %v1236, %v1544
      %v1546 = vpop.f32.mrf.mxu0
      %v1547 = vadd.f32 %v1238, %v1546
      %v1548 = vpop.f32.mrf.mxu0
      %v1549 = vadd.f32 %v1240, %v1548
      %1550 = vmatprep.mubr.bf16.mxu0 %v1474
      %1551 = vmatmul.mubr.bf16.gmra.mxu0 %v1346
      %v1552 = vpop.f32.mrf.mxu0
      %v1553 = vadd.f32 %v1244, %v1552
      %v1554 = vpop.f32.mrf.mxu0
      %v1555 = vadd.f32 %v1246, %v1554
      %v1556 = vpop.f32.mrf.mxu0
      %v1557 = vadd.f32 %v1248, %v1556
      %v1558 = vpop.f32.mrf.mxu0
      %v1559 = vadd.f32 %v1250, %v1558
      %1560 = vmatprep.mubr.bf16.mxu0 %v1477
      %1561 = vmatmul.mubr.bf16.gmra.mxu0 %v1348
      %v1562 = vpop.f32.mrf.mxu0
      %v1563 = vadd.f32 %v1254, %v1562
      %v1564 = vpop.f32.mrf.mxu0
      %v1565 = vadd.f32 %v1256, %v1564
      %v1566 = vpop.f32.mrf.mxu0
      %v1567 = vadd.f32 %v1258, %v1566
      %v1568 = vpop.f32.mrf.mxu0
      %v1569 = vadd.f32 %v1260, %v1568
      %1570 = vmatprep.mubr.bf16.mxu0 %v1480
      %1571 = vmatmul.mubr.bf16.gmra.mxu0 %v1350
      %v1572 = vpop.f32.mrf.mxu0
      %v1573 = vadd.f32 %v1264, %v1572
      %v1574 = vpop.f32.mrf.mxu0
      %v1575 = vadd.f32 %v1266, %v1574
      %v1576 = vpop.f32.mrf.mxu0
      %v1577 = vadd.f32 %v1268, %v1576
      %v1578 = vpop.f32.mrf.mxu0
      %v1579 = vadd.f32 %v1270, %v1578
      %1580 = vmatprep.mubr.bf16.mxu0 %v1483
      %1581 = vmatmul.mubr.bf16.gmra.mxu0 %v1352
      %v1582 = vpop.f32.mrf.mxu0
      %v1583 = vadd.f32 %v1274, %v1582
      %v1584 = vpop.f32.mrf.mxu0
      %v1585 = vadd.f32 %v1276, %v1584
      %v1586 = vpop.f32.mrf.mxu0
      %v1587 = vadd.f32 %v1278, %v1586
      %v1588 = vpop.f32.mrf.mxu0
      %v1589 = vadd.f32 %v1280, %v1588
      %1590 = vmatprep.mubr.bf16.mxu0 %v1486
      %1591 = vmatmul.mubr.bf16.gmra.mxu0 %v1354
      %v1592 = vpop.f32.mrf.mxu0
      %v1593 = vadd.f32 %v1284, %v1592
      %v1594 = vpop.f32.mrf.mxu0
      %v1595 = vadd.f32 %v1286, %v1594
      %v1596 = vpop.f32.mrf.mxu0
      %v1597 = vadd.f32 %v1288, %v1596
      %v1598 = vpop.f32.mrf.mxu0
      %v1599 = vadd.f32 %v1290, %v1598
      %1600 = vdwg.mxu0
      %s1601 = sadd.s32 %s616, 2
      %s1602 = smul.u32 %s1601, 4
      %s1603 = smul.addr %s1602, 4
      %s1604 = scalar_lea.vmem %s565, %s1603
      %v1605 = vld [vmem:[%s1604] sm:$0xff]
      %v1606 = vld [vmem:[%s1604 + $0x8] sm:$0xff]
      %v1607 = vld [vmem:[%s1604 + $0x10] sm:$0xff]
      %v1608 = vld [vmem:[%s1604 + $0x18] sm:$0xff]
      %v1609 = vld [vmem:[%s1604 + $0x20] sm:$0xff]
      %v1610 = vld [vmem:[%s1604 + $0x28] sm:$0xff]
      %v1611 = vld [vmem:[%s1604 + $0x30] sm:$0xff]
      %v1612 = vld [vmem:[%s1604 + $0x38] sm:$0xff]
      %v1613 = vld [vmem:[%s1604 + $0x40] sm:$0xff]
      %v1614 = vld [vmem:[%s1604 + $0x48] sm:$0xff]
      %v1615 = vld [vmem:[%s1604 + $0x50] sm:$0xff]
      %v1616 = vld [vmem:[%s1604 + $0x58] sm:$0xff]
      %v1617 = vld [vmem:[%s1604 + $0x60] sm:$0xff]
      %v1618 = vld [vmem:[%s1604 + $0x68] sm:$0xff]
      %v1619 = vld [vmem:[%s1604 + $0x70] sm:$0xff]
      %v1620 = vld [vmem:[%s1604 + $0x78] sm:$0xff]
      %s1621 = scalar_lea.vmem %s5, 320
      %v1622 = vld [vmem:[%s1621] sm:$0xff]
      %v1623 = vld [vmem:[%s1621 + $0x8] sm:$0xff]
      %v1624 = vld [vmem:[%s1621 + $0x10] sm:$0xff]
      %v1625 = vld [vmem:[%s1621 + $0x18] sm:$0xff]
      %v1626 = vld [vmem:[%s1621 + $0x20] sm:$0xff]
      %v1627 = vld [vmem:[%s1621 + $0x28] sm:$0xff]
      %v1628 = vld [vmem:[%s1621 + $0x30] sm:$0xff]
      %v1629 = vld [vmem:[%s1621 + $0x38] sm:$0xff]
      %v1630 = vld [vmem:[%s1621 + $0x40] sm:$0xff]
      %v1631 = vld [vmem:[%s1621 + $0x48] sm:$0xff]
      %v1632 = vld [vmem:[%s1621 + $0x50] sm:$0xff]
      %v1633 = vld [vmem:[%s1621 + $0x58] sm:$0xff]
      %v1634 = vld [vmem:[%s1621 + $0x60] sm:$0xff]
      %v1635 = vld [vmem:[%s1621 + $0x68] sm:$0xff]
      %v1636 = vld [vmem:[%s1621 + $0x70] sm:$0xff]
      %v1637 = vld [vmem:[%s1621 + $0x78] sm:$0xff]
      %v1638 = vld [vmem:[%s1621 + $0x80] sm:$0xff]
      %v1639 = vld [vmem:[%s1621 + $0x88] sm:$0xff]
      %v1640 = vld [vmem:[%s1621 + $0x90] sm:$0xff]
      %v1641 = vld [vmem:[%s1621 + $0x98] sm:$0xff]
      %v1658 = vunpack.c.l.b16 %v1605
      %v1659 = vunpack.c.h.b16 %v1605
      %v1660 = vunpack.c.l.b16 %v1606
      %v1661 = vunpack.c.h.b16 %v1606
      %v1662 = vunpack.c.l.b16 %v1607
      %v1663 = vunpack.c.h.b16 %v1607
      %v1664 = vunpack.c.l.b16 %v1608
      %v1665 = vunpack.c.h.b16 %v1608
      %v1666 = vunpack.c.l.b16 %v1609
      %v1667 = vunpack.c.h.b16 %v1609
      %v1668 = vunpack.c.l.b16 %v1610
      %v1669 = vunpack.c.h.b16 %v1610
      %v1670 = vunpack.c.l.b16 %v1611
      %v1671 = vunpack.c.h.b16 %v1611
      %v1672 = vunpack.c.l.b16 %v1612
      %v1673 = vunpack.c.h.b16 %v1612
      %v1674 = vunpack.c.l.b16 %v1613
      %v1675 = vunpack.c.h.b16 %v1613
      %v1676 = vunpack.c.l.b16 %v1614
      %v1677 = vunpack.c.h.b16 %v1614
      %v1678 = vunpack.c.l.b16 %v1615
      %v1679 = vunpack.c.h.b16 %v1615
      %v1680 = vunpack.c.l.b16 %v1616
      %v1681 = vunpack.c.h.b16 %v1616
      %v1682 = vunpack.c.l.b16 %v1617
      %v1683 = vunpack.c.h.b16 %v1617
      %v1684 = vunpack.c.l.b16 %v1618
      %v1685 = vunpack.c.h.b16 %v1618
      %v1686 = vunpack.c.l.b16 %v1619
      %v1687 = vunpack.c.h.b16 %v1619
      %v1688 = vunpack.c.l.b16 %v1620
      %v1689 = vunpack.c.h.b16 %v1620
      %v1690 = vpack.c.b16 %v1660, %v1658
      %v1691 = vpack.c.b16 %v1661, %v1659
      %v1692 = vpack.c.b16 %v1664, %v1662
      %v1693 = vpack.c.b16 %v1665, %v1663
      %v1694 = vpack.c.b16 %v1668, %v1666
      %v1695 = vpack.c.b16 %v1669, %v1667
      %v1696 = vpack.c.b16 %v1672, %v1670
      %v1697 = vpack.c.b16 %v1673, %v1671
      %v1698 = vpack.c.b16 %v1676, %v1674
      %v1699 = vpack.c.b16 %v1677, %v1675
      %v1700 = vpack.c.b16 %v1680, %v1678
      %v1701 = vpack.c.b16 %v1681, %v1679
      %v1702 = vpack.c.b16 %v1684, %v1682
      %v1703 = vpack.c.b16 %v1685, %v1683
      %v1704 = vpack.c.b16 %v1688, %v1686
      %v1705 = vpack.c.b16 %v1689, %v1687
      %v1734 = vunpack.c.l.b16 %v1622
      %v1735 = vunpack.c.h.b16 %v1622
      %v1736 = vunpack.c.l.b16 %v1623
      %v1737 = vunpack.c.h.b16 %v1623
      %v1738 = vunpack.c.l.b16 %v1624
      %v1739 = vunpack.c.h.b16 %v1624
      %v1740 = vunpack.c.l.b16 %v1625
      %v1741 = vunpack.c.h.b16 %v1625
      %v1742 = vunpack.c.l.b16 %v1626
      %v1743 = vunpack.c.h.b16 %v1626
      %v1744 = vunpack.c.l.b16 %v1627
      %v1745 = vunpack.c.h.b16 %v1627
      %v1746 = vunpack.c.l.b16 %v1628
      %v1747 = vunpack.c.h.b16 %v1628
      %v1748 = vunpack.c.l.b16 %v1629
      %v1749 = vunpack.c.h.b16 %v1629
      %v1750 = vunpack.c.l.b16 %v1630
      %v1751 = vunpack.c.h.b16 %v1630
      %v1752 = vunpack.c.l.b16 %v1631
      %v1753 = vunpack.c.h.b16 %v1631
      %v1754 = vunpack.c.l.b16 %v1632
      %v1755 = vunpack.c.h.b16 %v1632
      %v1756 = vunpack.c.l.b16 %v1633
      %v1757 = vunpack.c.h.b16 %v1633
      %v1758 = vunpack.c.l.b16 %v1634
      %v1759 = vunpack.c.h.b16 %v1634
      %v1760 = vunpack.c.l.b16 %v1635
      %v1761 = vunpack.c.h.b16 %v1635
      %v1762 = vunpack.c.l.b16 %v1636
      %v1763 = vunpack.c.h.b16 %v1636
      %v1764 = vunpack.c.l.b16 %v1637
      %v1765 = vunpack.c.h.b16 %v1637
      %v1766 = vunpack.c.l.b16 %v1638
      %v1767 = vunpack.c.h.b16 %v1638
      %v1768 = vunpack.c.l.b16 %v1639
      %v1769 = vunpack.c.h.b16 %v1639
      %v1770 = vunpack.c.l.b16 %v1640
      %v1771 = vunpack.c.h.b16 %v1640
      %v1772 = vunpack.c.l.b16 %v1641
      %v1773 = vunpack.c.h.b16 %v1641
      %v1774 = vpack.c.b16 %v1736, %v1734
      %v1775 = vpack.c.b16 %v1737, %v1735
      %v1776 = vpack.c.b16 %v1740, %v1738
      %v1777 = vpack.c.b16 %v1741, %v1739
      %v1778 = vpack.c.b16 %v1744, %v1742
      %v1779 = vpack.c.b16 %v1745, %v1743
      %v1780 = vpack.c.b16 %v1748, %v1746
      %v1781 = vpack.c.b16 %v1749, %v1747
      %v1782 = vpack.c.b16 %v1752, %v1750
      %v1783 = vpack.c.b16 %v1753, %v1751
      %v1784 = vpack.c.b16 %v1756, %v1754
      %v1785 = vpack.c.b16 %v1757, %v1755
      %v1786 = vpack.c.b16 %v1760, %v1758
      %v1787 = vpack.c.b16 %v1761, %v1759
      %v1788 = vpack.c.b16 %v1764, %v1762
      %v1789 = vpack.c.b16 %v1765, %v1763
      %v1790 = vpack.c.b16 %v1768, %v1766
      %v1791 = vpack.c.b16 %v1769, %v1767
      %v1792 = vpack.c.b16 %v1772, %v1770
      %v1793 = vpack.c.b16 %v1773, %v1771
      %v1815 = vsel %vm1154, %v1691, 0
      %v1818 = vsel %vm1154, %v1693, 0
      %v1821 = vsel %vm1154, %v1695, 0
      %v1824 = vsel %vm1154, %v1697, 0
      %v1827 = vsel %vm1154, %v1699, 0
      %v1830 = vsel %vm1154, %v1701, 0
      %v1833 = vsel %vm1154, %v1703, 0
      %v1836 = vsel %vm1154, %v1705, 0
      %1838 = vmatprep.subr.bf16.mxu0 %v1789
      %1839 = vmatpush1.bf16.msra.mxu0 %v1788
      %1840 = vmatprep.subr.bf16.mxu0 %v1787
      %1841 = vmatpush1.bf16.msra.mxu0 %v1786
      %1842 = vmatprep.subr.bf16.mxu0 %v1785
      %1843 = vmatpush1.bf16.msra.mxu0 %v1784
      %1844 = vmatprep.subr.bf16.mxu0 %v1783
      %1845 = vmatpush1.bf16.msra.mxu0 %v1782
      %1846 = vmatprep.subr.bf16.mxu0 %v1781
      %1847 = vmatpush1.bf16.msra.mxu0 %v1780
      %1848 = vmatprep.subr.bf16.mxu0 %v1779
      %1849 = vmatpush1.bf16.msra.mxu0 %v1778
      %1850 = vmatprep.subr.bf16.mxu0 %v1777
      %1851 = vmatpush1.bf16.msra.mxu0 %v1776
      %1852 = vmatprep.subr.bf16.mxu0 %v1775
      %1853 = vmatpush1.bf16.msra.mxu0 %v1774
      %1854 = vmatprep.subr.bf16.mxu0 0
      %1855 = vmatpush2.bf16.msra.mxu0 0
      %1856 = vmatprep.subr.bf16.mxu0 0
      %1857 = vmatpush2.bf16.msra.mxu0 0
      %1858 = vmatprep.subr.bf16.mxu0 0
      %1859 = vmatpush2.bf16.msra.mxu0 0
      %1860 = vmatprep.subr.bf16.mxu0 0
      %1861 = vmatpush2.bf16.msra.mxu0 0
      %1862 = vmatprep.subr.bf16.mxu0 0
      %1863 = vmatpush2.bf16.msra.mxu0 0
      %1864 = vmatprep.subr.bf16.mxu0 0
      %1865 = vmatpush2.bf16.msra.mxu0 0
      %1866 = vmatprep.subr.bf16.mxu0 %v1793
      %1867 = vmatpush2.bf16.msra.mxu0 %v1792
      %1868 = vmatprep.subr.bf16.mxu0 %v1791
      %1869 = vmatpush2.bf16.msra.mxu0 %v1790
      %1870 = vmatprep.mubr.bf16.mxu0 %v1815
      %1871 = vmatmul.mubr.bf16.gmra.mxu0 %v1690
      %v1872 = vpop.f32.mrf.mxu0
      %v1873 = vadd.f32 0.0, %v1872
      %v1874 = vpop.f32.mrf.mxu0
      %v1875 = vadd.f32 0.0, %v1874
      %v1876 = vpop.f32.mrf.mxu0
      %v1877 = vadd.f32 0.0, %v1876
      %v1878 = vpop.f32.mrf.mxu0
      %v1879 = vadd.f32 0.0, %v1878
      %1880 = vmatprep.mubr.bf16.mxu0 %v1818
      %1881 = vmatmul.mubr.bf16.gmra.mxu0 %v1692
      %v1882 = vpop.f32.mrf.mxu0
      %v1883 = vadd.f32 0.0, %v1882
      %v1884 = vpop.f32.mrf.mxu0
      %v1885 = vadd.f32 0.0, %v1884
      %v1886 = vpop.f32.mrf.mxu0
      %v1887 = vadd.f32 0.0, %v1886
      %v1888 = vpop.f32.mrf.mxu0
      %v1889 = vadd.f32 0.0, %v1888
      %1890 = vmatprep.mubr.bf16.mxu0 %v1821
      %1891 = vmatmul.mubr.bf16.gmra.mxu0 %v1694
      %v1892 = vpop.f32.mrf.mxu0
      %v1893 = vadd.f32 0.0, %v1892
      %v1894 = vpop.f32.mrf.mxu0
      %v1895 = vadd.f32 0.0, %v1894
      %v1896 = vpop.f32.mrf.mxu0
      %v1897 = vadd.f32 0.0, %v1896
      %v1898 = vpop.f32.mrf.mxu0
      %v1899 = vadd.f32 0.0, %v1898
      %1900 = vmatprep.mubr.bf16.mxu0 %v1824
      %1901 = vmatmul.mubr.bf16.gmra.mxu0 %v1696
      %v1902 = vpop.f32.mrf.mxu0
      %v1903 = vadd.f32 0.0, %v1902
      %v1904 = vpop.f32.mrf.mxu0
      %v1905 = vadd.f32 0.0, %v1904
      %v1906 = vpop.f32.mrf.mxu0
      %v1907 = vadd.f32 0.0, %v1906
      %v1908 = vpop.f32.mrf.mxu0
      %v1909 = vadd.f32 0.0, %v1908
      %1910 = vmatprep.mubr.bf16.mxu0 %v1827
      %1911 = vmatmul.mubr.bf16.gmra.mxu0 %v1698
      %v1912 = vpop.f32.mrf.mxu0
      %v1913 = vadd.f32 0.0, %v1912
      %v1914 = vpop.f32.mrf.mxu0
      %v1915 = vadd.f32 0.0, %v1914
      %v1916 = vpop.f32.mrf.mxu0
      %v1917 = vadd.f32 0.0, %v1916
      %v1918 = vpop.f32.mrf.mxu0
      %v1919 = vadd.f32 0.0, %v1918
      %1920 = vmatprep.mubr.bf16.mxu0 %v1830
      %1921 = vmatmul.mubr.bf16.gmra.mxu0 %v1700
      %v1922 = vpop.f32.mrf.mxu0
      %v1923 = vadd.f32 0.0, %v1922
      %v1924 = vpop.f32.mrf.mxu0
      %v1925 = vadd.f32 0.0, %v1924
      %v1926 = vpop.f32.mrf.mxu0
      %v1927 = vadd.f32 0.0, %v1926
      %v1928 = vpop.f32.mrf.mxu0
      %v1929 = vadd.f32 0.0, %v1928
      %1930 = vmatprep.mubr.bf16.mxu0 %v1833
      %1931 = vmatmul.mubr.bf16.gmra.mxu0 %v1702
      %v1932 = vpop.f32.mrf.mxu0
      %v1933 = vadd.f32 0.0, %v1932
      %v1934 = vpop.f32.mrf.mxu0
      %v1935 = vadd.f32 0.0, %v1934
      %v1936 = vpop.f32.mrf.mxu0
      %v1937 = vadd.f32 0.0, %v1936
      %v1938 = vpop.f32.mrf.mxu0
      %v1939 = vadd.f32 0.0, %v1938
      %1940 = vmatprep.mubr.bf16.mxu0 %v1836
      %1941 = vmatmul.mubr.bf16.gmra.mxu0 %v1704
      %v1942 = vpop.f32.mrf.mxu0
      %v1943 = vadd.f32 0.0, %v1942
      %v1944 = vpop.f32.mrf.mxu0
      %v1945 = vadd.f32 0.0, %v1944
      %v1946 = vpop.f32.mrf.mxu0
      %v1947 = vadd.f32 0.0, %v1946
      %v1948 = vpop.f32.mrf.mxu0
      %v1949 = vadd.f32 0.0, %v1948
      %1950 = vdwg.mxu0
      %v1951 = vadd.f32 %v1523, %v1873
      %v1952 = vadd.f32 %v1525, %v1875
      %v1953 = vadd.f32 %v1527, %v1877
      %v1954 = vadd.f32 %v1529, %v1879
      %v1955 = vadd.f32 %v1533, %v1883
      %v1956 = vadd.f32 %v1535, %v1885
      %v1957 = vadd.f32 %v1537, %v1887
      %v1958 = vadd.f32 %v1539, %v1889
      %v1959 = vadd.f32 %v1543, %v1893
      %v1960 = vadd.f32 %v1545, %v1895
      %v1961 = vadd.f32 %v1547, %v1897
      %v1962 = vadd.f32 %v1549, %v1899
      %v1963 = vadd.f32 %v1553, %v1903
      %v1964 = vadd.f32 %v1555, %v1905
      %v1965 = vadd.f32 %v1557, %v1907
      %v1966 = vadd.f32 %v1559, %v1909
      %v1967 = vadd.f32 %v1563, %v1913
      %v1968 = vadd.f32 %v1565, %v1915
      %v1969 = vadd.f32 %v1567, %v1917
      %v1970 = vadd.f32 %v1569, %v1919
      %v1971 = vadd.f32 %v1573, %v1923
      %v1972 = vadd.f32 %v1575, %v1925
      %v1973 = vadd.f32 %v1577, %v1927
      %v1974 = vadd.f32 %v1579, %v1929
      %v1975 = vadd.f32 %v1583, %v1933
      %v1976 = vadd.f32 %v1585, %v1935
      %v1977 = vadd.f32 %v1587, %v1937
      %v1978 = vadd.f32 %v1589, %v1939
      %v1979 = vadd.f32 %v1593, %v1943
      %v1980 = vadd.f32 %v1595, %v1945
      %v1981 = vadd.f32 %v1597, %v1947
      %v1982 = vadd.f32 %v1599, %v1949
      %s1983 = sadd.s32 %s616, 3
      %s1984 = smul.u32 %s1983, 4
      %s1985 = smul.addr %s1984, 4
      %s1986 = scalar_lea.vmem %s565, %s1985
      %v1987 = vld [vmem:[%s1986] sm:$0xff]
      %v1988 = vld [vmem:[%s1986 + $0x8] sm:$0xff]
      %v1989 = vld [vmem:[%s1986 + $0x10] sm:$0xff]
      %v1990 = vld [vmem:[%s1986 + $0x18] sm:$0xff]
      %v1991 = vld [vmem:[%s1986 + $0x20] sm:$0xff]
      %v1992 = vld [vmem:[%s1986 + $0x28] sm:$0xff]
      %v1993 = vld [vmem:[%s1986 + $0x30] sm:$0xff]
      %v1994 = vld [vmem:[%s1986 + $0x38] sm:$0xff]
      %v1995 = vld [vmem:[%s1986 + $0x40] sm:$0xff]
      %v1996 = vld [vmem:[%s1986 + $0x48] sm:$0xff]
      %v1997 = vld [vmem:[%s1986 + $0x50] sm:$0xff]
      %v1998 = vld [vmem:[%s1986 + $0x58] sm:$0xff]
      %v1999 = vld [vmem:[%s1986 + $0x60] sm:$0xff]
      %v2000 = vld [vmem:[%s1986 + $0x68] sm:$0xff]
      %v2001 = vld [vmem:[%s1986 + $0x70] sm:$0xff]
      %v2002 = vld [vmem:[%s1986 + $0x78] sm:$0xff]
      %s2003 = scalar_lea.vmem %s5, 480
      %v2004 = vld [vmem:[%s2003] sm:$0xff]
      %v2005 = vld [vmem:[%s2003 + $0x8] sm:$0xff]
      %v2006 = vld [vmem:[%s2003 + $0x10] sm:$0xff]
      %v2007 = vld [vmem:[%s2003 + $0x18] sm:$0xff]
      %v2008 = vld [vmem:[%s2003 + $0x20] sm:$0xff]
      %v2009 = vld [vmem:[%s2003 + $0x28] sm:$0xff]
      %v2010 = vld [vmem:[%s2003 + $0x30] sm:$0xff]
      %v2011 = vld [vmem:[%s2003 + $0x38] sm:$0xff]
      %v2012 = vld [vmem:[%s2003 + $0x40] sm:$0xff]
      %v2013 = vld [vmem:[%s2003 + $0x48] sm:$0xff]
      %v2014 = vld [vmem:[%s2003 + $0x50] sm:$0xff]
      %v2015 = vld [vmem:[%s2003 + $0x58] sm:$0xff]
      %v2016 = vld [vmem:[%s2003 + $0x60] sm:$0xff]
      %v2017 = vld [vmem:[%s2003 + $0x68] sm:$0xff]
      %v2018 = vld [vmem:[%s2003 + $0x70] sm:$0xff]
      %v2019 = vld [vmem:[%s2003 + $0x78] sm:$0xff]
      %v2020 = vld [vmem:[%s2003 + $0x80] sm:$0xff]
      %v2021 = vld [vmem:[%s2003 + $0x88] sm:$0xff]
      %v2022 = vld [vmem:[%s2003 + $0x90] sm:$0xff]
      %v2023 = vld [vmem:[%s2003 + $0x98] sm:$0xff]
      %v2040 = vunpack.c.l.b16 %v1987
      %v2041 = vunpack.c.h.b16 %v1987
      %v2042 = vunpack.c.l.b16 %v1988
      %v2043 = vunpack.c.h.b16 %v1988
      %v2044 = vunpack.c.l.b16 %v1989
      %v2045 = vunpack.c.h.b16 %v1989
      %v2046 = vunpack.c.l.b16 %v1990
      %v2047 = vunpack.c.h.b16 %v1990
      %v2048 = vunpack.c.l.b16 %v1991
      %v2049 = vunpack.c.h.b16 %v1991
      %v2050 = vunpack.c.l.b16 %v1992
      %v2051 = vunpack.c.h.b16 %v1992
      %v2052 = vunpack.c.l.b16 %v1993
      %v2053 = vunpack.c.h.b16 %v1993
      %v2054 = vunpack.c.l.b16 %v1994
      %v2055 = vunpack.c.h.b16 %v1994
      %v2056 = vunpack.c.l.b16 %v1995
      %v2057 = vunpack.c.h.b16 %v1995
      %v2058 = vunpack.c.l.b16 %v1996
      %v2059 = vunpack.c.h.b16 %v1996
      %v2060 = vunpack.c.l.b16 %v1997
      %v2061 = vunpack.c.h.b16 %v1997
      %v2062 = vunpack.c.l.b16 %v1998
      %v2063 = vunpack.c.h.b16 %v1998
      %v2064 = vunpack.c.l.b16 %v1999
      %v2065 = vunpack.c.h.b16 %v1999
      %v2066 = vunpack.c.l.b16 %v2000
      %v2067 = vunpack.c.h.b16 %v2000
      %v2068 = vunpack.c.l.b16 %v2001
      %v2069 = vunpack.c.h.b16 %v2001
      %v2070 = vunpack.c.l.b16 %v2002
      %v2071 = vunpack.c.h.b16 %v2002
      %v2072 = vpack.c.b16 %v2042, %v2040
      %v2073 = vpack.c.b16 %v2043, %v2041
      %v2074 = vpack.c.b16 %v2046, %v2044
      %v2075 = vpack.c.b16 %v2047, %v2045
      %v2076 = vpack.c.b16 %v2050, %v2048
      %v2077 = vpack.c.b16 %v2051, %v2049
      %v2078 = vpack.c.b16 %v2054, %v2052
      %v2079 = vpack.c.b16 %v2055, %v2053
      %v2080 = vpack.c.b16 %v2058, %v2056
      %v2081 = vpack.c.b16 %v2059, %v2057
      %v2082 = vpack.c.b16 %v2062, %v2060
      %v2083 = vpack.c.b16 %v2063, %v2061
      %v2084 = vpack.c.b16 %v2066, %v2064
      %v2085 = vpack.c.b16 %v2067, %v2065
      %v2086 = vpack.c.b16 %v2070, %v2068
      %v2087 = vpack.c.b16 %v2071, %v2069
      %v2116 = vunpack.c.l.b16 %v2004
      %v2117 = vunpack.c.h.b16 %v2004
      %v2118 = vunpack.c.l.b16 %v2005
      %v2119 = vunpack.c.h.b16 %v2005
      %v2120 = vunpack.c.l.b16 %v2006
      %v2121 = vunpack.c.h.b16 %v2006
      %v2122 = vunpack.c.l.b16 %v2007
      %v2123 = vunpack.c.h.b16 %v2007
      %v2124 = vunpack.c.l.b16 %v2008
      %v2125 = vunpack.c.h.b16 %v2008
      %v2126 = vunpack.c.l.b16 %v2009
      %v2127 = vunpack.c.h.b16 %v2009
      %v2128 = vunpack.c.l.b16 %v2010
      %v2129 = vunpack.c.h.b16 %v2010
      %v2130 = vunpack.c.l.b16 %v2011
      %v2131 = vunpack.c.h.b16 %v2011
      %v2132 = vunpack.c.l.b16 %v2012
      %v2133 = vunpack.c.h.b16 %v2012
      %v2134 = vunpack.c.l.b16 %v2013
      %v2135 = vunpack.c.h.b16 %v2013
      %v2136 = vunpack.c.l.b16 %v2014
      %v2137 = vunpack.c.h.b16 %v2014
      %v2138 = vunpack.c.l.b16 %v2015
      %v2139 = vunpack.c.h.b16 %v2015
      %v2140 = vunpack.c.l.b16 %v2016
      %v2141 = vunpack.c.h.b16 %v2016
      %v2142 = vunpack.c.l.b16 %v2017
      %v2143 = vunpack.c.h.b16 %v2017
      %v2144 = vunpack.c.l.b16 %v2018
      %v2145 = vunpack.c.h.b16 %v2018
      %v2146 = vunpack.c.l.b16 %v2019
      %v2147 = vunpack.c.h.b16 %v2019
      %v2148 = vunpack.c.l.b16 %v2020
      %v2149 = vunpack.c.h.b16 %v2020
      %v2150 = vunpack.c.l.b16 %v2021
      %v2151 = vunpack.c.h.b16 %v2021
      %v2152 = vunpack.c.l.b16 %v2022
      %v2153 = vunpack.c.h.b16 %v2022
      %v2154 = vunpack.c.l.b16 %v2023
      %v2155 = vunpack.c.h.b16 %v2023
      %v2156 = vpack.c.b16 %v2118, %v2116
      %v2157 = vpack.c.b16 %v2119, %v2117
      %v2158 = vpack.c.b16 %v2122, %v2120
      %v2159 = vpack.c.b16 %v2123, %v2121
      %v2160 = vpack.c.b16 %v2126, %v2124
      %v2161 = vpack.c.b16 %v2127, %v2125
      %v2162 = vpack.c.b16 %v2130, %v2128
      %v2163 = vpack.c.b16 %v2131, %v2129
      %v2164 = vpack.c.b16 %v2134, %v2132
      %v2165 = vpack.c.b16 %v2135, %v2133
      %v2166 = vpack.c.b16 %v2138, %v2136
      %v2167 = vpack.c.b16 %v2139, %v2137
      %v2168 = vpack.c.b16 %v2142, %v2140
      %v2169 = vpack.c.b16 %v2143, %v2141
      %v2170 = vpack.c.b16 %v2146, %v2144
      %v2171 = vpack.c.b16 %v2147, %v2145
      %v2172 = vpack.c.b16 %v2150, %v2148
      %v2173 = vpack.c.b16 %v2151, %v2149
      %v2174 = vpack.c.b16 %v2154, %v2152
      %v2175 = vpack.c.b16 %v2155, %v2153
      %v2197 = vsel %vm1154, %v2073, 0
      %v2200 = vsel %vm1154, %v2075, 0
      %v2203 = vsel %vm1154, %v2077, 0
      %v2206 = vsel %vm1154, %v2079, 0
      %v2209 = vsel %vm1154, %v2081, 0
      %v2212 = vsel %vm1154, %v2083, 0
      %v2215 = vsel %vm1154, %v2085, 0
      %v2218 = vsel %vm1154, %v2087, 0
      %2220 = vmatprep.subr.bf16.mxu0 %v2171
      %2221 = vmatpush1.bf16.msra.mxu0 %v2170
      %2222 = vmatprep.subr.bf16.mxu0 %v2169
      %2223 = vmatpush1.bf16.msra.mxu0 %v2168
      %2224 = vmatprep.subr.bf16.mxu0 %v2167
      %2225 = vmatpush1.bf16.msra.mxu0 %v2166
      %2226 = vmatprep.subr.bf16.mxu0 %v2165
      %2227 = vmatpush1.bf16.msra.mxu0 %v2164
      %2228 = vmatprep.subr.bf16.mxu0 %v2163
      %2229 = vmatpush1.bf16.msra.mxu0 %v2162
      %2230 = vmatprep.subr.bf16.mxu0 %v2161
      %2231 = vmatpush1.bf16.msra.mxu0 %v2160
      %2232 = vmatprep.subr.bf16.mxu0 %v2159
      %2233 = vmatpush1.bf16.msra.mxu0 %v2158
      %2234 = vmatprep.subr.bf16.mxu0 %v2157
      %2235 = vmatpush1.bf16.msra.mxu0 %v2156
      %2236 = vmatprep.subr.bf16.mxu0 0
      %2237 = vmatpush2.bf16.msra.mxu0 0
      %2238 = vmatprep.subr.bf16.mxu0 0
      %2239 = vmatpush2.bf16.msra.mxu0 0
      %2240 = vmatprep.subr.bf16.mxu0 0
      %2241 = vmatpush2.bf16.msra.mxu0 0
      %2242 = vmatprep.subr.bf16.mxu0 0
      %2243 = vmatpush2.bf16.msra.mxu0 0
      %2244 = vmatprep.subr.bf16.mxu0 0
      %2245 = vmatpush2.bf16.msra.mxu0 0
      %2246 = vmatprep.subr.bf16.mxu0 0
      %2247 = vmatpush2.bf16.msra.mxu0 0
      %2248 = vmatprep.subr.bf16.mxu0 %v2175
      %2249 = vmatpush2.bf16.msra.mxu0 %v2174
      %2250 = vmatprep.subr.bf16.mxu0 %v2173
      %2251 = vmatpush2.bf16.msra.mxu0 %v2172
      %2252 = vmatprep.mubr.bf16.mxu0 %v2197
      %2253 = vmatmul.mubr.bf16.gmra.mxu0 %v2072
      %v2254 = vpop.f32.mrf.mxu0
      %v2255 = vadd.f32 0.0, %v2254
      %v2256 = vpop.f32.mrf.mxu0
      %v2257 = vadd.f32 0.0, %v2256
      %v2258 = vpop.f32.mrf.mxu0
      %v2259 = vadd.f32 0.0, %v2258
      %v2260 = vpop.f32.mrf.mxu0
      %v2261 = vadd.f32 0.0, %v2260
      %2262 = vmatprep.mubr.bf16.mxu0 %v2200
      %2263 = vmatmul.mubr.bf16.gmra.mxu0 %v2074
      %v2264 = vpop.f32.mrf.mxu0
      %v2265 = vadd.f32 0.0, %v2264
      %v2266 = vpop.f32.mrf.mxu0
      %v2267 = vadd.f32 0.0, %v2266
      %v2268 = vpop.f32.mrf.mxu0
      %v2269 = vadd.f32 0.0, %v2268
      %v2270 = vpop.f32.mrf.mxu0
      %v2271 = vadd.f32 0.0, %v2270
      %2272 = vmatprep.mubr.bf16.mxu0 %v2203
      %2273 = vmatmul.mubr.bf16.gmra.mxu0 %v2076
      %v2274 = vpop.f32.mrf.mxu0
      %v2275 = vadd.f32 0.0, %v2274
      %v2276 = vpop.f32.mrf.mxu0
      %v2277 = vadd.f32 0.0, %v2276
      %v2278 = vpop.f32.mrf.mxu0
      %v2279 = vadd.f32 0.0, %v2278
      %v2280 = vpop.f32.mrf.mxu0
      %v2281 = vadd.f32 0.0, %v2280
      %2282 = vmatprep.mubr.bf16.mxu0 %v2206
      %2283 = vmatmul.mubr.bf16.gmra.mxu0 %v2078
      %v2284 = vpop.f32.mrf.mxu0
      %v2285 = vadd.f32 0.0, %v2284
      %v2286 = vpop.f32.mrf.mxu0
      %v2287 = vadd.f32 0.0, %v2286
      %v2288 = vpop.f32.mrf.mxu0
      %v2289 = vadd.f32 0.0, %v2288
      %v2290 = vpop.f32.mrf.mxu0
      %v2291 = vadd.f32 0.0, %v2290
      %2292 = vmatprep.mubr.bf16.mxu0 %v2209
      %2293 = vmatmul.mubr.bf16.gmra.mxu0 %v2080
      %v2294 = vpop.f32.mrf.mxu0
      %v2295 = vadd.f32 0.0, %v2294
      %v2296 = vpop.f32.mrf.mxu0
      %v2297 = vadd.f32 0.0, %v2296
      %v2298 = vpop.f32.mrf.mxu0
      %v2299 = vadd.f32 0.0, %v2298
      %v2300 = vpop.f32.mrf.mxu0
      %v2301 = vadd.f32 0.0, %v2300
      %2302 = vmatprep.mubr.bf16.mxu0 %v2212
      %2303 = vmatmul.mubr.bf16.gmra.mxu0 %v2082
      %v2304 = vpop.f32.mrf.mxu0
      %v2305 = vadd.f32 0.0, %v2304
      %v2306 = vpop.f32.mrf.mxu0
      %v2307 = vadd.f32 0.0, %v2306
      %v2308 = vpop.f32.mrf.mxu0
      %v2309 = vadd.f32 0.0, %v2308
      %v2310 = vpop.f32.mrf.mxu0
      %v2311 = vadd.f32 0.0, %v2310
      %2312 = vmatprep.mubr.bf16.mxu0 %v2215
      %2313 = vmatmul.mubr.bf16.gmra.mxu0 %v2084
      %v2314 = vpop.f32.mrf.mxu0
      %v2315 = vadd.f32 0.0, %v2314
      %v2316 = vpop.f32.mrf.mxu0
      %v2317 = vadd.f32 0.0, %v2316
      %v2318 = vpop.f32.mrf.mxu0
      %v2319 = vadd.f32 0.0, %v2318
      %v2320 = vpop.f32.mrf.mxu0
      %v2321 = vadd.f32 0.0, %v2320
      %2322 = vmatprep.mubr.bf16.mxu0 %v2218
      %2323 = vmatmul.mubr.bf16.gmra.mxu0 %v2086
      %v2324 = vpop.f32.mrf.mxu0
      %v2325 = vadd.f32 0.0, %v2324
      %v2326 = vpop.f32.mrf.mxu0
      %v2327 = vadd.f32 0.0, %v2326
      %v2328 = vpop.f32.mrf.mxu0
      %v2329 = vadd.f32 0.0, %v2328
      %v2330 = vpop.f32.mrf.mxu0
      %v2331 = vadd.f32 0.0, %v2330
      %2332 = vdwg.mxu0
      %v2333 = vadd.f32 %v1951, %v2255
      %v2334 = vadd.f32 %v1952, %v2257
      %v2335 = vadd.f32 %v1953, %v2259
      %v2336 = vadd.f32 %v1954, %v2261
      %v2337 = vadd.f32 %v1955, %v2265
      %v2338 = vadd.f32 %v1956, %v2267
      %v2339 = vadd.f32 %v1957, %v2269
      %v2340 = vadd.f32 %v1958, %v2271
      %v2341 = vadd.f32 %v1959, %v2275
      %v2342 = vadd.f32 %v1960, %v2277
      %v2343 = vadd.f32 %v1961, %v2279
      %v2344 = vadd.f32 %v1962, %v2281
      %v2345 = vadd.f32 %v1963, %v2285
      %v2346 = vadd.f32 %v1964, %v2287
      %v2347 = vadd.f32 %v1965, %v2289
      %v2348 = vadd.f32 %v1966, %v2291
      %v2349 = vadd.f32 %v1967, %v2295
      %v2350 = vadd.f32 %v1968, %v2297
      %v2351 = vadd.f32 %v1969, %v2299
      %v2352 = vadd.f32 %v1970, %v2301
      %v2353 = vadd.f32 %v1971, %v2305
      %v2354 = vadd.f32 %v1972, %v2307
      %v2355 = vadd.f32 %v1973, %v2309
      %v2356 = vadd.f32 %v1974, %v2311
      %v2357 = vadd.f32 %v1975, %v2315
      %v2358 = vadd.f32 %v1976, %v2317
      %v2359 = vadd.f32 %v1977, %v2319
      %v2360 = vadd.f32 %v1978, %v2321
      %v2361 = vadd.f32 %v1979, %v2325
      %v2362 = vadd.f32 %v1980, %v2327
      %v2363 = vadd.f32 %v1981, %v2329
      %v2364 = vadd.f32 %v1982, %v2331
      %s2365 = sadd.s32 %s616, 4
      %s2366 = smul.u32 %s2365, 4
      %s2367 = smul.addr %s2366, 4
      %s2368 = scalar_lea.vmem %s565, %s2367
      %v2369 = vld [vmem:[%s2368] sm:$0xff]
      %v2370 = vld [vmem:[%s2368 + $0x8] sm:$0xff]
      %v2371 = vld [vmem:[%s2368 + $0x10] sm:$0xff]
      %v2372 = vld [vmem:[%s2368 + $0x18] sm:$0xff]
      %v2373 = vld [vmem:[%s2368 + $0x20] sm:$0xff]
      %v2374 = vld [vmem:[%s2368 + $0x28] sm:$0xff]
      %v2375 = vld [vmem:[%s2368 + $0x30] sm:$0xff]
      %v2376 = vld [vmem:[%s2368 + $0x38] sm:$0xff]
      %v2377 = vld [vmem:[%s2368 + $0x40] sm:$0xff]
      %v2378 = vld [vmem:[%s2368 + $0x48] sm:$0xff]
      %v2379 = vld [vmem:[%s2368 + $0x50] sm:$0xff]
      %v2380 = vld [vmem:[%s2368 + $0x58] sm:$0xff]
      %v2381 = vld [vmem:[%s2368 + $0x60] sm:$0xff]
      %v2382 = vld [vmem:[%s2368 + $0x68] sm:$0xff]
      %v2383 = vld [vmem:[%s2368 + $0x70] sm:$0xff]
      %v2384 = vld [vmem:[%s2368 + $0x78] sm:$0xff]
      %s2385 = scalar_lea.vmem %s5, 640
      %v2386 = vld [vmem:[%s2385] sm:$0xff]
      %v2387 = vld [vmem:[%s2385 + $0x8] sm:$0xff]
      %v2388 = vld [vmem:[%s2385 + $0x10] sm:$0xff]
      %v2389 = vld [vmem:[%s2385 + $0x18] sm:$0xff]
      %v2390 = vld [vmem:[%s2385 + $0x20] sm:$0xff]
      %v2391 = vld [vmem:[%s2385 + $0x28] sm:$0xff]
      %v2392 = vld [vmem:[%s2385 + $0x30] sm:$0xff]
      %v2393 = vld [vmem:[%s2385 + $0x38] sm:$0xff]
      %v2394 = vld [vmem:[%s2385 + $0x40] sm:$0xff]
      %v2395 = vld [vmem:[%s2385 + $0x48] sm:$0xff]
      %v2396 = vld [vmem:[%s2385 + $0x50] sm:$0xff]
      %v2397 = vld [vmem:[%s2385 + $0x58] sm:$0xff]
      %v2398 = vld [vmem:[%s2385 + $0x60] sm:$0xff]
      %v2399 = vld [vmem:[%s2385 + $0x68] sm:$0xff]
      %v2400 = vld [vmem:[%s2385 + $0x70] sm:$0xff]
      %v2401 = vld [vmem:[%s2385 + $0x78] sm:$0xff]
      %v2402 = vld [vmem:[%s2385 + $0x80] sm:$0xff]
      %v2403 = vld [vmem:[%s2385 + $0x88] sm:$0xff]
      %v2404 = vld [vmem:[%s2385 + $0x90] sm:$0xff]
      %v2405 = vld [vmem:[%s2385 + $0x98] sm:$0xff]
      %v2422 = vunpack.c.l.b16 %v2369
      %v2423 = vunpack.c.h.b16 %v2369
      %v2424 = vunpack.c.l.b16 %v2370
      %v2425 = vunpack.c.h.b16 %v2370
      %v2426 = vunpack.c.l.b16 %v2371
      %v2427 = vunpack.c.h.b16 %v2371
      %v2428 = vunpack.c.l.b16 %v2372
      %v2429 = vunpack.c.h.b16 %v2372
      %v2430 = vunpack.c.l.b16 %v2373
      %v2431 = vunpack.c.h.b16 %v2373
      %v2432 = vunpack.c.l.b16 %v2374
      %v2433 = vunpack.c.h.b16 %v2374
      %v2434 = vunpack.c.l.b16 %v2375
      %v2435 = vunpack.c.h.b16 %v2375
      %v2436 = vunpack.c.l.b16 %v2376
      %v2437 = vunpack.c.h.b16 %v2376
      %v2438 = vunpack.c.l.b16 %v2377
      %v2439 = vunpack.c.h.b16 %v2377
      %v2440 = vunpack.c.l.b16 %v2378
      %v2441 = vunpack.c.h.b16 %v2378
      %v2442 = vunpack.c.l.b16 %v2379
      %v2443 = vunpack.c.h.b16 %v2379
      %v2444 = vunpack.c.l.b16 %v2380
      %v2445 = vunpack.c.h.b16 %v2380
      %v2446 = vunpack.c.l.b16 %v2381
      %v2447 = vunpack.c.h.b16 %v2381
      %v2448 = vunpack.c.l.b16 %v2382
      %v2449 = vunpack.c.h.b16 %v2382
      %v2450 = vunpack.c.l.b16 %v2383
      %v2451 = vunpack.c.h.b16 %v2383
      %v2452 = vunpack.c.l.b16 %v2384
      %v2453 = vunpack.c.h.b16 %v2384
      %v2454 = vpack.c.b16 %v2424, %v2422
      %v2455 = vpack.c.b16 %v2425, %v2423
      %v2456 = vpack.c.b16 %v2428, %v2426
      %v2457 = vpack.c.b16 %v2429, %v2427
      %v2458 = vpack.c.b16 %v2432, %v2430
      %v2459 = vpack.c.b16 %v2433, %v2431
      %v2460 = vpack.c.b16 %v2436, %v2434
      %v2461 = vpack.c.b16 %v2437, %v2435
      %v2462 = vpack.c.b16 %v2440, %v2438
      %v2463 = vpack.c.b16 %v2441, %v2439
      %v2464 = vpack.c.b16 %v2444, %v2442
      %v2465 = vpack.c.b16 %v2445, %v2443
      %v2466 = vpack.c.b16 %v2448, %v2446
      %v2467 = vpack.c.b16 %v2449, %v2447
      %v2468 = vpack.c.b16 %v2452, %v2450
      %v2469 = vpack.c.b16 %v2453, %v2451
      %v2498 = vunpack.c.l.b16 %v2386
      %v2499 = vunpack.c.h.b16 %v2386
      %v2500 = vunpack.c.l.b16 %v2387
      %v2501 = vunpack.c.h.b16 %v2387
      %v2502 = vunpack.c.l.b16 %v2388
      %v2503 = vunpack.c.h.b16 %v2388
      %v2504 = vunpack.c.l.b16 %v2389
      %v2505 = vunpack.c.h.b16 %v2389
      %v2506 = vunpack.c.l.b16 %v2390
      %v2507 = vunpack.c.h.b16 %v2390
      %v2508 = vunpack.c.l.b16 %v2391
      %v2509 = vunpack.c.h.b16 %v2391
      %v2510 = vunpack.c.l.b16 %v2392
      %v2511 = vunpack.c.h.b16 %v2392
      %v2512 = vunpack.c.l.b16 %v2393
      %v2513 = vunpack.c.h.b16 %v2393
      %v2514 = vunpack.c.l.b16 %v2394
      %v2515 = vunpack.c.h.b16 %v2394
      %v2516 = vunpack.c.l.b16 %v2395
      %v2517 = vunpack.c.h.b16 %v2395
      %v2518 = vunpack.c.l.b16 %v2396
      %v2519 = vunpack.c.h.b16 %v2396
      %v2520 = vunpack.c.l.b16 %v2397
      %v2521 = vunpack.c.h.b16 %v2397
      %v2522 = vunpack.c.l.b16 %v2398
      %v2523 = vunpack.c.h.b16 %v2398
      %v2524 = vunpack.c.l.b16 %v2399
      %v2525 = vunpack.c.h.b16 %v2399
      %v2526 = vunpack.c.l.b16 %v2400
      %v2527 = vunpack.c.h.b16 %v2400
      %v2528 = vunpack.c.l.b16 %v2401
      %v2529 = vunpack.c.h.b16 %v2401
      %v2530 = vunpack.c.l.b16 %v2402
      %v2531 = vunpack.c.h.b16 %v2402
      %v2532 = vunpack.c.l.b16 %v2403
      %v2533 = vunpack.c.h.b16 %v2403
      %v2534 = vunpack.c.l.b16 %v2404
      %v2535 = vunpack.c.h.b16 %v2404
      %v2536 = vunpack.c.l.b16 %v2405
      %v2537 = vunpack.c.h.b16 %v2405
      %v2538 = vpack.c.b16 %v2500, %v2498
      %v2539 = vpack.c.b16 %v2501, %v2499
      %v2540 = vpack.c.b16 %v2504, %v2502
      %v2541 = vpack.c.b16 %v2505, %v2503
      %v2542 = vpack.c.b16 %v2508, %v2506
      %v2543 = vpack.c.b16 %v2509, %v2507
      %v2544 = vpack.c.b16 %v2512, %v2510
      %v2545 = vpack.c.b16 %v2513, %v2511
      %v2546 = vpack.c.b16 %v2516, %v2514
      %v2547 = vpack.c.b16 %v2517, %v2515
      %v2548 = vpack.c.b16 %v2520, %v2518
      %v2549 = vpack.c.b16 %v2521, %v2519
      %v2550 = vpack.c.b16 %v2524, %v2522
      %v2551 = vpack.c.b16 %v2525, %v2523
      %v2552 = vpack.c.b16 %v2528, %v2526
      %v2553 = vpack.c.b16 %v2529, %v2527
      %v2554 = vpack.c.b16 %v2532, %v2530
      %v2555 = vpack.c.b16 %v2533, %v2531
      %v2556 = vpack.c.b16 %v2536, %v2534
      %v2557 = vpack.c.b16 %v2537, %v2535
      %v2579 = vsel %vm1154, %v2455, 0
      %v2582 = vsel %vm1154, %v2457, 0
      %v2585 = vsel %vm1154, %v2459, 0
      %v2588 = vsel %vm1154, %v2461, 0
      %v2591 = vsel %vm1154, %v2463, 0
      %v2594 = vsel %vm1154, %v2465, 0
      %v2597 = vsel %vm1154, %v2467, 0
      %v2600 = vsel %vm1154, %v2469, 0
      %2602 = vmatprep.subr.bf16.mxu0 %v2553
      %2603 = vmatpush1.bf16.msra.mxu0 %v2552
      %2604 = vmatprep.subr.bf16.mxu0 %v2551
      %2605 = vmatpush1.bf16.msra.mxu0 %v2550
      %2606 = vmatprep.subr.bf16.mxu0 %v2549
      %2607 = vmatpush1.bf16.msra.mxu0 %v2548
      %2608 = vmatprep.subr.bf16.mxu0 %v2547
      %2609 = vmatpush1.bf16.msra.mxu0 %v2546
      %2610 = vmatprep.subr.bf16.mxu0 %v2545
      %2611 = vmatpush1.bf16.msra.mxu0 %v2544
      %2612 = vmatprep.subr.bf16.mxu0 %v2543
      %2613 = vmatpush1.bf16.msra.mxu0 %v2542
      %2614 = vmatprep.subr.bf16.mxu0 %v2541
      %2615 = vmatpush1.bf16.msra.mxu0 %v2540
      %2616 = vmatprep.subr.bf16.mxu0 %v2539
      %2617 = vmatpush1.bf16.msra.mxu0 %v2538
      %2618 = vmatprep.subr.bf16.mxu0 0
      %2619 = vmatpush2.bf16.msra.mxu0 0
      %2620 = vmatprep.subr.bf16.mxu0 0
      %2621 = vmatpush2.bf16.msra.mxu0 0
      %2622 = vmatprep.subr.bf16.mxu0 0
      %2623 = vmatpush2.bf16.msra.mxu0 0
      %2624 = vmatprep.subr.bf16.mxu0 0
      %2625 = vmatpush2.bf16.msra.mxu0 0
      %2626 = vmatprep.subr.bf16.mxu0 0
      %2627 = vmatpush2.bf16.msra.mxu0 0
      %2628 = vmatprep.subr.bf16.mxu0 0
      %2629 = vmatpush2.bf16.msra.mxu0 0
      %2630 = vmatprep.subr.bf16.mxu0 %v2557
      %2631 = vmatpush2.bf16.msra.mxu0 %v2556
      %2632 = vmatprep.subr.bf16.mxu0 %v2555
      %2633 = vmatpush2.bf16.msra.mxu0 %v2554
      %2634 = vmatprep.mubr.bf16.mxu0 %v2579
      %2635 = vmatmul.mubr.bf16.gmra.mxu0 %v2454
      %v2636 = vpop.f32.mrf.mxu0
      %v2637 = vadd.f32 0.0, %v2636
      %v2638 = vpop.f32.mrf.mxu0
      %v2639 = vadd.f32 0.0, %v2638
      %v2640 = vpop.f32.mrf.mxu0
      %v2641 = vadd.f32 0.0, %v2640
      %v2642 = vpop.f32.mrf.mxu0
      %v2643 = vadd.f32 0.0, %v2642
      %2644 = vmatprep.mubr.bf16.mxu0 %v2582
      %2645 = vmatmul.mubr.bf16.gmra.mxu0 %v2456
      %v2646 = vpop.f32.mrf.mxu0
      %v2647 = vadd.f32 0.0, %v2646
      %v2648 = vpop.f32.mrf.mxu0
      %v2649 = vadd.f32 0.0, %v2648
      %v2650 = vpop.f32.mrf.mxu0
      %v2651 = vadd.f32 0.0, %v2650
      %v2652 = vpop.f32.mrf.mxu0
      %v2653 = vadd.f32 0.0, %v2652
      %2654 = vmatprep.mubr.bf16.mxu0 %v2585
      %2655 = vmatmul.mubr.bf16.gmra.mxu0 %v2458
      %v2656 = vpop.f32.mrf.mxu0
      %v2657 = vadd.f32 0.0, %v2656
      %v2658 = vpop.f32.mrf.mxu0
      %v2659 = vadd.f32 0.0, %v2658
      %v2660 = vpop.f32.mrf.mxu0
      %v2661 = vadd.f32 0.0, %v2660
      %v2662 = vpop.f32.mrf.mxu0
      %v2663 = vadd.f32 0.0, %v2662
      %2664 = vmatprep.mubr.bf16.mxu0 %v2588
      %2665 = vmatmul.mubr.bf16.gmra.mxu0 %v2460
      %v2666 = vpop.f32.mrf.mxu0
      %v2667 = vadd.f32 0.0, %v2666
      %v2668 = vpop.f32.mrf.mxu0
      %v2669 = vadd.f32 0.0, %v2668
      %v2670 = vpop.f32.mrf.mxu0
      %v2671 = vadd.f32 0.0, %v2670
      %v2672 = vpop.f32.mrf.mxu0
      %v2673 = vadd.f32 0.0, %v2672
      %2674 = vmatprep.mubr.bf16.mxu0 %v2591
      %2675 = vmatmul.mubr.bf16.gmra.mxu0 %v2462
      %v2676 = vpop.f32.mrf.mxu0
      %v2677 = vadd.f32 0.0, %v2676
      %v2678 = vpop.f32.mrf.mxu0
      %v2679 = vadd.f32 0.0, %v2678
      %v2680 = vpop.f32.mrf.mxu0
      %v2681 = vadd.f32 0.0, %v2680
      %v2682 = vpop.f32.mrf.mxu0
      %v2683 = vadd.f32 0.0, %v2682
      %2684 = vmatprep.mubr.bf16.mxu0 %v2594
      %2685 = vmatmul.mubr.bf16.gmra.mxu0 %v2464
      %v2686 = vpop.f32.mrf.mxu0
      %v2687 = vadd.f32 0.0, %v2686
      %v2688 = vpop.f32.mrf.mxu0
      %v2689 = vadd.f32 0.0, %v2688
      %v2690 = vpop.f32.mrf.mxu0
      %v2691 = vadd.f32 0.0, %v2690
      %v2692 = vpop.f32.mrf.mxu0
      %v2693 = vadd.f32 0.0, %v2692
      %2694 = vmatprep.mubr.bf16.mxu0 %v2597
      %2695 = vmatmul.mubr.bf16.gmra.mxu0 %v2466
      %v2696 = vpop.f32.mrf.mxu0
      %v2697 = vadd.f32 0.0, %v2696
      %v2698 = vpop.f32.mrf.mxu0
      %v2699 = vadd.f32 0.0, %v2698
      %v2700 = vpop.f32.mrf.mxu0
      %v2701 = vadd.f32 0.0, %v2700
      %v2702 = vpop.f32.mrf.mxu0
      %v2703 = vadd.f32 0.0, %v2702
      %2704 = vmatprep.mubr.bf16.mxu0 %v2600
      %2705 = vmatmul.mubr.bf16.gmra.mxu0 %v2468
      %v2706 = vpop.f32.mrf.mxu0
      %v2707 = vadd.f32 0.0, %v2706
      %v2708 = vpop.f32.mrf.mxu0
      %v2709 = vadd.f32 0.0, %v2708
      %v2710 = vpop.f32.mrf.mxu0
      %v2711 = vadd.f32 0.0, %v2710
      %v2712 = vpop.f32.mrf.mxu0
      %v2713 = vadd.f32 0.0, %v2712
      %2714 = vdwg.mxu0
      %v2715 = vadd.f32 %v2333, %v2637
      %v2716 = vadd.f32 %v2334, %v2639
      %v2717 = vadd.f32 %v2335, %v2641
      %v2718 = vadd.f32 %v2336, %v2643
      %v2719 = vadd.f32 %v2337, %v2647
      %v2720 = vadd.f32 %v2338, %v2649
      %v2721 = vadd.f32 %v2339, %v2651
      %v2722 = vadd.f32 %v2340, %v2653
      %v2723 = vadd.f32 %v2341, %v2657
      %v2724 = vadd.f32 %v2342, %v2659
      %v2725 = vadd.f32 %v2343, %v2661
      %v2726 = vadd.f32 %v2344, %v2663
      %v2727 = vadd.f32 %v2345, %v2667
      %v2728 = vadd.f32 %v2346, %v2669
      %v2729 = vadd.f32 %v2347, %v2671
      %v2730 = vadd.f32 %v2348, %v2673
      %v2731 = vadd.f32 %v2349, %v2677
      %v2732 = vadd.f32 %v2350, %v2679
      %v2733 = vadd.f32 %v2351, %v2681
      %v2734 = vadd.f32 %v2352, %v2683
      %v2735 = vadd.f32 %v2353, %v2687
      %v2736 = vadd.f32 %v2354, %v2689
      %v2737 = vadd.f32 %v2355, %v2691
      %v2738 = vadd.f32 %v2356, %v2693
      %v2739 = vadd.f32 %v2357, %v2697
      %v2740 = vadd.f32 %v2358, %v2699
      %v2741 = vadd.f32 %v2359, %v2701
      %v2742 = vadd.f32 %v2360, %v2703
      %v2743 = vadd.f32 %v2361, %v2707
      %v2744 = vadd.f32 %v2362, %v2709
      %v2745 = vadd.f32 %v2363, %v2711
      %v2746 = vadd.f32 %v2364, %v2713
      %v2747 = vld [vmem:[%s8] sm:$0x3]
      %v2749 = vlaneseq
      %v2750 = vshrl.u32 %v2749, 7
      %v2751 = vsub.s32 0, %v2750
      %v2752 = vrot.slane %v2747, %v2751
      %v2753 = vlaneseq
      %v2754 = vshrl.u32 %v2753, 7
      %v2755 = vsub.s32 1, %v2754
      %v2756 = vrot.slane %v2747, %v2755
      %v2759 = vadd.f32 %v2715, %v2752
      %v2760 = vadd.f32 %v2716, %v2756
      %v2761 = vadd.f32 %v2717, %v2752
      %v2762 = vadd.f32 %v2718, %v2756
      %v2763 = vadd.f32 %v2719, %v2752
      %v2764 = vadd.f32 %v2720, %v2756
      %v2765 = vadd.f32 %v2721, %v2752
      %v2766 = vadd.f32 %v2722, %v2756
      %v2767 = vadd.f32 %v2723, %v2752
      %v2768 = vadd.f32 %v2724, %v2756
      %v2769 = vadd.f32 %v2725, %v2752
      %v2770 = vadd.f32 %v2726, %v2756
      %v2771 = vadd.f32 %v2727, %v2752
      %v2772 = vadd.f32 %v2728, %v2756
      %v2773 = vadd.f32 %v2729, %v2752
      %v2774 = vadd.f32 %v2730, %v2756
      %v2775 = vadd.f32 %v2731, %v2752
      %v2776 = vadd.f32 %v2732, %v2756
      %v2777 = vadd.f32 %v2733, %v2752
      %v2778 = vadd.f32 %v2734, %v2756
      %v2779 = vadd.f32 %v2735, %v2752
      %v2780 = vadd.f32 %v2736, %v2756
      %v2781 = vadd.f32 %v2737, %v2752
      %v2782 = vadd.f32 %v2738, %v2756
      %v2783 = vadd.f32 %v2739, %v2752
      %v2784 = vadd.f32 %v2740, %v2756
      %v2785 = vadd.f32 %v2741, %v2752
      %v2786 = vadd.f32 %v2742, %v2756
      %v2787 = vadd.f32 %v2743, %v2752
      %v2788 = vadd.f32 %v2744, %v2756
      %v2789 = vadd.f32 %v2745, %v2752
      %v2790 = vadd.f32 %v2746, %v2756
      %s2791 = smul.addr %s902, 4
      %s2792 = scalar_lea.vmem %s570, %s2791
      %v2793 = vld [vmem:[%s2792] sm:$0xff]
      %v2794 = vld [vmem:[%s2792 + $0x8] sm:$0xff]
      %v2795 = vld [vmem:[%s2792 + $0x10] sm:$0xff]
      %v2796 = vld [vmem:[%s2792 + $0x18] sm:$0xff]
      %v2797 = vld [vmem:[%s2792 + $0x20] sm:$0xff]
      %v2798 = vld [vmem:[%s2792 + $0x28] sm:$0xff]
      %v2799 = vld [vmem:[%s2792 + $0x30] sm:$0xff]
      %v2800 = vld [vmem:[%s2792 + $0x38] sm:$0xff]
      %v2801 = vld [vmem:[%s2792 + $0x40] sm:$0xff]
      %v2802 = vld [vmem:[%s2792 + $0x48] sm:$0xff]
      %v2803 = vld [vmem:[%s2792 + $0x50] sm:$0xff]
      %v2804 = vld [vmem:[%s2792 + $0x58] sm:$0xff]
      %v2805 = vld [vmem:[%s2792 + $0x60] sm:$0xff]
      %v2806 = vld [vmem:[%s2792 + $0x68] sm:$0xff]
      %v2807 = vld [vmem:[%s2792 + $0x70] sm:$0xff]
      %v2808 = vld [vmem:[%s2792 + $0x78] sm:$0xff]
      %v2809 = vld [vmem:[%s6] sm:$0xff]
      %v2810 = vld [vmem:[%s6 + $0x8] sm:$0xff]
      %v2811 = vld [vmem:[%s6 + $0x10] sm:$0xff]
      %v2812 = vld [vmem:[%s6 + $0x18] sm:$0xff]
      %v2813 = vld [vmem:[%s6 + $0x20] sm:$0xff]
      %v2814 = vld [vmem:[%s6 + $0x28] sm:$0xff]
      %v2815 = vld [vmem:[%s6 + $0x30] sm:$0xff]
      %v2816 = vld [vmem:[%s6 + $0x38] sm:$0xff]
      %v2817 = vld [vmem:[%s6 + $0x40] sm:$0xff]
      %v2818 = vld [vmem:[%s6 + $0x48] sm:$0xff]
      %v2819 = vld [vmem:[%s6 + $0x50] sm:$0xff]
      %v2820 = vld [vmem:[%s6 + $0x58] sm:$0xff]
      %v2821 = vld [vmem:[%s6 + $0x60] sm:$0xff]
      %v2822 = vld [vmem:[%s6 + $0x68] sm:$0xff]
      %v2823 = vld [vmem:[%s6 + $0x70] sm:$0xff]
      %v2824 = vld [vmem:[%s6 + $0x78] sm:$0xff]
      %v2825 = vld [vmem:[%s6 + $0x80] sm:$0xff]
      %v2826 = vld [vmem:[%s6 + $0x88] sm:$0xff]
      %v2827 = vld [vmem:[%s6 + $0x90] sm:$0xff]
      %v2828 = vld [vmem:[%s6 + $0x98] sm:$0xff]
      %s2829 = smul.addr %s942, 4
      %s2830 = scalar_lea.vmem %s570, %s2829
      %v2831 = vld [vmem:[%s2830] sm:$0xff]
      %v2832 = vld [vmem:[%s2830 + $0x8] sm:$0xff]
      %v2833 = vld [vmem:[%s2830 + $0x10] sm:$0xff]
      %v2834 = vld [vmem:[%s2830 + $0x18] sm:$0xff]
      %v2835 = vld [vmem:[%s2830 + $0x20] sm:$0xff]
      %v2836 = vld [vmem:[%s2830 + $0x28] sm:$0xff]
      %v2837 = vld [vmem:[%s2830 + $0x30] sm:$0xff]
      %v2838 = vld [vmem:[%s2830 + $0x38] sm:$0xff]
      %v2839 = vld [vmem:[%s2830 + $0x40] sm:$0xff]
      %v2840 = vld [vmem:[%s2830 + $0x48] sm:$0xff]
      %v2841 = vld [vmem:[%s2830 + $0x50] sm:$0xff]
      %v2842 = vld [vmem:[%s2830 + $0x58] sm:$0xff]
      %v2843 = vld [vmem:[%s2830 + $0x60] sm:$0xff]
      %v2844 = vld [vmem:[%s2830 + $0x68] sm:$0xff]
      %v2845 = vld [vmem:[%s2830 + $0x70] sm:$0xff]
      %v2846 = vld [vmem:[%s2830 + $0x78] sm:$0xff]
      %s2847 = scalar_lea.vmem %s6, 160
      %v2848 = vld [vmem:[%s2847] sm:$0xff]
      %v2849 = vld [vmem:[%s2847 + $0x8] sm:$0xff]
      %v2850 = vld [vmem:[%s2847 + $0x10] sm:$0xff]
      %v2851 = vld [vmem:[%s2847 + $0x18] sm:$0xff]
      %v2852 = vld [vmem:[%s2847 + $0x20] sm:$0xff]
      %v2853 = vld [vmem:[%s2847 + $0x28] sm:$0xff]
      %v2854 = vld [vmem:[%s2847 + $0x30] sm:$0xff]
      %v2855 = vld [vmem:[%s2847 + $0x38] sm:$0xff]
      %v2856 = vld [vmem:[%s2847 + $0x40] sm:$0xff]
      %v2857 = vld [vmem:[%s2847 + $0x48] sm:$0xff]
      %v2858 = vld [vmem:[%s2847 + $0x50] sm:$0xff]
      %v2859 = vld [vmem:[%s2847 + $0x58] sm:$0xff]
      %v2860 = vld [vmem:[%s2847 + $0x60] sm:$0xff]
      %v2861 = vld [vmem:[%s2847 + $0x68] sm:$0xff]
      %v2862 = vld [vmem:[%s2847 + $0x70] sm:$0xff]
      %v2863 = vld [vmem:[%s2847 + $0x78] sm:$0xff]
      %v2864 = vld [vmem:[%s2847 + $0x80] sm:$0xff]
      %v2865 = vld [vmem:[%s2847 + $0x88] sm:$0xff]
      %v2866 = vld [vmem:[%s2847 + $0x90] sm:$0xff]
      %v2867 = vld [vmem:[%s2847 + $0x98] sm:$0xff]
      %v2884 = vunpack.c.l.b16 %v2831
      %v2885 = vunpack.c.h.b16 %v2831
      %v2886 = vunpack.c.l.b16 %v2832
      %v2887 = vunpack.c.h.b16 %v2832
      %v2888 = vunpack.c.l.b16 %v2833
      %v2889 = vunpack.c.h.b16 %v2833
      %v2890 = vunpack.c.l.b16 %v2834
      %v2891 = vunpack.c.h.b16 %v2834
      %v2892 = vunpack.c.l.b16 %v2835
      %v2893 = vunpack.c.h.b16 %v2835
      %v2894 = vunpack.c.l.b16 %v2836
      %v2895 = vunpack.c.h.b16 %v2836
      %v2896 = vunpack.c.l.b16 %v2837
      %v2897 = vunpack.c.h.b16 %v2837
      %v2898 = vunpack.c.l.b16 %v2838
      %v2899 = vunpack.c.h.b16 %v2838
      %v2900 = vunpack.c.l.b16 %v2839
      %v2901 = vunpack.c.h.b16 %v2839
      %v2902 = vunpack.c.l.b16 %v2840
      %v2903 = vunpack.c.h.b16 %v2840
      %v2904 = vunpack.c.l.b16 %v2841
      %v2905 = vunpack.c.h.b16 %v2841
      %v2906 = vunpack.c.l.b16 %v2842
      %v2907 = vunpack.c.h.b16 %v2842
      %v2908 = vunpack.c.l.b16 %v2843
      %v2909 = vunpack.c.h.b16 %v2843
      %v2910 = vunpack.c.l.b16 %v2844
      %v2911 = vunpack.c.h.b16 %v2844
      %v2912 = vunpack.c.l.b16 %v2845
      %v2913 = vunpack.c.h.b16 %v2845
      %v2914 = vunpack.c.l.b16 %v2846
      %v2915 = vunpack.c.h.b16 %v2846
      %v2916 = vpack.c.b16 %v2886, %v2884
      %v2917 = vpack.c.b16 %v2887, %v2885
      %v2918 = vpack.c.b16 %v2890, %v2888
      %v2919 = vpack.c.b16 %v2891, %v2889
      %v2920 = vpack.c.b16 %v2894, %v2892
      %v2921 = vpack.c.b16 %v2895, %v2893
      %v2922 = vpack.c.b16 %v2898, %v2896
      %v2923 = vpack.c.b16 %v2899, %v2897
      %v2924 = vpack.c.b16 %v2902, %v2900
      %v2925 = vpack.c.b16 %v2903, %v2901
      %v2926 = vpack.c.b16 %v2906, %v2904
      %v2927 = vpack.c.b16 %v2907, %v2905
      %v2928 = vpack.c.b16 %v2910, %v2908
      %v2929 = vpack.c.b16 %v2911, %v2909
      %v2930 = vpack.c.b16 %v2914, %v2912
      %v2931 = vpack.c.b16 %v2915, %v2913
      %v2960 = vunpack.c.l.b16 %v2848
      %v2961 = vunpack.c.h.b16 %v2848
      %v2962 = vunpack.c.l.b16 %v2849
      %v2963 = vunpack.c.h.b16 %v2849
      %v2964 = vunpack.c.l.b16 %v2850
      %v2965 = vunpack.c.h.b16 %v2850
      %v2966 = vunpack.c.l.b16 %v2851
      %v2967 = vunpack.c.h.b16 %v2851
      %v2968 = vunpack.c.l.b16 %v2852
      %v2969 = vunpack.c.h.b16 %v2852
      %v2970 = vunpack.c.l.b16 %v2853
      %v2971 = vunpack.c.h.b16 %v2853
      %v2972 = vunpack.c.l.b16 %v2854
      %v2973 = vunpack.c.h.b16 %v2854
      %v2974 = vunpack.c.l.b16 %v2855
      %v2975 = vunpack.c.h.b16 %v2855
      %v2976 = vunpack.c.l.b16 %v2856
      %v2977 = vunpack.c.h.b16 %v2856
      %v2978 = vunpack.c.l.b16 %v2857
      %v2979 = vunpack.c.h.b16 %v2857
      %v2980 = vunpack.c.l.b16 %v2858
      %v2981 = vunpack.c.h.b16 %v2858
      %v2982 = vunpack.c.l.b16 %v2859
      %v2983 = vunpack.c.h.b16 %v2859
      %v2984 = vunpack.c.l.b16 %v2860
      %v2985 = vunpack.c.h.b16 %v2860
      %v2986 = vunpack.c.l.b16 %v2861
      %v2987 = vunpack.c.h.b16 %v2861
      %v2988 = vunpack.c.l.b16 %v2862
      %v2989 = vunpack.c.h.b16 %v2862
      %v2990 = vunpack.c.l.b16 %v2863
      %v2991 = vunpack.c.h.b16 %v2863
      %v2992 = vunpack.c.l.b16 %v2864
      %v2993 = vunpack.c.h.b16 %v2864
      %v2994 = vunpack.c.l.b16 %v2865
      %v2995 = vunpack.c.h.b16 %v2865
      %v2996 = vunpack.c.l.b16 %v2866
      %v2997 = vunpack.c.h.b16 %v2866
      %v2998 = vunpack.c.l.b16 %v2867
      %v2999 = vunpack.c.h.b16 %v2867
      %v3000 = vpack.c.b16 %v2962, %v2960
      %v3001 = vpack.c.b16 %v2963, %v2961
      %v3002 = vpack.c.b16 %v2966, %v2964
      %v3003 = vpack.c.b16 %v2967, %v2965
      %v3004 = vpack.c.b16 %v2970, %v2968
      %v3005 = vpack.c.b16 %v2971, %v2969
      %v3006 = vpack.c.b16 %v2974, %v2972
      %v3007 = vpack.c.b16 %v2975, %v2973
      %v3008 = vpack.c.b16 %v2978, %v2976
      %v3009 = vpack.c.b16 %v2979, %v2977
      %v3010 = vpack.c.b16 %v2982, %v2980
      %v3011 = vpack.c.b16 %v2983, %v2981
      %v3012 = vpack.c.b16 %v2986, %v2984
      %v3013 = vpack.c.b16 %v2987, %v2985
      %v3014 = vpack.c.b16 %v2990, %v2988
      %v3015 = vpack.c.b16 %v2991, %v2989
      %v3016 = vpack.c.b16 %v2994, %v2992
      %v3017 = vpack.c.b16 %v2995, %v2993
      %v3018 = vpack.c.b16 %v2998, %v2996
      %v3019 = vpack.c.b16 %v2999, %v2997
      %v3041 = vsel %vm1154, %v2917, 0
      %v3044 = vsel %vm1154, %v2919, 0
      %v3047 = vsel %vm1154, %v2921, 0
      %v3050 = vsel %vm1154, %v2923, 0
      %v3053 = vsel %vm1154, %v2925, 0
      %v3056 = vsel %vm1154, %v2927, 0
      %v3059 = vsel %vm1154, %v2929, 0
      %v3062 = vsel %vm1154, %v2931, 0
      %3064 = vmatprep.subr.bf16.mxu0 %v3015
      %3065 = vmatpush1.bf16.msra.mxu0 %v3014
      %3066 = vmatprep.subr.bf16.mxu0 %v3013
      %3067 = vmatpush1.bf16.msra.mxu0 %v3012
      %3068 = vmatprep.subr.bf16.mxu0 %v3011
      %3069 = vmatpush1.bf16.msra.mxu0 %v3010
      %3070 = vmatprep.subr.bf16.mxu0 %v3009
      %3071 = vmatpush1.bf16.msra.mxu0 %v3008
      %3072 = vmatprep.subr.bf16.mxu0 %v3007
      %3073 = vmatpush1.bf16.msra.mxu0 %v3006
      %3074 = vmatprep.subr.bf16.mxu0 %v3005
      %3075 = vmatpush1.bf16.msra.mxu0 %v3004
      %3076 = vmatprep.subr.bf16.mxu0 %v3003
      %3077 = vmatpush1.bf16.msra.mxu0 %v3002
      %3078 = vmatprep.subr.bf16.mxu0 %v3001
      %3079 = vmatpush1.bf16.msra.mxu0 %v3000
      %3080 = vmatprep.subr.bf16.mxu0 0
      %3081 = vmatpush2.bf16.msra.mxu0 0
      %3082 = vmatprep.subr.bf16.mxu0 0
      %3083 = vmatpush2.bf16.msra.mxu0 0
      %3084 = vmatprep.subr.bf16.mxu0 0
      %3085 = vmatpush2.bf16.msra.mxu0 0
      %3086 = vmatprep.subr.bf16.mxu0 0
      %3087 = vmatpush2.bf16.msra.mxu0 0
      %3088 = vmatprep.subr.bf16.mxu0 0
      %3089 = vmatpush2.bf16.msra.mxu0 0
      %3090 = vmatprep.subr.bf16.mxu0 0
      %3091 = vmatpush2.bf16.msra.mxu0 0
      %3092 = vmatprep.subr.bf16.mxu0 %v3019
      %3093 = vmatpush2.bf16.msra.mxu0 %v3018
      %3094 = vmatprep.subr.bf16.mxu0 %v3017
      %3095 = vmatpush2.bf16.msra.mxu0 %v3016
      %3096 = vmatprep.mubr.bf16.mxu0 %v3041
      %3097 = vmatmul.mubr.bf16.gmra.mxu0 %v2916
      %v3098 = vpop.f32.mrf.mxu0
      %v3099 = vadd.f32 0.0, %v3098
      %v3100 = vpop.f32.mrf.mxu0
      %v3101 = vadd.f32 0.0, %v3100
      %v3102 = vpop.f32.mrf.mxu0
      %v3103 = vadd.f32 0.0, %v3102
      %v3104 = vpop.f32.mrf.mxu0
      %v3105 = vadd.f32 0.0, %v3104
      %3106 = vmatprep.mubr.bf16.mxu0 %v3044
      %3107 = vmatmul.mubr.bf16.gmra.mxu0 %v2918
      %v3108 = vpop.f32.mrf.mxu0
      %v3109 = vadd.f32 0.0, %v3108
      %v3110 = vpop.f32.mrf.mxu0
      %v3111 = vadd.f32 0.0, %v3110
      %v3112 = vpop.f32.mrf.mxu0
      %v3113 = vadd.f32 0.0, %v3112
      %v3114 = vpop.f32.mrf.mxu0
      %v3115 = vadd.f32 0.0, %v3114
      %3116 = vmatprep.mubr.bf16.mxu0 %v3047
      %3117 = vmatmul.mubr.bf16.gmra.mxu0 %v2920
      %v3118 = vpop.f32.mrf.mxu0
      %v3119 = vadd.f32 0.0, %v3118
      %v3120 = vpop.f32.mrf.mxu0
      %v3121 = vadd.f32 0.0, %v3120
      %v3122 = vpop.f32.mrf.mxu0
      %v3123 = vadd.f32 0.0, %v3122
      %v3124 = vpop.f32.mrf.mxu0
      %v3125 = vadd.f32 0.0, %v3124
      %3126 = vmatprep.mubr.bf16.mxu0 %v3050
      %3127 = vmatmul.mubr.bf16.gmra.mxu0 %v2922
      %v3128 = vpop.f32.mrf.mxu0
      %v3129 = vadd.f32 0.0, %v3128
      %v3130 = vpop.f32.mrf.mxu0
      %v3131 = vadd.f32 0.0, %v3130
      %v3132 = vpop.f32.mrf.mxu0
      %v3133 = vadd.f32 0.0, %v3132
      %v3134 = vpop.f32.mrf.mxu0
      %v3135 = vadd.f32 0.0, %v3134
      %3136 = vmatprep.mubr.bf16.mxu0 %v3053
      %3137 = vmatmul.mubr.bf16.gmra.mxu0 %v2924
      %v3138 = vpop.f32.mrf.mxu0
      %v3139 = vadd.f32 0.0, %v3138
      %v3140 = vpop.f32.mrf.mxu0
      %v3141 = vadd.f32 0.0, %v3140
      %v3142 = vpop.f32.mrf.mxu0
      %v3143 = vadd.f32 0.0, %v3142
      %v3144 = vpop.f32.mrf.mxu0
      %v3145 = vadd.f32 0.0, %v3144
      %3146 = vmatprep.mubr.bf16.mxu0 %v3056
      %3147 = vmatmul.mubr.bf16.gmra.mxu0 %v2926
      %v3148 = vpop.f32.mrf.mxu0
      %v3149 = vadd.f32 0.0, %v3148
      %v3150 = vpop.f32.mrf.mxu0
      %v3151 = vadd.f32 0.0, %v3150
      %v3152 = vpop.f32.mrf.mxu0
      %v3153 = vadd.f32 0.0, %v3152
      %v3154 = vpop.f32.mrf.mxu0
      %v3155 = vadd.f32 0.0, %v3154
      %3156 = vmatprep.mubr.bf16.mxu0 %v3059
      %3157 = vmatmul.mubr.bf16.gmra.mxu0 %v2928
      %v3158 = vpop.f32.mrf.mxu0
      %v3159 = vadd.f32 0.0, %v3158
      %v3160 = vpop.f32.mrf.mxu0
      %v3161 = vadd.f32 0.0, %v3160
      %v3162 = vpop.f32.mrf.mxu0
      %v3163 = vadd.f32 0.0, %v3162
      %v3164 = vpop.f32.mrf.mxu0
      %v3165 = vadd.f32 0.0, %v3164
      %3166 = vmatprep.mubr.bf16.mxu0 %v3062
      %3167 = vmatmul.mubr.bf16.gmra.mxu0 %v2930
      %v3168 = vpop.f32.mrf.mxu0
      %v3169 = vadd.f32 0.0, %v3168
      %v3170 = vpop.f32.mrf.mxu0
      %v3171 = vadd.f32 0.0, %v3170
      %v3172 = vpop.f32.mrf.mxu0
      %v3173 = vadd.f32 0.0, %v3172
      %v3174 = vpop.f32.mrf.mxu0
      %v3175 = vadd.f32 0.0, %v3174
      %3176 = vdwg.mxu0
      %v3193 = vunpack.c.l.b16 %v2793
      %v3194 = vunpack.c.h.b16 %v2793
      %v3195 = vunpack.c.l.b16 %v2794
      %v3196 = vunpack.c.h.b16 %v2794
      %v3197 = vunpack.c.l.b16 %v2795
      %v3198 = vunpack.c.h.b16 %v2795
      %v3199 = vunpack.c.l.b16 %v2796
      %v3200 = vunpack.c.h.b16 %v2796
      %v3201 = vunpack.c.l.b16 %v2797
      %v3202 = vunpack.c.h.b16 %v2797
      %v3203 = vunpack.c.l.b16 %v2798
      %v3204 = vunpack.c.h.b16 %v2798
      %v3205 = vunpack.c.l.b16 %v2799
      %v3206 = vunpack.c.h.b16 %v2799
      %v3207 = vunpack.c.l.b16 %v2800
      %v3208 = vunpack.c.h.b16 %v2800
      %v3209 = vunpack.c.l.b16 %v2801
      %v3210 = vunpack.c.h.b16 %v2801
      %v3211 = vunpack.c.l.b16 %v2802
      %v3212 = vunpack.c.h.b16 %v2802
      %v3213 = vunpack.c.l.b16 %v2803
      %v3214 = vunpack.c.h.b16 %v2803
      %v3215 = vunpack.c.l.b16 %v2804
      %v3216 = vunpack.c.h.b16 %v2804
      %v3217 = vunpack.c.l.b16 %v2805
      %v3218 = vunpack.c.h.b16 %v2805
      %v3219 = vunpack.c.l.b16 %v2806
      %v3220 = vunpack.c.h.b16 %v2806
      %v3221 = vunpack.c.l.b16 %v2807
      %v3222 = vunpack.c.h.b16 %v2807
      %v3223 = vunpack.c.l.b16 %v2808
      %v3224 = vunpack.c.h.b16 %v2808
      %v3225 = vpack.c.b16 %v3195, %v3193
      %v3226 = vpack.c.b16 %v3196, %v3194
      %v3227 = vpack.c.b16 %v3199, %v3197
      %v3228 = vpack.c.b16 %v3200, %v3198
      %v3229 = vpack.c.b16 %v3203, %v3201
      %v3230 = vpack.c.b16 %v3204, %v3202
      %v3231 = vpack.c.b16 %v3207, %v3205
      %v3232 = vpack.c.b16 %v3208, %v3206
      %v3233 = vpack.c.b16 %v3211, %v3209
      %v3234 = vpack.c.b16 %v3212, %v3210
      %v3235 = vpack.c.b16 %v3215, %v3213
      %v3236 = vpack.c.b16 %v3216, %v3214
      %v3237 = vpack.c.b16 %v3219, %v3217
      %v3238 = vpack.c.b16 %v3220, %v3218
      %v3239 = vpack.c.b16 %v3223, %v3221
      %v3240 = vpack.c.b16 %v3224, %v3222
      %v3269 = vunpack.c.l.b16 %v2809
      %v3270 = vunpack.c.h.b16 %v2809
      %v3271 = vunpack.c.l.b16 %v2810
      %v3272 = vunpack.c.h.b16 %v2810
      %v3273 = vunpack.c.l.b16 %v2811
      %v3274 = vunpack.c.h.b16 %v2811
      %v3275 = vunpack.c.l.b16 %v2812
      %v3276 = vunpack.c.h.b16 %v2812
      %v3277 = vunpack.c.l.b16 %v2813
      %v3278 = vunpack.c.h.b16 %v2813
      %v3279 = vunpack.c.l.b16 %v2814
      %v3280 = vunpack.c.h.b16 %v2814
      %v3281 = vunpack.c.l.b16 %v2815
      %v3282 = vunpack.c.h.b16 %v2815
      %v3283 = vunpack.c.l.b16 %v2816
      %v3284 = vunpack.c.h.b16 %v2816
      %v3285 = vunpack.c.l.b16 %v2817
      %v3286 = vunpack.c.h.b16 %v2817
      %v3287 = vunpack.c.l.b16 %v2818
      %v3288 = vunpack.c.h.b16 %v2818
      %v3289 = vunpack.c.l.b16 %v2819
      %v3290 = vunpack.c.h.b16 %v2819
      %v3291 = vunpack.c.l.b16 %v2820
      %v3292 = vunpack.c.h.b16 %v2820
      %v3293 = vunpack.c.l.b16 %v2821
      %v3294 = vunpack.c.h.b16 %v2821
      %v3295 = vunpack.c.l.b16 %v2822
      %v3296 = vunpack.c.h.b16 %v2822
      %v3297 = vunpack.c.l.b16 %v2823
      %v3298 = vunpack.c.h.b16 %v2823
      %v3299 = vunpack.c.l.b16 %v2824
      %v3300 = vunpack.c.h.b16 %v2824
      %v3301 = vunpack.c.l.b16 %v2825
      %v3302 = vunpack.c.h.b16 %v2825
      %v3303 = vunpack.c.l.b16 %v2826
      %v3304 = vunpack.c.h.b16 %v2826
      %v3305 = vunpack.c.l.b16 %v2827
      %v3306 = vunpack.c.h.b16 %v2827
      %v3307 = vunpack.c.l.b16 %v2828
      %v3308 = vunpack.c.h.b16 %v2828
      %v3309 = vpack.c.b16 %v3271, %v3269
      %v3310 = vpack.c.b16 %v3272, %v3270
      %v3311 = vpack.c.b16 %v3275, %v3273
      %v3312 = vpack.c.b16 %v3276, %v3274
      %v3313 = vpack.c.b16 %v3279, %v3277
      %v3314 = vpack.c.b16 %v3280, %v3278
      %v3315 = vpack.c.b16 %v3283, %v3281
      %v3316 = vpack.c.b16 %v3284, %v3282
      %v3317 = vpack.c.b16 %v3287, %v3285
      %v3318 = vpack.c.b16 %v3288, %v3286
      %v3319 = vpack.c.b16 %v3291, %v3289
      %v3320 = vpack.c.b16 %v3292, %v3290
      %v3321 = vpack.c.b16 %v3295, %v3293
      %v3322 = vpack.c.b16 %v3296, %v3294
      %v3323 = vpack.c.b16 %v3299, %v3297
      %v3324 = vpack.c.b16 %v3300, %v3298
      %v3325 = vpack.c.b16 %v3303, %v3301
      %v3326 = vpack.c.b16 %v3304, %v3302
      %v3327 = vpack.c.b16 %v3307, %v3305
      %v3328 = vpack.c.b16 %v3308, %v3306
      %v3350 = vsel %vm1154, %v3226, 0
      %v3353 = vsel %vm1154, %v3228, 0
      %v3356 = vsel %vm1154, %v3230, 0
      %v3359 = vsel %vm1154, %v3232, 0
      %v3362 = vsel %vm1154, %v3234, 0
      %v3365 = vsel %vm1154, %v3236, 0
      %v3368 = vsel %vm1154, %v3238, 0
      %v3371 = vsel %vm1154, %v3240, 0
      %3373 = vmatprep.subr.bf16.mxu0 %v3324
      %3374 = vmatpush1.bf16.msra.mxu0 %v3323
      %3375 = vmatprep.subr.bf16.mxu0 %v3322
      %3376 = vmatpush1.bf16.msra.mxu0 %v3321
      %3377 = vmatprep.subr.bf16.mxu0 %v3320
      %3378 = vmatpush1.bf16.msra.mxu0 %v3319
      %3379 = vmatprep.subr.bf16.mxu0 %v3318
      %3380 = vmatpush1.bf16.msra.mxu0 %v3317
      %3381 = vmatprep.subr.bf16.mxu0 %v3316
      %3382 = vmatpush1.bf16.msra.mxu0 %v3315
      %3383 = vmatprep.subr.bf16.mxu0 %v3314
      %3384 = vmatpush1.bf16.msra.mxu0 %v3313
      %3385 = vmatprep.subr.bf16.mxu0 %v3312
      %3386 = vmatpush1.bf16.msra.mxu0 %v3311
      %3387 = vmatprep.subr.bf16.mxu0 %v3310
      %3388 = vmatpush1.bf16.msra.mxu0 %v3309
      %3389 = vmatprep.subr.bf16.mxu0 0
      %3390 = vmatpush2.bf16.msra.mxu0 0
      %3391 = vmatprep.subr.bf16.mxu0 0
      %3392 = vmatpush2.bf16.msra.mxu0 0
      %3393 = vmatprep.subr.bf16.mxu0 0
      %3394 = vmatpush2.bf16.msra.mxu0 0
      %3395 = vmatprep.subr.bf16.mxu0 0
      %3396 = vmatpush2.bf16.msra.mxu0 0
      %3397 = vmatprep.subr.bf16.mxu0 0
      %3398 = vmatpush2.bf16.msra.mxu0 0
      %3399 = vmatprep.subr.bf16.mxu0 0
      %3400 = vmatpush2.bf16.msra.mxu0 0
      %3401 = vmatprep.subr.bf16.mxu0 %v3328
      %3402 = vmatpush2.bf16.msra.mxu0 %v3327
      %3403 = vmatprep.subr.bf16.mxu0 %v3326
      %3404 = vmatpush2.bf16.msra.mxu0 %v3325
      %3405 = vmatprep.mubr.bf16.mxu0 %v3350
      %3406 = vmatmul.mubr.bf16.gmra.mxu0 %v3225
      %v3407 = vpop.f32.mrf.mxu0
      %v3408 = vadd.f32 %v3099, %v3407
      %v3409 = vpop.f32.mrf.mxu0
      %v3410 = vadd.f32 %v3101, %v3409
      %v3411 = vpop.f32.mrf.mxu0
      %v3412 = vadd.f32 %v3103, %v3411
      %v3413 = vpop.f32.mrf.mxu0
      %v3414 = vadd.f32 %v3105, %v3413
      %3415 = vmatprep.mubr.bf16.mxu0 %v3353
      %3416 = vmatmul.mubr.bf16.gmra.mxu0 %v3227
      %v3417 = vpop.f32.mrf.mxu0
      %v3418 = vadd.f32 %v3109, %v3417
      %v3419 = vpop.f32.mrf.mxu0
      %v3420 = vadd.f32 %v3111, %v3419
      %v3421 = vpop.f32.mrf.mxu0
      %v3422 = vadd.f32 %v3113, %v3421
      %v3423 = vpop.f32.mrf.mxu0
      %v3424 = vadd.f32 %v3115, %v3423
      %3425 = vmatprep.mubr.bf16.mxu0 %v3356
      %3426 = vmatmul.mubr.bf16.gmra.mxu0 %v3229
      %v3427 = vpop.f32.mrf.mxu0
      %v3428 = vadd.f32 %v3119, %v3427
      %v3429 = vpop.f32.mrf.mxu0
      %v3430 = vadd.f32 %v3121, %v3429
      %v3431 = vpop.f32.mrf.mxu0
      %v3432 = vadd.f32 %v3123, %v3431
      %v3433 = vpop.f32.mrf.mxu0
      %v3434 = vadd.f32 %v3125, %v3433
      %3435 = vmatprep.mubr.bf16.mxu0 %v3359
      %3436 = vmatmul.mubr.bf16.gmra.mxu0 %v3231
      %v3437 = vpop.f32.mrf.mxu0
      %v3438 = vadd.f32 %v3129, %v3437
      %v3439 = vpop.f32.mrf.mxu0
      %v3440 = vadd.f32 %v3131, %v3439
      %v3441 = vpop.f32.mrf.mxu0
      %v3442 = vadd.f32 %v3133, %v3441
      %v3443 = vpop.f32.mrf.mxu0
      %v3444 = vadd.f32 %v3135, %v3443
      %3445 = vmatprep.mubr.bf16.mxu0 %v3362
      %3446 = vmatmul.mubr.bf16.gmra.mxu0 %v3233
      %v3447 = vpop.f32.mrf.mxu0
      %v3448 = vadd.f32 %v3139, %v3447
      %v3449 = vpop.f32.mrf.mxu0
      %v3450 = vadd.f32 %v3141, %v3449
      %v3451 = vpop.f32.mrf.mxu0
      %v3452 = vadd.f32 %v3143, %v3451
      %v3453 = vpop.f32.mrf.mxu0
      %v3454 = vadd.f32 %v3145, %v3453
      %3455 = vmatprep.mubr.bf16.mxu0 %v3365
      %3456 = vmatmul.mubr.bf16.gmra.mxu0 %v3235
      %v3457 = vpop.f32.mrf.mxu0
      %v3458 = vadd.f32 %v3149, %v3457
      %v3459 = vpop.f32.mrf.mxu0
      %v3460 = vadd.f32 %v3151, %v3459
      %v3461 = vpop.f32.mrf.mxu0
      %v3462 = vadd.f32 %v3153, %v3461
      %v3463 = vpop.f32.mrf.mxu0
      %v3464 = vadd.f32 %v3155, %v3463
      %3465 = vmatprep.mubr.bf16.mxu0 %v3368
      %3466 = vmatmul.mubr.bf16.gmra.mxu0 %v3237
      %v3467 = vpop.f32.mrf.mxu0
      %v3468 = vadd.f32 %v3159, %v3467
      %v3469 = vpop.f32.mrf.mxu0
      %v3470 = vadd.f32 %v3161, %v3469
      %v3471 = vpop.f32.mrf.mxu0
      %v3472 = vadd.f32 %v3163, %v3471
      %v3473 = vpop.f32.mrf.mxu0
      %v3474 = vadd.f32 %v3165, %v3473
      %3475 = vmatprep.mubr.bf16.mxu0 %v3371
      %3476 = vmatmul.mubr.bf16.gmra.mxu0 %v3239
      %v3477 = vpop.f32.mrf.mxu0
      %v3478 = vadd.f32 %v3169, %v3477
      %v3479 = vpop.f32.mrf.mxu0
      %v3480 = vadd.f32 %v3171, %v3479
      %v3481 = vpop.f32.mrf.mxu0
      %v3482 = vadd.f32 %v3173, %v3481
      %v3483 = vpop.f32.mrf.mxu0
      %v3484 = vadd.f32 %v3175, %v3483
      %3485 = vdwg.mxu0
      %s3486 = smul.addr %s1602, 4
      %s3487 = scalar_lea.vmem %s570, %s3486
      %v3488 = vld [vmem:[%s3487] sm:$0xff]
      %v3489 = vld [vmem:[%s3487 + $0x8] sm:$0xff]
      %v3490 = vld [vmem:[%s3487 + $0x10] sm:$0xff]
      %v3491 = vld [vmem:[%s3487 + $0x18] sm:$0xff]
      %v3492 = vld [vmem:[%s3487 + $0x20] sm:$0xff]
      %v3493 = vld [vmem:[%s3487 + $0x28] sm:$0xff]
      %v3494 = vld [vmem:[%s3487 + $0x30] sm:$0xff]
      %v3495 = vld [vmem:[%s3487 + $0x38] sm:$0xff]
      %v3496 = vld [vmem:[%s3487 + $0x40] sm:$0xff]
      %v3497 = vld [vmem:[%s3487 + $0x48] sm:$0xff]
      %v3498 = vld [vmem:[%s3487 + $0x50] sm:$0xff]
      %v3499 = vld [vmem:[%s3487 + $0x58] sm:$0xff]
      %v3500 = vld [vmem:[%s3487 + $0x60] sm:$0xff]
      %v3501 = vld [vmem:[%s3487 + $0x68] sm:$0xff]
      %v3502 = vld [vmem:[%s3487 + $0x70] sm:$0xff]
      %v3503 = vld [vmem:[%s3487 + $0x78] sm:$0xff]
      %s3504 = scalar_lea.vmem %s6, 320
      %v3505 = vld [vmem:[%s3504] sm:$0xff]
      %v3506 = vld [vmem:[%s3504 + $0x8] sm:$0xff]
      %v3507 = vld [vmem:[%s3504 + $0x10] sm:$0xff]
      %v3508 = vld [vmem:[%s3504 + $0x18] sm:$0xff]
      %v3509 = vld [vmem:[%s3504 + $0x20] sm:$0xff]
      %v3510 = vld [vmem:[%s3504 + $0x28] sm:$0xff]
      %v3511 = vld [vmem:[%s3504 + $0x30] sm:$0xff]
      %v3512 = vld [vmem:[%s3504 + $0x38] sm:$0xff]
      %v3513 = vld [vmem:[%s3504 + $0x40] sm:$0xff]
      %v3514 = vld [vmem:[%s3504 + $0x48] sm:$0xff]
      %v3515 = vld [vmem:[%s3504 + $0x50] sm:$0xff]
      %v3516 = vld [vmem:[%s3504 + $0x58] sm:$0xff]
      %v3517 = vld [vmem:[%s3504 + $0x60] sm:$0xff]
      %v3518 = vld [vmem:[%s3504 + $0x68] sm:$0xff]
      %v3519 = vld [vmem:[%s3504 + $0x70] sm:$0xff]
      %v3520 = vld [vmem:[%s3504 + $0x78] sm:$0xff]
      %v3521 = vld [vmem:[%s3504 + $0x80] sm:$0xff]
      %v3522 = vld [vmem:[%s3504 + $0x88] sm:$0xff]
      %v3523 = vld [vmem:[%s3504 + $0x90] sm:$0xff]
      %v3524 = vld [vmem:[%s3504 + $0x98] sm:$0xff]
      %v3541 = vunpack.c.l.b16 %v3488
      %v3542 = vunpack.c.h.b16 %v3488
      %v3543 = vunpack.c.l.b16 %v3489
      %v3544 = vunpack.c.h.b16 %v3489
      %v3545 = vunpack.c.l.b16 %v3490
      %v3546 = vunpack.c.h.b16 %v3490
      %v3547 = vunpack.c.l.b16 %v3491
      %v3548 = vunpack.c.h.b16 %v3491
      %v3549 = vunpack.c.l.b16 %v3492
      %v3550 = vunpack.c.h.b16 %v3492
      %v3551 = vunpack.c.l.b16 %v3493
      %v3552 = vunpack.c.h.b16 %v3493
      %v3553 = vunpack.c.l.b16 %v3494
      %v3554 = vunpack.c.h.b16 %v3494
      %v3555 = vunpack.c.l.b16 %v3495
      %v3556 = vunpack.c.h.b16 %v3495
      %v3557 = vunpack.c.l.b16 %v3496
      %v3558 = vunpack.c.h.b16 %v3496
      %v3559 = vunpack.c.l.b16 %v3497
      %v3560 = vunpack.c.h.b16 %v3497
      %v3561 = vunpack.c.l.b16 %v3498
      %v3562 = vunpack.c.h.b16 %v3498
      %v3563 = vunpack.c.l.b16 %v3499
      %v3564 = vunpack.c.h.b16 %v3499
      %v3565 = vunpack.c.l.b16 %v3500
      %v3566 = vunpack.c.h.b16 %v3500
      %v3567 = vunpack.c.l.b16 %v3501
      %v3568 = vunpack.c.h.b16 %v3501
      %v3569 = vunpack.c.l.b16 %v3502
      %v3570 = vunpack.c.h.b16 %v3502
      %v3571 = vunpack.c.l.b16 %v3503
      %v3572 = vunpack.c.h.b16 %v3503
      %v3573 = vpack.c.b16 %v3543, %v3541
      %v3574 = vpack.c.b16 %v3544, %v3542
      %v3575 = vpack.c.b16 %v3547, %v3545
      %v3576 = vpack.c.b16 %v3548, %v3546
      %v3577 = vpack.c.b16 %v3551, %v3549
      %v3578 = vpack.c.b16 %v3552, %v3550
      %v3579 = vpack.c.b16 %v3555, %v3553
      %v3580 = vpack.c.b16 %v3556, %v3554
      %v3581 = vpack.c.b16 %v3559, %v3557
      %v3582 = vpack.c.b16 %v3560, %v3558
      %v3583 = vpack.c.b16 %v3563, %v3561
      %v3584 = vpack.c.b16 %v3564, %v3562
      %v3585 = vpack.c.b16 %v3567, %v3565
      %v3586 = vpack.c.b16 %v3568, %v3566
      %v3587 = vpack.c.b16 %v3571, %v3569
      %v3588 = vpack.c.b16 %v3572, %v3570
      %v3617 = vunpack.c.l.b16 %v3505
      %v3618 = vunpack.c.h.b16 %v3505
      %v3619 = vunpack.c.l.b16 %v3506
      %v3620 = vunpack.c.h.b16 %v3506
      %v3621 = vunpack.c.l.b16 %v3507
      %v3622 = vunpack.c.h.b16 %v3507
      %v3623 = vunpack.c.l.b16 %v3508
      %v3624 = vunpack.c.h.b16 %v3508
      %v3625 = vunpack.c.l.b16 %v3509
      %v3626 = vunpack.c.h.b16 %v3509
      %v3627 = vunpack.c.l.b16 %v3510
      %v3628 = vunpack.c.h.b16 %v3510
      %v3629 = vunpack.c.l.b16 %v3511
      %v3630 = vunpack.c.h.b16 %v3511
      %v3631 = vunpack.c.l.b16 %v3512
      %v3632 = vunpack.c.h.b16 %v3512
      %v3633 = vunpack.c.l.b16 %v3513
      %v3634 = vunpack.c.h.b16 %v3513
      %v3635 = vunpack.c.l.b16 %v3514
      %v3636 = vunpack.c.h.b16 %v3514
      %v3637 = vunpack.c.l.b16 %v3515
      %v3638 = vunpack.c.h.b16 %v3515
      %v3639 = vunpack.c.l.b16 %v3516
      %v3640 = vunpack.c.h.b16 %v3516
      %v3641 = vunpack.c.l.b16 %v3517
      %v3642 = vunpack.c.h.b16 %v3517
      %v3643 = vunpack.c.l.b16 %v3518
      %v3644 = vunpack.c.h.b16 %v3518
      %v3645 = vunpack.c.l.b16 %v3519
      %v3646 = vunpack.c.h.b16 %v3519
      %v3647 = vunpack.c.l.b16 %v3520
      %v3648 = vunpack.c.h.b16 %v3520
      %v3649 = vunpack.c.l.b16 %v3521
      %v3650 = vunpack.c.h.b16 %v3521
      %v3651 = vunpack.c.l.b16 %v3522
      %v3652 = vunpack.c.h.b16 %v3522
      %v3653 = vunpack.c.l.b16 %v3523
      %v3654 = vunpack.c.h.b16 %v3523
      %v3655 = vunpack.c.l.b16 %v3524
      %v3656 = vunpack.c.h.b16 %v3524
      %v3657 = vpack.c.b16 %v3619, %v3617
      %v3658 = vpack.c.b16 %v3620, %v3618
      %v3659 = vpack.c.b16 %v3623, %v3621
      %v3660 = vpack.c.b16 %v3624, %v3622
      %v3661 = vpack.c.b16 %v3627, %v3625
      %v3662 = vpack.c.b16 %v3628, %v3626
      %v3663 = vpack.c.b16 %v3631, %v3629
      %v3664 = vpack.c.b16 %v3632, %v3630
      %v3665 = vpack.c.b16 %v3635, %v3633
      %v3666 = vpack.c.b16 %v3636, %v3634
      %v3667 = vpack.c.b16 %v3639, %v3637
      %v3668 = vpack.c.b16 %v3640, %v3638
      %v3669 = vpack.c.b16 %v3643, %v3641
      %v3670 = vpack.c.b16 %v3644, %v3642
      %v3671 = vpack.c.b16 %v3647, %v3645
      %v3672 = vpack.c.b16 %v3648, %v3646
      %v3673 = vpack.c.b16 %v3651, %v3649
      %v3674 = vpack.c.b16 %v3652, %v3650
      %v3675 = vpack.c.b16 %v3655, %v3653
      %v3676 = vpack.c.b16 %v3656, %v3654
      %v3698 = vsel %vm1154, %v3574, 0
      %v3701 = vsel %vm1154, %v3576, 0
      %v3704 = vsel %vm1154, %v3578, 0
      %v3707 = vsel %vm1154, %v3580, 0
      %v3710 = vsel %vm1154, %v3582, 0
      %v3713 = vsel %vm1154, %v3584, 0
      %v3716 = vsel %vm1154, %v3586, 0
      %v3719 = vsel %vm1154, %v3588, 0
      %3721 = vmatprep.subr.bf16.mxu0 %v3672
      %3722 = vmatpush1.bf16.msra.mxu0 %v3671
      %3723 = vmatprep.subr.bf16.mxu0 %v3670
      %3724 = vmatpush1.bf16.msra.mxu0 %v3669
      %3725 = vmatprep.subr.bf16.mxu0 %v3668
      %3726 = vmatpush1.bf16.msra.mxu0 %v3667
      %3727 = vmatprep.subr.bf16.mxu0 %v3666
      %3728 = vmatpush1.bf16.msra.mxu0 %v3665
      %3729 = vmatprep.subr.bf16.mxu0 %v3664
      %3730 = vmatpush1.bf16.msra.mxu0 %v3663
      %3731 = vmatprep.subr.bf16.mxu0 %v3662
      %3732 = vmatpush1.bf16.msra.mxu0 %v3661
      %3733 = vmatprep.subr.bf16.mxu0 %v3660
      %3734 = vmatpush1.bf16.msra.mxu0 %v3659
      %3735 = vmatprep.subr.bf16.mxu0 %v3658
      %3736 = vmatpush1.bf16.msra.mxu0 %v3657
      %3737 = vmatprep.subr.bf16.mxu0 0
      %3738 = vmatpush2.bf16.msra.mxu0 0
      %3739 = vmatprep.subr.bf16.mxu0 0
      %3740 = vmatpush2.bf16.msra.mxu0 0
      %3741 = vmatprep.subr.bf16.mxu0 0
      %3742 = vmatpush2.bf16.msra.mxu0 0
      %3743 = vmatprep.subr.bf16.mxu0 0
      %3744 = vmatpush2.bf16.msra.mxu0 0
      %3745 = vmatprep.subr.bf16.mxu0 0
      %3746 = vmatpush2.bf16.msra.mxu0 0
      %3747 = vmatprep.subr.bf16.mxu0 0
      %3748 = vmatpush2.bf16.msra.mxu0 0
      %3749 = vmatprep.subr.bf16.mxu0 %v3676
      %3750 = vmatpush2.bf16.msra.mxu0 %v3675
      %3751 = vmatprep.subr.bf16.mxu0 %v3674
      %3752 = vmatpush2.bf16.msra.mxu0 %v3673
      %3753 = vmatprep.mubr.bf16.mxu0 %v3698
      %3754 = vmatmul.mubr.bf16.gmra.mxu0 %v3573
      %v3755 = vpop.f32.mrf.mxu0
      %v3756 = vadd.f32 0.0, %v3755
      %v3757 = vpop.f32.mrf.mxu0
      %v3758 = vadd.f32 0.0, %v3757
      %v3759 = vpop.f32.mrf.mxu0
      %v3760 = vadd.f32 0.0, %v3759
      %v3761 = vpop.f32.mrf.mxu0
      %v3762 = vadd.f32 0.0, %v3761
      %3763 = vmatprep.mubr.bf16.mxu0 %v3701
      %3764 = vmatmul.mubr.bf16.gmra.mxu0 %v3575
      %v3765 = vpop.f32.mrf.mxu0
      %v3766 = vadd.f32 0.0, %v3765
      %v3767 = vpop.f32.mrf.mxu0
      %v3768 = vadd.f32 0.0, %v3767
      %v3769 = vpop.f32.mrf.mxu0
      %v3770 = vadd.f32 0.0, %v3769
      %v3771 = vpop.f32.mrf.mxu0
      %v3772 = vadd.f32 0.0, %v3771
      %3773 = vmatprep.mubr.bf16.mxu0 %v3704
      %3774 = vmatmul.mubr.bf16.gmra.mxu0 %v3577
      %v3775 = vpop.f32.mrf.mxu0
      %v3776 = vadd.f32 0.0, %v3775
      %v3777 = vpop.f32.mrf.mxu0
      %v3778 = vadd.f32 0.0, %v3777
      %v3779 = vpop.f32.mrf.mxu0
      %v3780 = vadd.f32 0.0, %v3779
      %v3781 = vpop.f32.mrf.mxu0
      %v3782 = vadd.f32 0.0, %v3781
      %3783 = vmatprep.mubr.bf16.mxu0 %v3707
      %3784 = vmatmul.mubr.bf16.gmra.mxu0 %v3579
      %v3785 = vpop.f32.mrf.mxu0
      %v3786 = vadd.f32 0.0, %v3785
      %v3787 = vpop.f32.mrf.mxu0
      %v3788 = vadd.f32 0.0, %v3787
      %v3789 = vpop.f32.mrf.mxu0
      %v3790 = vadd.f32 0.0, %v3789
      %v3791 = vpop.f32.mrf.mxu0
      %v3792 = vadd.f32 0.0, %v3791
      %3793 = vmatprep.mubr.bf16.mxu0 %v3710
      %3794 = vmatmul.mubr.bf16.gmra.mxu0 %v3581
      %v3795 = vpop.f32.mrf.mxu0
      %v3796 = vadd.f32 0.0, %v3795
      %v3797 = vpop.f32.mrf.mxu0
      %v3798 = vadd.f32 0.0, %v3797
      %v3799 = vpop.f32.mrf.mxu0
      %v3800 = vadd.f32 0.0, %v3799
      %v3801 = vpop.f32.mrf.mxu0
      %v3802 = vadd.f32 0.0, %v3801
      %3803 = vmatprep.mubr.bf16.mxu0 %v3713
      %3804 = vmatmul.mubr.bf16.gmra.mxu0 %v3583
      %v3805 = vpop.f32.mrf.mxu0
      %v3806 = vadd.f32 0.0, %v3805
      %v3807 = vpop.f32.mrf.mxu0
      %v3808 = vadd.f32 0.0, %v3807
      %v3809 = vpop.f32.mrf.mxu0
      %v3810 = vadd.f32 0.0, %v3809
      %v3811 = vpop.f32.mrf.mxu0
      %v3812 = vadd.f32 0.0, %v3811
      %3813 = vmatprep.mubr.bf16.mxu0 %v3716
      %3814 = vmatmul.mubr.bf16.gmra.mxu0 %v3585
      %v3815 = vpop.f32.mrf.mxu0
      %v3816 = vadd.f32 0.0, %v3815
      %v3817 = vpop.f32.mrf.mxu0
      %v3818 = vadd.f32 0.0, %v3817
      %v3819 = vpop.f32.mrf.mxu0
      %v3820 = vadd.f32 0.0, %v3819
      %v3821 = vpop.f32.mrf.mxu0
      %v3822 = vadd.f32 0.0, %v3821
      %3823 = vmatprep.mubr.bf16.mxu0 %v3719
      %3824 = vmatmul.mubr.bf16.gmra.mxu0 %v3587
      %v3825 = vpop.f32.mrf.mxu0
      %v3826 = vadd.f32 0.0, %v3825
      %v3827 = vpop.f32.mrf.mxu0
      %v3828 = vadd.f32 0.0, %v3827
      %v3829 = vpop.f32.mrf.mxu0
      %v3830 = vadd.f32 0.0, %v3829
      %v3831 = vpop.f32.mrf.mxu0
      %v3832 = vadd.f32 0.0, %v3831
      %3833 = vdwg.mxu0
      %v3834 = vadd.f32 %v3408, %v3756
      %v3835 = vadd.f32 %v3410, %v3758
      %v3836 = vadd.f32 %v3412, %v3760
      %v3837 = vadd.f32 %v3414, %v3762
      %v3838 = vadd.f32 %v3418, %v3766
      %v3839 = vadd.f32 %v3420, %v3768
      %v3840 = vadd.f32 %v3422, %v3770
      %v3841 = vadd.f32 %v3424, %v3772
      %v3842 = vadd.f32 %v3428, %v3776
      %v3843 = vadd.f32 %v3430, %v3778
      %v3844 = vadd.f32 %v3432, %v3780
      %v3845 = vadd.f32 %v3434, %v3782
      %v3846 = vadd.f32 %v3438, %v3786
      %v3847 = vadd.f32 %v3440, %v3788
      %v3848 = vadd.f32 %v3442, %v3790
      %v3849 = vadd.f32 %v3444, %v3792
      %v3850 = vadd.f32 %v3448, %v3796
      %v3851 = vadd.f32 %v3450, %v3798
      %v3852 = vadd.f32 %v3452, %v3800
      %v3853 = vadd.f32 %v3454, %v3802
      %v3854 = vadd.f32 %v3458, %v3806
      %v3855 = vadd.f32 %v3460, %v3808
      %v3856 = vadd.f32 %v3462, %v3810
      %v3857 = vadd.f32 %v3464, %v3812
      %v3858 = vadd.f32 %v3468, %v3816
      %v3859 = vadd.f32 %v3470, %v3818
      %v3860 = vadd.f32 %v3472, %v3820
      %v3861 = vadd.f32 %v3474, %v3822
      %v3862 = vadd.f32 %v3478, %v3826
      %v3863 = vadd.f32 %v3480, %v3828
      %v3864 = vadd.f32 %v3482, %v3830
      %v3865 = vadd.f32 %v3484, %v3832
      %s3866 = smul.addr %s1984, 4
      %s3867 = scalar_lea.vmem %s570, %s3866
      %v3868 = vld [vmem:[%s3867] sm:$0xff]
      %v3869 = vld [vmem:[%s3867 + $0x8] sm:$0xff]
      %v3870 = vld [vmem:[%s3867 + $0x10] sm:$0xff]
      %v3871 = vld [vmem:[%s3867 + $0x18] sm:$0xff]
      %v3872 = vld [vmem:[%s3867 + $0x20] sm:$0xff]
      %v3873 = vld [vmem:[%s3867 + $0x28] sm:$0xff]
      %v3874 = vld [vmem:[%s3867 + $0x30] sm:$0xff]
      %v3875 = vld [vmem:[%s3867 + $0x38] sm:$0xff]
      %v3876 = vld [vmem:[%s3867 + $0x40] sm:$0xff]
      %v3877 = vld [vmem:[%s3867 + $0x48] sm:$0xff]
      %v3878 = vld [vmem:[%s3867 + $0x50] sm:$0xff]
      %v3879 = vld [vmem:[%s3867 + $0x58] sm:$0xff]
      %v3880 = vld [vmem:[%s3867 + $0x60] sm:$0xff]
      %v3881 = vld [vmem:[%s3867 + $0x68] sm:$0xff]
      %v3882 = vld [vmem:[%s3867 + $0x70] sm:$0xff]
      %v3883 = vld [vmem:[%s3867 + $0x78] sm:$0xff]
      %s3884 = scalar_lea.vmem %s6, 480
      %v3885 = vld [vmem:[%s3884] sm:$0xff]
      %v3886 = vld [vmem:[%s3884 + $0x8] sm:$0xff]
      %v3887 = vld [vmem:[%s3884 + $0x10] sm:$0xff]
      %v3888 = vld [vmem:[%s3884 + $0x18] sm:$0xff]
      %v3889 = vld [vmem:[%s3884 + $0x20] sm:$0xff]
      %v3890 = vld [vmem:[%s3884 + $0x28] sm:$0xff]
      %v3891 = vld [vmem:[%s3884 + $0x30] sm:$0xff]
      %v3892 = vld [vmem:[%s3884 + $0x38] sm:$0xff]
      %v3893 = vld [vmem:[%s3884 + $0x40] sm:$0xff]
      %v3894 = vld [vmem:[%s3884 + $0x48] sm:$0xff]
      %v3895 = vld [vmem:[%s3884 + $0x50] sm:$0xff]
      %v3896 = vld [vmem:[%s3884 + $0x58] sm:$0xff]
      %v3897 = vld [vmem:[%s3884 + $0x60] sm:$0xff]
      %v3898 = vld [vmem:[%s3884 + $0x68] sm:$0xff]
      %v3899 = vld [vmem:[%s3884 + $0x70] sm:$0xff]
      %v3900 = vld [vmem:[%s3884 + $0x78] sm:$0xff]
      %v3901 = vld [vmem:[%s3884 + $0x80] sm:$0xff]
      %v3902 = vld [vmem:[%s3884 + $0x88] sm:$0xff]
      %v3903 = vld [vmem:[%s3884 + $0x90] sm:$0xff]
      %v3904 = vld [vmem:[%s3884 + $0x98] sm:$0xff]
      %v3921 = vunpack.c.l.b16 %v3868
      %v3922 = vunpack.c.h.b16 %v3868
      %v3923 = vunpack.c.l.b16 %v3869
      %v3924 = vunpack.c.h.b16 %v3869
      %v3925 = vunpack.c.l.b16 %v3870
      %v3926 = vunpack.c.h.b16 %v3870
      %v3927 = vunpack.c.l.b16 %v3871
      %v3928 = vunpack.c.h.b16 %v3871
      %v3929 = vunpack.c.l.b16 %v3872
      %v3930 = vunpack.c.h.b16 %v3872
      %v3931 = vunpack.c.l.b16 %v3873
      %v3932 = vunpack.c.h.b16 %v3873
      %v3933 = vunpack.c.l.b16 %v3874
      %v3934 = vunpack.c.h.b16 %v3874
      %v3935 = vunpack.c.l.b16 %v3875
      %v3936 = vunpack.c.h.b16 %v3875
      %v3937 = vunpack.c.l.b16 %v3876
      %v3938 = vunpack.c.h.b16 %v3876
      %v3939 = vunpack.c.l.b16 %v3877
      %v3940 = vunpack.c.h.b16 %v3877
      %v3941 = vunpack.c.l.b16 %v3878
      %v3942 = vunpack.c.h.b16 %v3878
      %v3943 = vunpack.c.l.b16 %v3879
      %v3944 = vunpack.c.h.b16 %v3879
      %v3945 = vunpack.c.l.b16 %v3880
      %v3946 = vunpack.c.h.b16 %v3880
      %v3947 = vunpack.c.l.b16 %v3881
      %v3948 = vunpack.c.h.b16 %v3881
      %v3949 = vunpack.c.l.b16 %v3882
      %v3950 = vunpack.c.h.b16 %v3882
      %v3951 = vunpack.c.l.b16 %v3883
      %v3952 = vunpack.c.h.b16 %v3883
      %v3953 = vpack.c.b16 %v3923, %v3921
      %v3954 = vpack.c.b16 %v3924, %v3922
      %v3955 = vpack.c.b16 %v3927, %v3925
      %v3956 = vpack.c.b16 %v3928, %v3926
      %v3957 = vpack.c.b16 %v3931, %v3929
      %v3958 = vpack.c.b16 %v3932, %v3930
      %v3959 = vpack.c.b16 %v3935, %v3933
      %v3960 = vpack.c.b16 %v3936, %v3934
      %v3961 = vpack.c.b16 %v3939, %v3937
      %v3962 = vpack.c.b16 %v3940, %v3938
      %v3963 = vpack.c.b16 %v3943, %v3941
      %v3964 = vpack.c.b16 %v3944, %v3942
      %v3965 = vpack.c.b16 %v3947, %v3945
      %v3966 = vpack.c.b16 %v3948, %v3946
      %v3967 = vpack.c.b16 %v3951, %v3949
      %v3968 = vpack.c.b16 %v3952, %v3950
      %v3997 = vunpack.c.l.b16 %v3885
      %v3998 = vunpack.c.h.b16 %v3885
      %v3999 = vunpack.c.l.b16 %v3886
      %v4000 = vunpack.c.h.b16 %v3886
      %v4001 = vunpack.c.l.b16 %v3887
      %v4002 = vunpack.c.h.b16 %v3887
      %v4003 = vunpack.c.l.b16 %v3888
      %v4004 = vunpack.c.h.b16 %v3888
      %v4005 = vunpack.c.l.b16 %v3889
      %v4006 = vunpack.c.h.b16 %v3889
      %v4007 = vunpack.c.l.b16 %v3890
      %v4008 = vunpack.c.h.b16 %v3890
      %v4009 = vunpack.c.l.b16 %v3891
      %v4010 = vunpack.c.h.b16 %v3891
      %v4011 = vunpack.c.l.b16 %v3892
      %v4012 = vunpack.c.h.b16 %v3892
      %v4013 = vunpack.c.l.b16 %v3893
      %v4014 = vunpack.c.h.b16 %v3893
      %v4015 = vunpack.c.l.b16 %v3894
      %v4016 = vunpack.c.h.b16 %v3894
      %v4017 = vunpack.c.l.b16 %v3895
      %v4018 = vunpack.c.h.b16 %v3895
      %v4019 = vunpack.c.l.b16 %v3896
      %v4020 = vunpack.c.h.b16 %v3896
      %v4021 = vunpack.c.l.b16 %v3897
      %v4022 = vunpack.c.h.b16 %v3897
      %v4023 = vunpack.c.l.b16 %v3898
      %v4024 = vunpack.c.h.b16 %v3898
      %v4025 = vunpack.c.l.b16 %v3899
      %v4026 = vunpack.c.h.b16 %v3899
      %v4027 = vunpack.c.l.b16 %v3900
      %v4028 = vunpack.c.h.b16 %v3900
      %v4029 = vunpack.c.l.b16 %v3901
      %v4030 = vunpack.c.h.b16 %v3901
      %v4031 = vunpack.c.l.b16 %v3902
      %v4032 = vunpack.c.h.b16 %v3902
      %v4033 = vunpack.c.l.b16 %v3903
      %v4034 = vunpack.c.h.b16 %v3903
      %v4035 = vunpack.c.l.b16 %v3904
      %v4036 = vunpack.c.h.b16 %v3904
      %v4037 = vpack.c.b16 %v3999, %v3997
      %v4038 = vpack.c.b16 %v4000, %v3998
      %v4039 = vpack.c.b16 %v4003, %v4001
      %v4040 = vpack.c.b16 %v4004, %v4002
      %v4041 = vpack.c.b16 %v4007, %v4005
      %v4042 = vpack.c.b16 %v4008, %v4006
      %v4043 = vpack.c.b16 %v4011, %v4009
      %v4044 = vpack.c.b16 %v4012, %v4010
      %v4045 = vpack.c.b16 %v4015, %v4013
      %v4046 = vpack.c.b16 %v4016, %v4014
      %v4047 = vpack.c.b16 %v4019, %v4017
      %v4048 = vpack.c.b16 %v4020, %v4018
      %v4049 = vpack.c.b16 %v4023, %v4021
      %v4050 = vpack.c.b16 %v4024, %v4022
      %v4051 = vpack.c.b16 %v4027, %v4025
      %v4052 = vpack.c.b16 %v4028, %v4026
      %v4053 = vpack.c.b16 %v4031, %v4029
      %v4054 = vpack.c.b16 %v4032, %v4030
      %v4055 = vpack.c.b16 %v4035, %v4033
      %v4056 = vpack.c.b16 %v4036, %v4034
      %v4078 = vsel %vm1154, %v3954, 0
      %v4081 = vsel %vm1154, %v3956, 0
      %v4084 = vsel %vm1154, %v3958, 0
      %v4087 = vsel %vm1154, %v3960, 0
      %v4090 = vsel %vm1154, %v3962, 0
      %v4093 = vsel %vm1154, %v3964, 0
      %v4096 = vsel %vm1154, %v3966, 0
      %v4099 = vsel %vm1154, %v3968, 0
      %4101 = vmatprep.subr.bf16.mxu0 %v4052
      %4102 = vmatpush1.bf16.msra.mxu0 %v4051
      %4103 = vmatprep.subr.bf16.mxu0 %v4050
      %4104 = vmatpush1.bf16.msra.mxu0 %v4049
      %4105 = vmatprep.subr.bf16.mxu0 %v4048
      %4106 = vmatpush1.bf16.msra.mxu0 %v4047
      %4107 = vmatprep.subr.bf16.mxu0 %v4046
      %4108 = vmatpush1.bf16.msra.mxu0 %v4045
      %4109 = vmatprep.subr.bf16.mxu0 %v4044
      %4110 = vmatpush1.bf16.msra.mxu0 %v4043
      %4111 = vmatprep.subr.bf16.mxu0 %v4042
      %4112 = vmatpush1.bf16.msra.mxu0 %v4041
      %4113 = vmatprep.subr.bf16.mxu0 %v4040
      %4114 = vmatpush1.bf16.msra.mxu0 %v4039
      %4115 = vmatprep.subr.bf16.mxu0 %v4038
      %4116 = vmatpush1.bf16.msra.mxu0 %v4037
      %4117 = vmatprep.subr.bf16.mxu0 0
      %4118 = vmatpush2.bf16.msra.mxu0 0
      %4119 = vmatprep.subr.bf16.mxu0 0
      %4120 = vmatpush2.bf16.msra.mxu0 0
      %4121 = vmatprep.subr.bf16.mxu0 0
      %4122 = vmatpush2.bf16.msra.mxu0 0
      %4123 = vmatprep.subr.bf16.mxu0 0
      %4124 = vmatpush2.bf16.msra.mxu0 0
      %4125 = vmatprep.subr.bf16.mxu0 0
      %4126 = vmatpush2.bf16.msra.mxu0 0
      %4127 = vmatprep.subr.bf16.mxu0 0
      %4128 = vmatpush2.bf16.msra.mxu0 0
      %4129 = vmatprep.subr.bf16.mxu0 %v4056
      %4130 = vmatpush2.bf16.msra.mxu0 %v4055
      %4131 = vmatprep.subr.bf16.mxu0 %v4054
      %4132 = vmatpush2.bf16.msra.mxu0 %v4053
      %4133 = vmatprep.mubr.bf16.mxu0 %v4078
      %4134 = vmatmul.mubr.bf16.gmra.mxu0 %v3953
      %v4135 = vpop.f32.mrf.mxu0
      %v4136 = vadd.f32 0.0, %v4135
      %v4137 = vpop.f32.mrf.mxu0
      %v4138 = vadd.f32 0.0, %v4137
      %v4139 = vpop.f32.mrf.mxu0
      %v4140 = vadd.f32 0.0, %v4139
      %v4141 = vpop.f32.mrf.mxu0
      %v4142 = vadd.f32 0.0, %v4141
      %4143 = vmatprep.mubr.bf16.mxu0 %v4081
      %4144 = vmatmul.mubr.bf16.gmra.mxu0 %v3955
      %v4145 = vpop.f32.mrf.mxu0
      %v4146 = vadd.f32 0.0, %v4145
      %v4147 = vpop.f32.mrf.mxu0
      %v4148 = vadd.f32 0.0, %v4147
      %v4149 = vpop.f32.mrf.mxu0
      %v4150 = vadd.f32 0.0, %v4149
      %v4151 = vpop.f32.mrf.mxu0
      %v4152 = vadd.f32 0.0, %v4151
      %4153 = vmatprep.mubr.bf16.mxu0 %v4084
      %4154 = vmatmul.mubr.bf16.gmra.mxu0 %v3957
      %v4155 = vpop.f32.mrf.mxu0
      %v4156 = vadd.f32 0.0, %v4155
      %v4157 = vpop.f32.mrf.mxu0
      %v4158 = vadd.f32 0.0, %v4157
      %v4159 = vpop.f32.mrf.mxu0
      %v4160 = vadd.f32 0.0, %v4159
      %v4161 = vpop.f32.mrf.mxu0
      %v4162 = vadd.f32 0.0, %v4161
      %4163 = vmatprep.mubr.bf16.mxu0 %v4087
      %4164 = vmatmul.mubr.bf16.gmra.mxu0 %v3959
      %v4165 = vpop.f32.mrf.mxu0
      %v4166 = vadd.f32 0.0, %v4165
      %v4167 = vpop.f32.mrf.mxu0
      %v4168 = vadd.f32 0.0, %v4167
      %v4169 = vpop.f32.mrf.mxu0
      %v4170 = vadd.f32 0.0, %v4169
      %v4171 = vpop.f32.mrf.mxu0
      %v4172 = vadd.f32 0.0, %v4171
      %4173 = vmatprep.mubr.bf16.mxu0 %v4090
      %4174 = vmatmul.mubr.bf16.gmra.mxu0 %v3961
      %v4175 = vpop.f32.mrf.mxu0
      %v4176 = vadd.f32 0.0, %v4175
      %v4177 = vpop.f32.mrf.mxu0
      %v4178 = vadd.f32 0.0, %v4177
      %v4179 = vpop.f32.mrf.mxu0
      %v4180 = vadd.f32 0.0, %v4179
      %v4181 = vpop.f32.mrf.mxu0
      %v4182 = vadd.f32 0.0, %v4181
      %4183 = vmatprep.mubr.bf16.mxu0 %v4093
      %4184 = vmatmul.mubr.bf16.gmra.mxu0 %v3963
      %v4185 = vpop.f32.mrf.mxu0
      %v4186 = vadd.f32 0.0, %v4185
      %v4187 = vpop.f32.mrf.mxu0
      %v4188 = vadd.f32 0.0, %v4187
      %v4189 = vpop.f32.mrf.mxu0
      %v4190 = vadd.f32 0.0, %v4189
      %v4191 = vpop.f32.mrf.mxu0
      %v4192 = vadd.f32 0.0, %v4191
      %4193 = vmatprep.mubr.bf16.mxu0 %v4096
      %4194 = vmatmul.mubr.bf16.gmra.mxu0 %v3965
      %v4195 = vpop.f32.mrf.mxu0
      %v4196 = vadd.f32 0.0, %v4195
      %v4197 = vpop.f32.mrf.mxu0
      %v4198 = vadd.f32 0.0, %v4197
      %v4199 = vpop.f32.mrf.mxu0
      %v4200 = vadd.f32 0.0, %v4199
      %v4201 = vpop.f32.mrf.mxu0
      %v4202 = vadd.f32 0.0, %v4201
      %4203 = vmatprep.mubr.bf16.mxu0 %v4099
      %4204 = vmatmul.mubr.bf16.gmra.mxu0 %v3967
      %v4205 = vpop.f32.mrf.mxu0
      %v4206 = vadd.f32 0.0, %v4205
      %v4207 = vpop.f32.mrf.mxu0
      %v4208 = vadd.f32 0.0, %v4207
      %v4209 = vpop.f32.mrf.mxu0
      %v4210 = vadd.f32 0.0, %v4209
      %v4211 = vpop.f32.mrf.mxu0
      %v4212 = vadd.f32 0.0, %v4211
      %4213 = vdwg.mxu0
      %v4214 = vadd.f32 %v3834, %v4136
      %v4215 = vadd.f32 %v3835, %v4138
      %v4216 = vadd.f32 %v3836, %v4140
      %v4217 = vadd.f32 %v3837, %v4142
      %v4218 = vadd.f32 %v3838, %v4146
      %v4219 = vadd.f32 %v3839, %v4148
      %v4220 = vadd.f32 %v3840, %v4150
      %v4221 = vadd.f32 %v3841, %v4152
      %v4222 = vadd.f32 %v3842, %v4156
      %v4223 = vadd.f32 %v3843, %v4158
      %v4224 = vadd.f32 %v3844, %v4160
      %v4225 = vadd.f32 %v3845, %v4162
      %v4226 = vadd.f32 %v3846, %v4166
      %v4227 = vadd.f32 %v3847, %v4168
      %v4228 = vadd.f32 %v3848, %v4170
      %v4229 = vadd.f32 %v3849, %v4172
      %v4230 = vadd.f32 %v3850, %v4176
      %v4231 = vadd.f32 %v3851, %v4178
      %v4232 = vadd.f32 %v3852, %v4180
      %v4233 = vadd.f32 %v3853, %v4182
      %v4234 = vadd.f32 %v3854, %v4186
      %v4235 = vadd.f32 %v3855, %v4188
      %v4236 = vadd.f32 %v3856, %v4190
      %v4237 = vadd.f32 %v3857, %v4192
      %v4238 = vadd.f32 %v3858, %v4196
      %v4239 = vadd.f32 %v3859, %v4198
      %v4240 = vadd.f32 %v3860, %v4200
      %v4241 = vadd.f32 %v3861, %v4202
      %v4242 = vadd.f32 %v3862, %v4206
      %v4243 = vadd.f32 %v3863, %v4208
      %v4244 = vadd.f32 %v3864, %v4210
      %v4245 = vadd.f32 %v3865, %v4212
      %s4246 = smul.addr %s2366, 4
      %s4247 = scalar_lea.vmem %s570, %s4246
      %v4248 = vld [vmem:[%s4247] sm:$0xff]
      %v4249 = vld [vmem:[%s4247 + $0x8] sm:$0xff]
      %v4250 = vld [vmem:[%s4247 + $0x10] sm:$0xff]
      %v4251 = vld [vmem:[%s4247 + $0x18] sm:$0xff]
      %v4252 = vld [vmem:[%s4247 + $0x20] sm:$0xff]
      %v4253 = vld [vmem:[%s4247 + $0x28] sm:$0xff]
      %v4254 = vld [vmem:[%s4247 + $0x30] sm:$0xff]
      %v4255 = vld [vmem:[%s4247 + $0x38] sm:$0xff]
      %v4256 = vld [vmem:[%s4247 + $0x40] sm:$0xff]
      %v4257 = vld [vmem:[%s4247 + $0x48] sm:$0xff]
      %v4258 = vld [vmem:[%s4247 + $0x50] sm:$0xff]
      %v4259 = vld [vmem:[%s4247 + $0x58] sm:$0xff]
      %v4260 = vld [vmem:[%s4247 + $0x60] sm:$0xff]
      %v4261 = vld [vmem:[%s4247 + $0x68] sm:$0xff]
      %v4262 = vld [vmem:[%s4247 + $0x70] sm:$0xff]
      %v4263 = vld [vmem:[%s4247 + $0x78] sm:$0xff]
      %s4264 = scalar_lea.vmem %s6, 640
      %v4265 = vld [vmem:[%s4264] sm:$0xff]
      %v4266 = vld [vmem:[%s4264 + $0x8] sm:$0xff]
      %v4267 = vld [vmem:[%s4264 + $0x10] sm:$0xff]
      %v4268 = vld [vmem:[%s4264 + $0x18] sm:$0xff]
      %v4269 = vld [vmem:[%s4264 + $0x20] sm:$0xff]
      %v4270 = vld [vmem:[%s4264 + $0x28] sm:$0xff]
      %v4271 = vld [vmem:[%s4264 + $0x30] sm:$0xff]
      %v4272 = vld [vmem:[%s4264 + $0x38] sm:$0xff]
      %v4273 = vld [vmem:[%s4264 + $0x40] sm:$0xff]
      %v4274 = vld [vmem:[%s4264 + $0x48] sm:$0xff]
      %v4275 = vld [vmem:[%s4264 + $0x50] sm:$0xff]
      %v4276 = vld [vmem:[%s4264 + $0x58] sm:$0xff]
      %v4277 = vld [vmem:[%s4264 + $0x60] sm:$0xff]
      %v4278 = vld [vmem:[%s4264 + $0x68] sm:$0xff]
      %v4279 = vld [vmem:[%s4264 + $0x70] sm:$0xff]
      %v4280 = vld [vmem:[%s4264 + $0x78] sm:$0xff]
      %v4281 = vld [vmem:[%s4264 + $0x80] sm:$0xff]
      %v4282 = vld [vmem:[%s4264 + $0x88] sm:$0xff]
      %v4283 = vld [vmem:[%s4264 + $0x90] sm:$0xff]
      %v4284 = vld [vmem:[%s4264 + $0x98] sm:$0xff]
      %v4301 = vunpack.c.l.b16 %v4248
      %v4302 = vunpack.c.h.b16 %v4248
      %v4303 = vunpack.c.l.b16 %v4249
      %v4304 = vunpack.c.h.b16 %v4249
      %v4305 = vunpack.c.l.b16 %v4250
      %v4306 = vunpack.c.h.b16 %v4250
      %v4307 = vunpack.c.l.b16 %v4251
      %v4308 = vunpack.c.h.b16 %v4251
      %v4309 = vunpack.c.l.b16 %v4252
      %v4310 = vunpack.c.h.b16 %v4252
      %v4311 = vunpack.c.l.b16 %v4253
      %v4312 = vunpack.c.h.b16 %v4253
      %v4313 = vunpack.c.l.b16 %v4254
      %v4314 = vunpack.c.h.b16 %v4254
      %v4315 = vunpack.c.l.b16 %v4255
      %v4316 = vunpack.c.h.b16 %v4255
      %v4317 = vunpack.c.l.b16 %v4256
      %v4318 = vunpack.c.h.b16 %v4256
      %v4319 = vunpack.c.l.b16 %v4257
      %v4320 = vunpack.c.h.b16 %v4257
      %v4321 = vunpack.c.l.b16 %v4258
      %v4322 = vunpack.c.h.b16 %v4258
      %v4323 = vunpack.c.l.b16 %v4259
      %v4324 = vunpack.c.h.b16 %v4259
      %v4325 = vunpack.c.l.b16 %v4260
      %v4326 = vunpack.c.h.b16 %v4260
      %v4327 = vunpack.c.l.b16 %v4261
      %v4328 = vunpack.c.h.b16 %v4261
      %v4329 = vunpack.c.l.b16 %v4262
      %v4330 = vunpack.c.h.b16 %v4262
      %v4331 = vunpack.c.l.b16 %v4263
      %v4332 = vunpack.c.h.b16 %v4263
      %v4333 = vpack.c.b16 %v4303, %v4301
      %v4334 = vpack.c.b16 %v4304, %v4302
      %v4335 = vpack.c.b16 %v4307, %v4305
      %v4336 = vpack.c.b16 %v4308, %v4306
      %v4337 = vpack.c.b16 %v4311, %v4309
      %v4338 = vpack.c.b16 %v4312, %v4310
      %v4339 = vpack.c.b16 %v4315, %v4313
      %v4340 = vpack.c.b16 %v4316, %v4314
      %v4341 = vpack.c.b16 %v4319, %v4317
      %v4342 = vpack.c.b16 %v4320, %v4318
      %v4343 = vpack.c.b16 %v4323, %v4321
      %v4344 = vpack.c.b16 %v4324, %v4322
      %v4345 = vpack.c.b16 %v4327, %v4325
      %v4346 = vpack.c.b16 %v4328, %v4326
      %v4347 = vpack.c.b16 %v4331, %v4329
      %v4348 = vpack.c.b16 %v4332, %v4330
      %v4377 = vunpack.c.l.b16 %v4265
      %v4378 = vunpack.c.h.b16 %v4265
      %v4379 = vunpack.c.l.b16 %v4266
      %v4380 = vunpack.c.h.b16 %v4266
      %v4381 = vunpack.c.l.b16 %v4267
      %v4382 = vunpack.c.h.b16 %v4267
      %v4383 = vunpack.c.l.b16 %v4268
      %v4384 = vunpack.c.h.b16 %v4268
      %v4385 = vunpack.c.l.b16 %v4269
      %v4386 = vunpack.c.h.b16 %v4269
      %v4387 = vunpack.c.l.b16 %v4270
      %v4388 = vunpack.c.h.b16 %v4270
      %v4389 = vunpack.c.l.b16 %v4271
      %v4390 = vunpack.c.h.b16 %v4271
      %v4391 = vunpack.c.l.b16 %v4272
      %v4392 = vunpack.c.h.b16 %v4272
      %v4393 = vunpack.c.l.b16 %v4273
      %v4394 = vunpack.c.h.b16 %v4273
      %v4395 = vunpack.c.l.b16 %v4274
      %v4396 = vunpack.c.h.b16 %v4274
      %v4397 = vunpack.c.l.b16 %v4275
      %v4398 = vunpack.c.h.b16 %v4275
      %v4399 = vunpack.c.l.b16 %v4276
      %v4400 = vunpack.c.h.b16 %v4276
      %v4401 = vunpack.c.l.b16 %v4277
      %v4402 = vunpack.c.h.b16 %v4277
      %v4403 = vunpack.c.l.b16 %v4278
      %v4404 = vunpack.c.h.b16 %v4278
      %v4405 = vunpack.c.l.b16 %v4279
      %v4406 = vunpack.c.h.b16 %v4279
      %v4407 = vunpack.c.l.b16 %v4280
      %v4408 = vunpack.c.h.b16 %v4280
      %v4409 = vunpack.c.l.b16 %v4281
      %v4410 = vunpack.c.h.b16 %v4281
      %v4411 = vunpack.c.l.b16 %v4282
      %v4412 = vunpack.c.h.b16 %v4282
      %v4413 = vunpack.c.l.b16 %v4283
      %v4414 = vunpack.c.h.b16 %v4283
      %v4415 = vunpack.c.l.b16 %v4284
      %v4416 = vunpack.c.h.b16 %v4284
      %v4417 = vpack.c.b16 %v4379, %v4377
      %v4418 = vpack.c.b16 %v4380, %v4378
      %v4419 = vpack.c.b16 %v4383, %v4381
      %v4420 = vpack.c.b16 %v4384, %v4382
      %v4421 = vpack.c.b16 %v4387, %v4385
      %v4422 = vpack.c.b16 %v4388, %v4386
      %v4423 = vpack.c.b16 %v4391, %v4389
      %v4424 = vpack.c.b16 %v4392, %v4390
      %v4425 = vpack.c.b16 %v4395, %v4393
      %v4426 = vpack.c.b16 %v4396, %v4394
      %v4427 = vpack.c.b16 %v4399, %v4397
      %v4428 = vpack.c.b16 %v4400, %v4398
      %v4429 = vpack.c.b16 %v4403, %v4401
      %v4430 = vpack.c.b16 %v4404, %v4402
      %v4431 = vpack.c.b16 %v4407, %v4405
      %v4432 = vpack.c.b16 %v4408, %v4406
      %v4433 = vpack.c.b16 %v4411, %v4409
      %v4434 = vpack.c.b16 %v4412, %v4410
      %v4435 = vpack.c.b16 %v4415, %v4413
      %v4436 = vpack.c.b16 %v4416, %v4414
      %v4458 = vsel %vm1154, %v4334, 0
      %v4461 = vsel %vm1154, %v4336, 0
      %v4464 = vsel %vm1154, %v4338, 0
      %v4467 = vsel %vm1154, %v4340, 0
      %v4470 = vsel %vm1154, %v4342, 0
      %v4473 = vsel %vm1154, %v4344, 0
      %v4476 = vsel %vm1154, %v4346, 0
      %v4479 = vsel %vm1154, %v4348, 0
      %4481 = vmatprep.subr.bf16.mxu0 %v4432
      %4482 = vmatpush1.bf16.msra.mxu0 %v4431
      %4483 = vmatprep.subr.bf16.mxu0 %v4430
      %4484 = vmatpush1.bf16.msra.mxu0 %v4429
      %4485 = vmatprep.subr.bf16.mxu0 %v4428
      %4486 = vmatpush1.bf16.msra.mxu0 %v4427
      %4487 = vmatprep.subr.bf16.mxu0 %v4426
      %4488 = vmatpush1.bf16.msra.mxu0 %v4425
      %4489 = vmatprep.subr.bf16.mxu0 %v4424
      %4490 = vmatpush1.bf16.msra.mxu0 %v4423
      %4491 = vmatprep.subr.bf16.mxu0 %v4422
      %4492 = vmatpush1.bf16.msra.mxu0 %v4421
      %4493 = vmatprep.subr.bf16.mxu0 %v4420
      %4494 = vmatpush1.bf16.msra.mxu0 %v4419
      %4495 = vmatprep.subr.bf16.mxu0 %v4418
      %4496 = vmatpush1.bf16.msra.mxu0 %v4417
      %4497 = vmatprep.subr.bf16.mxu0 0
      %4498 = vmatpush2.bf16.msra.mxu0 0
      %4499 = vmatprep.subr.bf16.mxu0 0
      %4500 = vmatpush2.bf16.msra.mxu0 0
      %4501 = vmatprep.subr.bf16.mxu0 0
      %4502 = vmatpush2.bf16.msra.mxu0 0
      %4503 = vmatprep.subr.bf16.mxu0 0
      %4504 = vmatpush2.bf16.msra.mxu0 0
      %4505 = vmatprep.subr.bf16.mxu0 0
      %4506 = vmatpush2.bf16.msra.mxu0 0
      %4507 = vmatprep.subr.bf16.mxu0 0
      %4508 = vmatpush2.bf16.msra.mxu0 0
      %4509 = vmatprep.subr.bf16.mxu0 %v4436
      %4510 = vmatpush2.bf16.msra.mxu0 %v4435
      %4511 = vmatprep.subr.bf16.mxu0 %v4434
      %4512 = vmatpush2.bf16.msra.mxu0 %v4433
      %4513 = vmatprep.mubr.bf16.mxu0 %v4458
      %4514 = vmatmul.mubr.bf16.gmra.mxu0 %v4333
      %v4515 = vpop.f32.mrf.mxu0
      %v4516 = vadd.f32 0.0, %v4515
      %v4517 = vpop.f32.mrf.mxu0
      %v4518 = vadd.f32 0.0, %v4517
      %v4519 = vpop.f32.mrf.mxu0
      %v4520 = vadd.f32 0.0, %v4519
      %v4521 = vpop.f32.mrf.mxu0
      %v4522 = vadd.f32 0.0, %v4521
      %4523 = vmatprep.mubr.bf16.mxu0 %v4461
      %4524 = vmatmul.mubr.bf16.gmra.mxu0 %v4335
      %v4525 = vpop.f32.mrf.mxu0
      %v4526 = vadd.f32 0.0, %v4525
      %v4527 = vpop.f32.mrf.mxu0
      %v4528 = vadd.f32 0.0, %v4527
      %v4529 = vpop.f32.mrf.mxu0
      %v4530 = vadd.f32 0.0, %v4529
      %v4531 = vpop.f32.mrf.mxu0
      %v4532 = vadd.f32 0.0, %v4531
      %4533 = vmatprep.mubr.bf16.mxu0 %v4464
      %4534 = vmatmul.mubr.bf16.gmra.mxu0 %v4337
      %v4535 = vpop.f32.mrf.mxu0
      %v4536 = vadd.f32 0.0, %v4535
      %v4537 = vpop.f32.mrf.mxu0
      %v4538 = vadd.f32 0.0, %v4537
      %v4539 = vpop.f32.mrf.mxu0
      %v4540 = vadd.f32 0.0, %v4539
      %v4541 = vpop.f32.mrf.mxu0
      %v4542 = vadd.f32 0.0, %v4541
      %4543 = vmatprep.mubr.bf16.mxu0 %v4467
      %4544 = vmatmul.mubr.bf16.gmra.mxu0 %v4339
      %v4545 = vpop.f32.mrf.mxu0
      %v4546 = vadd.f32 0.0, %v4545
      %v4547 = vpop.f32.mrf.mxu0
      %v4548 = vadd.f32 0.0, %v4547
      %v4549 = vpop.f32.mrf.mxu0
      %v4550 = vadd.f32 0.0, %v4549
      %v4551 = vpop.f32.mrf.mxu0
      %v4552 = vadd.f32 0.0, %v4551
      %4553 = vmatprep.mubr.bf16.mxu0 %v4470
      %4554 = vmatmul.mubr.bf16.gmra.mxu0 %v4341
      %v4555 = vpop.f32.mrf.mxu0
      %v4556 = vadd.f32 0.0, %v4555
      %v4557 = vpop.f32.mrf.mxu0
      %v4558 = vadd.f32 0.0, %v4557
      %v4559 = vpop.f32.mrf.mxu0
      %v4560 = vadd.f32 0.0, %v4559
      %v4561 = vpop.f32.mrf.mxu0
      %v4562 = vadd.f32 0.0, %v4561
      %4563 = vmatprep.mubr.bf16.mxu0 %v4473
      %4564 = vmatmul.mubr.bf16.gmra.mxu0 %v4343
      %v4565 = vpop.f32.mrf.mxu0
      %v4566 = vadd.f32 0.0, %v4565
      %v4567 = vpop.f32.mrf.mxu0
      %v4568 = vadd.f32 0.0, %v4567
      %v4569 = vpop.f32.mrf.mxu0
      %v4570 = vadd.f32 0.0, %v4569
      %v4571 = vpop.f32.mrf.mxu0
      %v4572 = vadd.f32 0.0, %v4571
      %4573 = vmatprep.mubr.bf16.mxu0 %v4476
      %4574 = vmatmul.mubr.bf16.gmra.mxu0 %v4345
      %v4575 = vpop.f32.mrf.mxu0
      %v4576 = vadd.f32 0.0, %v4575
      %v4577 = vpop.f32.mrf.mxu0
      %v4578 = vadd.f32 0.0, %v4577
      %v4579 = vpop.f32.mrf.mxu0
      %v4580 = vadd.f32 0.0, %v4579
      %v4581 = vpop.f32.mrf.mxu0
      %v4582 = vadd.f32 0.0, %v4581
      %4583 = vmatprep.mubr.bf16.mxu0 %v4479
      %4584 = vmatmul.mubr.bf16.gmra.mxu0 %v4347
      %v4585 = vpop.f32.mrf.mxu0
      %v4586 = vadd.f32 0.0, %v4585
      %v4587 = vpop.f32.mrf.mxu0
      %v4588 = vadd.f32 0.0, %v4587
      %v4589 = vpop.f32.mrf.mxu0
      %v4590 = vadd.f32 0.0, %v4589
      %v4591 = vpop.f32.mrf.mxu0
      %v4592 = vadd.f32 0.0, %v4591
      %4593 = vdwg.mxu0
      %v4594 = vadd.f32 %v4214, %v4516
      %v4595 = vadd.f32 %v4215, %v4518
      %v4596 = vadd.f32 %v4216, %v4520
      %v4597 = vadd.f32 %v4217, %v4522
      %v4598 = vadd.f32 %v4218, %v4526
      %v4599 = vadd.f32 %v4219, %v4528
      %v4600 = vadd.f32 %v4220, %v4530
      %v4601 = vadd.f32 %v4221, %v4532
      %v4602 = vadd.f32 %v4222, %v4536
      %v4603 = vadd.f32 %v4223, %v4538
      %v4604 = vadd.f32 %v4224, %v4540
      %v4605 = vadd.f32 %v4225, %v4542
      %v4606 = vadd.f32 %v4226, %v4546
      %v4607 = vadd.f32 %v4227, %v4548
      %v4608 = vadd.f32 %v4228, %v4550
      %v4609 = vadd.f32 %v4229, %v4552
      %v4610 = vadd.f32 %v4230, %v4556
      %v4611 = vadd.f32 %v4231, %v4558
      %v4612 = vadd.f32 %v4232, %v4560
      %v4613 = vadd.f32 %v4233, %v4562
      %v4614 = vadd.f32 %v4234, %v4566
      %v4615 = vadd.f32 %v4235, %v4568
      %v4616 = vadd.f32 %v4236, %v4570
      %v4617 = vadd.f32 %v4237, %v4572
      %v4618 = vadd.f32 %v4238, %v4576
      %v4619 = vadd.f32 %v4239, %v4578
      %v4620 = vadd.f32 %v4240, %v4580
      %v4621 = vadd.f32 %v4241, %v4582
      %v4622 = vadd.f32 %v4242, %v4586
      %v4623 = vadd.f32 %v4243, %v4588
      %v4624 = vadd.f32 %v4244, %v4590
      %v4625 = vadd.f32 %v4245, %v4592
      %v4626 = vld [vmem:[%s9] sm:$0x3]
      %v4628 = vlaneseq
      %v4629 = vshrl.u32 %v4628, 7
      %v4630 = vsub.s32 0, %v4629
      %v4631 = vrot.slane %v4626, %v4630
      %v4632 = vlaneseq
      %v4633 = vshrl.u32 %v4632, 7
      %v4634 = vsub.s32 1, %v4633
      %v4635 = vrot.slane %v4626, %v4634
      %v4638 = vadd.f32 %v4594, %v4631
      %v4639 = vadd.f32 %v4595, %v4635
      %v4640 = vadd.f32 %v4596, %v4631
      %v4641 = vadd.f32 %v4597, %v4635
      %v4642 = vadd.f32 %v4598, %v4631
      %v4643 = vadd.f32 %v4599, %v4635
      %v4644 = vadd.f32 %v4600, %v4631
      %v4645 = vadd.f32 %v4601, %v4635
      %v4646 = vadd.f32 %v4602, %v4631
      %v4647 = vadd.f32 %v4603, %v4635
      %v4648 = vadd.f32 %v4604, %v4631
      %v4649 = vadd.f32 %v4605, %v4635
      %v4650 = vadd.f32 %v4606, %v4631
      %v4651 = vadd.f32 %v4607, %v4635
      %v4652 = vadd.f32 %v4608, %v4631
      %v4653 = vadd.f32 %v4609, %v4635
      %v4654 = vadd.f32 %v4610, %v4631
      %v4655 = vadd.f32 %v4611, %v4635
      %v4656 = vadd.f32 %v4612, %v4631
      %v4657 = vadd.f32 %v4613, %v4635
      %v4658 = vadd.f32 %v4614, %v4631
      %v4659 = vadd.f32 %v4615, %v4635
      %v4660 = vadd.f32 %v4616, %v4631
      %v4661 = vadd.f32 %v4617, %v4635
      %v4662 = vadd.f32 %v4618, %v4631
      %v4663 = vadd.f32 %v4619, %v4635
      %v4664 = vadd.f32 %v4620, %v4631
      %v4665 = vadd.f32 %v4621, %v4635
      %v4666 = vadd.f32 %v4622, %v4631
      %v4667 = vadd.f32 %v4623, %v4635
      %v4668 = vadd.f32 %v4624, %v4631
      %v4669 = vadd.f32 %v4625, %v4635
      %v4670 = vmul.f32 %v824, 2.0
      %v4671 = vmul.f32 %v826, 2.0
      %v4672 = vmul.f32 %v828, 2.0
      %v4673 = vmul.f32 %v830, 2.0
      %v4674 = vmul.f32 %v834, 2.0
      %v4675 = vmul.f32 %v836, 2.0
      %v4676 = vmul.f32 %v838, 2.0
      %v4677 = vmul.f32 %v840, 2.0
      %v4678 = vmul.f32 %v844, 2.0
      %v4679 = vmul.f32 %v846, 2.0
      %v4680 = vmul.f32 %v848, 2.0
      %v4681 = vmul.f32 %v850, 2.0
      %v4682 = vmul.f32 %v854, 2.0
      %v4683 = vmul.f32 %v856, 2.0
      %v4684 = vmul.f32 %v858, 2.0
      %v4685 = vmul.f32 %v860, 2.0
      %v4686 = vmul.f32 %v864, 2.0
      %v4687 = vmul.f32 %v866, 2.0
      %v4688 = vmul.f32 %v868, 2.0
      %v4689 = vmul.f32 %v870, 2.0
      %v4690 = vmul.f32 %v874, 2.0
      %v4691 = vmul.f32 %v876, 2.0
      %v4692 = vmul.f32 %v878, 2.0
      %v4693 = vmul.f32 %v880, 2.0
      %v4694 = vmul.f32 %v884, 2.0
      %v4695 = vmul.f32 %v886, 2.0
      %v4696 = vmul.f32 %v888, 2.0
      %v4697 = vmul.f32 %v890, 2.0
      %v4698 = vmul.f32 %v894, 2.0
      %v4699 = vmul.f32 %v896, 2.0
      %v4700 = vmul.f32 %v898, 2.0
      %v4701 = vmul.f32 %v900, 2.0
      %v4702 = vmul.f32 %v4670, %v824
      %v4703 = vmul.f32 %v4671, %v826
      %v4704 = vmul.f32 %v4672, %v828
      %v4705 = vmul.f32 %v4673, %v830
      %v4706 = vmul.f32 %v4674, %v834
      %v4707 = vmul.f32 %v4675, %v836
      %v4708 = vmul.f32 %v4676, %v838
      %v4709 = vmul.f32 %v4677, %v840
      %v4710 = vmul.f32 %v4678, %v844
      %v4711 = vmul.f32 %v4679, %v846
      %v4712 = vmul.f32 %v4680, %v848
      %v4713 = vmul.f32 %v4681, %v850
      %v4714 = vmul.f32 %v4682, %v854
      %v4715 = vmul.f32 %v4683, %v856
      %v4716 = vmul.f32 %v4684, %v858
      %v4717 = vmul.f32 %v4685, %v860
      %v4718 = vmul.f32 %v4686, %v864
      %v4719 = vmul.f32 %v4687, %v866
      %v4720 = vmul.f32 %v4688, %v868
      %v4721 = vmul.f32 %v4689, %v870
      %v4722 = vmul.f32 %v4690, %v874
      %v4723 = vmul.f32 %v4691, %v876
      %v4724 = vmul.f32 %v4692, %v878
      %v4725 = vmul.f32 %v4693, %v880
      %v4726 = vmul.f32 %v4694, %v884
      %v4727 = vmul.f32 %v4695, %v886
      %v4728 = vmul.f32 %v4696, %v888
      %v4729 = vmul.f32 %v4697, %v890
      %v4730 = vmul.f32 %v4698, %v894
      %v4731 = vmul.f32 %v4699, %v896
      %v4732 = vmul.f32 %v4700, %v898
      %v4733 = vmul.f32 %v4701, %v900
      %v4734 = vsub.f32 %v4702, 1.0
      %v4735 = vsub.f32 %v4703, 1.0
      %v4736 = vsub.f32 %v4704, 1.0
      %v4737 = vsub.f32 %v4705, 1.0
      %v4738 = vsub.f32 %v4706, 1.0
      %v4739 = vsub.f32 %v4707, 1.0
      %v4740 = vsub.f32 %v4708, 1.0
      %v4741 = vsub.f32 %v4709, 1.0
      %v4742 = vsub.f32 %v4710, 1.0
      %v4743 = vsub.f32 %v4711, 1.0
      %v4744 = vsub.f32 %v4712, 1.0
      %v4745 = vsub.f32 %v4713, 1.0
      %v4746 = vsub.f32 %v4714, 1.0
      %v4747 = vsub.f32 %v4715, 1.0
      %v4748 = vsub.f32 %v4716, 1.0
      %v4749 = vsub.f32 %v4717, 1.0
      %v4750 = vsub.f32 %v4718, 1.0
      %v4751 = vsub.f32 %v4719, 1.0
      %v4752 = vsub.f32 %v4720, 1.0
      %v4753 = vsub.f32 %v4721, 1.0
      %v4754 = vsub.f32 %v4722, 1.0
      %v4755 = vsub.f32 %v4723, 1.0
      %v4756 = vsub.f32 %v4724, 1.0
      %v4757 = vsub.f32 %v4725, 1.0
      %v4758 = vsub.f32 %v4726, 1.0
      %v4759 = vsub.f32 %v4727, 1.0
      %v4760 = vsub.f32 %v4728, 1.0
      %v4761 = vsub.f32 %v4729, 1.0
      %v4762 = vsub.f32 %v4730, 1.0
      %v4763 = vsub.f32 %v4731, 1.0
      %v4764 = vsub.f32 %v4732, 1.0
      %v4765 = vsub.f32 %v4733, 1.0
      %v4766 = vmul.f32 %v2759, 2.0
      %v4767 = vmul.f32 %v2760, 2.0
      %v4768 = vmul.f32 %v2761, 2.0
      %v4769 = vmul.f32 %v2762, 2.0
      %v4770 = vmul.f32 %v2763, 2.0
      %v4771 = vmul.f32 %v2764, 2.0
      %v4772 = vmul.f32 %v2765, 2.0
      %v4773 = vmul.f32 %v2766, 2.0
      %v4774 = vmul.f32 %v2767, 2.0
      %v4775 = vmul.f32 %v2768, 2.0
      %v4776 = vmul.f32 %v2769, 2.0
      %v4777 = vmul.f32 %v2770, 2.0
      %v4778 = vmul.f32 %v2771, 2.0
      %v4779 = vmul.f32 %v2772, 2.0
      %v4780 = vmul.f32 %v2773, 2.0
      %v4781 = vmul.f32 %v2774, 2.0
      %v4782 = vmul.f32 %v2775, 2.0
      %v4783 = vmul.f32 %v2776, 2.0
      %v4784 = vmul.f32 %v2777, 2.0
      %v4785 = vmul.f32 %v2778, 2.0
      %v4786 = vmul.f32 %v2779, 2.0
      %v4787 = vmul.f32 %v2780, 2.0
      %v4788 = vmul.f32 %v2781, 2.0
      %v4789 = vmul.f32 %v2782, 2.0
      %v4790 = vmul.f32 %v2783, 2.0
      %v4791 = vmul.f32 %v2784, 2.0
      %v4792 = vmul.f32 %v2785, 2.0
      %v4793 = vmul.f32 %v2786, 2.0
      %v4794 = vmul.f32 %v2787, 2.0
      %v4795 = vmul.f32 %v2788, 2.0
      %v4796 = vmul.f32 %v2789, 2.0
      %v4797 = vmul.f32 %v2790, 2.0
      %v4798 = vmul.f32 %v4766, %v2759
      %v4799 = vmul.f32 %v4767, %v2760
      %v4800 = vmul.f32 %v4768, %v2761
      %v4801 = vmul.f32 %v4769, %v2762
      %v4802 = vmul.f32 %v4770, %v2763
      %v4803 = vmul.f32 %v4771, %v2764
      %v4804 = vmul.f32 %v4772, %v2765
      %v4805 = vmul.f32 %v4773, %v2766
      %v4806 = vmul.f32 %v4774, %v2767
      %v4807 = vmul.f32 %v4775, %v2768
      %v4808 = vmul.f32 %v4776, %v2769
      %v4809 = vmul.f32 %v4777, %v2770
      %v4810 = vmul.f32 %v4778, %v2771
      %v4811 = vmul.f32 %v4779, %v2772
      %v4812 = vmul.f32 %v4780, %v2773
      %v4813 = vmul.f32 %v4781, %v2774
      %v4814 = vmul.f32 %v4782, %v2775
      %v4815 = vmul.f32 %v4783, %v2776
      %v4816 = vmul.f32 %v4784, %v2777
      %v4817 = vmul.f32 %v4785, %v2778
      %v4818 = vmul.f32 %v4786, %v2779
      %v4819 = vmul.f32 %v4787, %v2780
      %v4820 = vmul.f32 %v4788, %v2781
      %v4821 = vmul.f32 %v4789, %v2782
      %v4822 = vmul.f32 %v4790, %v2783
      %v4823 = vmul.f32 %v4791, %v2784
      %v4824 = vmul.f32 %v4792, %v2785
      %v4825 = vmul.f32 %v4793, %v2786
      %v4826 = vmul.f32 %v4794, %v2787
      %v4827 = vmul.f32 %v4795, %v2788
      %v4828 = vmul.f32 %v4796, %v2789
      %v4829 = vmul.f32 %v4797, %v2790
      %v4830 = vsub.f32 %v4798, 1.0
      %v4831 = vsub.f32 %v4799, 1.0
      %v4832 = vsub.f32 %v4800, 1.0
      %v4833 = vsub.f32 %v4801, 1.0
      %v4834 = vsub.f32 %v4802, 1.0
      %v4835 = vsub.f32 %v4803, 1.0
      %v4836 = vsub.f32 %v4804, 1.0
      %v4837 = vsub.f32 %v4805, 1.0
      %v4838 = vsub.f32 %v4806, 1.0
      %v4839 = vsub.f32 %v4807, 1.0
      %v4840 = vsub.f32 %v4808, 1.0
      %v4841 = vsub.f32 %v4809, 1.0
      %v4842 = vsub.f32 %v4810, 1.0
      %v4843 = vsub.f32 %v4811, 1.0
      %v4844 = vsub.f32 %v4812, 1.0
      %v4845 = vsub.f32 %v4813, 1.0
      %v4846 = vsub.f32 %v4814, 1.0
      %v4847 = vsub.f32 %v4815, 1.0
      %v4848 = vsub.f32 %v4816, 1.0
      %v4849 = vsub.f32 %v4817, 1.0
      %v4850 = vsub.f32 %v4818, 1.0
      %v4851 = vsub.f32 %v4819, 1.0
      %v4852 = vsub.f32 %v4820, 1.0
      %v4853 = vsub.f32 %v4821, 1.0
      %v4854 = vsub.f32 %v4822, 1.0
      %v4855 = vsub.f32 %v4823, 1.0
      %v4856 = vsub.f32 %v4824, 1.0
      %v4857 = vsub.f32 %v4825, 1.0
      %v4858 = vsub.f32 %v4826, 1.0
      %v4859 = vsub.f32 %v4827, 1.0
      %v4860 = vsub.f32 %v4828, 1.0
      %v4861 = vsub.f32 %v4829, 1.0
      %v4862 = vadd.f32 %v4734, %v4830
      %v4863 = vadd.f32 %v4735, %v4831
      %v4864 = vadd.f32 %v4736, %v4832
      %v4865 = vadd.f32 %v4737, %v4833
      %v4866 = vadd.f32 %v4738, %v4834
      %v4867 = vadd.f32 %v4739, %v4835
      %v4868 = vadd.f32 %v4740, %v4836
      %v4869 = vadd.f32 %v4741, %v4837
      %v4870 = vadd.f32 %v4742, %v4838
      %v4871 = vadd.f32 %v4743, %v4839
      %v4872 = vadd.f32 %v4744, %v4840
      %v4873 = vadd.f32 %v4745, %v4841
      %v4874 = vadd.f32 %v4746, %v4842
      %v4875 = vadd.f32 %v4747, %v4843
      %v4876 = vadd.f32 %v4748, %v4844
      %v4877 = vadd.f32 %v4749, %v4845
      %v4878 = vadd.f32 %v4750, %v4846
      %v4879 = vadd.f32 %v4751, %v4847
      %v4880 = vadd.f32 %v4752, %v4848
      %v4881 = vadd.f32 %v4753, %v4849
      %v4882 = vadd.f32 %v4754, %v4850
      %v4883 = vadd.f32 %v4755, %v4851
      %v4884 = vadd.f32 %v4756, %v4852
      %v4885 = vadd.f32 %v4757, %v4853
      %v4886 = vadd.f32 %v4758, %v4854
      %v4887 = vadd.f32 %v4759, %v4855
      %v4888 = vadd.f32 %v4760, %v4856
      %v4889 = vadd.f32 %v4761, %v4857
      %v4890 = vadd.f32 %v4762, %v4858
      %v4891 = vadd.f32 %v4763, %v4859
      %v4892 = vadd.f32 %v4764, %v4860
      %v4893 = vadd.f32 %v4765, %v4861
      %v4894 = vmul.f32 %v4638, 2.0
      %v4895 = vmul.f32 %v4639, 2.0
      %v4896 = vmul.f32 %v4640, 2.0
      %v4897 = vmul.f32 %v4641, 2.0
      %v4898 = vmul.f32 %v4642, 2.0
      %v4899 = vmul.f32 %v4643, 2.0
      %v4900 = vmul.f32 %v4644, 2.0
      %v4901 = vmul.f32 %v4645, 2.0
      %v4902 = vmul.f32 %v4646, 2.0
      %v4903 = vmul.f32 %v4647, 2.0
      %v4904 = vmul.f32 %v4648, 2.0
      %v4905 = vmul.f32 %v4649, 2.0
      %v4906 = vmul.f32 %v4650, 2.0
      %v4907 = vmul.f32 %v4651, 2.0
      %v4908 = vmul.f32 %v4652, 2.0
      %v4909 = vmul.f32 %v4653, 2.0
      %v4910 = vmul.f32 %v4654, 2.0
      %v4911 = vmul.f32 %v4655, 2.0
      %v4912 = vmul.f32 %v4656, 2.0
      %v4913 = vmul.f32 %v4657, 2.0
      %v4914 = vmul.f32 %v4658, 2.0
      %v4915 = vmul.f32 %v4659, 2.0
      %v4916 = vmul.f32 %v4660, 2.0
      %v4917 = vmul.f32 %v4661, 2.0
      %v4918 = vmul.f32 %v4662, 2.0
      %v4919 = vmul.f32 %v4663, 2.0
      %v4920 = vmul.f32 %v4664, 2.0
      %v4921 = vmul.f32 %v4665, 2.0
      %v4922 = vmul.f32 %v4666, 2.0
      %v4923 = vmul.f32 %v4667, 2.0
      %v4924 = vmul.f32 %v4668, 2.0
      %v4925 = vmul.f32 %v4669, 2.0
      %v4926 = vmul.f32 %v4894, %v4638
      %v4927 = vmul.f32 %v4895, %v4639
      %v4928 = vmul.f32 %v4896, %v4640
      %v4929 = vmul.f32 %v4897, %v4641
      %v4930 = vmul.f32 %v4898, %v4642
      %v4931 = vmul.f32 %v4899, %v4643
      %v4932 = vmul.f32 %v4900, %v4644
      %v4933 = vmul.f32 %v4901, %v4645
      %v4934 = vmul.f32 %v4902, %v4646
      %v4935 = vmul.f32 %v4903, %v4647
      %v4936 = vmul.f32 %v4904, %v4648
      %v4937 = vmul.f32 %v4905, %v4649
      %v4938 = vmul.f32 %v4906, %v4650
      %v4939 = vmul.f32 %v4907, %v4651
      %v4940 = vmul.f32 %v4908, %v4652
      %v4941 = vmul.f32 %v4909, %v4653
      %v4942 = vmul.f32 %v4910, %v4654
      %v4943 = vmul.f32 %v4911, %v4655
      %v4944 = vmul.f32 %v4912, %v4656
      %v4945 = vmul.f32 %v4913, %v4657
      %v4946 = vmul.f32 %v4914, %v4658
      %v4947 = vmul.f32 %v4915, %v4659
      %v4948 = vmul.f32 %v4916, %v4660
      %v4949 = vmul.f32 %v4917, %v4661
      %v4950 = vmul.f32 %v4918, %v4662
      %v4951 = vmul.f32 %v4919, %v4663
      %v4952 = vmul.f32 %v4920, %v4664
      %v4953 = vmul.f32 %v4921, %v4665
      %v4954 = vmul.f32 %v4922, %v4666
      %v4955 = vmul.f32 %v4923, %v4667
      %v4956 = vmul.f32 %v4924, %v4668
      %v4957 = vmul.f32 %v4925, %v4669
      %v4958 = vsub.f32 %v4926, 1.0
      %v4959 = vsub.f32 %v4927, 1.0
      %v4960 = vsub.f32 %v4928, 1.0
      %v4961 = vsub.f32 %v4929, 1.0
      %v4962 = vsub.f32 %v4930, 1.0
      %v4963 = vsub.f32 %v4931, 1.0
      %v4964 = vsub.f32 %v4932, 1.0
      %v4965 = vsub.f32 %v4933, 1.0
      %v4966 = vsub.f32 %v4934, 1.0
      %v4967 = vsub.f32 %v4935, 1.0
      %v4968 = vsub.f32 %v4936, 1.0
      %v4969 = vsub.f32 %v4937, 1.0
      %v4970 = vsub.f32 %v4938, 1.0
      %v4971 = vsub.f32 %v4939, 1.0
      %v4972 = vsub.f32 %v4940, 1.0
      %v4973 = vsub.f32 %v4941, 1.0
      %v4974 = vsub.f32 %v4942, 1.0
      %v4975 = vsub.f32 %v4943, 1.0
      %v4976 = vsub.f32 %v4944, 1.0
      %v4977 = vsub.f32 %v4945, 1.0
      %v4978 = vsub.f32 %v4946, 1.0
      %v4979 = vsub.f32 %v4947, 1.0
      %v4980 = vsub.f32 %v4948, 1.0
      %v4981 = vsub.f32 %v4949, 1.0
      %v4982 = vsub.f32 %v4950, 1.0
      %v4983 = vsub.f32 %v4951, 1.0
      %v4984 = vsub.f32 %v4952, 1.0
      %v4985 = vsub.f32 %v4953, 1.0
      %v4986 = vsub.f32 %v4954, 1.0
      %v4987 = vsub.f32 %v4955, 1.0
      %v4988 = vsub.f32 %v4956, 1.0
      %v4989 = vsub.f32 %v4957, 1.0
      %v4990 = vadd.f32 %v4862, %v4958
      %v4991 = vadd.f32 %v4863, %v4959
      %v4992 = vadd.f32 %v4864, %v4960
      %v4993 = vadd.f32 %v4865, %v4961
      %v4994 = vadd.f32 %v4866, %v4962
      %v4995 = vadd.f32 %v4867, %v4963
      %v4996 = vadd.f32 %v4868, %v4964
      %v4997 = vadd.f32 %v4869, %v4965
      %v4998 = vadd.f32 %v4870, %v4966
      %v4999 = vadd.f32 %v4871, %v4967
      %v5000 = vadd.f32 %v4872, %v4968
      %v5001 = vadd.f32 %v4873, %v4969
      %v5002 = vadd.f32 %v4874, %v4970
      %v5003 = vadd.f32 %v4875, %v4971
      %v5004 = vadd.f32 %v4876, %v4972
      %v5005 = vadd.f32 %v4877, %v4973
      %v5006 = vadd.f32 %v4878, %v4974
      %v5007 = vadd.f32 %v4879, %v4975
      %v5008 = vadd.f32 %v4880, %v4976
      %v5009 = vadd.f32 %v4881, %v4977
      %v5010 = vadd.f32 %v4882, %v4978
      %v5011 = vadd.f32 %v4883, %v4979
      %v5012 = vadd.f32 %v4884, %v4980
      %v5013 = vadd.f32 %v4885, %v4981
      %v5014 = vadd.f32 %v4886, %v4982
      %v5015 = vadd.f32 %v4887, %v4983
      %v5016 = vadd.f32 %v4888, %v4984
      %v5017 = vadd.f32 %v4889, %v4985
      %v5018 = vadd.f32 %v4890, %v4986
      %v5019 = vadd.f32 %v4891, %v4987
      %v5020 = vadd.f32 %v4892, %v4988
      %v5021 = vadd.f32 %v4893, %v4989
      %v5022 = vld [vmem:[%s10] sm:$0x3]
      %v5024 = vlaneseq
      %v5025 = vshrl.u32 %v5024, 7
      %v5026 = vsub.s32 0, %v5025
      %v5027 = vrot.slane %v5022, %v5026
      %v5028 = vlaneseq
      %v5029 = vshrl.u32 %v5028, 7
      %v5030 = vsub.s32 1, %v5029
      %v5031 = vrot.slane %v5022, %v5030
      %v5034 = vadd.f32 %v4990, %v5027
      %v5035 = vadd.f32 %v4991, %v5031
      %v5036 = vadd.f32 %v4992, %v5027
      %v5037 = vadd.f32 %v4993, %v5031
      %v5038 = vadd.f32 %v4994, %v5027
      %v5039 = vadd.f32 %v4995, %v5031
      %v5040 = vadd.f32 %v4996, %v5027
      %v5041 = vadd.f32 %v4997, %v5031
      %v5042 = vadd.f32 %v4998, %v5027
      %v5043 = vadd.f32 %v4999, %v5031
      %v5044 = vadd.f32 %v5000, %v5027
      %v5045 = vadd.f32 %v5001, %v5031
      %v5046 = vadd.f32 %v5002, %v5027
      %v5047 = vadd.f32 %v5003, %v5031
      %v5048 = vadd.f32 %v5004, %v5027
      %v5049 = vadd.f32 %v5005, %v5031
      %v5050 = vadd.f32 %v5006, %v5027
      %v5051 = vadd.f32 %v5007, %v5031
      %v5052 = vadd.f32 %v5008, %v5027
      %v5053 = vadd.f32 %v5009, %v5031
      %v5054 = vadd.f32 %v5010, %v5027
      %v5055 = vadd.f32 %v5011, %v5031
      %v5056 = vadd.f32 %v5012, %v5027
      %v5057 = vadd.f32 %v5013, %v5031
      %v5058 = vadd.f32 %v5014, %v5027
      %v5059 = vadd.f32 %v5015, %v5031
      %v5060 = vadd.f32 %v5016, %v5027
      %v5061 = vadd.f32 %v5017, %v5031
      %v5062 = vadd.f32 %v5018, %v5027
      %v5063 = vadd.f32 %v5019, %v5031
      %v5064 = vadd.f32 %v5020, %v5027
      %v5065 = vadd.f32 %v5021, %v5031
      %v5066 = vmul.f32 %v5034, 0.5
      %v5067 = vmul.f32 %v5036, 0.5
      %v5068 = vmul.f32 %v5038, 0.5
      %v5069 = vmul.f32 %v5040, 0.5
      %v5070 = vmul.f32 %v5042, 0.5
      %v5071 = vmul.f32 %v5044, 0.5
      %v5072 = vmul.f32 %v5046, 0.5
      %v5073 = vmul.f32 %v5048, 0.5
      %v5074 = vmul.f32 %v5050, 0.5
      %v5075 = vmul.f32 %v5052, 0.5
      %v5076 = vmul.f32 %v5054, 0.5
      %v5077 = vmul.f32 %v5056, 0.5
      %v5078 = vmul.f32 %v5058, 0.5
      %v5079 = vmul.f32 %v5060, 0.5
      %v5080 = vmul.f32 %v5062, 0.5
      %v5081 = vmul.f32 %v5064, 0.5
      %v5082 = vtanh.pop %v5066
      %v5083 = vtanh.pop %v5067
      %v5084 = vtanh.pop %v5068
      %v5085 = vtanh.pop %v5069
      %v5086 = vtanh.pop %v5070
      %v5087 = vtanh.pop %v5071
      %v5088 = vtanh.pop %v5072
      %v5089 = vtanh.pop %v5073
      %v5090 = vtanh.pop %v5074
      %v5091 = vtanh.pop %v5075
      %v5092 = vtanh.pop %v5076
      %v5093 = vtanh.pop %v5077
      %v5094 = vtanh.pop %v5078
      %v5095 = vtanh.pop %v5079
      %v5096 = vtanh.pop %v5080
      %v5097 = vtanh.pop %v5081
      %v5098 = vmul.f32 %v5082, 0.5
      %v5099 = vmul.f32 %v5083, 0.5
      %v5100 = vmul.f32 %v5084, 0.5
      %v5101 = vmul.f32 %v5085, 0.5
      %v5102 = vmul.f32 %v5086, 0.5
      %v5103 = vmul.f32 %v5087, 0.5
      %v5104 = vmul.f32 %v5088, 0.5
      %v5105 = vmul.f32 %v5089, 0.5
      %v5106 = vmul.f32 %v5090, 0.5
      %v5107 = vmul.f32 %v5091, 0.5
      %v5108 = vmul.f32 %v5092, 0.5
      %v5109 = vmul.f32 %v5093, 0.5
      %v5110 = vmul.f32 %v5094, 0.5
      %v5111 = vmul.f32 %v5095, 0.5
      %v5112 = vmul.f32 %v5096, 0.5
      %v5113 = vmul.f32 %v5097, 0.5
      %v5114 = vadd.f32 %v5098, 0.5
      %v5115 = vadd.f32 %v5099, 0.5
      %v5116 = vadd.f32 %v5100, 0.5
      %v5117 = vadd.f32 %v5101, 0.5
      %v5118 = vadd.f32 %v5102, 0.5
      %v5119 = vadd.f32 %v5103, 0.5
      %v5120 = vadd.f32 %v5104, 0.5
      %v5121 = vadd.f32 %v5105, 0.5
      %v5122 = vadd.f32 %v5106, 0.5
      %v5123 = vadd.f32 %v5107, 0.5
      %v5124 = vadd.f32 %v5108, 0.5
      %v5125 = vadd.f32 %v5109, 0.5
      %v5126 = vadd.f32 %v5110, 0.5
      %v5127 = vadd.f32 %v5111, 0.5
      %v5128 = vadd.f32 %v5112, 0.5
      %v5129 = vadd.f32 %v5113, 0.5
      %v5130 = vtanh.pop %v5035
      %v5131 = vtanh.pop %v5037
      %v5132 = vtanh.pop %v5039
      %v5133 = vtanh.pop %v5041
      %v5134 = vtanh.pop %v5043
      %v5135 = vtanh.pop %v5045
      %v5136 = vtanh.pop %v5047
      %v5137 = vtanh.pop %v5049
      %v5138 = vtanh.pop %v5051
      %v5139 = vtanh.pop %v5053
      %v5140 = vtanh.pop %v5055
      %v5141 = vtanh.pop %v5057
      %v5142 = vtanh.pop %v5059
      %v5143 = vtanh.pop %v5061
      %v5144 = vtanh.pop %v5063
      %v5145 = vtanh.pop %v5065
      %v5146 = vld [vmem:[%s580] sm:$0xff]
      %v5147 = vld [vmem:[%s580 + $0x8] sm:$0xff]
      %v5148 = vld [vmem:[%s580 + $0x10] sm:$0xff]
      %v5149 = vld [vmem:[%s580 + $0x18] sm:$0xff]
      %v5150 = vld [vmem:[%s580 + $0x20] sm:$0xff]
      %v5151 = vld [vmem:[%s580 + $0x28] sm:$0xff]
      %v5152 = vld [vmem:[%s580 + $0x30] sm:$0xff]
      %v5153 = vld [vmem:[%s580 + $0x38] sm:$0xff]
      %v5154 = vld [vmem:[%s580 + $0x40] sm:$0xff]
      %v5155 = vld [vmem:[%s580 + $0x48] sm:$0xff]
      %v5156 = vld [vmem:[%s580 + $0x50] sm:$0xff]
      %v5157 = vld [vmem:[%s580 + $0x58] sm:$0xff]
      %v5158 = vld [vmem:[%s580 + $0x60] sm:$0xff]
      %v5159 = vld [vmem:[%s580 + $0x68] sm:$0xff]
      %v5160 = vld [vmem:[%s580 + $0x70] sm:$0xff]
      %v5161 = vld [vmem:[%s580 + $0x78] sm:$0xff]
      %5178 = vrot.lane.b32.xlu0 %v5146, 64
      %v5179 = vpop.permute.xlu0 %5178
      %5180 = vrot.lane.b32.xlu0 %v5147, 64
      %v5181 = vpop.permute.xlu0 %5180
      %5182 = vrot.lane.b32.xlu0 %v5148, 64
      %v5183 = vpop.permute.xlu0 %5182
      %5184 = vrot.lane.b32.xlu0 %v5149, 64
      %v5185 = vpop.permute.xlu0 %5184
      %5186 = vrot.lane.b32.xlu0 %v5150, 64
      %v5187 = vpop.permute.xlu0 %5186
      %5188 = vrot.lane.b32.xlu0 %v5151, 64
      %v5189 = vpop.permute.xlu0 %5188
      %5190 = vrot.lane.b32.xlu0 %v5152, 64
      %v5191 = vpop.permute.xlu0 %5190
      %5192 = vrot.lane.b32.xlu0 %v5153, 64
      %v5193 = vpop.permute.xlu0 %5192
      %5194 = vrot.lane.b32.xlu0 %v5154, 64
      %v5195 = vpop.permute.xlu0 %5194
      %5196 = vrot.lane.b32.xlu0 %v5155, 64
      %v5197 = vpop.permute.xlu0 %5196
      %5198 = vrot.lane.b32.xlu0 %v5156, 64
      %v5199 = vpop.permute.xlu0 %5198
      %5200 = vrot.lane.b32.xlu0 %v5157, 64
      %v5201 = vpop.permute.xlu0 %5200
      %5202 = vrot.lane.b32.xlu0 %v5158, 64
      %v5203 = vpop.permute.xlu0 %5202
      %5204 = vrot.lane.b32.xlu0 %v5159, 64
      %v5205 = vpop.permute.xlu0 %5204
      %5206 = vrot.lane.b32.xlu0 %v5160, 64
      %v5207 = vpop.permute.xlu0 %5206
      %5208 = vrot.lane.b32.xlu0 %v5161, 64
      %v5209 = vpop.permute.xlu0 %5208
      %v5226 = vmul.f32 %v5114, %v5179
      %v5227 = vmul.f32 %v5115, %v5181
      %v5228 = vmul.f32 %v5116, %v5183
      %v5229 = vmul.f32 %v5117, %v5185
      %v5230 = vmul.f32 %v5118, %v5187
      %v5231 = vmul.f32 %v5119, %v5189
      %v5232 = vmul.f32 %v5120, %v5191
      %v5233 = vmul.f32 %v5121, %v5193
      %v5234 = vmul.f32 %v5122, %v5195
      %v5235 = vmul.f32 %v5123, %v5197
      %v5236 = vmul.f32 %v5124, %v5199
      %v5237 = vmul.f32 %v5125, %v5201
      %v5238 = vmul.f32 %v5126, %v5203
      %v5239 = vmul.f32 %v5127, %v5205
      %v5240 = vmul.f32 %v5128, %v5207
      %v5241 = vmul.f32 %v5129, %v5209
      %v5242 = vmul.f32 %v5114, %v5130
      %v5243 = vmul.f32 %v5115, %v5131
      %v5244 = vmul.f32 %v5116, %v5132
      %v5245 = vmul.f32 %v5117, %v5133
      %v5246 = vmul.f32 %v5118, %v5134
      %v5247 = vmul.f32 %v5119, %v5135
      %v5248 = vmul.f32 %v5120, %v5136
      %v5249 = vmul.f32 %v5121, %v5137
      %v5250 = vmul.f32 %v5122, %v5138
      %v5251 = vmul.f32 %v5123, %v5139
      %v5252 = vmul.f32 %v5124, %v5140
      %v5253 = vmul.f32 %v5125, %v5141
      %v5254 = vmul.f32 %v5126, %v5142
      %v5255 = vmul.f32 %v5127, %v5143
      %v5256 = vmul.f32 %v5128, %v5144
      %v5257 = vmul.f32 %v5129, %v5145
      %5274 = vrot.lane.b32.xlu0 %v5242, 64
      %v5275 = vpop.permute.xlu0 %5274
      %5276 = vrot.lane.b32.xlu0 %v5243, 64
      %v5277 = vpop.permute.xlu0 %5276
      %5278 = vrot.lane.b32.xlu0 %v5244, 64
      %v5279 = vpop.permute.xlu0 %5278
      %5280 = vrot.lane.b32.xlu0 %v5245, 64
      %v5281 = vpop.permute.xlu0 %5280
      %5282 = vrot.lane.b32.xlu0 %v5246, 64
      %v5283 = vpop.permute.xlu0 %5282
      %5284 = vrot.lane.b32.xlu0 %v5247, 64
      %v5285 = vpop.permute.xlu0 %5284
      %5286 = vrot.lane.b32.xlu0 %v5248, 64
      %v5287 = vpop.permute.xlu0 %5286
      %5288 = vrot.lane.b32.xlu0 %v5249, 64
      %v5289 = vpop.permute.xlu0 %5288
      %5290 = vrot.lane.b32.xlu0 %v5250, 64
      %v5291 = vpop.permute.xlu0 %5290
      %5292 = vrot.lane.b32.xlu0 %v5251, 64
      %v5293 = vpop.permute.xlu0 %5292
      %5294 = vrot.lane.b32.xlu0 %v5252, 64
      %v5295 = vpop.permute.xlu0 %5294
      %5296 = vrot.lane.b32.xlu0 %v5253, 64
      %v5297 = vpop.permute.xlu0 %5296
      %5298 = vrot.lane.b32.xlu0 %v5254, 64
      %v5299 = vpop.permute.xlu0 %5298
      %5300 = vrot.lane.b32.xlu0 %v5255, 64
      %v5301 = vpop.permute.xlu0 %5300
      %5302 = vrot.lane.b32.xlu0 %v5256, 64
      %v5303 = vpop.permute.xlu0 %5302
      %5304 = vrot.lane.b32.xlu0 %v5257, 64
      %v5305 = vpop.permute.xlu0 %5304
      %v5322 = vadd.f32 %v5226, %v5275
      %v5323 = vadd.f32 %v5227, %v5277
      %v5324 = vadd.f32 %v5228, %v5279
      %v5325 = vadd.f32 %v5229, %v5281
      %v5326 = vadd.f32 %v5230, %v5283
      %v5327 = vadd.f32 %v5231, %v5285
      %v5328 = vadd.f32 %v5232, %v5287
      %v5329 = vadd.f32 %v5233, %v5289
      %v5330 = vadd.f32 %v5234, %v5291
      %v5331 = vadd.f32 %v5235, %v5293
      %v5332 = vadd.f32 %v5236, %v5295
      %v5333 = vadd.f32 %v5237, %v5297
      %v5334 = vadd.f32 %v5238, %v5299
      %v5335 = vadd.f32 %v5239, %v5301
      %v5336 = vadd.f32 %v5240, %v5303
      %v5337 = vadd.f32 %v5241, %v5305
      %5354 = vrot.lane.b32.xlu0 %v5322, 64
      %v5355 = vpop.permute.xlu0 %5354
      %5356 = vrot.lane.b32.xlu0 %v5323, 64
      %v5357 = vpop.permute.xlu0 %5356
      %5358 = vrot.lane.b32.xlu0 %v5324, 64
      %v5359 = vpop.permute.xlu0 %5358
      %5360 = vrot.lane.b32.xlu0 %v5325, 64
      %v5361 = vpop.permute.xlu0 %5360
      %5362 = vrot.lane.b32.xlu0 %v5326, 64
      %v5363 = vpop.permute.xlu0 %5362
      %5364 = vrot.lane.b32.xlu0 %v5327, 64
      %v5365 = vpop.permute.xlu0 %5364
      %5366 = vrot.lane.b32.xlu0 %v5328, 64
      %v5367 = vpop.permute.xlu0 %5366
      %5368 = vrot.lane.b32.xlu0 %v5329, 64
      %v5369 = vpop.permute.xlu0 %5368
      %5370 = vrot.lane.b32.xlu0 %v5330, 64
      %v5371 = vpop.permute.xlu0 %5370
      %5372 = vrot.lane.b32.xlu0 %v5331, 64
      %v5373 = vpop.permute.xlu0 %5372
      %5374 = vrot.lane.b32.xlu0 %v5332, 64
      %v5375 = vpop.permute.xlu0 %5374
      %5376 = vrot.lane.b32.xlu0 %v5333, 64
      %v5377 = vpop.permute.xlu0 %5376
      %5378 = vrot.lane.b32.xlu0 %v5334, 64
      %v5379 = vpop.permute.xlu0 %5378
      %5380 = vrot.lane.b32.xlu0 %v5335, 64
      %v5381 = vpop.permute.xlu0 %5380
      %5382 = vrot.lane.b32.xlu0 %v5336, 64
      %v5383 = vpop.permute.xlu0 %5382
      %5384 = vrot.lane.b32.xlu0 %v5337, 64
      %v5385 = vpop.permute.xlu0 %5384
      %vm5402 = vcmask 523264
      %5403 = vst.msk [vmem:[%s591] sm:$0xff] %vm5402, %v5355
      %5404 = vst.msk [vmem:[%s591 + $0x8] sm:$0xff] %vm5402, %v5357
      %5405 = vst.msk [vmem:[%s591 + $0x10] sm:$0xff] %vm5402, %v5359
      %5406 = vst.msk [vmem:[%s591 + $0x18] sm:$0xff] %vm5402, %v5361
      %5407 = vst.msk [vmem:[%s591 + $0x20] sm:$0xff] %vm5402, %v5363
      %5408 = vst.msk [vmem:[%s591 + $0x28] sm:$0xff] %vm5402, %v5365
      %5409 = vst.msk [vmem:[%s591 + $0x30] sm:$0xff] %vm5402, %v5367
      %5410 = vst.msk [vmem:[%s591 + $0x38] sm:$0xff] %vm5402, %v5369
      %5411 = vst.msk [vmem:[%s591 + $0x40] sm:$0xff] %vm5402, %v5371
      %5412 = vst.msk [vmem:[%s591 + $0x48] sm:$0xff] %vm5402, %v5373
      %5413 = vst.msk [vmem:[%s591 + $0x50] sm:$0xff] %vm5402, %v5375
      %5414 = vst.msk [vmem:[%s591 + $0x58] sm:$0xff] %vm5402, %v5377
      %5415 = vst.msk [vmem:[%s591 + $0x60] sm:$0xff] %vm5402, %v5379
      %5416 = vst.msk [vmem:[%s591 + $0x68] sm:$0xff] %vm5402, %v5381
      %5417 = vst.msk [vmem:[%s591 + $0x70] sm:$0xff] %vm5402, %v5383
      %5418 = vst.msk [vmem:[%s591 + $0x78] sm:$0xff] %vm5402, %v5385
      %v5419 = vpack.c.bf16 %v5323, %v5322
      %v5420 = vpack.c.bf16 %v5325, %v5324
      %v5421 = vpack.c.bf16 %v5327, %v5326
      %v5422 = vpack.c.bf16 %v5329, %v5328
      %v5423 = vpack.c.bf16 %v5331, %v5330
      %v5424 = vpack.c.bf16 %v5333, %v5332
      %v5425 = vpack.c.bf16 %v5335, %v5334
      %v5426 = vpack.c.bf16 %v5337, %v5336
      %v5435 = vunpack.c.l.b16 %v5419
      %v5436 = vunpack.c.h.b16 %v5419
      %v5437 = vunpack.c.l.b16 %v5420
      %v5438 = vunpack.c.h.b16 %v5420
      %v5439 = vunpack.c.l.b16 %v5421
      %v5440 = vunpack.c.h.b16 %v5421
      %v5441 = vunpack.c.l.b16 %v5422
      %v5442 = vunpack.c.h.b16 %v5422
      %v5443 = vunpack.c.l.b16 %v5423
      %v5444 = vunpack.c.h.b16 %v5423
      %v5445 = vunpack.c.l.b16 %v5424
      %v5446 = vunpack.c.h.b16 %v5424
      %v5447 = vunpack.c.l.b16 %v5425
      %v5448 = vunpack.c.h.b16 %v5425
      %v5449 = vunpack.c.l.b16 %v5426
      %v5450 = vunpack.c.h.b16 %v5426
      %v5451 = vpack.c.b16 %v5435, %v5435
      %v5452 = vpack.c.b16 %v5436, %v5436
      %v5453 = vpack.c.b16 %v5437, %v5437
      %v5454 = vpack.c.b16 %v5438, %v5438
      %v5455 = vpack.c.b16 %v5439, %v5439
      %v5456 = vpack.c.b16 %v5440, %v5440
      %v5457 = vpack.c.b16 %v5441, %v5441
      %v5458 = vpack.c.b16 %v5442, %v5442
      %v5459 = vpack.c.b16 %v5443, %v5443
      %v5460 = vpack.c.b16 %v5444, %v5444
      %v5461 = vpack.c.b16 %v5445, %v5445
      %v5462 = vpack.c.b16 %v5446, %v5446
      %v5463 = vpack.c.b16 %v5447, %v5447
      %v5464 = vpack.c.b16 %v5448, %v5448
      %v5465 = vpack.c.b16 %v5449, %v5449
      %v5466 = vpack.c.b16 %v5450, %v5450
      %5467 = vrot.lane.b32.xlu0 %v5451, 64
      %v5468 = vpop.permute.xlu0 %5467
      %5469 = vrot.lane.b32.xlu0 %v5452, 64
      %v5470 = vpop.permute.xlu0 %5469
      %5471 = vrot.lane.b32.xlu0 %v5453, 64
      %v5472 = vpop.permute.xlu0 %5471
      %5473 = vrot.lane.b32.xlu0 %v5454, 64
      %v5474 = vpop.permute.xlu0 %5473
      %5475 = vrot.lane.b32.xlu0 %v5455, 64
      %v5476 = vpop.permute.xlu0 %5475
      %5477 = vrot.lane.b32.xlu0 %v5456, 64
      %v5478 = vpop.permute.xlu0 %5477
      %5479 = vrot.lane.b32.xlu0 %v5457, 64
      %v5480 = vpop.permute.xlu0 %5479
      %5481 = vrot.lane.b32.xlu0 %v5458, 64
      %v5482 = vpop.permute.xlu0 %5481
      %5483 = vrot.lane.b32.xlu0 %v5459, 64
      %v5484 = vpop.permute.xlu0 %5483
      %5485 = vrot.lane.b32.xlu0 %v5460, 64
      %v5486 = vpop.permute.xlu0 %5485
      %5487 = vrot.lane.b32.xlu0 %v5461, 64
      %v5488 = vpop.permute.xlu0 %5487
      %5489 = vrot.lane.b32.xlu0 %v5462, 64
      %v5490 = vpop.permute.xlu0 %5489
      %5491 = vrot.lane.b32.xlu0 %v5463, 64
      %v5492 = vpop.permute.xlu0 %5491
      %5493 = vrot.lane.b32.xlu0 %v5464, 64
      %v5494 = vpop.permute.xlu0 %5493
      %5495 = vrot.lane.b32.xlu0 %v5465, 64
      %v5496 = vpop.permute.xlu0 %5495
      %5497 = vrot.lane.b32.xlu0 %v5466, 64
      %v5498 = vpop.permute.xlu0 %5497
      %vm5515 = vcmask 519168
      %5516 = vst.msk [vmem:[%s602] sm:$0xf] %vm5515, %v5468
      %5517 = vst.msk [vmem:[%s602 + $0x4] sm:$0xf] %vm5515, %v5470
      %5518 = vst.msk [vmem:[%s602 + $0x8] sm:$0xf] %vm5515, %v5472
      %5519 = vst.msk [vmem:[%s602 + $0xc] sm:$0xf] %vm5515, %v5474
      %5520 = vst.msk [vmem:[%s602 + $0x10] sm:$0xf] %vm5515, %v5476
      %5521 = vst.msk [vmem:[%s602 + $0x14] sm:$0xf] %vm5515, %v5478
      %5522 = vst.msk [vmem:[%s602 + $0x18] sm:$0xf] %vm5515, %v5480
      %5523 = vst.msk [vmem:[%s602 + $0x1c] sm:$0xf] %vm5515, %v5482
      %5524 = vst.msk [vmem:[%s602 + $0x20] sm:$0xf] %vm5515, %v5484
      %5525 = vst.msk [vmem:[%s602 + $0x24] sm:$0xf] %vm5515, %v5486
      %5526 = vst.msk [vmem:[%s602 + $0x28] sm:$0xf] %vm5515, %v5488
      %5527 = vst.msk [vmem:[%s602 + $0x2c] sm:$0xf] %vm5515, %v5490
      %5528 = vst.msk [vmem:[%s602 + $0x30] sm:$0xf] %vm5515, %v5492
      %5529 = vst.msk [vmem:[%s602 + $0x34] sm:$0xf] %vm5515, %v5494
      %5530 = vst.msk [vmem:[%s602 + $0x38] sm:$0xf] %vm5515, %v5496
      %5531 = vst.msk [vmem:[%s602 + $0x3c] sm:$0xf] %vm5515, %v5498
      %5548 = vrot.lane.b32.xlu0 %v5035, 64
      %v5549 = vpop.permute.xlu0 %5548
      %5550 = vrot.lane.b32.xlu0 %v5037, 64
      %v5551 = vpop.permute.xlu0 %5550
      %5552 = vrot.lane.b32.xlu0 %v5039, 64
      %v5553 = vpop.permute.xlu0 %5552
      %5554 = vrot.lane.b32.xlu0 %v5041, 64
      %v5555 = vpop.permute.xlu0 %5554
      %5556 = vrot.lane.b32.xlu0 %v5043, 64
      %v5557 = vpop.permute.xlu0 %5556
      %5558 = vrot.lane.b32.xlu0 %v5045, 64
      %v5559 = vpop.permute.xlu0 %5558
      %5560 = vrot.lane.b32.xlu0 %v5047, 64
      %v5561 = vpop.permute.xlu0 %5560
      %5562 = vrot.lane.b32.xlu0 %v5049, 64
      %v5563 = vpop.permute.xlu0 %5562
      %5564 = vrot.lane.b32.xlu0 %v5051, 64
      %v5565 = vpop.permute.xlu0 %5564
      %5566 = vrot.lane.b32.xlu0 %v5053, 64
      %v5567 = vpop.permute.xlu0 %5566
      %5568 = vrot.lane.b32.xlu0 %v5055, 64
      %v5569 = vpop.permute.xlu0 %5568
      %5570 = vrot.lane.b32.xlu0 %v5057, 64
      %v5571 = vpop.permute.xlu0 %5570
      %5572 = vrot.lane.b32.xlu0 %v5059, 64
      %v5573 = vpop.permute.xlu0 %5572
      %5574 = vrot.lane.b32.xlu0 %v5061, 64
      %v5575 = vpop.permute.xlu0 %5574
      %5576 = vrot.lane.b32.xlu0 %v5063, 64
      %v5577 = vpop.permute.xlu0 %5576
      %5578 = vrot.lane.b32.xlu0 %v5065, 64
      %v5579 = vpop.permute.xlu0 %5578
      %5596 = vst.msk [vmem:[%s613] sm:$0xff] %vm1154, %v5549
      %5597 = vst.msk [vmem:[%s613 + $0x8] sm:$0xff] %vm1154, %v5551
      %5598 = vst.msk [vmem:[%s613 + $0x10] sm:$0xff] %vm1154, %v5553
      %5599 = vst.msk [vmem:[%s613 + $0x18] sm:$0xff] %vm1154, %v5555
      %5600 = vst.msk [vmem:[%s613 + $0x20] sm:$0xff] %vm1154, %v5557
      %5601 = vst.msk [vmem:[%s613 + $0x28] sm:$0xff] %vm1154, %v5559
      %5602 = vst.msk [vmem:[%s613 + $0x30] sm:$0xff] %vm1154, %v5561
      %5603 = vst.msk [vmem:[%s613 + $0x38] sm:$0xff] %vm1154, %v5563
      %5604 = vst.msk [vmem:[%s613 + $0x40] sm:$0xff] %vm1154, %v5565
      %5605 = vst.msk [vmem:[%s613 + $0x48] sm:$0xff] %vm1154, %v5567
      %5606 = vst.msk [vmem:[%s613 + $0x50] sm:$0xff] %vm1154, %v5569
      %5607 = vst.msk [vmem:[%s613 + $0x58] sm:$0xff] %vm1154, %v5571
      %5608 = vst.msk [vmem:[%s613 + $0x60] sm:$0xff] %vm1154, %v5573
      %5609 = vst.msk [vmem:[%s613 + $0x68] sm:$0xff] %vm1154, %v5575
      %5610 = vst.msk [vmem:[%s613 + $0x70] sm:$0xff] %vm1154, %v5577
      %5611 = vst.msk [vmem:[%s613 + $0x78] sm:$0xff] %vm1154, %v5579
      %s5612 = smul.u32 8, %s30
      %p5613 = scmp.lt.s32.totalorder %s29, 1
      %s5614 = scalar_select %p5613, %s29, 1
      %p5615 = scmp.lt.s32.totalorder %s5612, 15
      %s5616 = scalar_select %p5615, %s5612, 15
      %s5617 = smul.addr %s5616, 2
      %s5618 = smul.addr %s5614, 32
      %s5619 = sadd.s32 %s5617, %s5618
      %s5620 = smul.addr %s5619, 8
      %s5621 = scalar_lea.vmem %s11, %s5620
      %s5622 = smul.u32 8, %s30
      %p5623 = scmp.lt.s32.totalorder %s29, 1
      %s5624 = scalar_select %p5623, %s29, 1
      %p5625 = scmp.lt.s32.totalorder %s5622, 15
      %s5626 = scalar_select %p5625, %s5622, 15
      %s5627 = smul.addr %s5626, 2
      %s5628 = smul.addr %s5624, 32
      %s5629 = sadd.s32 %s5627, %s5628
      %s5630 = smul.addr %s5629, 4
      %s5631 = scalar_lea.vmem %s12, %s5630
      %s5632 = smul.u32 8, %s30
      %p5633 = scmp.lt.s32.totalorder %s29, 1
      %s5634 = scalar_select %p5633, %s29, 1
      %p5635 = scmp.lt.s32.totalorder %s5632, 15
      %s5636 = scalar_select %p5635, %s5632, 15
      %s5637 = smul.addr %s5636, 2
      %s5638 = smul.addr %s5634, 32
      %s5639 = sadd.s32 %s5637, %s5638
      %s5640 = smul.addr %s5639, 8
      %s5641 = scalar_lea.vmem %s13, %s5640
      // Predicated region
      $region65: #{st_lstm_cell_poly.2} parent=63 // pred_check
        %p5642 = pneg %p312
      $region66: #{st_lstm_cell_poly.2} parent=63 // pred_check_branch
        %5644 = sbr.rel (%p5642) target = $region68
      $region67: #{st_lstm_cell_poly.2} parent=63 // pred_region
        %s5645 = smul.u32 8, %s30
      $region68: #{st_lstm_cell_poly.2} parent=63 // pred_fallthru
        _
      // Predicated region
      $region69: #{st_lstm_cell_poly.2} parent=63 // pred_check
        %p5646 = pneg %p340
      $region70: #{st_lstm_cell_poly.2} parent=63 // pred_check_branch
        %5648 = sbr.rel (%p5646) target = $region72
      $region71: #{st_lstm_cell_poly.2} parent=63 // pred_region
        %s5649 = smul.u32 8, %s30
      $region72: #{st_lstm_cell_poly.2} parent=63 // pred_fallthru
        _
      // Predicated region
      $region73: #{st_lstm_cell_poly.2} parent=63 // pred_check
        %p5650 = pneg %p368
      $region74: #{st_lstm_cell_poly.2} parent=63 // pred_check_branch
        %5652 = sbr.rel (%p5650) target = $region76
      $region75: #{st_lstm_cell_poly.2} parent=63 // pred_region
        %s5653 = smul.u32 8, %s30
      $region76: #{st_lstm_cell_poly.2} parent=63 // pred_fallthru
        _
    $region64: #{st_lstm_cell_poly.2} parent=5 // pred_fallthru
      _
    %p5654 = scmp.le.s32.totalorder 2, %s20
    // Predicated region
    $region77: #{st_lstm_cell_poly.2} parent=5 // pred_check
      %p5655 = pneg %p5654
    $region78: #{st_lstm_cell_poly.2} parent=5 // pred_check_branch
      %5657 = sbr.rel (%p5655) target = $region80
    $region79: #{st_lstm_cell_poly.2} parent=5 // pred_region
      %s5658 = ssub.s32 %s20, 2
      // Predicated region
      $region81: #{st_lstm_cell_poly.2} parent=79 // pred_check
        %p5659 = pneg %p318
      $region82: #{st_lstm_cell_poly.2} parent=79 // pred_check_branch
        %5661 = sbr.rel (%p5659) target = $region84
      $region83: #{st_lstm_cell_poly.2} parent=79 // pred_region
        %s5662 = smul.u32 8, %s32
        %p5663 = scmp.lt.s32.totalorder %s31, 1
        %s5664 = scalar_select %p5663, %s31, 1
        %p5665 = scmp.lt.s32.totalorder %s5662, 15
        %s5666 = scalar_select %p5665, %s5662, 15
        %s5667 = smul.addr %s5666, 2
        %s5668 = smul.addr %s5664, 32
        %s5669 = sadd.s32 %s5667, %s5668
        %s5670 = smul.addr %s5669, 8
        %s5671 = scalar_lea.vmem %s11, %s5670
      $region84: #{st_lstm_cell_poly.2} parent=79 // pred_fallthru
        _
      // Predicated region
      $region85: #{st_lstm_cell_poly.2} parent=79 // pred_check
        %p5672 = pneg %p346
      $region86: #{st_lstm_cell_poly.2} parent=79 // pred_check_branch
        %5674 = sbr.rel (%p5672) target = $region88
      $region87: #{st_lstm_cell_poly.2} parent=79 // pred_region
        %s5675 = smul.u32 8, %s32
        %p5676 = scmp.lt.s32.totalorder %s31, 1
        %s5677 = scalar_select %p5676, %s31, 1
        %p5678 = scmp.lt.s32.totalorder %s5675, 15
        %s5679 = scalar_select %p5678, %s5675, 15
        %s5680 = smul.addr %s5679, 2
        %s5681 = smul.addr %s5677, 32
        %s5682 = sadd.s32 %s5680, %s5681
        %s5683 = smul.addr %s5682, 4
        %s5684 = scalar_lea.vmem %s12, %s5683
      $region88: #{st_lstm_cell_poly.2} parent=79 // pred_fallthru
        _
      // Predicated region
      $region89: #{st_lstm_cell_poly.2} parent=79 // pred_check
        %p5685 = pneg %p374
      $region90: #{st_lstm_cell_poly.2} parent=79 // pred_check_branch
        %5687 = sbr.rel (%p5685) target = $region92
      $region91: #{st_lstm_cell_poly.2} parent=79 // pred_region
        %s5688 = smul.u32 8, %s32
        %p5689 = scmp.lt.s32.totalorder %s31, 1
        %s5690 = scalar_select %p5689, %s31, 1
        %p5691 = scmp.lt.s32.totalorder %s5688, 15
        %s5692 = scalar_select %p5691, %s5688, 15
        %s5693 = smul.addr %s5692, 2
        %s5694 = smul.addr %s5690, 32
        %s5695 = sadd.s32 %s5693, %s5694
        %s5696 = smul.addr %s5695, 8
        %s5697 = scalar_lea.vmem %s13, %s5696
      $region92: #{st_lstm_cell_poly.2} parent=79 // pred_fallthru
        _
    $region80: #{st_lstm_cell_poly.2} parent=5 // pred_fallthru
      _
  $region6: #{st_lstm_cell_poly.2} parent=0 // loop_footer
    %s24 = sadd.s32 1, %s20
  $region7: #{st_lstm_cell_poly.2} parent=0 // loop_footer_branch
    %19 = sbr.rel target = $region3
  $region8: #{st_lstm_cell_poly.2} parent=0 // loop_exit
    _

// kernel: st_lstm_cell_poly.3
$region0: #{st_lstm_cell_poly.3}
  #allocation0 [shape = 'u32[]', space=smem, size = 0x4, offset = 0x4, fixed_abs, tag = 'smem constant byte address 0x4 - core index']
  #allocation1 [shape = 'u32[144,128]{1,0:T(1,128)}', space=vmem, size = 0x12000, scoped, tag = 'internal scratch']
  %s0 = inlined_call_operand.vmem [shape: bf16[2,20,16,320], index: 0, kind: input, shape index: {}]
  %s1 = inlined_call_operand.vmem [shape: f32[2,16,16,32], index: 1, kind: input, shape index: {}]
  %s2 = inlined_call_operand.vmem [shape: bf16[5,320,128], index: 2, kind: input, shape index: {}]
  %s3 = inlined_call_operand.vmem [shape: f32[1,128], index: 3, kind: input, shape index: {}]
  %s4 = inlined_call_operand.hbm [shape: f32[2,16,16,32], index: 4, kind: output, shape index: {}]
  %s5 = sld [smem:[#allocation0]]
  $region49: #{st_lstm_cell_poly.3} parent=0
    _
  %s7 = ssub.s32 1, %s5
  %s8 = scalar_select 0, %s7, %s5
  $region1: #{st_lstm_cell_poly.3} parent=0
    #allocation2 [shape = 'u8[131072]{0}', space=vmem, size = 0x20000, scoped, tag = 'output window, operand 0']
    #allocation3 [shape = 's32[2]{0}', space=sflag, size = 0x8, scoped, tag = 'scoped memory for st_lstm_cell_poly.3']
    %9 = vsyncpa [#allocation3], 0
    %s10 = scalar_lea.sflag [#allocation3], 1
    %11 = vsyncpa %s10, 0
    loop: start=0, step=1, limit=6
    $region2: #{st_lstm_cell_poly.3} parent=1 // loop_pre_header
      _
    $region3: #{st_lstm_cell_poly.3} parent=1 // loop_header
      %s13 = sphi 0, %s17
      %p14 = scmp.ge.s32.totalorder %s13, 6
      %s20 = sphi 0, %s32
      %s21 = sphi 0, %s28
      %s22 = sphi 0, %s20
      %s23 = sphi 0, %s21
      %s24 = sphi 0, %s22
      %s25 = sphi 0, %s23
      %s35 = sphi 0, %s37
      %s38 = sphi 0, %s35
      %s39 = sphi 0, %s38
      %s55 = sphi 0, %s39
      %s63 = sphi 0, %s65
      %s66 = sphi 0, %s63
      %s67 = sphi 0, %s66
      %s83 = sphi 0, %s67
      %s87 = sphi 0, %s87
      %s89 = sphi 0, %s87
      %s90 = sphi 0, %s89
      %s104 = sphi 0, %s90
      %s108 = sphi 0, %s108
      %s110 = sphi 0, %s108
      %s111 = sphi 0, %s110
      %s125 = sphi 0, %s111
      %s133 = sphi 0, %s135
      %s136 = sphi 0, %s133
      %s137 = sphi 0, %s136
      %s153 = sphi 0, %s137
    $region4: #{st_lstm_cell_poly.3} parent=1 // loop_header_branch
      %16 = sbr.rel (%p14) target = $region8
    $region5: #{st_lstm_cell_poly.3} parent=1 // loop_body
      %s18 = ssub.s32 %s13, 1
      %s19 = ssub.s32 %s13, 2
      %s26 = sadd.s32 1, %s21
      %p27 = scmp.ge.s32.totalorder %s26, 2
      %s28 = scalar_select %p27, 0, %s26
      %s29 = sadd.s32 1, %s20
      %s30 = scalar_select %p27, %s29, %s20
      %p31 = scmp.ge.s32.totalorder %s30, 2
      %s32 = scalar_select %p31, 0, %s30
      %s33 = ssub.s32 %s20, %s32
      %p34 = scmp.eq.s32.totalorder %s33, 0
      %s36 = sadd.s32 %s35, 1
      %s37 = scalar_select %p34, %s35, %s36
      %p40 = pneg %p34
      %p41 = scmp.eq.s32.totalorder %s13, 3
      %p42 = por %p40, %p41
      %p43 = scmp.ne.s32.totalorder %s35, %s38
      %p44 = scmp.eq.s32.totalorder %s13, 0
      %p45 = por %p43, %p44
      %p46 = scmp.ne.s32.totalorder %s35, %s38
      %p47 = scmp.eq.s32.totalorder %s18, 3
      %p48 = por %p46, %p47
      %p49 = scmp.ne.s32.totalorder %s38, %s39
      %p50 = scmp.eq.s32.totalorder %s18, 0
      %p51 = por %p49, %p50
      %p52 = scmp.ne.s32.totalorder %s38, %s39
      %p53 = scmp.eq.s32.totalorder %s19, 3
      %p54 = por %p52, %p53
      %p56 = scmp.ne.s32.totalorder %s39, %s55
      %p57 = scmp.eq.s32.totalorder %s19, 0
      %p58 = por %p56, %p57
      %s59 = ssub.s32 %s20, %s32
      %s60 = ssub.s32 %s21, %s28
      %s61 = sor.u32 %s59, %s60
      %p62 = scmp.eq.s32.totalorder %s61, 0
      %s64 = sadd.s32 %s63, 1
      %s65 = scalar_select %p62, %s63, %s64
      %p68 = pneg %p62
      %p69 = scmp.eq.s32.totalorder %s13, 3
      %p70 = por %p68, %p69
      %p71 = scmp.ne.s32.totalorder %s63, %s66
      %p72 = scmp.eq.s32.totalorder %s13, 0
      %p73 = por %p71, %p72
      %p74 = scmp.ne.s32.totalorder %s63, %s66
      %p75 = scmp.eq.s32.totalorder %s18, 3
      %p76 = por %p74, %p75
      %p77 = scmp.ne.s32.totalorder %s66, %s67
      %p78 = scmp.eq.s32.totalorder %s18, 0
      %p79 = por %p77, %p78
      %p80 = scmp.ne.s32.totalorder %s66, %s67
      %p81 = scmp.eq.s32.totalorder %s19, 3
      %p82 = por %p80, %p81
      %p84 = scmp.ne.s32.totalorder %s67, %s83
      %p85 = scmp.eq.s32.totalorder %s19, 0
      %p86 = por %p84, %p85
      %s88 = sadd.s32 %s87, 1
      %p91 = scmp.eq.s32.totalorder %s13, 3
      %p92 = scmp.ne.s32.totalorder %s87, %s89
      %p93 = scmp.eq.s32.totalorder %s13, 0
      %p94 = por %p92, %p93
      %p95 = scmp.ne.s32.totalorder %s87, %s89
      %p96 = scmp.eq.s32.totalorder %s18, 3
      %p97 = por %p95, %p96
      %p98 = scmp.ne.s32.totalorder %s89, %s90
      %p99 = scmp.eq.s32.totalorder %s18, 0
      %p100 = por %p98, %p99
      %p101 = scmp.ne.s32.totalorder %s89, %s90
      %p102 = scmp.eq.s32.totalorder %s19, 3
      %p103 = por %p101, %p102
      %p105 = scmp.ne.s32.totalorder %s90, %s104
      %p106 = scmp.eq.s32.totalorder %s19, 0
      %p107 = por %p105, %p106
      %s109 = sadd.s32 %s108, 1
      %p112 = scmp.eq.s32.totalorder %s13, 3
      %p113 = scmp.ne.s32.totalorder %s108, %s110
      %p114 = scmp.eq.s32.totalorder %s13, 0
      %p115 = por %p113, %p114
      %p116 = scmp.ne.s32.totalorder %s108, %s110
      %p117 = scmp.eq.s32.totalorder %s18, 3
      %p118 = por %p116, %p117
      %p119 = scmp.ne.s32.totalorder %s110, %s111
      %p120 = scmp.eq.s32.totalorder %s18, 0
      %p121 = por %p119, %p120
      %p122 = scmp.ne.s32.totalorder %s110, %s111
      %p123 = scmp.eq.s32.totalorder %s19, 3
      %p124 = por %p122, %p123
      %p126 = scmp.ne.s32.totalorder %s111, %s125
      %p127 = scmp.eq.s32.totalorder %s19, 0
      %p128 = por %p126, %p127
      %s129 = ssub.s32 %s20, %s32
      %s130 = ssub.s32 %s21, %s28
      %s131 = sor.u32 %s129, %s130
      %p132 = scmp.eq.s32.totalorder %s131, 0
      %s134 = sadd.s32 %s133, 1
      %s135 = scalar_select %p132, %s133, %s134
      %p138 = pneg %p132
      %p139 = scmp.eq.s32.totalorder %s13, 3
      %p140 = por %p138, %p139
      %p141 = scmp.ne.s32.totalorder %s133, %s136
      %p142 = scmp.eq.s32.totalorder %s13, 0
      %p143 = por %p141, %p142
      %p144 = scmp.ne.s32.totalorder %s133, %s136
      %p145 = scmp.eq.s32.totalorder %s18, 3
      %p146 = por %p144, %p145
      %p147 = scmp.ne.s32.totalorder %s136, %s137
      %p148 = scmp.eq.s32.totalorder %s18, 0
      %p149 = por %p147, %p148
      %p150 = scmp.ne.s32.totalorder %s136, %s137
      %p151 = scmp.eq.s32.totalorder %s19, 3
      %p152 = por %p150, %p151
      %p154 = scmp.ne.s32.totalorder %s137, %s153
      %p155 = scmp.eq.s32.totalorder %s19, 0
      %p156 = por %p154, %p155
      %p157 = scmp.le.s32.totalorder 1, %s13
      %p158 = scmp.lt.s32.totalorder %s13, 5
      %p159 = pnand %p157, %p158
      %p160 = pneg %p159
      // Predicated region
      $region9: #{st_lstm_cell_poly.3} parent=5 // pred_check
        _
      $region10: #{st_lstm_cell_poly.3} parent=5 // pred_check_branch
        %162 = sbr.rel (%p159) target = $region12
      $region11: #{st_lstm_cell_poly.3} parent=5 // pred_region
        %s163 = ssub.s32 %s13, 1
        // Predicated region
        $region13: #{st_lstm_cell_poly.3} parent=11 // pred_check
          %p164 = pneg %p100
        $region14: #{st_lstm_cell_poly.3} parent=11 // pred_check_branch
          %166 = sbr.rel (%p164) target = $region16
        $region15: #{st_lstm_cell_poly.3} parent=11 // pred_region
          _
        $region16: #{st_lstm_cell_poly.3} parent=11 // pred_fallthru
          _
        // Predicated region
        $region17: #{st_lstm_cell_poly.3} parent=11 // pred_check
          %p167 = pneg %p121
        $region18: #{st_lstm_cell_poly.3} parent=11 // pred_check_branch
          %169 = sbr.rel (%p167) target = $region20
        $region19: #{st_lstm_cell_poly.3} parent=11 // pred_region
          _
        $region20: #{st_lstm_cell_poly.3} parent=11 // pred_fallthru
          _
      $region12: #{st_lstm_cell_poly.3} parent=5 // pred_fallthru
        _
      %p170 = scmp.lt.s32.totalorder %s13, 4
      // Predicated region
      $region21: #{st_lstm_cell_poly.3} parent=5 // pred_check
        %p171 = pneg %p170
      $region22: #{st_lstm_cell_poly.3} parent=5 // pred_check_branch
        %173 = sbr.rel (%p171) target = $region24
      $region23: #{st_lstm_cell_poly.3} parent=5 // pred_region
        // Predicated region
        $region25: #{st_lstm_cell_poly.3} parent=23 // pred_check
          %p174 = pneg %p45
        $region26: #{st_lstm_cell_poly.3} parent=23 // pred_check_branch
          %176 = sbr.rel (%p174) target = $region28
        $region27: #{st_lstm_cell_poly.3} parent=23 // pred_region
          %p177 = scmp.lt.s32.totalorder %s20, 1
          %s178 = scalar_select %p177, %s20, 1
          %s179 = smul.addr %s178, 120
          %s180 = smul.addr %s179, 4
          %s181 = scalar_lea.vmem %s0, %s180
        $region28: #{st_lstm_cell_poly.3} parent=23 // pred_fallthru
          _
        // Predicated region
        $region29: #{st_lstm_cell_poly.3} parent=23 // pred_check
          %p182 = pneg %p73
        $region30: #{st_lstm_cell_poly.3} parent=23 // pred_check_branch
          %184 = sbr.rel (%p182) target = $region32
        $region31: #{st_lstm_cell_poly.3} parent=23 // pred_region
          %s185 = smul.u32 8, %s21
          %p186 = scmp.lt.s32.totalorder %s20, 1
          %s187 = scalar_select %p186, %s20, 1
          %p188 = scmp.lt.s32.totalorder %s185, 15
          %s189 = scalar_select %p188, %s185, 15
          %s190 = smul.addr %s189, 2
          %s191 = smul.addr %s187, 32
          %s192 = sadd.s32 %s190, %s191
          %s193 = smul.addr %s192, 8
          %s194 = scalar_lea.vmem %s1, %s193
          %s195 = smul.u32 8, %s21
        $region32: #{st_lstm_cell_poly.3} parent=23 // pred_fallthru
          _
      $region24: #{st_lstm_cell_poly.3} parent=5 // pred_fallthru
        _
      %p196 = scmp.le.s32.totalorder 1, %s13
      %p197 = scmp.lt.s32.totalorder %s13, 5
      %p198 = pnand %p196, %p197
      %p199 = pneg %p198
      // Predicated region
      $region33: #{st_lstm_cell_poly.3} parent=5 // pred_check
        _
      $region34: #{st_lstm_cell_poly.3} parent=5 // pred_check_branch
        %201 = sbr.rel (%p198) target = $region36
      $region35: #{st_lstm_cell_poly.3} parent=5 // pred_region
        %s202 = ssub.s32 %s13, 1
        %p203 = scmp.lt.s32.totalorder %s22, 1
        %s204 = scalar_select %p203, %s22, 1
        %s205 = smul.addr %s204, 120
        %s206 = smul.addr %s205, 4
        %s207 = scalar_lea.vmem %s0, %s206
        %p208 = pneg %p51
        %p209 = pneg %p48
        %s210 = smul.u32 8, %s23
        %p211 = scmp.lt.s32.totalorder %s22, 1
        %s212 = scalar_select %p211, %s22, 1
        %p213 = scmp.lt.s32.totalorder %s210, 15
        %s214 = scalar_select %p213, %s210, 15
        %s215 = smul.addr %s214, 2
        %s216 = smul.addr %s212, 32
        %s217 = sadd.s32 %s215, %s216
        %s218 = smul.addr %s217, 8
        %s219 = scalar_lea.vmem %s1, %s218
        %p220 = pneg %p79
        %p221 = pneg %p76
        %p222 = pneg %p100
        %p223 = pneg %p97
        %p224 = pneg %p121
        %p225 = pneg %p118
        %p226 = pneg %p149
        %p227 = pneg %p146
        %s228 = sand.u32 %s136, 1
        %s229 = scalar_lea.sflag [#allocation3], %s228
        %s230 = sand.u32 %s136, 1
        %s231 = smul.addr %s230, 128
        %s232 = scalar_lea.vmem [#allocation2], %s231
        %p233 = scmp.lt.s32.totalorder %s22, 1
        %s234 = scalar_select %p233, %s22, 1
        %s235 = smul.addr %s234, 120
        %s236 = smul.addr %s235, 4
        %s237 = scalar_lea.vmem %s0, %s236
        %s238 = smul.u32 8, %s23
        %p239 = scmp.lt.s32.totalorder %s22, 1
        %s240 = scalar_select %p239, %s22, 1
        %p241 = scmp.lt.s32.totalorder %s238, 15
        %s242 = scalar_select %p241, %s238, 15
        %s243 = smul.addr %s242, 2
        %s244 = smul.addr %s240, 32
        %s245 = sadd.s32 %s243, %s244
        %s246 = smul.addr %s245, 8
        %s247 = scalar_lea.vmem %s1, %s246
        %s248 = smul.u32 8, %s23
        %s249 = smul.u32 8, %s23
        %s251 = smul.u32 %s23, 8
        %s252 = smul.u32 %s251, 6
        %s253 = smul.addr %s252, 4
        %s254 = scalar_lea.vmem %s237, %s253
        %v255 = vld [vmem:[%s254] sm:$0xff]
        %v256 = vld [vmem:[%s254 + $0x8] sm:$0xf]
        %v257 = vld [vmem:[%s254 + $0xc] sm:$0xff]
        %v258 = vld [vmem:[%s254 + $0x14] sm:$0xf]
        %v259 = vld [vmem:[%s254 + $0x18] sm:$0xff]
        %v260 = vld [vmem:[%s254 + $0x20] sm:$0xf]
        %v261 = vld [vmem:[%s254 + $0x24] sm:$0xff]
        %v262 = vld [vmem:[%s254 + $0x2c] sm:$0xf]
        %v263 = vld [vmem:[%s254 + $0x30] sm:$0xff]
        %v264 = vld [vmem:[%s254 + $0x38] sm:$0xf]
        %v265 = vld [vmem:[%s254 + $0x3c] sm:$0xff]
        %v266 = vld [vmem:[%s254 + $0x44] sm:$0xf]
        %v267 = vld [vmem:[%s254 + $0x48] sm:$0xff]
        %v268 = vld [vmem:[%s254 + $0x50] sm:$0xf]
        %v269 = vld [vmem:[%s254 + $0x54] sm:$0xff]
        %v270 = vld [vmem:[%s254 + $0x5c] sm:$0xf]
        %v271 = vld [vmem:[%s254 + $0x60] sm:$0xff]
        %v272 = vld [vmem:[%s254 + $0x68] sm:$0xf]
        %v273 = vld [vmem:[%s254 + $0x6c] sm:$0xff]
        %v274 = vld [vmem:[%s254 + $0x74] sm:$0xf]
        %v275 = vld [vmem:[%s254 + $0x78] sm:$0xff]
        %v276 = vld [vmem:[%s254 + $0x80] sm:$0xf]
        %v277 = vld [vmem:[%s254 + $0x84] sm:$0xff]
        %v278 = vld [vmem:[%s254 + $0x8c] sm:$0xf]
        %v279 = vld [vmem:[%s254 + $0x90] sm:$0xff]
        %v280 = vld [vmem:[%s254 + $0x98] sm:$0xf]
        %v281 = vld [vmem:[%s254 + $0x9c] sm:$0xff]
        %v282 = vld [vmem:[%s254 + $0xa4] sm:$0xf]
        %v283 = vld [vmem:[%s254 + $0xa8] sm:$0xff]
        %v284 = vld [vmem:[%s254 + $0xb0] sm:$0xf]
        %v285 = vld [vmem:[%s254 + $0xb4] sm:$0xff]
        %v286 = vld [vmem:[%s254 + $0xbc] sm:$0xf]
        %v287 = vld [vmem:[%s2] sm:$0xf]
        %v288 = vld [vmem:[%s2 + $0x4] sm:$0xf]
        %v289 = vld [vmem:[%s2 + $0x8] sm:$0xf]
        %v290 = vld [vmem:[%s2 + $0xc] sm:$0xf]
        %v291 = vld [vmem:[%s2 + $0x10] sm:$0xf]
        %v292 = vld [vmem:[%s2 + $0x14] sm:$0xf]
        %v293 = vld [vmem:[%s2 + $0x18] sm:$0xf]
        %v294 = vld [vmem:[%s2 + $0x1c] sm:$0xf]
        %v295 = vld [vmem:[%s2 + $0x20] sm:$0xf]
        %v296 = vld [vmem:[%s2 + $0x24] sm:$0xf]
        %v297 = vld [vmem:[%s2 + $0x28] sm:$0xf]
        %v298 = vld [vmem:[%s2 + $0x2c] sm:$0xf]
        %v299 = vld [vmem:[%s2 + $0x30] sm:$0xf]
        %v300 = vld [vmem:[%s2 + $0x34] sm:$0xf]
        %v301 = vld [vmem:[%s2 + $0x38] sm:$0xf]
        %v302 = vld [vmem:[%s2 + $0x3c] sm:$0xf]
        %v303 = vld [vmem:[%s2 + $0x40] sm:$0xf]
        %v304 = vld [vmem:[%s2 + $0x44] sm:$0xf]
        %v305 = vld [vmem:[%s2 + $0x48] sm:$0xf]
        %v306 = vld [vmem:[%s2 + $0x4c] sm:$0xf]
        %v307 = vld [vmem:[%s2 + $0x50] sm:$0xf]
        %v308 = vld [vmem:[%s2 + $0x54] sm:$0xf]
        %v309 = vld [vmem:[%s2 + $0x58] sm:$0xf]
        %v310 = vld [vmem:[%s2 + $0x5c] sm:$0xf]
        %v311 = vld [vmem:[%s2 + $0x60] sm:$0xf]
        %v312 = vld [vmem:[%s2 + $0x64] sm:$0xf]
        %v313 = vld [vmem:[%s2 + $0x68] sm:$0xf]
        %v314 = vld [vmem:[%s2 + $0x6c] sm:$0xf]
        %v315 = vld [vmem:[%s2 + $0x70] sm:$0xf]
        %v316 = vld [vmem:[%s2 + $0x74] sm:$0xf]
        %v317 = vld [vmem:[%s2 + $0x78] sm:$0xf]
        %v318 = vld [vmem:[%s2 + $0x7c] sm:$0xf]
        %v319 = vld [vmem:[%s2 + $0x80] sm:$0xf]
        %v320 = vld [vmem:[%s2 + $0x84] sm:$0xf]
        %v321 = vld [vmem:[%s2 + $0x88] sm:$0xf]
        %v322 = vld [vmem:[%s2 + $0x8c] sm:$0xf]
        %v323 = vld [vmem:[%s2 + $0x90] sm:$0xf]
        %v324 = vld [vmem:[%s2 + $0x94] sm:$0xf]
        %v325 = vld [vmem:[%s2 + $0x98] sm:$0xf]
        %v326 = vld [vmem:[%s2 + $0x9c] sm:$0xf]
        %s327 = sadd.s32 %s251, 1
        %s328 = smul.u32 %s327, 6
        %s329 = smul.addr %s328, 4
        %s330 = scalar_lea.vmem %s237, %s329
        %v331 = vld [vmem:[%s330] sm:$0xff]
        %v332 = vld [vmem:[%s330 + $0x8] sm:$0xf]
        %v333 = vld [vmem:[%s330 + $0xc] sm:$0xff]
        %v334 = vld [vmem:[%s330 + $0x14] sm:$0xf]
        %v335 = vld [vmem:[%s330 + $0x18] sm:$0xff]
        %v336 = vld [vmem:[%s330 + $0x20] sm:$0xf]
        %v337 = vld [vmem:[%s330 + $0x24] sm:$0xff]
        %v338 = vld [vmem:[%s330 + $0x2c] sm:$0xf]
        %v339 = vld [vmem:[%s330 + $0x30] sm:$0xff]
        %v340 = vld [vmem:[%s330 + $0x38] sm:$0xf]
        %v341 = vld [vmem:[%s330 + $0x3c] sm:$0xff]
        %v342 = vld [vmem:[%s330 + $0x44] sm:$0xf]
        %v343 = vld [vmem:[%s330 + $0x48] sm:$0xff]
        %v344 = vld [vmem:[%s330 + $0x50] sm:$0xf]
        %v345 = vld [vmem:[%s330 + $0x54] sm:$0xff]
        %v346 = vld [vmem:[%s330 + $0x5c] sm:$0xf]
        %v347 = vld [vmem:[%s330 + $0x60] sm:$0xff]
        %v348 = vld [vmem:[%s330 + $0x68] sm:$0xf]
        %v349 = vld [vmem:[%s330 + $0x6c] sm:$0xff]
        %v350 = vld [vmem:[%s330 + $0x74] sm:$0xf]
        %v351 = vld [vmem:[%s330 + $0x78] sm:$0xff]
        %v352 = vld [vmem:[%s330 + $0x80] sm:$0xf]
        %v353 = vld [vmem:[%s330 + $0x84] sm:$0xff]
        %v354 = vld [vmem:[%s330 + $0x8c] sm:$0xf]
        %v355 = vld [vmem:[%s330 + $0x90] sm:$0xff]
        %v356 = vld [vmem:[%s330 + $0x98] sm:$0xf]
        %v357 = vld [vmem:[%s330 + $0x9c] sm:$0xff]
        %v358 = vld [vmem:[%s330 + $0xa4] sm:$0xf]
        %v359 = vld [vmem:[%s330 + $0xa8] sm:$0xff]
        %v360 = vld [vmem:[%s330 + $0xb0] sm:$0xf]
        %v361 = vld [vmem:[%s330 + $0xb4] sm:$0xff]
        %v362 = vld [vmem:[%s330 + $0xbc] sm:$0xf]
        %s363 = scalar_lea.vmem %s2, 160
        %v364 = vld [vmem:[%s363] sm:$0xf]
        %v365 = vld [vmem:[%s363 + $0x4] sm:$0xf]
        %v366 = vld [vmem:[%s363 + $0x8] sm:$0xf]
        %v367 = vld [vmem:[%s363 + $0xc] sm:$0xf]
        %v368 = vld [vmem:[%s363 + $0x10] sm:$0xf]
        %v369 = vld [vmem:[%s363 + $0x14] sm:$0xf]
        %v370 = vld [vmem:[%s363 + $0x18] sm:$0xf]
        %v371 = vld [vmem:[%s363 + $0x1c] sm:$0xf]
        %v372 = vld [vmem:[%s363 + $0x20] sm:$0xf]
        %v373 = vld [vmem:[%s363 + $0x24] sm:$0xf]
        %v374 = vld [vmem:[%s363 + $0x28] sm:$0xf]
        %v375 = vld [vmem:[%s363 + $0x2c] sm:$0xf]
        %v376 = vld [vmem:[%s363 + $0x30] sm:$0xf]
        %v377 = vld [vmem:[%s363 + $0x34] sm:$0xf]
        %v378 = vld [vmem:[%s363 + $0x38] sm:$0xf]
        %v379 = vld [vmem:[%s363 + $0x3c] sm:$0xf]
        %v380 = vld [vmem:[%s363 + $0x40] sm:$0xf]
        %v381 = vld [vmem:[%s363 + $0x44] sm:$0xf]
        %v382 = vld [vmem:[%s363 + $0x48] sm:$0xf]
        %v383 = vld [vmem:[%s363 + $0x4c] sm:$0xf]
        %v384 = vld [vmem:[%s363 + $0x50] sm:$0xf]
        %v385 = vld [vmem:[%s363 + $0x54] sm:$0xf]
        %v386 = vld [vmem:[%s363 + $0x58] sm:$0xf]
        %v387 = vld [vmem:[%s363 + $0x5c] sm:$0xf]
        %v388 = vld [vmem:[%s363 + $0x60] sm:$0xf]
        %v389 = vld [vmem:[%s363 + $0x64] sm:$0xf]
        %v390 = vld [vmem:[%s363 + $0x68] sm:$0xf]
        %v391 = vld [vmem:[%s363 + $0x6c] sm:$0xf]
        %v392 = vld [vmem:[%s363 + $0x70] sm:$0xf]
        %v393 = vld [vmem:[%s363 + $0x74] sm:$0xf]
        %v394 = vld [vmem:[%s363 + $0x78] sm:$0xf]
        %v395 = vld [vmem:[%s363 + $0x7c] sm:$0xf]
        %v396 = vld [vmem:[%s363 + $0x80] sm:$0xf]
        %v397 = vld [vmem:[%s363 + $0x84] sm:$0xf]
        %v398 = vld [vmem:[%s363 + $0x88] sm:$0xf]
        %v399 = vld [vmem:[%s363 + $0x8c] sm:$0xf]
        %v400 = vld [vmem:[%s363 + $0x90] sm:$0xf]
        %v401 = vld [vmem:[%s363 + $0x94] sm:$0xf]
        %v402 = vld [vmem:[%s363 + $0x98] sm:$0xf]
        %v403 = vld [vmem:[%s363 + $0x9c] sm:$0xf]
        %v436 = vunpack.c.l.b16 %v331
        %v437 = vunpack.c.h.b16 %v331
        %v438 = vunpack.c.l.b16 %v332
        %v439 = vunpack.c.l.b16 %v333
        %v440 = vunpack.c.h.b16 %v333
        %v441 = vunpack.c.l.b16 %v334
        %v442 = vunpack.c.l.b16 %v335
        %v443 = vunpack.c.h.b16 %v335
        %v444 = vunpack.c.l.b16 %v336
        %v445 = vunpack.c.l.b16 %v337
        %v446 = vunpack.c.h.b16 %v337
        %v447 = vunpack.c.l.b16 %v338
        %v448 = vunpack.c.l.b16 %v339
        %v449 = vunpack.c.h.b16 %v339
        %v450 = vunpack.c.l.b16 %v340
        %v451 = vunpack.c.l.b16 %v341
        %v452 = vunpack.c.h.b16 %v341
        %v453 = vunpack.c.l.b16 %v342
        %v454 = vunpack.c.l.b16 %v343
        %v455 = vunpack.c.h.b16 %v343
        %v456 = vunpack.c.l.b16 %v344
        %v457 = vunpack.c.l.b16 %v345
        %v458 = vunpack.c.h.b16 %v345
        %v459 = vunpack.c.l.b16 %v346
        %v460 = vunpack.c.l.b16 %v347
        %v461 = vunpack.c.h.b16 %v347
        %v462 = vunpack.c.l.b16 %v348
        %v463 = vunpack.c.l.b16 %v349
        %v464 = vunpack.c.h.b16 %v349
        %v465 = vunpack.c.l.b16 %v350
        %v466 = vunpack.c.l.b16 %v351
        %v467 = vunpack.c.h.b16 %v351
        %v468 = vunpack.c.l.b16 %v352
        %v469 = vunpack.c.l.b16 %v353
        %v470 = vunpack.c.h.b16 %v353
        %v471 = vunpack.c.l.b16 %v354
        %v472 = vunpack.c.l.b16 %v355
        %v473 = vunpack.c.h.b16 %v355
        %v474 = vunpack.c.l.b16 %v356
        %v475 = vunpack.c.l.b16 %v357
        %v476 = vunpack.c.h.b16 %v357
        %v477 = vunpack.c.l.b16 %v358
        %v478 = vunpack.c.l.b16 %v359
        %v479 = vunpack.c.h.b16 %v359
        %v480 = vunpack.c.l.b16 %v360
        %v481 = vunpack.c.l.b16 %v361
        %v482 = vunpack.c.h.b16 %v361
        %v483 = vunpack.c.l.b16 %v362
        %v484 = vpack.c.b16 %v439, %v436
        %v485 = vpack.c.b16 %v440, %v437
        %v486 = vpack.c.b16 %v441, %v438
        %v487 = vpack.c.b16 %v445, %v442
        %v488 = vpack.c.b16 %v446, %v443
        %v489 = vpack.c.b16 %v447, %v444
        %v490 = vpack.c.b16 %v451, %v448
        %v491 = vpack.c.b16 %v452, %v449
        %v492 = vpack.c.b16 %v453, %v450
        %v493 = vpack.c.b16 %v457, %v454
        %v494 = vpack.c.b16 %v458, %v455
        %v495 = vpack.c.b16 %v459, %v456
        %v496 = vpack.c.b16 %v463, %v460
        %v497 = vpack.c.b16 %v464, %v461
        %v498 = vpack.c.b16 %v465, %v462
        %v499 = vpack.c.b16 %v469, %v466
        %v500 = vpack.c.b16 %v470, %v467
        %v501 = vpack.c.b16 %v471, %v468
        %v502 = vpack.c.b16 %v475, %v472
        %v503 = vpack.c.b16 %v476, %v473
        %v504 = vpack.c.b16 %v477, %v474
        %v505 = vpack.c.b16 %v481, %v478
        %v506 = vpack.c.b16 %v482, %v479
        %v507 = vpack.c.b16 %v483, %v480
        %v564 = vunpack.c.l.b16 %v364
        %v565 = vunpack.c.l.b16 %v365
        %v566 = vunpack.c.l.b16 %v366
        %v567 = vunpack.c.l.b16 %v367
        %v568 = vunpack.c.l.b16 %v368
        %v569 = vunpack.c.l.b16 %v369
        %v570 = vunpack.c.l.b16 %v370
        %v571 = vunpack.c.l.b16 %v371
        %v572 = vunpack.c.l.b16 %v372
        %v573 = vunpack.c.l.b16 %v373
        %v574 = vunpack.c.l.b16 %v374
        %v575 = vunpack.c.l.b16 %v375
        %v576 = vunpack.c.l.b16 %v376
        %v577 = vunpack.c.l.b16 %v377
        %v578 = vunpack.c.l.b16 %v378
        %v579 = vunpack.c.l.b16 %v379
        %v580 = vunpack.c.l.b16 %v380
        %v581 = vunpack.c.l.b16 %v381
        %v582 = vunpack.c.l.b16 %v382
        %v583 = vunpack.c.l.b16 %v383
        %v584 = vunpack.c.l.b16 %v384
        %v585 = vunpack.c.l.b16 %v385
        %v586 = vunpack.c.l.b16 %v386
        %v587 = vunpack.c.l.b16 %v387
        %v588 = vunpack.c.l.b16 %v388
        %v589 = vunpack.c.l.b16 %v389
        %v590 = vunpack.c.l.b16 %v390
        %v591 = vunpack.c.l.b16 %v391
        %v592 = vunpack.c.l.b16 %v392
        %v593 = vunpack.c.l.b16 %v393
        %v594 = vunpack.c.l.b16 %v394
        %v595 = vunpack.c.l.b16 %v395
        %v596 = vunpack.c.l.b16 %v396
        %v597 = vunpack.c.l.b16 %v397
        %v598 = vunpack.c.l.b16 %v398
        %v599 = vunpack.c.l.b16 %v399
        %v600 = vunpack.c.l.b16 %v400
        %v601 = vunpack.c.l.b16 %v401
        %v602 = vunpack.c.l.b16 %v402
        %v603 = vunpack.c.l.b16 %v403
        %v604 = vpack.c.b16 %v565, %v564
        %v605 = vpack.c.b16 %v567, %v566
        %v606 = vpack.c.b16 %v569, %v568
        %v607 = vpack.c.b16 %v571, %v570
        %v608 = vpack.c.b16 %v573, %v572
        %v609 = vpack.c.b16 %v575, %v574
        %v610 = vpack.c.b16 %v577, %v576
        %v611 = vpack.c.b16 %v579, %v578
        %v612 = vpack.c.b16 %v581, %v580
        %v613 = vpack.c.b16 %v583, %v582
        %v614 = vpack.c.b16 %v585, %v584
        %v615 = vpack.c.b16 %v587, %v586
        %v616 = vpack.c.b16 %v589, %v588
        %v617 = vpack.c.b16 %v591, %v590
        %v618 = vpack.c.b16 %v593, %v592
        %v619 = vpack.c.b16 %v595, %v594
        %v620 = vpack.c.b16 %v597, %v596
        %v621 = vpack.c.b16 %v599, %v598
        %v622 = vpack.c.b16 %v601, %v600
        %v623 = vpack.c.b16 %v603, %v602
        %vm644 = vcmask 523264
        %v646 = vsel %vm644, %v486, 0
        %v649 = vsel %vm644, %v489, 0
        %v652 = vsel %vm644, %v492, 0
        %v655 = vsel %vm644, %v495, 0
        %v658 = vsel %vm644, %v498, 0
        %v661 = vsel %vm644, %v501, 0
        %v664 = vsel %vm644, %v504, 0
        %v667 = vsel %vm644, %v507, 0
        %669 = vmatprep.subr.bf16.mxu0 0
        %670 = vmatpush1.bf16.msra.mxu0 %v611
        %671 = vmatprep.subr.bf16.mxu0 0
        %672 = vmatpush1.bf16.msra.mxu0 %v610
        %673 = vmatprep.subr.bf16.mxu0 0
        %674 = vmatpush1.bf16.msra.mxu0 %v609
        %675 = vmatprep.subr.bf16.mxu0 0
        %676 = vmatpush1.bf16.msra.mxu0 %v608
        %677 = vmatprep.subr.bf16.mxu0 0
        %678 = vmatpush1.bf16.msra.mxu0 %v607
        %679 = vmatprep.subr.bf16.mxu0 0
        %680 = vmatpush1.bf16.msra.mxu0 %v606
        %681 = vmatprep.subr.bf16.mxu0 0
        %682 = vmatpush1.bf16.msra.mxu0 %v605
        %683 = vmatprep.subr.bf16.mxu0 0
        %684 = vmatpush1.bf16.msra.mxu0 %v604
        %685 = vmatprep.subr.bf16.mxu0 0
        %686 = vmatpush2.bf16.msra.mxu0 %v619
        %687 = vmatprep.subr.bf16.mxu0 0
        %688 = vmatpush2.bf16.msra.mxu0 %v618
        %689 = vmatprep.subr.bf16.mxu0 0
        %690 = vmatpush2.bf16.msra.mxu0 %v617
        %691 = vmatprep.subr.bf16.mxu0 0
        %692 = vmatpush2.bf16.msra.mxu0 %v616
        %693 = vmatprep.subr.bf16.mxu0 0
        %694 = vmatpush2.bf16.msra.mxu0 %v615
        %695 = vmatprep.subr.bf16.mxu0 0
        %696 = vmatpush2.bf16.msra.mxu0 %v614
        %697 = vmatprep.subr.bf16.mxu0 0
        %698 = vmatpush2.bf16.msra.mxu0 %v613
        %699 = vmatprep.subr.bf16.mxu0 0
        %700 = vmatpush2.bf16.msra.mxu0 %v612
        %701 = vmatprep.mubr.bf16.mxu0 %v485
        %702 = vmatmul.mubr.bf16.gmra.mxu0 %v484
        %v703 = vpop.f32.mrf.mxu0
        %v704 = vadd.f32 0.0, %v703
        %v705 = vpop.f32.mrf.mxu0
        %v706 = vpop.f32.mrf.mxu0
        %v707 = vadd.f32 0.0, %v706
        %v708 = vpop.f32.mrf.mxu0
        %709 = vmatprep.mubr.bf16.mxu0 %v488
        %710 = vmatmul.mubr.bf16.gmra.mxu0 %v487
        %v711 = vpop.f32.mrf.mxu0
        %v712 = vadd.f32 0.0, %v711
        %v713 = vpop.f32.mrf.mxu0
        %v714 = vpop.f32.mrf.mxu0
        %v715 = vadd.f32 0.0, %v714
        %v716 = vpop.f32.mrf.mxu0
        %717 = vmatprep.mubr.bf16.mxu0 %v491
        %718 = vmatmul.mubr.bf16.gmra.mxu0 %v490
        %v719 = vpop.f32.mrf.mxu0
        %v720 = vadd.f32 0.0, %v719
        %v721 = vpop.f32.mrf.mxu0
        %v722 = vpop.f32.mrf.mxu0
        %v723 = vadd.f32 0.0, %v722
        %v724 = vpop.f32.mrf.mxu0
        %725 = vmatprep.mubr.bf16.mxu0 %v494
        %726 = vmatmul.mubr.bf16.gmra.mxu0 %v493
        %v727 = vpop.f32.mrf.mxu0
        %v728 = vadd.f32 0.0, %v727
        %v729 = vpop.f32.mrf.mxu0
        %v730 = vpop.f32.mrf.mxu0
        %v731 = vadd.f32 0.0, %v730
        %v732 = vpop.f32.mrf.mxu0
        %733 = vmatprep.mubr.bf16.mxu0 %v497
        %734 = vmatmul.mubr.bf16.gmra.mxu0 %v496
        %v735 = vpop.f32.mrf.mxu0
        %v736 = vadd.f32 0.0, %v735
        %v737 = vpop.f32.mrf.mxu0
        %v738 = vpop.f32.mrf.mxu0
        %v739 = vadd.f32 0.0, %v738
        %v740 = vpop.f32.mrf.mxu0
        %741 = vmatprep.mubr.bf16.mxu0 %v500
        %742 = vmatmul.mubr.bf16.gmra.mxu0 %v499
        %v743 = vpop.f32.mrf.mxu0
        %v744 = vadd.f32 0.0, %v743
        %v745 = vpop.f32.mrf.mxu0
        %v746 = vpop.f32.mrf.mxu0
        %v747 = vadd.f32 0.0, %v746
        %v748 = vpop.f32.mrf.mxu0
        %749 = vmatprep.mubr.bf16.mxu0 %v503
        %750 = vmatmul.mubr.bf16.gmra.mxu0 %v502
        %v751 = vpop.f32.mrf.mxu0
        %v752 = vadd.f32 0.0, %v751
        %v753 = vpop.f32.mrf.mxu0
        %v754 = vpop.f32.mrf.mxu0
        %v755 = vadd.f32 0.0, %v754
        %v756 = vpop.f32.mrf.mxu0
        %757 = vmatprep.mubr.bf16.mxu0 %v506
        %758 = vmatmul.mubr.bf16.gmra.mxu0 %v505
        %v759 = vpop.f32.mrf.mxu0
        %v760 = vadd.f32 0.0, %v759
        %v761 = vpop.f32.mrf.mxu0
        %v762 = vpop.f32.mrf.mxu0
        %v763 = vadd.f32 0.0, %v762
        %v764 = vpop.f32.mrf.mxu0
        %765 = vdwg.mxu0
        %766 = vmatprep.subr.bf16.mxu0 0
        %767 = vmatpush1.bf16.msra.mxu0 0
        %768 = vmatprep.subr.bf16.mxu0 0
        %769 = vmatpush1.bf16.msra.mxu0 0
        %770 = vmatprep.subr.bf16.mxu0 0
        %771 = vmatpush1.bf16.msra.mxu0 0
        %772 = vmatprep.subr.bf16.mxu0 0
        %773 = vmatpush1.bf16.msra.mxu0 0
        %774 = vmatprep.subr.bf16.mxu0 0
        %775 = vmatpush1.bf16.msra.mxu0 %v623
        %776 = vmatprep.subr.bf16.mxu0 0
        %777 = vmatpush1.bf16.msra.mxu0 %v622
        %778 = vmatprep.subr.bf16.mxu0 0
        %779 = vmatpush1.bf16.msra.mxu0 %v621
        %780 = vmatprep.subr.bf16.mxu0 0
        %781 = vmatpush1.bf16.msra.mxu0 %v620
        %782 = vmatprep.subr.bf16.mxu0 0
        %783 = vmatpush2.bf16.msra.mxu0 0
        %784 = vmatprep.subr.bf16.mxu0 0
        %785 = vmatpush2.bf16.msra.mxu0 0
        %786 = vmatprep.subr.bf16.mxu0 0
        %787 = vmatpush2.bf16.msra.mxu0 0
        %788 = vmatprep.subr.bf16.mxu0 0
        %789 = vmatpush2.bf16.msra.mxu0 0
        %790 = vmatprep.subr.bf16.mxu0 0
        %791 = vmatpush2.bf16.msra.mxu0 0
        %792 = vmatprep.subr.bf16.mxu0 0
        %793 = vmatpush2.bf16.msra.mxu0 0
        %794 = vmatprep.subr.bf16.mxu0 0
        %795 = vmatpush2.bf16.msra.mxu0 0
        %796 = vmatprep.subr.bf16.mxu0 0
        %797 = vmatpush2.bf16.msra.mxu0 0
        %798 = vmatprep.mubr.bf16.mxu0 0
        %799 = vmatmul.mubr.bf16.gmra.mxu0 %v646
        %v800 = vpop.f32.mrf.mxu0
        %v801 = vadd.f32 %v704, %v800
        %v802 = vpop.f32.mrf.mxu0
        %v803 = vpop.f32.mrf.mxu0
        %v804 = vadd.f32 %v707, %v803
        %v805 = vpop.f32.mrf.mxu0
        %806 = vmatprep.mubr.bf16.mxu0 0
        %807 = vmatmul.mubr.bf16.gmra.mxu0 %v649
        %v808 = vpop.f32.mrf.mxu0
        %v809 = vadd.f32 %v712, %v808
        %v810 = vpop.f32.mrf.mxu0
        %v811 = vpop.f32.mrf.mxu0
        %v812 = vadd.f32 %v715, %v811
        %v813 = vpop.f32.mrf.mxu0
        %814 = vmatprep.mubr.bf16.mxu0 0
        %815 = vmatmul.mubr.bf16.gmra.mxu0 %v652
        %v816 = vpop.f32.mrf.mxu0
        %v817 = vadd.f32 %v720, %v816
        %v818 = vpop.f32.mrf.mxu0
        %v819 = vpop.f32.mrf.mxu0
        %v820 = vadd.f32 %v723, %v819
        %v821 = vpop.f32.mrf.mxu0
        %822 = vmatprep.mubr.bf16.mxu0 0
        %823 = vmatmul.mubr.bf16.gmra.mxu0 %v655
        %v824 = vpop.f32.mrf.mxu0
        %v825 = vadd.f32 %v728, %v824
        %v826 = vpop.f32.mrf.mxu0
        %v827 = vpop.f32.mrf.mxu0
        %v828 = vadd.f32 %v731, %v827
        %v829 = vpop.f32.mrf.mxu0
        %830 = vmatprep.mubr.bf16.mxu0 0
        %831 = vmatmul.mubr.bf16.gmra.mxu0 %v658
        %v832 = vpop.f32.mrf.mxu0
        %v833 = vadd.f32 %v736, %v832
        %v834 = vpop.f32.mrf.mxu0
        %v835 = vpop.f32.mrf.mxu0
        %v836 = vadd.f32 %v739, %v835
        %v837 = vpop.f32.mrf.mxu0
        %838 = vmatprep.mubr.bf16.mxu0 0
        %839 = vmatmul.mubr.bf16.gmra.mxu0 %v661
        %v840 = vpop.f32.mrf.mxu0
        %v841 = vadd.f32 %v744, %v840
        %v842 = vpop.f32.mrf.mxu0
        %v843 = vpop.f32.mrf.mxu0
        %v844 = vadd.f32 %v747, %v843
        %v845 = vpop.f32.mrf.mxu0
        %846 = vmatprep.mubr.bf16.mxu0 0
        %847 = vmatmul.mubr.bf16.gmra.mxu0 %v664
        %v848 = vpop.f32.mrf.mxu0
        %v849 = vadd.f32 %v752, %v848
        %v850 = vpop.f32.mrf.mxu0
        %v851 = vpop.f32.mrf.mxu0
        %v852 = vadd.f32 %v755, %v851
        %v853 = vpop.f32.mrf.mxu0
        %854 = vmatprep.mubr.bf16.mxu0 0
        %855 = vmatmul.mubr.bf16.gmra.mxu0 %v667
        %v856 = vpop.f32.mrf.mxu0
        %v857 = vadd.f32 %v760, %v856
        %v858 = vpop.f32.mrf.mxu0
        %v859 = vpop.f32.mrf.mxu0
        %v860 = vadd.f32 %v763, %v859
        %v861 = vpop.f32.mrf.mxu0
        %862 = vdwg.mxu0
        %v895 = vunpack.c.l.b16 %v255
        %v896 = vunpack.c.h.b16 %v255
        %v897 = vunpack.c.l.b16 %v256
        %v898 = vunpack.c.l.b16 %v257
        %v899 = vunpack.c.h.b16 %v257
        %v900 = vunpack.c.l.b16 %v258
        %v901 = vunpack.c.l.b16 %v259
        %v902 = vunpack.c.h.b16 %v259
        %v903 = vunpack.c.l.b16 %v260
        %v904 = vunpack.c.l.b16 %v261
        %v905 = vunpack.c.h.b16 %v261
        %v906 = vunpack.c.l.b16 %v262
        %v907 = vunpack.c.l.b16 %v263
        %v908 = vunpack.c.h.b16 %v263
        %v909 = vunpack.c.l.b16 %v264
        %v910 = vunpack.c.l.b16 %v265
        %v911 = vunpack.c.h.b16 %v265
        %v912 = vunpack.c.l.b16 %v266
        %v913 = vunpack.c.l.b16 %v267
        %v914 = vunpack.c.h.b16 %v267
        %v915 = vunpack.c.l.b16 %v268
        %v916 = vunpack.c.l.b16 %v269
        %v917 = vunpack.c.h.b16 %v269
        %v918 = vunpack.c.l.b16 %v270
        %v919 = vunpack.c.l.b16 %v271
        %v920 = vunpack.c.h.b16 %v271
        %v921 = vunpack.c.l.b16 %v272
        %v922 = vunpack.c.l.b16 %v273
        %v923 = vunpack.c.h.b16 %v273
        %v924 = vunpack.c.l.b16 %v274
        %v925 = vunpack.c.l.b16 %v275
        %v926 = vunpack.c.h.b16 %v275
        %v927 = vunpack.c.l.b16 %v276
        %v928 = vunpack.c.l.b16 %v277
        %v929 = vunpack.c.h.b16 %v277
        %v930 = vunpack.c.l.b16 %v278
        %v931 = vunpack.c.l.b16 %v279
        %v932 = vunpack.c.h.b16 %v279
        %v933 = vunpack.c.l.b16 %v280
        %v934 = vunpack.c.l.b16 %v281
        %v935 = vunpack.c.h.b16 %v281
        %v936 = vunpack.c.l.b16 %v282
        %v937 = vunpack.c.l.b16 %v283
        %v938 = vunpack.c.h.b16 %v283
        %v939 = vunpack.c.l.b16 %v284
        %v940 = vunpack.c.l.b16 %v285
        %v941 = vunpack.c.h.b16 %v285
        %v942 = vunpack.c.l.b16 %v286
        %v943 = vpack.c.b16 %v898, %v895
        %v944 = vpack.c.b16 %v899, %v896
        %v945 = vpack.c.b16 %v900, %v897
        %v946 = vpack.c.b16 %v904, %v901
        %v947 = vpack.c.b16 %v905, %v902
        %v948 = vpack.c.b16 %v906, %v903
        %v949 = vpack.c.b16 %v910, %v907
        %v950 = vpack.c.b16 %v911, %v908
        %v951 = vpack.c.b16 %v912, %v909
        %v952 = vpack.c.b16 %v916, %v913
        %v953 = vpack.c.b16 %v917, %v914
        %v954 = vpack.c.b16 %v918, %v915
        %v955 = vpack.c.b16 %v922, %v919
        %v956 = vpack.c.b16 %v923, %v920
        %v957 = vpack.c.b16 %v924, %v921
        %v958 = vpack.c.b16 %v928, %v925
        %v959 = vpack.c.b16 %v929, %v926
        %v960 = vpack.c.b16 %v930, %v927
        %v961 = vpack.c.b16 %v934, %v931
        %v962 = vpack.c.b16 %v935, %v932
        %v963 = vpack.c.b16 %v936, %v933
        %v964 = vpack.c.b16 %v940, %v937
        %v965 = vpack.c.b16 %v941, %v938
        %v966 = vpack.c.b16 %v942, %v939
        %v1023 = vunpack.c.l.b16 %v287
        %v1024 = vunpack.c.l.b16 %v288
        %v1025 = vunpack.c.l.b16 %v289
        %v1026 = vunpack.c.l.b16 %v290
        %v1027 = vunpack.c.l.b16 %v291
        %v1028 = vunpack.c.l.b16 %v292
        %v1029 = vunpack.c.l.b16 %v293
        %v1030 = vunpack.c.l.b16 %v294
        %v1031 = vunpack.c.l.b16 %v295
        %v1032 = vunpack.c.l.b16 %v296
        %v1033 = vunpack.c.l.b16 %v297
        %v1034 = vunpack.c.l.b16 %v298
        %v1035 = vunpack.c.l.b16 %v299
        %v1036 = vunpack.c.l.b16 %v300
        %v1037 = vunpack.c.l.b16 %v301
        %v1038 = vunpack.c.l.b16 %v302
        %v1039 = vunpack.c.l.b16 %v303
        %v1040 = vunpack.c.l.b16 %v304
        %v1041 = vunpack.c.l.b16 %v305
        %v1042 = vunpack.c.l.b16 %v306
        %v1043 = vunpack.c.l.b16 %v307
        %v1044 = vunpack.c.l.b16 %v308
        %v1045 = vunpack.c.l.b16 %v309
        %v1046 = vunpack.c.l.b16 %v310
        %v1047 = vunpack.c.l.b16 %v311
        %v1048 = vunpack.c.l.b16 %v312
        %v1049 = vunpack.c.l.b16 %v313
        %v1050 = vunpack.c.l.b16 %v314
        %v1051 = vunpack.c.l.b16 %v315
        %v1052 = vunpack.c.l.b16 %v316
        %v1053 = vunpack.c.l.b16 %v317
        %v1054 = vunpack.c.l.b16 %v318
        %v1055 = vunpack.c.l.b16 %v319
        %v1056 = vunpack.c.l.b16 %v320
        %v1057 = vunpack.c.l.b16 %v321
        %v1058 = vunpack.c.l.b16 %v322
        %v1059 = vunpack.c.l.b16 %v323
        %v1060 = vunpack.c.l.b16 %v324
        %v1061 = vunpack.c.l.b16 %v325
        %v1062 = vunpack.c.l.b16 %v326
        %v1063 = vpack.c.b16 %v1024, %v1023
        %v1064 = vpack.c.b16 %v1026, %v1025
        %v1065 = vpack.c.b16 %v1028, %v1027
        %v1066 = vpack.c.b16 %v1030, %v1029
        %v1067 = vpack.c.b16 %v1032, %v1031
        %v1068 = vpack.c.b16 %v1034, %v1033
        %v1069 = vpack.c.b16 %v1036, %v1035
        %v1070 = vpack.c.b16 %v1038, %v1037
        %v1071 = vpack.c.b16 %v1040, %v1039
        %v1072 = vpack.c.b16 %v1042, %v1041
        %v1073 = vpack.c.b16 %v1044, %v1043
        %v1074 = vpack.c.b16 %v1046, %v1045
        %v1075 = vpack.c.b16 %v1048, %v1047
        %v1076 = vpack.c.b16 %v1050, %v1049
        %v1077 = vpack.c.b16 %v1052, %v1051
        %v1078 = vpack.c.b16 %v1054, %v1053
        %v1079 = vpack.c.b16 %v1056, %v1055
        %v1080 = vpack.c.b16 %v1058, %v1057
        %v1081 = vpack.c.b16 %v1060, %v1059
        %v1082 = vpack.c.b16 %v1062, %v1061
        %v1104 = vsel %vm644, %v945, 0
        %v1107 = vsel %vm644, %v948, 0
        %v1110 = vsel %vm644, %v951, 0
        %v1113 = vsel %vm644, %v954, 0
        %v1116 = vsel %vm644, %v957, 0
        %v1119 = vsel %vm644, %v960, 0
        %v1122 = vsel %vm644, %v963, 0
        %v1125 = vsel %vm644, %v966, 0
        %1127 = vmatprep.subr.bf16.mxu0 0
        %1128 = vmatpush1.bf16.msra.mxu0 %v1070
        %1129 = vmatprep.subr.bf16.mxu0 0
        %1130 = vmatpush1.bf16.msra.mxu0 %v1069
        %1131 = vmatprep.subr.bf16.mxu0 0
        %1132 = vmatpush1.bf16.msra.mxu0 %v1068
        %1133 = vmatprep.subr.bf16.mxu0 0
        %1134 = vmatpush1.bf16.msra.mxu0 %v1067
        %1135 = vmatprep.subr.bf16.mxu0 0
        %1136 = vmatpush1.bf16.msra.mxu0 %v1066
        %1137 = vmatprep.subr.bf16.mxu0 0
        %1138 = vmatpush1.bf16.msra.mxu0 %v1065
        %1139 = vmatprep.subr.bf16.mxu0 0
        %1140 = vmatpush1.bf16.msra.mxu0 %v1064
        %1141 = vmatprep.subr.bf16.mxu0 0
        %1142 = vmatpush1.bf16.msra.mxu0 %v1063
        %1143 = vmatprep.subr.bf16.mxu0 0
        %1144 = vmatpush2.bf16.msra.mxu0 %v1078
        %1145 = vmatprep.subr.bf16.mxu0 0
        %1146 = vmatpush2.bf16.msra.mxu0 %v1077
        %1147 = vmatprep.subr.bf16.mxu0 0
        %1148 = vmatpush2.bf16.msra.mxu0 %v1076
        %1149 = vmatprep.subr.bf16.mxu0 0
        %1150 = vmatpush2.bf16.msra.mxu0 %v1075
        %1151 = vmatprep.subr.bf16.mxu0 0
        %1152 = vmatpush2.bf16.msra.mxu0 %v1074
        %1153 = vmatprep.subr.bf16.mxu0 0
        %1154 = vmatpush2.bf16.msra.mxu0 %v1073
        %1155 = vmatprep.subr.bf16.mxu0 0
        %1156 = vmatpush2.bf16.msra.mxu0 %v1072
        %1157 = vmatprep.subr.bf16.mxu0 0
        %1158 = vmatpush2.bf16.msra.mxu0 %v1071
        %1159 = vmatprep.mubr.bf16.mxu0 %v944
        %1160 = vmatmul.mubr.bf16.gmra.mxu0 %v943
        %v1161 = vpop.f32.mrf.mxu0
        %v1162 = vadd.f32 %v801, %v1161
        %v1163 = vpop.f32.mrf.mxu0
        %v1164 = vpop.f32.mrf.mxu0
        %v1165 = vadd.f32 %v804, %v1164
        %v1166 = vpop.f32.mrf.mxu0
        %1167 = vmatprep.mubr.bf16.mxu0 %v947
        %1168 = vmatmul.mubr.bf16.gmra.mxu0 %v946
        %v1169 = vpop.f32.mrf.mxu0
        %v1170 = vadd.f32 %v809, %v1169
        %v1171 = vpop.f32.mrf.mxu0
        %v1172 = vpop.f32.mrf.mxu0
        %v1173 = vadd.f32 %v812, %v1172
        %v1174 = vpop.f32.mrf.mxu0
        %1175 = vmatprep.mubr.bf16.mxu0 %v950
        %1176 = vmatmul.mubr.bf16.gmra.mxu0 %v949
        %v1177 = vpop.f32.mrf.mxu0
        %v1178 = vadd.f32 %v817, %v1177
        %v1179 = vpop.f32.mrf.mxu0
        %v1180 = vpop.f32.mrf.mxu0
        %v1181 = vadd.f32 %v820, %v1180
        %v1182 = vpop.f32.mrf.mxu0
        %1183 = vmatprep.mubr.bf16.mxu0 %v953
        %1184 = vmatmul.mubr.bf16.gmra.mxu0 %v952
        %v1185 = vpop.f32.mrf.mxu0
        %v1186 = vadd.f32 %v825, %v1185
        %v1187 = vpop.f32.mrf.mxu0
        %v1188 = vpop.f32.mrf.mxu0
        %v1189 = vadd.f32 %v828, %v1188
        %v1190 = vpop.f32.mrf.mxu0
        %1191 = vmatprep.mubr.bf16.mxu0 %v956
        %1192 = vmatmul.mubr.bf16.gmra.mxu0 %v955
        %v1193 = vpop.f32.mrf.mxu0
        %v1194 = vadd.f32 %v833, %v1193
        %v1195 = vpop.f32.mrf.mxu0
        %v1196 = vpop.f32.mrf.mxu0
        %v1197 = vadd.f32 %v836, %v1196
        %v1198 = vpop.f32.mrf.mxu0
        %1199 = vmatprep.mubr.bf16.mxu0 %v959
        %1200 = vmatmul.mubr.bf16.gmra.mxu0 %v958
        %v1201 = vpop.f32.mrf.mxu0
        %v1202 = vadd.f32 %v841, %v1201
        %v1203 = vpop.f32.mrf.mxu0
        %v1204 = vpop.f32.mrf.mxu0
        %v1205 = vadd.f32 %v844, %v1204
        %v1206 = vpop.f32.mrf.mxu0
        %1207 = vmatprep.mubr.bf16.mxu0 %v962
        %1208 = vmatmul.mubr.bf16.gmra.mxu0 %v961
        %v1209 = vpop.f32.mrf.mxu0
        %v1210 = vadd.f32 %v849, %v1209
        %v1211 = vpop.f32.mrf.mxu0
        %v1212 = vpop.f32.mrf.mxu0
        %v1213 = vadd.f32 %v852, %v1212
        %v1214 = vpop.f32.mrf.mxu0
        %1215 = vmatprep.mubr.bf16.mxu0 %v965
        %1216 = vmatmul.mubr.bf16.gmra.mxu0 %v964
        %v1217 = vpop.f32.mrf.mxu0
        %v1218 = vadd.f32 %v857, %v1217
        %v1219 = vpop.f32.mrf.mxu0
        %v1220 = vpop.f32.mrf.mxu0
        %v1221 = vadd.f32 %v860, %v1220
        %v1222 = vpop.f32.mrf.mxu0
        %1223 = vdwg.mxu0
        %1224 = vmatprep.subr.bf16.mxu0 0
        %1225 = vmatpush1.bf16.msra.mxu0 0
        %1226 = vmatprep.subr.bf16.mxu0 0
        %1227 = vmatpush1.bf16.msra.mxu0 0
        %1228 = vmatprep.subr.bf16.mxu0 0
        %1229 = vmatpush1.bf16.msra.mxu0 0
        %1230 = vmatprep.subr.bf16.mxu0 0
        %1231 = vmatpush1.bf16.msra.mxu0 0
        %1232 = vmatprep.subr.bf16.mxu0 0
        %1233 = vmatpush1.bf16.msra.mxu0 %v1082
        %1234 = vmatprep.subr.bf16.mxu0 0
        %1235 = vmatpush1.bf16.msra.mxu0 %v1081
        %1236 = vmatprep.subr.bf16.mxu0 0
        %1237 = vmatpush1.bf16.msra.mxu0 %v1080
        %1238 = vmatprep.subr.bf16.mxu0 0
        %1239 = vmatpush1.bf16.msra.mxu0 %v1079
        %1240 = vmatprep.subr.bf16.mxu0 0
        %1241 = vmatpush2.bf16.msra.mxu0 0
        %1242 = vmatprep.subr.bf16.mxu0 0
        %1243 = vmatpush2.bf16.msra.mxu0 0
        %1244 = vmatprep.subr.bf16.mxu0 0
        %1245 = vmatpush2.bf16.msra.mxu0 0
        %1246 = vmatprep.subr.bf16.mxu0 0
        %1247 = vmatpush2.bf16.msra.mxu0 0
        %1248 = vmatprep.subr.bf16.mxu0 0
        %1249 = vmatpush2.bf16.msra.mxu0 0
        %1250 = vmatprep.subr.bf16.mxu0 0
        %1251 = vmatpush2.bf16.msra.mxu0 0
        %1252 = vmatprep.subr.bf16.mxu0 0
        %1253 = vmatpush2.bf16.msra.mxu0 0
        %1254 = vmatprep.subr.bf16.mxu0 0
        %1255 = vmatpush2.bf16.msra.mxu0 0
        %1256 = vmatprep.mubr.bf16.mxu0 0
        %1257 = vmatmul.mubr.bf16.gmra.mxu0 %v1104
        %v1258 = vpop.f32.mrf.mxu0
        %v1259 = vadd.f32 %v1162, %v1258
        %v1260 = vpop.f32.mrf.mxu0
        %v1261 = vpop.f32.mrf.mxu0
        %v1262 = vadd.f32 %v1165, %v1261
        %v1263 = vpop.f32.mrf.mxu0
        %1264 = vmatprep.mubr.bf16.mxu0 0
        %1265 = vmatmul.mubr.bf16.gmra.mxu0 %v1107
        %v1266 = vpop.f32.mrf.mxu0
        %v1267 = vadd.f32 %v1170, %v1266
        %v1268 = vpop.f32.mrf.mxu0
        %v1269 = vpop.f32.mrf.mxu0
        %v1270 = vadd.f32 %v1173, %v1269
        %v1271 = vpop.f32.mrf.mxu0
        %1272 = vmatprep.mubr.bf16.mxu0 0
        %1273 = vmatmul.mubr.bf16.gmra.mxu0 %v1110
        %v1274 = vpop.f32.mrf.mxu0
        %v1275 = vadd.f32 %v1178, %v1274
        %v1276 = vpop.f32.mrf.mxu0
        %v1277 = vpop.f32.mrf.mxu0
        %v1278 = vadd.f32 %v1181, %v1277
        %v1279 = vpop.f32.mrf.mxu0
        %1280 = vmatprep.mubr.bf16.mxu0 0
        %1281 = vmatmul.mubr.bf16.gmra.mxu0 %v1113
        %v1282 = vpop.f32.mrf.mxu0
        %v1283 = vadd.f32 %v1186, %v1282
        %v1284 = vpop.f32.mrf.mxu0
        %v1285 = vpop.f32.mrf.mxu0
        %v1286 = vadd.f32 %v1189, %v1285
        %v1287 = vpop.f32.mrf.mxu0
        %1288 = vmatprep.mubr.bf16.mxu0 0
        %1289 = vmatmul.mubr.bf16.gmra.mxu0 %v1116
        %v1290 = vpop.f32.mrf.mxu0
        %v1291 = vadd.f32 %v1194, %v1290
        %v1292 = vpop.f32.mrf.mxu0
        %v1293 = vpop.f32.mrf.mxu0
        %v1294 = vadd.f32 %v1197, %v1293
        %v1295 = vpop.f32.mrf.mxu0
        %1296 = vmatprep.mubr.bf16.mxu0 0
        %1297 = vmatmul.mubr.bf16.gmra.mxu0 %v1119
        %v1298 = vpop.f32.mrf.mxu0
        %v1299 = vadd.f32 %v1202, %v1298
        %v1300 = vpop.f32.mrf.mxu0
        %v1301 = vpop.f32.mrf.mxu0
        %v1302 = vadd.f32 %v1205, %v1301
        %v1303 = vpop.f32.mrf.mxu0
        %1304 = vmatprep.mubr.bf16.mxu0 0
        %1305 = vmatmul.mubr.bf16.gmra.mxu0 %v1122
        %v1306 = vpop.f32.mrf.mxu0
        %v1307 = vadd.f32 %v1210, %v1306
        %v1308 = vpop.f32.mrf.mxu0
        %v1309 = vpop.f32.mrf.mxu0
        %v1310 = vadd.f32 %v1213, %v1309
        %v1311 = vpop.f32.mrf.mxu0
        %1312 = vmatprep.mubr.bf16.mxu0 0
        %1313 = vmatmul.mubr.bf16.gmra.mxu0 %v1125
        %v1314 = vpop.f32.mrf.mxu0
        %v1315 = vadd.f32 %v1218, %v1314
        %v1316 = vpop.f32.mrf.mxu0
        %v1317 = vpop.f32.mrf.mxu0
        %v1318 = vadd.f32 %v1221, %v1317
        %v1319 = vpop.f32.mrf.mxu0
        %1320 = vdwg.mxu0
        %s1321 = sadd.s32 %s251, 2
        %s1322 = smul.u32 %s1321, 6
        %s1323 = smul.addr %s1322, 4
        %s1324 = scalar_lea.vmem %s237, %s1323
        %v1325 = vld [vmem:[%s1324] sm:$0xff]
        %v1326 = vld [vmem:[%s1324 + $0x8] sm:$0xf]
        %v1327 = vld [vmem:[%s1324 + $0xc] sm:$0xff]
        %v1328 = vld [vmem:[%s1324 + $0x14] sm:$0xf]
        %v1329 = vld [vmem:[%s1324 + $0x18] sm:$0xff]
        %v1330 = vld [vmem:[%s1324 + $0x20] sm:$0xf]
        %v1331 = vld [vmem:[%s1324 + $0x24] sm:$0xff]
        %v1332 = vld [vmem:[%s1324 + $0x2c] sm:$0xf]
        %v1333 = vld [vmem:[%s1324 + $0x30] sm:$0xff]
        %v1334 = vld [vmem:[%s1324 + $0x38] sm:$0xf]
        %v1335 = vld [vmem:[%s1324 + $0x3c] sm:$0xff]
        %v1336 = vld [vmem:[%s1324 + $0x44] sm:$0xf]
        %v1337 = vld [vmem:[%s1324 + $0x48] sm:$0xff]
        %v1338 = vld [vmem:[%s1324 + $0x50] sm:$0xf]
        %v1339 = vld [vmem:[%s1324 + $0x54] sm:$0xff]
        %v1340 = vld [vmem:[%s1324 + $0x5c] sm:$0xf]
        %v1341 = vld [vmem:[%s1324 + $0x60] sm:$0xff]
        %v1342 = vld [vmem:[%s1324 + $0x68] sm:$0xf]
        %v1343 = vld [vmem:[%s1324 + $0x6c] sm:$0xff]
        %v1344 = vld [vmem:[%s1324 + $0x74] sm:$0xf]
        %v1345 = vld [vmem:[%s1324 + $0x78] sm:$0xff]
        %v1346 = vld [vmem:[%s1324 + $0x80] sm:$0xf]
        %v1347 = vld [vmem:[%s1324 + $0x84] sm:$0xff]
        %v1348 = vld [vmem:[%s1324 + $0x8c] sm:$0xf]
        %v1349 = vld [vmem:[%s1324 + $0x90] sm:$0xff]
        %v1350 = vld [vmem:[%s1324 + $0x98] sm:$0xf]
        %v1351 = vld [vmem:[%s1324 + $0x9c] sm:$0xff]
        %v1352 = vld [vmem:[%s1324 + $0xa4] sm:$0xf]
        %v1353 = vld [vmem:[%s1324 + $0xa8] sm:$0xff]
        %v1354 = vld [vmem:[%s1324 + $0xb0] sm:$0xf]
        %v1355 = vld [vmem:[%s1324 + $0xb4] sm:$0xff]
        %v1356 = vld [vmem:[%s1324 + $0xbc] sm:$0xf]
        %s1357 = scalar_lea.vmem %s2, 320
        %v1358 = vld [vmem:[%s1357] sm:$0xf]
        %v1359 = vld [vmem:[%s1357 + $0x4] sm:$0xf]
        %v1360 = vld [vmem:[%s1357 + $0x8] sm:$0xf]
        %v1361 = vld [vmem:[%s1357 + $0xc] sm:$0xf]
        %v1362 = vld [vmem:[%s1357 + $0x10] sm:$0xf]
        %v1363 = vld [vmem:[%s1357 + $0x14] sm:$0xf]
        %v1364 = vld [vmem:[%s1357 + $0x18] sm:$0xf]
        %v1365 = vld [vmem:[%s1357 + $0x1c] sm:$0xf]
        %v1366 = vld [vmem:[%s1357 + $0x20] sm:$0xf]
        %v1367 = vld [vmem:[%s1357 + $0x24] sm:$0xf]
        %v1368 = vld [vmem:[%s1357 + $0x28] sm:$0xf]
        %v1369 = vld [vmem:[%s1357 + $0x2c] sm:$0xf]
        %v1370 = vld [vmem:[%s1357 + $0x30] sm:$0xf]
        %v1371 = vld [vmem:[%s1357 + $0x34] sm:$0xf]
        %v1372 = vld [vmem:[%s1357 + $0x38] sm:$0xf]
        %v1373 = vld [vmem:[%s1357 + $0x3c] sm:$0xf]
        %v1374 = vld [vmem:[%s1357 + $0x40] sm:$0xf]
        %v1375 = vld [vmem:[%s1357 + $0x44] sm:$0xf]
        %v1376 = vld [vmem:[%s1357 + $0x48] sm:$0xf]
        %v1377 = vld [vmem:[%s1357 + $0x4c] sm:$0xf]
        %v1378 = vld [vmem:[%s1357 + $0x50] sm:$0xf]
        %v1379 = vld [vmem:[%s1357 + $0x54] sm:$0xf]
        %v1380 = vld [vmem:[%s1357 + $0x58] sm:$0xf]
        %v1381 = vld [vmem:[%s1357 + $0x5c] sm:$0xf]
        %v1382 = vld [vmem:[%s1357 + $0x60] sm:$0xf]
        %v1383 = vld [vmem:[%s1357 + $0x64] sm:$0xf]
        %v1384 = vld [vmem:[%s1357 + $0x68] sm:$0xf]
        %v1385 = vld [vmem:[%s1357 + $0x6c] sm:$0xf]
        %v1386 = vld [vmem:[%s1357 + $0x70] sm:$0xf]
        %v1387 = vld [vmem:[%s1357 + $0x74] sm:$0xf]
        %v1388 = vld [vmem:[%s1357 + $0x78] sm:$0xf]
        %v1389 = vld [vmem:[%s1357 + $0x7c] sm:$0xf]
        %v1390 = vld [vmem:[%s1357 + $0x80] sm:$0xf]
        %v1391 = vld [vmem:[%s1357 + $0x84] sm:$0xf]
        %v1392 = vld [vmem:[%s1357 + $0x88] sm:$0xf]
        %v1393 = vld [vmem:[%s1357 + $0x8c] sm:$0xf]
        %v1394 = vld [vmem:[%s1357 + $0x90] sm:$0xf]
        %v1395 = vld [vmem:[%s1357 + $0x94] sm:$0xf]
        %v1396 = vld [vmem:[%s1357 + $0x98] sm:$0xf]
        %v1397 = vld [vmem:[%s1357 + $0x9c] sm:$0xf]
        %v1430 = vunpack.c.l.b16 %v1325
        %v1431 = vunpack.c.h.b16 %v1325
        %v1432 = vunpack.c.l.b16 %v1326
        %v1433 = vunpack.c.l.b16 %v1327
        %v1434 = vunpack.c.h.b16 %v1327
        %v1435 = vunpack.c.l.b16 %v1328
        %v1436 = vunpack.c.l.b16 %v1329
        %v1437 = vunpack.c.h.b16 %v1329
        %v1438 = vunpack.c.l.b16 %v1330
        %v1439 = vunpack.c.l.b16 %v1331
        %v1440 = vunpack.c.h.b16 %v1331
        %v1441 = vunpack.c.l.b16 %v1332
        %v1442 = vunpack.c.l.b16 %v1333
        %v1443 = vunpack.c.h.b16 %v1333
        %v1444 = vunpack.c.l.b16 %v1334
        %v1445 = vunpack.c.l.b16 %v1335
        %v1446 = vunpack.c.h.b16 %v1335
        %v1447 = vunpack.c.l.b16 %v1336
        %v1448 = vunpack.c.l.b16 %v1337
        %v1449 = vunpack.c.h.b16 %v1337
        %v1450 = vunpack.c.l.b16 %v1338
        %v1451 = vunpack.c.l.b16 %v1339
        %v1452 = vunpack.c.h.b16 %v1339
        %v1453 = vunpack.c.l.b16 %v1340
        %v1454 = vunpack.c.l.b16 %v1341
        %v1455 = vunpack.c.h.b16 %v1341
        %v1456 = vunpack.c.l.b16 %v1342
        %v1457 = vunpack.c.l.b16 %v1343
        %v1458 = vunpack.c.h.b16 %v1343
        %v1459 = vunpack.c.l.b16 %v1344
        %v1460 = vunpack.c.l.b16 %v1345
        %v1461 = vunpack.c.h.b16 %v1345
        %v1462 = vunpack.c.l.b16 %v1346
        %v1463 = vunpack.c.l.b16 %v1347
        %v1464 = vunpack.c.h.b16 %v1347
        %v1465 = vunpack.c.l.b16 %v1348
        %v1466 = vunpack.c.l.b16 %v1349
        %v1467 = vunpack.c.h.b16 %v1349
        %v1468 = vunpack.c.l.b16 %v1350
        %v1469 = vunpack.c.l.b16 %v1351
        %v1470 = vunpack.c.h.b16 %v1351
        %v1471 = vunpack.c.l.b16 %v1352
        %v1472 = vunpack.c.l.b16 %v1353
        %v1473 = vunpack.c.h.b16 %v1353
        %v1474 = vunpack.c.l.b16 %v1354
        %v1475 = vunpack.c.l.b16 %v1355
        %v1476 = vunpack.c.h.b16 %v1355
        %v1477 = vunpack.c.l.b16 %v1356
        %v1478 = vpack.c.b16 %v1433, %v1430
        %v1479 = vpack.c.b16 %v1434, %v1431
        %v1480 = vpack.c.b16 %v1435, %v1432
        %v1481 = vpack.c.b16 %v1439, %v1436
        %v1482 = vpack.c.b16 %v1440, %v1437
        %v1483 = vpack.c.b16 %v1441, %v1438
        %v1484 = vpack.c.b16 %v1445, %v1442
        %v1485 = vpack.c.b16 %v1446, %v1443
        %v1486 = vpack.c.b16 %v1447, %v1444
        %v1487 = vpack.c.b16 %v1451, %v1448
        %v1488 = vpack.c.b16 %v1452, %v1449
        %v1489 = vpack.c.b16 %v1453, %v1450
        %v1490 = vpack.c.b16 %v1457, %v1454
        %v1491 = vpack.c.b16 %v1458, %v1455
        %v1492 = vpack.c.b16 %v1459, %v1456
        %v1493 = vpack.c.b16 %v1463, %v1460
        %v1494 = vpack.c.b16 %v1464, %v1461
        %v1495 = vpack.c.b16 %v1465, %v1462
        %v1496 = vpack.c.b16 %v1469, %v1466
        %v1497 = vpack.c.b16 %v1470, %v1467
        %v1498 = vpack.c.b16 %v1471, %v1468
        %v1499 = vpack.c.b16 %v1475, %v1472
        %v1500 = vpack.c.b16 %v1476, %v1473
        %v1501 = vpack.c.b16 %v1477, %v1474
        %v1558 = vunpack.c.l.b16 %v1358
        %v1559 = vunpack.c.l.b16 %v1359
        %v1560 = vunpack.c.l.b16 %v1360
        %v1561 = vunpack.c.l.b16 %v1361
        %v1562 = vunpack.c.l.b16 %v1362
        %v1563 = vunpack.c.l.b16 %v1363
        %v1564 = vunpack.c.l.b16 %v1364
        %v1565 = vunpack.c.l.b16 %v1365
        %v1566 = vunpack.c.l.b16 %v1366
        %v1567 = vunpack.c.l.b16 %v1367
        %v1568 = vunpack.c.l.b16 %v1368
        %v1569 = vunpack.c.l.b16 %v1369
        %v1570 = vunpack.c.l.b16 %v1370
        %v1571 = vunpack.c.l.b16 %v1371
        %v1572 = vunpack.c.l.b16 %v1372
        %v1573 = vunpack.c.l.b16 %v1373
        %v1574 = vunpack.c.l.b16 %v1374
        %v1575 = vunpack.c.l.b16 %v1375
        %v1576 = vunpack.c.l.b16 %v1376
        %v1577 = vunpack.c.l.b16 %v1377
        %v1578 = vunpack.c.l.b16 %v1378
        %v1579 = vunpack.c.l.b16 %v1379
        %v1580 = vunpack.c.l.b16 %v1380
        %v1581 = vunpack.c.l.b16 %v1381
        %v1582 = vunpack.c.l.b16 %v1382
        %v1583 = vunpack.c.l.b16 %v1383
        %v1584 = vunpack.c.l.b16 %v1384
        %v1585 = vunpack.c.l.b16 %v1385
        %v1586 = vunpack.c.l.b16 %v1386
        %v1587 = vunpack.c.l.b16 %v1387
        %v1588 = vunpack.c.l.b16 %v1388
        %v1589 = vunpack.c.l.b16 %v1389
        %v1590 = vunpack.c.l.b16 %v1390
        %v1591 = vunpack.c.l.b16 %v1391
        %v1592 = vunpack.c.l.b16 %v1392
        %v1593 = vunpack.c.l.b16 %v1393
        %v1594 = vunpack.c.l.b16 %v1394
        %v1595 = vunpack.c.l.b16 %v1395
        %v1596 = vunpack.c.l.b16 %v1396
        %v1597 = vunpack.c.l.b16 %v1397
        %v1598 = vpack.c.b16 %v1559, %v1558
        %v1599 = vpack.c.b16 %v1561, %v1560
        %v1600 = vpack.c.b16 %v1563, %v1562
        %v1601 = vpack.c.b16 %v1565, %v1564
        %v1602 = vpack.c.b16 %v1567, %v1566
        %v1603 = vpack.c.b16 %v1569, %v1568
        %v1604 = vpack.c.b16 %v1571, %v1570
        %v1605 = vpack.c.b16 %v1573, %v1572
        %v1606 = vpack.c.b16 %v1575, %v1574
        %v1607 = vpack.c.b16 %v1577, %v1576
        %v1608 = vpack.c.b16 %v1579, %v1578
        %v1609 = vpack.c.b16 %v1581, %v1580
        %v1610 = vpack.c.b16 %v1583, %v1582
        %v1611 = vpack.c.b16 %v1585, %v1584
        %v1612 = vpack.c.b16 %v1587, %v1586
        %v1613 = vpack.c.b16 %v1589, %v1588
        %v1614 = vpack.c.b16 %v1591, %v1590
        %v1615 = vpack.c.b16 %v1593, %v1592
        %v1616 = vpack.c.b16 %v1595, %v1594
        %v1617 = vpack.c.b16 %v1597, %v1596
        %v1639 = vsel %vm644, %v1480, 0
        %v1642 = vsel %vm644, %v1483, 0
        %v1645 = vsel %vm644, %v1486, 0
        %v1648 = vsel %vm644, %v1489, 0
        %v1651 = vsel %vm644, %v1492, 0
        %v1654 = vsel %vm644, %v1495, 0
        %v1657 = vsel %vm644, %v1498, 0
        %v1660 = vsel %vm644, %v1501, 0
        %1662 = vmatprep.subr.bf16.mxu0 0
        %1663 = vmatpush1.bf16.msra.mxu0 %v1605
        %1664 = vmatprep.subr.bf16.mxu0 0
        %1665 = vmatpush1.bf16.msra.mxu0 %v1604
        %1666 = vmatprep.subr.bf16.mxu0 0
        %1667 = vmatpush1.bf16.msra.mxu0 %v1603
        %1668 = vmatprep.subr.bf16.mxu0 0
        %1669 = vmatpush1.bf16.msra.mxu0 %v1602
        %1670 = vmatprep.subr.bf16.mxu0 0
        %1671 = vmatpush1.bf16.msra.mxu0 %v1601
        %1672 = vmatprep.subr.bf16.mxu0 0
        %1673 = vmatpush1.bf16.msra.mxu0 %v1600
        %1674 = vmatprep.subr.bf16.mxu0 0
        %1675 = vmatpush1.bf16.msra.mxu0 %v1599
        %1676 = vmatprep.subr.bf16.mxu0 0
        %1677 = vmatpush1.bf16.msra.mxu0 %v1598
        %1678 = vmatprep.subr.bf16.mxu0 0
        %1679 = vmatpush2.bf16.msra.mxu0 %v1613
        %1680 = vmatprep.subr.bf16.mxu0 0
        %1681 = vmatpush2.bf16.msra.mxu0 %v1612
        %1682 = vmatprep.subr.bf16.mxu0 0
        %1683 = vmatpush2.bf16.msra.mxu0 %v1611
        %1684 = vmatprep.subr.bf16.mxu0 0
        %1685 = vmatpush2.bf16.msra.mxu0 %v1610
        %1686 = vmatprep.subr.bf16.mxu0 0
        %1687 = vmatpush2.bf16.msra.mxu0 %v1609
        %1688 = vmatprep.subr.bf16.mxu0 0
        %1689 = vmatpush2.bf16.msra.mxu0 %v1608
        %1690 = vmatprep.subr.bf16.mxu0 0
        %1691 = vmatpush2.bf16.msra.mxu0 %v1607
        %1692 = vmatprep.subr.bf16.mxu0 0
        %1693 = vmatpush2.bf16.msra.mxu0 %v1606
        %1694 = vmatprep.mubr.bf16.mxu0 %v1479
        %1695 = vmatmul.mubr.bf16.gmra.mxu0 %v1478
        %v1696 = vpop.f32.mrf.mxu0
        %v1697 = vadd.f32 0.0, %v1696
        %v1698 = vpop.f32.mrf.mxu0
        %v1699 = vpop.f32.mrf.mxu0
        %v1700 = vadd.f32 0.0, %v1699
        %v1701 = vpop.f32.mrf.mxu0
        %1702 = vmatprep.mubr.bf16.mxu0 %v1482
        %1703 = vmatmul.mubr.bf16.gmra.mxu0 %v1481
        %v1704 = vpop.f32.mrf.mxu0
        %v1705 = vadd.f32 0.0, %v1704
        %v1706 = vpop.f32.mrf.mxu0
        %v1707 = vpop.f32.mrf.mxu0
        %v1708 = vadd.f32 0.0, %v1707
        %v1709 = vpop.f32.mrf.mxu0
        %1710 = vmatprep.mubr.bf16.mxu0 %v1485
        %1711 = vmatmul.mubr.bf16.gmra.mxu0 %v1484
        %v1712 = vpop.f32.mrf.mxu0
        %v1713 = vadd.f32 0.0, %v1712
        %v1714 = vpop.f32.mrf.mxu0
        %v1715 = vpop.f32.mrf.mxu0
        %v1716 = vadd.f32 0.0, %v1715
        %v1717 = vpop.f32.mrf.mxu0
        %1718 = vmatprep.mubr.bf16.mxu0 %v1488
        %1719 = vmatmul.mubr.bf16.gmra.mxu0 %v1487
        %v1720 = vpop.f32.mrf.mxu0
        %v1721 = vadd.f32 0.0, %v1720
        %v1722 = vpop.f32.mrf.mxu0
        %v1723 = vpop.f32.mrf.mxu0
        %v1724 = vadd.f32 0.0, %v1723
        %v1725 = vpop.f32.mrf.mxu0
        %1726 = vmatprep.mubr.bf16.mxu0 %v1491
        %1727 = vmatmul.mubr.bf16.gmra.mxu0 %v1490
        %v1728 = vpop.f32.mrf.mxu0
        %v1729 = vadd.f32 0.0, %v1728
        %v1730 = vpop.f32.mrf.mxu0
        %v1731 = vpop.f32.mrf.mxu0
        %v1732 = vadd.f32 0.0, %v1731
        %v1733 = vpop.f32.mrf.mxu0
        %1734 = vmatprep.mubr.bf16.mxu0 %v1494
        %1735 = vmatmul.mubr.bf16.gmra.mxu0 %v1493
        %v1736 = vpop.f32.mrf.mxu0
        %v1737 = vadd.f32 0.0, %v1736
        %v1738 = vpop.f32.mrf.mxu0
        %v1739 = vpop.f32.mrf.mxu0
        %v1740 = vadd.f32 0.0, %v1739
        %v1741 = vpop.f32.mrf.mxu0
        %1742 = vmatprep.mubr.bf16.mxu0 %v1497
        %1743 = vmatmul.mubr.bf16.gmra.mxu0 %v1496
        %v1744 = vpop.f32.mrf.mxu0
        %v1745 = vadd.f32 0.0, %v1744
        %v1746 = vpop.f32.mrf.mxu0
        %v1747 = vpop.f32.mrf.mxu0
        %v1748 = vadd.f32 0.0, %v1747
        %v1749 = vpop.f32.mrf.mxu0
        %1750 = vmatprep.mubr.bf16.mxu0 %v1500
        %1751 = vmatmul.mubr.bf16.gmra.mxu0 %v1499
        %v1752 = vpop.f32.mrf.mxu0
        %v1753 = vadd.f32 0.0, %v1752
        %v1754 = vpop.f32.mrf.mxu0
        %v1755 = vpop.f32.mrf.mxu0
        %v1756 = vadd.f32 0.0, %v1755
        %v1757 = vpop.f32.mrf.mxu0
        %1758 = vdwg.mxu0
        %1759 = vmatprep.subr.bf16.mxu0 0
        %1760 = vmatpush1.bf16.msra.mxu0 0
        %1761 = vmatprep.subr.bf16.mxu0 0
        %1762 = vmatpush1.bf16.msra.mxu0 0
        %1763 = vmatprep.subr.bf16.mxu0 0
        %1764 = vmatpush1.bf16.msra.mxu0 0
        %1765 = vmatprep.subr.bf16.mxu0 0
        %1766 = vmatpush1.bf16.msra.mxu0 0
        %1767 = vmatprep.subr.bf16.mxu0 0
        %1768 = vmatpush1.bf16.msra.mxu0 %v1617
        %1769 = vmatprep.subr.bf16.mxu0 0
        %1770 = vmatpush1.bf16.msra.mxu0 %v1616
        %1771 = vmatprep.subr.bf16.mxu0 0
        %1772 = vmatpush1.bf16.msra.mxu0 %v1615
        %1773 = vmatprep.subr.bf16.mxu0 0
        %1774 = vmatpush1.bf16.msra.mxu0 %v1614
        %1775 = vmatprep.subr.bf16.mxu0 0
        %1776 = vmatpush2.bf16.msra.mxu0 0
        %1777 = vmatprep.subr.bf16.mxu0 0
        %1778 = vmatpush2.bf16.msra.mxu0 0
        %1779 = vmatprep.subr.bf16.mxu0 0
        %1780 = vmatpush2.bf16.msra.mxu0 0
        %1781 = vmatprep.subr.bf16.mxu0 0
        %1782 = vmatpush2.bf16.msra.mxu0 0
        %1783 = vmatprep.subr.bf16.mxu0 0
        %1784 = vmatpush2.bf16.msra.mxu0 0
        %1785 = vmatprep.subr.bf16.mxu0 0
        %1786 = vmatpush2.bf16.msra.mxu0 0
        %1787 = vmatprep.subr.bf16.mxu0 0
        %1788 = vmatpush2.bf16.msra.mxu0 0
        %1789 = vmatprep.subr.bf16.mxu0 0
        %1790 = vmatpush2.bf16.msra.mxu0 0
        %1791 = vmatprep.mubr.bf16.mxu0 0
        %1792 = vmatmul.mubr.bf16.gmra.mxu0 %v1639
        %v1793 = vpop.f32.mrf.mxu0
        %v1794 = vadd.f32 %v1697, %v1793
        %v1795 = vpop.f32.mrf.mxu0
        %v1796 = vpop.f32.mrf.mxu0
        %v1797 = vadd.f32 %v1700, %v1796
        %v1798 = vpop.f32.mrf.mxu0
        %1799 = vmatprep.mubr.bf16.mxu0 0
        %1800 = vmatmul.mubr.bf16.gmra.mxu0 %v1642
        %v1801 = vpop.f32.mrf.mxu0
        %v1802 = vadd.f32 %v1705, %v1801
        %v1803 = vpop.f32.mrf.mxu0
        %v1804 = vpop.f32.mrf.mxu0
        %v1805 = vadd.f32 %v1708, %v1804
        %v1806 = vpop.f32.mrf.mxu0
        %1807 = vmatprep.mubr.bf16.mxu0 0
        %1808 = vmatmul.mubr.bf16.gmra.mxu0 %v1645
        %v1809 = vpop.f32.mrf.mxu0
        %v1810 = vadd.f32 %v1713, %v1809
        %v1811 = vpop.f32.mrf.mxu0
        %v1812 = vpop.f32.mrf.mxu0
        %v1813 = vadd.f32 %v1716, %v1812
        %v1814 = vpop.f32.mrf.mxu0
        %1815 = vmatprep.mubr.bf16.mxu0 0
        %1816 = vmatmul.mubr.bf16.gmra.mxu0 %v1648
        %v1817 = vpop.f32.mrf.mxu0
        %v1818 = vadd.f32 %v1721, %v1817
        %v1819 = vpop.f32.mrf.mxu0
        %v1820 = vpop.f32.mrf.mxu0
        %v1821 = vadd.f32 %v1724, %v1820
        %v1822 = vpop.f32.mrf.mxu0
        %1823 = vmatprep.mubr.bf16.mxu0 0
        %1824 = vmatmul.mubr.bf16.gmra.mxu0 %v1651
        %v1825 = vpop.f32.mrf.mxu0
        %v1826 = vadd.f32 %v1729, %v1825
        %v1827 = vpop.f32.mrf.mxu0
        %v1828 = vpop.f32.mrf.mxu0
        %v1829 = vadd.f32 %v1732, %v1828
        %v1830 = vpop.f32.mrf.mxu0
        %1831 = vmatprep.mubr.bf16.mxu0 0
        %1832 = vmatmul.mubr.bf16.gmra.mxu0 %v1654
        %v1833 = vpop.f32.mrf.mxu0
        %v1834 = vadd.f32 %v1737, %v1833
        %v1835 = vpop.f32.mrf.mxu0
        %v1836 = vpop.f32.mrf.mxu0
        %v1837 = vadd.f32 %v1740, %v1836
        %v1838 = vpop.f32.mrf.mxu0
        %1839 = vmatprep.mubr.bf16.mxu0 0
        %1840 = vmatmul.mubr.bf16.gmra.mxu0 %v1657
        %v1841 = vpop.f32.mrf.mxu0
        %v1842 = vadd.f32 %v1745, %v1841
        %v1843 = vpop.f32.mrf.mxu0
        %v1844 = vpop.f32.mrf.mxu0
        %v1845 = vadd.f32 %v1748, %v1844
        %v1846 = vpop.f32.mrf.mxu0
        %1847 = vmatprep.mubr.bf16.mxu0 0
        %1848 = vmatmul.mubr.bf16.gmra.mxu0 %v1660
        %v1849 = vpop.f32.mrf.mxu0
        %v1850 = vadd.f32 %v1753, %v1849
        %v1851 = vpop.f32.mrf.mxu0
        %v1852 = vpop.f32.mrf.mxu0
        %v1853 = vadd.f32 %v1756, %v1852
        %v1854 = vpop.f32.mrf.mxu0
        %1855 = vdwg.mxu0
        %v1856 = vadd.f32 %v1259, %v1794
        %v1857 = vadd.f32 %v1262, %v1797
        %v1858 = vadd.f32 %v1267, %v1802
        %v1859 = vadd.f32 %v1270, %v1805
        %v1860 = vadd.f32 %v1275, %v1810
        %v1861 = vadd.f32 %v1278, %v1813
        %v1862 = vadd.f32 %v1283, %v1818
        %v1863 = vadd.f32 %v1286, %v1821
        %v1864 = vadd.f32 %v1291, %v1826
        %v1865 = vadd.f32 %v1294, %v1829
        %v1866 = vadd.f32 %v1299, %v1834
        %v1867 = vadd.f32 %v1302, %v1837
        %v1868 = vadd.f32 %v1307, %v1842
        %v1869 = vadd.f32 %v1310, %v1845
        %v1870 = vadd.f32 %v1315, %v1850
        %v1871 = vadd.f32 %v1318, %v1853
        %s1872 = sadd.s32 %s251, 3
        %s1873 = smul.u32 %s1872, 6
        %s1874 = smul.addr %s1873, 4
        %s1875 = scalar_lea.vmem %s237, %s1874
        %v1876 = vld [vmem:[%s1875] sm:$0xff]
        %v1877 = vld [vmem:[%s1875 + $0x8] sm:$0xf]
        %v1878 = vld [vmem:[%s1875 + $0xc] sm:$0xff]
        %v1879 = vld [vmem:[%s1875 + $0x14] sm:$0xf]
        %v1880 = vld [vmem:[%s1875 + $0x18] sm:$0xff]
        %v1881 = vld [vmem:[%s1875 + $0x20] sm:$0xf]
        %v1882 = vld [vmem:[%s1875 + $0x24] sm:$0xff]
        %v1883 = vld [vmem:[%s1875 + $0x2c] sm:$0xf]
        %v1884 = vld [vmem:[%s1875 + $0x30] sm:$0xff]
        %v1885 = vld [vmem:[%s1875 + $0x38] sm:$0xf]
        %v1886 = vld [vmem:[%s1875 + $0x3c] sm:$0xff]
        %v1887 = vld [vmem:[%s1875 + $0x44] sm:$0xf]
        %v1888 = vld [vmem:[%s1875 + $0x48] sm:$0xff]
        %v1889 = vld [vmem:[%s1875 + $0x50] sm:$0xf]
        %v1890 = vld [vmem:[%s1875 + $0x54] sm:$0xff]
        %v1891 = vld [vmem:[%s1875 + $0x5c] sm:$0xf]
        %v1892 = vld [vmem:[%s1875 + $0x60] sm:$0xff]
        %v1893 = vld [vmem:[%s1875 + $0x68] sm:$0xf]
        %v1894 = vld [vmem:[%s1875 + $0x6c] sm:$0xff]
        %v1895 = vld [vmem:[%s1875 + $0x74] sm:$0xf]
        %v1896 = vld [vmem:[%s1875 + $0x78] sm:$0xff]
        %v1897 = vld [vmem:[%s1875 + $0x80] sm:$0xf]
        %v1898 = vld [vmem:[%s1875 + $0x84] sm:$0xff]
        %v1899 = vld [vmem:[%s1875 + $0x8c] sm:$0xf]
        %v1900 = vld [vmem:[%s1875 + $0x90] sm:$0xff]
        %v1901 = vld [vmem:[%s1875 + $0x98] sm:$0xf]
        %v1902 = vld [vmem:[%s1875 + $0x9c] sm:$0xff]
        %v1903 = vld [vmem:[%s1875 + $0xa4] sm:$0xf]
        %v1904 = vld [vmem:[%s1875 + $0xa8] sm:$0xff]
        %v1905 = vld [vmem:[%s1875 + $0xb0] sm:$0xf]
        %v1906 = vld [vmem:[%s1875 + $0xb4] sm:$0xff]
        %v1907 = vld [vmem:[%s1875 + $0xbc] sm:$0xf]
        %s1908 = scalar_lea.vmem %s2, 480
        %v1909 = vld [vmem:[%s1908] sm:$0xf]
        %v1910 = vld [vmem:[%s1908 + $0x4] sm:$0xf]
        %v1911 = vld [vmem:[%s1908 + $0x8] sm:$0xf]
        %v1912 = vld [vmem:[%s1908 + $0xc] sm:$0xf]
        %v1913 = vld [vmem:[%s1908 + $0x10] sm:$0xf]
        %v1914 = vld [vmem:[%s1908 + $0x14] sm:$0xf]
        %v1915 = vld [vmem:[%s1908 + $0x18] sm:$0xf]
        %v1916 = vld [vmem:[%s1908 + $0x1c] sm:$0xf]
        %v1917 = vld [vmem:[%s1908 + $0x20] sm:$0xf]
        %v1918 = vld [vmem:[%s1908 + $0x24] sm:$0xf]
        %v1919 = vld [vmem:[%s1908 + $0x28] sm:$0xf]
        %v1920 = vld [vmem:[%s1908 + $0x2c] sm:$0xf]
        %v1921 = vld [vmem:[%s1908 + $0x30] sm:$0xf]
        %v1922 = vld [vmem:[%s1908 + $0x34] sm:$0xf]
        %v1923 = vld [vmem:[%s1908 + $0x38] sm:$0xf]
        %v1924 = vld [vmem:[%s1908 + $0x3c] sm:$0xf]
        %v1925 = vld [vmem:[%s1908 + $0x40] sm:$0xf]
        %v1926 = vld [vmem:[%s1908 + $0x44] sm:$0xf]
        %v1927 = vld [vmem:[%s1908 + $0x48] sm:$0xf]
        %v1928 = vld [vmem:[%s1908 + $0x4c] sm:$0xf]
        %v1929 = vld [vmem:[%s1908 + $0x50] sm:$0xf]
        %v1930 = vld [vmem:[%s1908 + $0x54] sm:$0xf]
        %v1931 = vld [vmem:[%s1908 + $0x58] sm:$0xf]
        %v1932 = vld [vmem:[%s1908 + $0x5c] sm:$0xf]
        %v1933 = vld [vmem:[%s1908 + $0x60] sm:$0xf]
        %v1934 = vld [vmem:[%s1908 + $0x64] sm:$0xf]
        %v1935 = vld [vmem:[%s1908 + $0x68] sm:$0xf]
        %v1936 = vld [vmem:[%s1908 + $0x6c] sm:$0xf]
        %v1937 = vld [vmem:[%s1908 + $0x70] sm:$0xf]
        %v1938 = vld [vmem:[%s1908 + $0x74] sm:$0xf]
        %v1939 = vld [vmem:[%s1908 + $0x78] sm:$0xf]
        %v1940 = vld [vmem:[%s1908 + $0x7c] sm:$0xf]
        %v1941 = vld [vmem:[%s1908 + $0x80] sm:$0xf]
        %v1942 = vld [vmem:[%s1908 + $0x84] sm:$0xf]
        %v1943 = vld [vmem:[%s1908 + $0x88] sm:$0xf]
        %v1944 = vld [vmem:[%s1908 + $0x8c] sm:$0xf]
        %v1945 = vld [vmem:[%s1908 + $0x90] sm:$0xf]
        %v1946 = vld [vmem:[%s1908 + $0x94] sm:$0xf]
        %v1947 = vld [vmem:[%s1908 + $0x98] sm:$0xf]
        %v1948 = vld [vmem:[%s1908 + $0x9c] sm:$0xf]
        %v1981 = vunpack.c.l.b16 %v1876
        %v1982 = vunpack.c.h.b16 %v1876
        %v1983 = vunpack.c.l.b16 %v1877
        %v1984 = vunpack.c.l.b16 %v1878
        %v1985 = vunpack.c.h.b16 %v1878
        %v1986 = vunpack.c.l.b16 %v1879
        %v1987 = vunpack.c.l.b16 %v1880
        %v1988 = vunpack.c.h.b16 %v1880
        %v1989 = vunpack.c.l.b16 %v1881
        %v1990 = vunpack.c.l.b16 %v1882
        %v1991 = vunpack.c.h.b16 %v1882
        %v1992 = vunpack.c.l.b16 %v1883
        %v1993 = vunpack.c.l.b16 %v1884
        %v1994 = vunpack.c.h.b16 %v1884
        %v1995 = vunpack.c.l.b16 %v1885
        %v1996 = vunpack.c.l.b16 %v1886
        %v1997 = vunpack.c.h.b16 %v1886
        %v1998 = vunpack.c.l.b16 %v1887
        %v1999 = vunpack.c.l.b16 %v1888
        %v2000 = vunpack.c.h.b16 %v1888
        %v2001 = vunpack.c.l.b16 %v1889
        %v2002 = vunpack.c.l.b16 %v1890
        %v2003 = vunpack.c.h.b16 %v1890
        %v2004 = vunpack.c.l.b16 %v1891
        %v2005 = vunpack.c.l.b16 %v1892
        %v2006 = vunpack.c.h.b16 %v1892
        %v2007 = vunpack.c.l.b16 %v1893
        %v2008 = vunpack.c.l.b16 %v1894
        %v2009 = vunpack.c.h.b16 %v1894
        %v2010 = vunpack.c.l.b16 %v1895
        %v2011 = vunpack.c.l.b16 %v1896
        %v2012 = vunpack.c.h.b16 %v1896
        %v2013 = vunpack.c.l.b16 %v1897
        %v2014 = vunpack.c.l.b16 %v1898
        %v2015 = vunpack.c.h.b16 %v1898
        %v2016 = vunpack.c.l.b16 %v1899
        %v2017 = vunpack.c.l.b16 %v1900
        %v2018 = vunpack.c.h.b16 %v1900
        %v2019 = vunpack.c.l.b16 %v1901
        %v2020 = vunpack.c.l.b16 %v1902
        %v2021 = vunpack.c.h.b16 %v1902
        %v2022 = vunpack.c.l.b16 %v1903
        %v2023 = vunpack.c.l.b16 %v1904
        %v2024 = vunpack.c.h.b16 %v1904
        %v2025 = vunpack.c.l.b16 %v1905
        %v2026 = vunpack.c.l.b16 %v1906
        %v2027 = vunpack.c.h.b16 %v1906
        %v2028 = vunpack.c.l.b16 %v1907
        %v2029 = vpack.c.b16 %v1984, %v1981
        %v2030 = vpack.c.b16 %v1985, %v1982
        %v2031 = vpack.c.b16 %v1986, %v1983
        %v2032 = vpack.c.b16 %v1990, %v1987
        %v2033 = vpack.c.b16 %v1991, %v1988
        %v2034 = vpack.c.b16 %v1992, %v1989
        %v2035 = vpack.c.b16 %v1996, %v1993
        %v2036 = vpack.c.b16 %v1997, %v1994
        %v2037 = vpack.c.b16 %v1998, %v1995
        %v2038 = vpack.c.b16 %v2002, %v1999
        %v2039 = vpack.c.b16 %v2003, %v2000
        %v2040 = vpack.c.b16 %v2004, %v2001
        %v2041 = vpack.c.b16 %v2008, %v2005
        %v2042 = vpack.c.b16 %v2009, %v2006
        %v2043 = vpack.c.b16 %v2010, %v2007
        %v2044 = vpack.c.b16 %v2014, %v2011
        %v2045 = vpack.c.b16 %v2015, %v2012
        %v2046 = vpack.c.b16 %v2016, %v2013
        %v2047 = vpack.c.b16 %v2020, %v2017
        %v2048 = vpack.c.b16 %v2021, %v2018
        %v2049 = vpack.c.b16 %v2022, %v2019
        %v2050 = vpack.c.b16 %v2026, %v2023
        %v2051 = vpack.c.b16 %v2027, %v2024
        %v2052 = vpack.c.b16 %v2028, %v2025
        %v2109 = vunpack.c.l.b16 %v1909
        %v2110 = vunpack.c.l.b16 %v1910
        %v2111 = vunpack.c.l.b16 %v1911
        %v2112 = vunpack.c.l.b16 %v1912
        %v2113 = vunpack.c.l.b16 %v1913
        %v2114 = vunpack.c.l.b16 %v1914
        %v2115 = vunpack.c.l.b16 %v1915
        %v2116 = vunpack.c.l.b16 %v1916
        %v2117 = vunpack.c.l.b16 %v1917
        %v2118 = vunpack.c.l.b16 %v1918
        %v2119 = vunpack.c.l.b16 %v1919
        %v2120 = vunpack.c.l.b16 %v1920
        %v2121 = vunpack.c.l.b16 %v1921
        %v2122 = vunpack.c.l.b16 %v1922
        %v2123 = vunpack.c.l.b16 %v1923
        %v2124 = vunpack.c.l.b16 %v1924
        %v2125 = vunpack.c.l.b16 %v1925
        %v2126 = vunpack.c.l.b16 %v1926
        %v2127 = vunpack.c.l.b16 %v1927
        %v2128 = vunpack.c.l.b16 %v1928
        %v2129 = vunpack.c.l.b16 %v1929
        %v2130 = vunpack.c.l.b16 %v1930
        %v2131 = vunpack.c.l.b16 %v1931
        %v2132 = vunpack.c.l.b16 %v1932
        %v2133 = vunpack.c.l.b16 %v1933
        %v2134 = vunpack.c.l.b16 %v1934
        %v2135 = vunpack.c.l.b16 %v1935
        %v2136 = vunpack.c.l.b16 %v1936
        %v2137 = vunpack.c.l.b16 %v1937
        %v2138 = vunpack.c.l.b16 %v1938
        %v2139 = vunpack.c.l.b16 %v1939
        %v2140 = vunpack.c.l.b16 %v1940
        %v2141 = vunpack.c.l.b16 %v1941
        %v2142 = vunpack.c.l.b16 %v1942
        %v2143 = vunpack.c.l.b16 %v1943
        %v2144 = vunpack.c.l.b16 %v1944
        %v2145 = vunpack.c.l.b16 %v1945
        %v2146 = vunpack.c.l.b16 %v1946
        %v2147 = vunpack.c.l.b16 %v1947
        %v2148 = vunpack.c.l.b16 %v1948
        %v2149 = vpack.c.b16 %v2110, %v2109
        %v2150 = vpack.c.b16 %v2112, %v2111
        %v2151 = vpack.c.b16 %v2114, %v2113
        %v2152 = vpack.c.b16 %v2116, %v2115
        %v2153 = vpack.c.b16 %v2118, %v2117
        %v2154 = vpack.c.b16 %v2120, %v2119
        %v2155 = vpack.c.b16 %v2122, %v2121
        %v2156 = vpack.c.b16 %v2124, %v2123
        %v2157 = vpack.c.b16 %v2126, %v2125
        %v2158 = vpack.c.b16 %v2128, %v2127
        %v2159 = vpack.c.b16 %v2130, %v2129
        %v2160 = vpack.c.b16 %v2132, %v2131
        %v2161 = vpack.c.b16 %v2134, %v2133
        %v2162 = vpack.c.b16 %v2136, %v2135
        %v2163 = vpack.c.b16 %v2138, %v2137
        %v2164 = vpack.c.b16 %v2140, %v2139
        %v2165 = vpack.c.b16 %v2142, %v2141
        %v2166 = vpack.c.b16 %v2144, %v2143
        %v2167 = vpack.c.b16 %v2146, %v2145
        %v2168 = vpack.c.b16 %v2148, %v2147
        %v2190 = vsel %vm644, %v2031, 0
        %v2193 = vsel %vm644, %v2034, 0
        %v2196 = vsel %vm644, %v2037, 0
        %v2199 = vsel %vm644, %v2040, 0
        %v2202 = vsel %vm644, %v2043, 0
        %v2205 = vsel %vm644, %v2046, 0
        %v2208 = vsel %vm644, %v2049, 0
        %v2211 = vsel %vm644, %v2052, 0
        %2213 = vmatprep.subr.bf16.mxu0 0
        %2214 = vmatpush1.bf16.msra.mxu0 %v2156
        %2215 = vmatprep.subr.bf16.mxu0 0
        %2216 = vmatpush1.bf16.msra.mxu0 %v2155
        %2217 = vmatprep.subr.bf16.mxu0 0
        %2218 = vmatpush1.bf16.msra.mxu0 %v2154
        %2219 = vmatprep.subr.bf16.mxu0 0
        %2220 = vmatpush1.bf16.msra.mxu0 %v2153
        %2221 = vmatprep.subr.bf16.mxu0 0
        %2222 = vmatpush1.bf16.msra.mxu0 %v2152
        %2223 = vmatprep.subr.bf16.mxu0 0
        %2224 = vmatpush1.bf16.msra.mxu0 %v2151
        %2225 = vmatprep.subr.bf16.mxu0 0
        %2226 = vmatpush1.bf16.msra.mxu0 %v2150
        %2227 = vmatprep.subr.bf16.mxu0 0
        %2228 = vmatpush1.bf16.msra.mxu0 %v2149
        %2229 = vmatprep.subr.bf16.mxu0 0
        %2230 = vmatpush2.bf16.msra.mxu0 %v2164
        %2231 = vmatprep.subr.bf16.mxu0 0
        %2232 = vmatpush2.bf16.msra.mxu0 %v2163
        %2233 = vmatprep.subr.bf16.mxu0 0
        %2234 = vmatpush2.bf16.msra.mxu0 %v2162
        %2235 = vmatprep.subr.bf16.mxu0 0
        %2236 = vmatpush2.bf16.msra.mxu0 %v2161
        %2237 = vmatprep.subr.bf16.mxu0 0
        %2238 = vmatpush2.bf16.msra.mxu0 %v2160
        %2239 = vmatprep.subr.bf16.mxu0 0
        %2240 = vmatpush2.bf16.msra.mxu0 %v2159
        %2241 = vmatprep.subr.bf16.mxu0 0
        %2242 = vmatpush2.bf16.msra.mxu0 %v2158
        %2243 = vmatprep.subr.bf16.mxu0 0
        %2244 = vmatpush2.bf16.msra.mxu0 %v2157
        %2245 = vmatprep.mubr.bf16.mxu0 %v2030
        %2246 = vmatmul.mubr.bf16.gmra.mxu0 %v2029
        %v2247 = vpop.f32.mrf.mxu0
        %v2248 = vadd.f32 0.0, %v2247
        %v2249 = vpop.f32.mrf.mxu0
        %v2250 = vpop.f32.mrf.mxu0
        %v2251 = vadd.f32 0.0, %v2250
        %v2252 = vpop.f32.mrf.mxu0
        %2253 = vmatprep.mubr.bf16.mxu0 %v2033
        %2254 = vmatmul.mubr.bf16.gmra.mxu0 %v2032
        %v2255 = vpop.f32.mrf.mxu0
        %v2256 = vadd.f32 0.0, %v2255
        %v2257 = vpop.f32.mrf.mxu0
        %v2258 = vpop.f32.mrf.mxu0
        %v2259 = vadd.f32 0.0, %v2258
        %v2260 = vpop.f32.mrf.mxu0
        %2261 = vmatprep.mubr.bf16.mxu0 %v2036
        %2262 = vmatmul.mubr.bf16.gmra.mxu0 %v2035
        %v2263 = vpop.f32.mrf.mxu0
        %v2264 = vadd.f32 0.0, %v2263
        %v2265 = vpop.f32.mrf.mxu0
        %v2266 = vpop.f32.mrf.mxu0
        %v2267 = vadd.f32 0.0, %v2266
        %v2268 = vpop.f32.mrf.mxu0
        %2269 = vmatprep.mubr.bf16.mxu0 %v2039
        %2270 = vmatmul.mubr.bf16.gmra.mxu0 %v2038
        %v2271 = vpop.f32.mrf.mxu0
        %v2272 = vadd.f32 0.0, %v2271
        %v2273 = vpop.f32.mrf.mxu0
        %v2274 = vpop.f32.mrf.mxu0
        %v2275 = vadd.f32 0.0, %v2274
        %v2276 = vpop.f32.mrf.mxu0
        %2277 = vmatprep.mubr.bf16.mxu0 %v2042
        %2278 = vmatmul.mubr.bf16.gmra.mxu0 %v2041
        %v2279 = vpop.f32.mrf.mxu0
        %v2280 = vadd.f32 0.0, %v2279
        %v2281 = vpop.f32.mrf.mxu0
        %v2282 = vpop.f32.mrf.mxu0
        %v2283 = vadd.f32 0.0, %v2282
        %v2284 = vpop.f32.mrf.mxu0
        %2285 = vmatprep.mubr.bf16.mxu0 %v2045
        %2286 = vmatmul.mubr.bf16.gmra.mxu0 %v2044
        %v2287 = vpop.f32.mrf.mxu0
        %v2288 = vadd.f32 0.0, %v2287
        %v2289 = vpop.f32.mrf.mxu0
        %v2290 = vpop.f32.mrf.mxu0
        %v2291 = vadd.f32 0.0, %v2290
        %v2292 = vpop.f32.mrf.mxu0
        %2293 = vmatprep.mubr.bf16.mxu0 %v2048
        %2294 = vmatmul.mubr.bf16.gmra.mxu0 %v2047
        %v2295 = vpop.f32.mrf.mxu0
        %v2296 = vadd.f32 0.0, %v2295
        %v2297 = vpop.f32.mrf.mxu0
        %v2298 = vpop.f32.mrf.mxu0
        %v2299 = vadd.f32 0.0, %v2298
        %v2300 = vpop.f32.mrf.mxu0
        %2301 = vmatprep.mubr.bf16.mxu0 %v2051
        %2302 = vmatmul.mubr.bf16.gmra.mxu0 %v2050
        %v2303 = vpop.f32.mrf.mxu0
        %v2304 = vadd.f32 0.0, %v2303
        %v2305 = vpop.f32.mrf.mxu0
        %v2306 = vpop.f32.mrf.mxu0
        %v2307 = vadd.f32 0.0, %v2306
        %v2308 = vpop.f32.mrf.mxu0
        %2309 = vdwg.mxu0
        %2310 = vmatprep.subr.bf16.mxu0 0
        %2311 = vmatpush1.bf16.msra.mxu0 0
        %2312 = vmatprep.subr.bf16.mxu0 0
        %2313 = vmatpush1.bf16.msra.mxu0 0
        %2314 = vmatprep.subr.bf16.mxu0 0
        %2315 = vmatpush1.bf16.msra.mxu0 0
        %2316 = vmatprep.subr.bf16.mxu0 0
        %2317 = vmatpush1.bf16.msra.mxu0 0
        %2318 = vmatprep.subr.bf16.mxu0 0
        %2319 = vmatpush1.bf16.msra.mxu0 %v2168
        %2320 = vmatprep.subr.bf16.mxu0 0
        %2321 = vmatpush1.bf16.msra.mxu0 %v2167
        %2322 = vmatprep.subr.bf16.mxu0 0
        %2323 = vmatpush1.bf16.msra.mxu0 %v2166
        %2324 = vmatprep.subr.bf16.mxu0 0
        %2325 = vmatpush1.bf16.msra.mxu0 %v2165
        %2326 = vmatprep.subr.bf16.mxu0 0
        %2327 = vmatpush2.bf16.msra.mxu0 0
        %2328 = vmatprep.subr.bf16.mxu0 0
        %2329 = vmatpush2.bf16.msra.mxu0 0
        %2330 = vmatprep.subr.bf16.mxu0 0
        %2331 = vmatpush2.bf16.msra.mxu0 0
        %2332 = vmatprep.subr.bf16.mxu0 0
        %2333 = vmatpush2.bf16.msra.mxu0 0
        %2334 = vmatprep.subr.bf16.mxu0 0
        %2335 = vmatpush2.bf16.msra.mxu0 0
        %2336 = vmatprep.subr.bf16.mxu0 0
        %2337 = vmatpush2.bf16.msra.mxu0 0
        %2338 = vmatprep.subr.bf16.mxu0 0
        %2339 = vmatpush2.bf16.msra.mxu0 0
        %2340 = vmatprep.subr.bf16.mxu0 0
        %2341 = vmatpush2.bf16.msra.mxu0 0
        %2342 = vmatprep.mubr.bf16.mxu0 0
        %2343 = vmatmul.mubr.bf16.gmra.mxu0 %v2190
        %v2344 = vpop.f32.mrf.mxu0
        %v2345 = vadd.f32 %v2248, %v2344
        %v2346 = vpop.f32.mrf.mxu0
        %v2347 = vpop.f32.mrf.mxu0
        %v2348 = vadd.f32 %v2251, %v2347
        %v2349 = vpop.f32.mrf.mxu0
        %2350 = vmatprep.mubr.bf16.mxu0 0
        %2351 = vmatmul.mubr.bf16.gmra.mxu0 %v2193
        %v2352 = vpop.f32.mrf.mxu0
        %v2353 = vadd.f32 %v2256, %v2352
        %v2354 = vpop.f32.mrf.mxu0
        %v2355 = vpop.f32.mrf.mxu0
        %v2356 = vadd.f32 %v2259, %v2355
        %v2357 = vpop.f32.mrf.mxu0
        %2358 = vmatprep.mubr.bf16.mxu0 0
        %2359 = vmatmul.mubr.bf16.gmra.mxu0 %v2196
        %v2360 = vpop.f32.mrf.mxu0
        %v2361 = vadd.f32 %v2264, %v2360
        %v2362 = vpop.f32.mrf.mxu0
        %v2363 = vpop.f32.mrf.mxu0
        %v2364 = vadd.f32 %v2267, %v2363
        %v2365 = vpop.f32.mrf.mxu0
        %2366 = vmatprep.mubr.bf16.mxu0 0
        %2367 = vmatmul.mubr.bf16.gmra.mxu0 %v2199
        %v2368 = vpop.f32.mrf.mxu0
        %v2369 = vadd.f32 %v2272, %v2368
        %v2370 = vpop.f32.mrf.mxu0
        %v2371 = vpop.f32.mrf.mxu0
        %v2372 = vadd.f32 %v2275, %v2371
        %v2373 = vpop.f32.mrf.mxu0
        %2374 = vmatprep.mubr.bf16.mxu0 0
        %2375 = vmatmul.mubr.bf16.gmra.mxu0 %v2202
        %v2376 = vpop.f32.mrf.mxu0
        %v2377 = vadd.f32 %v2280, %v2376
        %v2378 = vpop.f32.mrf.mxu0
        %v2379 = vpop.f32.mrf.mxu0
        %v2380 = vadd.f32 %v2283, %v2379
        %v2381 = vpop.f32.mrf.mxu0
        %2382 = vmatprep.mubr.bf16.mxu0 0
        %2383 = vmatmul.mubr.bf16.gmra.mxu0 %v2205
        %v2384 = vpop.f32.mrf.mxu0
        %v2385 = vadd.f32 %v2288, %v2384
        %v2386 = vpop.f32.mrf.mxu0
        %v2387 = vpop.f32.mrf.mxu0
        %v2388 = vadd.f32 %v2291, %v2387
        %v2389 = vpop.f32.mrf.mxu0
        %2390 = vmatprep.mubr.bf16.mxu0 0
        %2391 = vmatmul.mubr.bf16.gmra.mxu0 %v2208
        %v2392 = vpop.f32.mrf.mxu0
        %v2393 = vadd.f32 %v2296, %v2392
        %v2394 = vpop.f32.mrf.mxu0
        %v2395 = vpop.f32.mrf.mxu0
        %v2396 = vadd.f32 %v2299, %v2395
        %v2397 = vpop.f32.mrf.mxu0
        %2398 = vmatprep.mubr.bf16.mxu0 0
        %2399 = vmatmul.mubr.bf16.gmra.mxu0 %v2211
        %v2400 = vpop.f32.mrf.mxu0
        %v2401 = vadd.f32 %v2304, %v2400
        %v2402 = vpop.f32.mrf.mxu0
        %v2403 = vpop.f32.mrf.mxu0
        %v2404 = vadd.f32 %v2307, %v2403
        %v2405 = vpop.f32.mrf.mxu0
        %2406 = vdwg.mxu0
        %v2407 = vadd.f32 %v1856, %v2345
        %v2408 = vadd.f32 %v1857, %v2348
        %v2409 = vadd.f32 %v1858, %v2353
        %v2410 = vadd.f32 %v1859, %v2356
        %v2411 = vadd.f32 %v1860, %v2361
        %v2412 = vadd.f32 %v1861, %v2364
        %v2413 = vadd.f32 %v1862, %v2369
        %v2414 = vadd.f32 %v1863, %v2372
        %v2415 = vadd.f32 %v1864, %v2377
        %v2416 = vadd.f32 %v1865, %v2380
        %v2417 = vadd.f32 %v1866, %v2385
        %v2418 = vadd.f32 %v1867, %v2388
        %v2419 = vadd.f32 %v1868, %v2393
        %v2420 = vadd.f32 %v1869, %v2396
        %v2421 = vadd.f32 %v1870, %v2401
        %v2422 = vadd.f32 %v1871, %v2404
        %s2423 = sadd.s32 %s251, 4
        %s2424 = smul.u32 %s2423, 6
        %s2425 = smul.addr %s2424, 4
        %s2426 = scalar_lea.vmem %s237, %s2425
        %v2427 = vld [vmem:[%s2426] sm:$0xff]
        %v2428 = vld [vmem:[%s2426 + $0x8] sm:$0xf]
        %v2429 = vld [vmem:[%s2426 + $0xc] sm:$0xff]
        %v2430 = vld [vmem:[%s2426 + $0x14] sm:$0xf]
        %v2431 = vld [vmem:[%s2426 + $0x18] sm:$0xff]
        %v2432 = vld [vmem:[%s2426 + $0x20] sm:$0xf]
        %v2433 = vld [vmem:[%s2426 + $0x24] sm:$0xff]
        %v2434 = vld [vmem:[%s2426 + $0x2c] sm:$0xf]
        %v2435 = vld [vmem:[%s2426 + $0x30] sm:$0xff]
        %v2436 = vld [vmem:[%s2426 + $0x38] sm:$0xf]
        %v2437 = vld [vmem:[%s2426 + $0x3c] sm:$0xff]
        %v2438 = vld [vmem:[%s2426 + $0x44] sm:$0xf]
        %v2439 = vld [vmem:[%s2426 + $0x48] sm:$0xff]
        %v2440 = vld [vmem:[%s2426 + $0x50] sm:$0xf]
        %v2441 = vld [vmem:[%s2426 + $0x54] sm:$0xff]
        %v2442 = vld [vmem:[%s2426 + $0x5c] sm:$0xf]
        %v2443 = vld [vmem:[%s2426 + $0x60] sm:$0xff]
        %v2444 = vld [vmem:[%s2426 + $0x68] sm:$0xf]
        %v2445 = vld [vmem:[%s2426 + $0x6c] sm:$0xff]
        %v2446 = vld [vmem:[%s2426 + $0x74] sm:$0xf]
        %v2447 = vld [vmem:[%s2426 + $0x78] sm:$0xff]
        %v2448 = vld [vmem:[%s2426 + $0x80] sm:$0xf]
        %v2449 = vld [vmem:[%s2426 + $0x84] sm:$0xff]
        %v2450 = vld [vmem:[%s2426 + $0x8c] sm:$0xf]
        %v2451 = vld [vmem:[%s2426 + $0x90] sm:$0xff]
        %v2452 = vld [vmem:[%s2426 + $0x98] sm:$0xf]
        %v2453 = vld [vmem:[%s2426 + $0x9c] sm:$0xff]
        %v2454 = vld [vmem:[%s2426 + $0xa4] sm:$0xf]
        %v2455 = vld [vmem:[%s2426 + $0xa8] sm:$0xff]
        %v2456 = vld [vmem:[%s2426 + $0xb0] sm:$0xf]
        %v2457 = vld [vmem:[%s2426 + $0xb4] sm:$0xff]
        %v2458 = vld [vmem:[%s2426 + $0xbc] sm:$0xf]
        %s2459 = scalar_lea.vmem %s2, 640
        %v2460 = vld [vmem:[%s2459] sm:$0xf]
        %v2461 = vld [vmem:[%s2459 + $0x4] sm:$0xf]
        %v2462 = vld [vmem:[%s2459 + $0x8] sm:$0xf]
        %v2463 = vld [vmem:[%s2459 + $0xc] sm:$0xf]
        %v2464 = vld [vmem:[%s2459 + $0x10] sm:$0xf]
        %v2465 = vld [vmem:[%s2459 + $0x14] sm:$0xf]
        %v2466 = vld [vmem:[%s2459 + $0x18] sm:$0xf]
        %v2467 = vld [vmem:[%s2459 + $0x1c] sm:$0xf]
        %v2468 = vld [vmem:[%s2459 + $0x20] sm:$0xf]
        %v2469 = vld [vmem:[%s2459 + $0x24] sm:$0xf]
        %v2470 = vld [vmem:[%s2459 + $0x28] sm:$0xf]
        %v2471 = vld [vmem:[%s2459 + $0x2c] sm:$0xf]
        %v2472 = vld [vmem:[%s2459 + $0x30] sm:$0xf]
        %v2473 = vld [vmem:[%s2459 + $0x34] sm:$0xf]
        %v2474 = vld [vmem:[%s2459 + $0x38] sm:$0xf]
        %v2475 = vld [vmem:[%s2459 + $0x3c] sm:$0xf]
        %v2476 = vld [vmem:[%s2459 + $0x40] sm:$0xf]
        %v2477 = vld [vmem:[%s2459 + $0x44] sm:$0xf]
        %v2478 = vld [vmem:[%s2459 + $0x48] sm:$0xf]
        %v2479 = vld [vmem:[%s2459 + $0x4c] sm:$0xf]
        %v2480 = vld [vmem:[%s2459 + $0x50] sm:$0xf]
        %v2481 = vld [vmem:[%s2459 + $0x54] sm:$0xf]
        %v2482 = vld [vmem:[%s2459 + $0x58] sm:$0xf]
        %v2483 = vld [vmem:[%s2459 + $0x5c] sm:$0xf]
        %v2484 = vld [vmem:[%s2459 + $0x60] sm:$0xf]
        %v2485 = vld [vmem:[%s2459 + $0x64] sm:$0xf]
        %v2486 = vld [vmem:[%s2459 + $0x68] sm:$0xf]
        %v2487 = vld [vmem:[%s2459 + $0x6c] sm:$0xf]
        %v2488 = vld [vmem:[%s2459 + $0x70] sm:$0xf]
        %v2489 = vld [vmem:[%s2459 + $0x74] sm:$0xf]
        %v2490 = vld [vmem:[%s2459 + $0x78] sm:$0xf]
        %v2491 = vld [vmem:[%s2459 + $0x7c] sm:$0xf]
        %v2492 = vld [vmem:[%s2459 + $0x80] sm:$0xf]
        %v2493 = vld [vmem:[%s2459 + $0x84] sm:$0xf]
        %v2494 = vld [vmem:[%s2459 + $0x88] sm:$0xf]
        %v2495 = vld [vmem:[%s2459 + $0x8c] sm:$0xf]
        %v2496 = vld [vmem:[%s2459 + $0x90] sm:$0xf]
        %v2497 = vld [vmem:[%s2459 + $0x94] sm:$0xf]
        %v2498 = vld [vmem:[%s2459 + $0x98] sm:$0xf]
        %v2499 = vld [vmem:[%s2459 + $0x9c] sm:$0xf]
        %v2532 = vunpack.c.l.b16 %v2427
        %v2533 = vunpack.c.h.b16 %v2427
        %v2534 = vunpack.c.l.b16 %v2428
        %v2535 = vunpack.c.l.b16 %v2429
        %v2536 = vunpack.c.h.b16 %v2429
        %v2537 = vunpack.c.l.b16 %v2430
        %v2538 = vunpack.c.l.b16 %v2431
        %v2539 = vunpack.c.h.b16 %v2431
        %v2540 = vunpack.c.l.b16 %v2432
        %v2541 = vunpack.c.l.b16 %v2433
        %v2542 = vunpack.c.h.b16 %v2433
        %v2543 = vunpack.c.l.b16 %v2434
        %v2544 = vunpack.c.l.b16 %v2435
        %v2545 = vunpack.c.h.b16 %v2435
        %v2546 = vunpack.c.l.b16 %v2436
        %v2547 = vunpack.c.l.b16 %v2437
        %v2548 = vunpack.c.h.b16 %v2437
        %v2549 = vunpack.c.l.b16 %v2438
        %v2550 = vunpack.c.l.b16 %v2439
        %v2551 = vunpack.c.h.b16 %v2439
        %v2552 = vunpack.c.l.b16 %v2440
        %v2553 = vunpack.c.l.b16 %v2441
        %v2554 = vunpack.c.h.b16 %v2441
        %v2555 = vunpack.c.l.b16 %v2442
        %v2556 = vunpack.c.l.b16 %v2443
        %v2557 = vunpack.c.h.b16 %v2443
        %v2558 = vunpack.c.l.b16 %v2444
        %v2559 = vunpack.c.l.b16 %v2445
        %v2560 = vunpack.c.h.b16 %v2445
        %v2561 = vunpack.c.l.b16 %v2446
        %v2562 = vunpack.c.l.b16 %v2447
        %v2563 = vunpack.c.h.b16 %v2447
        %v2564 = vunpack.c.l.b16 %v2448
        %v2565 = vunpack.c.l.b16 %v2449
        %v2566 = vunpack.c.h.b16 %v2449
        %v2567 = vunpack.c.l.b16 %v2450
        %v2568 = vunpack.c.l.b16 %v2451
        %v2569 = vunpack.c.h.b16 %v2451
        %v2570 = vunpack.c.l.b16 %v2452
        %v2571 = vunpack.c.l.b16 %v2453
        %v2572 = vunpack.c.h.b16 %v2453
        %v2573 = vunpack.c.l.b16 %v2454
        %v2574 = vunpack.c.l.b16 %v2455
        %v2575 = vunpack.c.h.b16 %v2455
        %v2576 = vunpack.c.l.b16 %v2456
        %v2577 = vunpack.c.l.b16 %v2457
        %v2578 = vunpack.c.h.b16 %v2457
        %v2579 = vunpack.c.l.b16 %v2458
        %v2580 = vpack.c.b16 %v2535, %v2532
        %v2581 = vpack.c.b16 %v2536, %v2533
        %v2582 = vpack.c.b16 %v2537, %v2534
        %v2583 = vpack.c.b16 %v2541, %v2538
        %v2584 = vpack.c.b16 %v2542, %v2539
        %v2585 = vpack.c.b16 %v2543, %v2540
        %v2586 = vpack.c.b16 %v2547, %v2544
        %v2587 = vpack.c.b16 %v2548, %v2545
        %v2588 = vpack.c.b16 %v2549, %v2546
        %v2589 = vpack.c.b16 %v2553, %v2550
        %v2590 = vpack.c.b16 %v2554, %v2551
        %v2591 = vpack.c.b16 %v2555, %v2552
        %v2592 = vpack.c.b16 %v2559, %v2556
        %v2593 = vpack.c.b16 %v2560, %v2557
        %v2594 = vpack.c.b16 %v2561, %v2558
        %v2595 = vpack.c.b16 %v2565, %v2562
        %v2596 = vpack.c.b16 %v2566, %v2563
        %v2597 = vpack.c.b16 %v2567, %v2564
        %v2598 = vpack.c.b16 %v2571, %v2568
        %v2599 = vpack.c.b16 %v2572, %v2569
        %v2600 = vpack.c.b16 %v2573, %v2570
        %v2601 = vpack.c.b16 %v2577, %v2574
        %v2602 = vpack.c.b16 %v2578, %v2575
        %v2603 = vpack.c.b16 %v2579, %v2576
        %v2660 = vunpack.c.l.b16 %v2460
        %v2661 = vunpack.c.l.b16 %v2461
        %v2662 = vunpack.c.l.b16 %v2462
        %v2663 = vunpack.c.l.b16 %v2463
        %v2664 = vunpack.c.l.b16 %v2464
        %v2665 = vunpack.c.l.b16 %v2465
        %v2666 = vunpack.c.l.b16 %v2466
        %v2667 = vunpack.c.l.b16 %v2467
        %v2668 = vunpack.c.l.b16 %v2468
        %v2669 = vunpack.c.l.b16 %v2469
        %v2670 = vunpack.c.l.b16 %v2470
        %v2671 = vunpack.c.l.b16 %v2471
        %v2672 = vunpack.c.l.b16 %v2472
        %v2673 = vunpack.c.l.b16 %v2473
        %v2674 = vunpack.c.l.b16 %v2474
        %v2675 = vunpack.c.l.b16 %v2475
        %v2676 = vunpack.c.l.b16 %v2476
        %v2677 = vunpack.c.l.b16 %v2477
        %v2678 = vunpack.c.l.b16 %v2478
        %v2679 = vunpack.c.l.b16 %v2479
        %v2680 = vunpack.c.l.b16 %v2480
        %v2681 = vunpack.c.l.b16 %v2481
        %v2682 = vunpack.c.l.b16 %v2482
        %v2683 = vunpack.c.l.b16 %v2483
        %v2684 = vunpack.c.l.b16 %v2484
        %v2685 = vunpack.c.l.b16 %v2485
        %v2686 = vunpack.c.l.b16 %v2486
        %v2687 = vunpack.c.l.b16 %v2487
        %v2688 = vunpack.c.l.b16 %v2488
        %v2689 = vunpack.c.l.b16 %v2489
        %v2690 = vunpack.c.l.b16 %v2490
        %v2691 = vunpack.c.l.b16 %v2491
        %v2692 = vunpack.c.l.b16 %v2492
        %v2693 = vunpack.c.l.b16 %v2493
        %v2694 = vunpack.c.l.b16 %v2494
        %v2695 = vunpack.c.l.b16 %v2495
        %v2696 = vunpack.c.l.b16 %v2496
        %v2697 = vunpack.c.l.b16 %v2497
        %v2698 = vunpack.c.l.b16 %v2498
        %v2699 = vunpack.c.l.b16 %v2499
        %v2700 = vpack.c.b16 %v2661, %v2660
        %v2701 = vpack.c.b16 %v2663, %v2662
        %v2702 = vpack.c.b16 %v2665, %v2664
        %v2703 = vpack.c.b16 %v2667, %v2666
        %v2704 = vpack.c.b16 %v2669, %v2668
        %v2705 = vpack.c.b16 %v2671, %v2670
        %v2706 = vpack.c.b16 %v2673, %v2672
        %v2707 = vpack.c.b16 %v2675, %v2674
        %v2708 = vpack.c.b16 %v2677, %v2676
        %v2709 = vpack.c.b16 %v2679, %v2678
        %v2710 = vpack.c.b16 %v2681, %v2680
        %v2711 = vpack.c.b16 %v2683, %v2682
        %v2712 = vpack.c.b16 %v2685, %v2684
        %v2713 = vpack.c.b16 %v2687, %v2686
        %v2714 = vpack.c.b16 %v2689, %v2688
        %v2715 = vpack.c.b16 %v2691, %v2690
        %v2716 = vpack.c.b16 %v2693, %v2692
        %v2717 = vpack.c.b16 %v2695, %v2694
        %v2718 = vpack.c.b16 %v2697, %v2696
        %v2719 = vpack.c.b16 %v2699, %v2698
        %v2741 = vsel %vm644, %v2582, 0
        %v2744 = vsel %vm644, %v2585, 0
        %v2747 = vsel %vm644, %v2588, 0
        %v2750 = vsel %vm644, %v2591, 0
        %v2753 = vsel %vm644, %v2594, 0
        %v2756 = vsel %vm644, %v2597, 0
        %v2759 = vsel %vm644, %v2600, 0
        %v2762 = vsel %vm644, %v2603, 0
        %2764 = vmatprep.subr.bf16.mxu0 0
        %2765 = vmatpush1.bf16.msra.mxu0 %v2707
        %2766 = vmatprep.subr.bf16.mxu0 0
        %2767 = vmatpush1.bf16.msra.mxu0 %v2706
        %2768 = vmatprep.subr.bf16.mxu0 0
        %2769 = vmatpush1.bf16.msra.mxu0 %v2705
        %2770 = vmatprep.subr.bf16.mxu0 0
        %2771 = vmatpush1.bf16.msra.mxu0 %v2704
        %2772 = vmatprep.subr.bf16.mxu0 0
        %2773 = vmatpush1.bf16.msra.mxu0 %v2703
        %2774 = vmatprep.subr.bf16.mxu0 0
        %2775 = vmatpush1.bf16.msra.mxu0 %v2702
        %2776 = vmatprep.subr.bf16.mxu0 0
        %2777 = vmatpush1.bf16.msra.mxu0 %v2701
        %2778 = vmatprep.subr.bf16.mxu0 0
        %2779 = vmatpush1.bf16.msra.mxu0 %v2700
        %2780 = vmatprep.subr.bf16.mxu0 0
        %2781 = vmatpush2.bf16.msra.mxu0 %v2715
        %2782 = vmatprep.subr.bf16.mxu0 0
        %2783 = vmatpush2.bf16.msra.mxu0 %v2714
        %2784 = vmatprep.subr.bf16.mxu0 0
        %2785 = vmatpush2.bf16.msra.mxu0 %v2713
        %2786 = vmatprep.subr.bf16.mxu0 0
        %2787 = vmatpush2.bf16.msra.mxu0 %v2712
        %2788 = vmatprep.subr.bf16.mxu0 0
        %2789 = vmatpush2.bf16.msra.mxu0 %v2711
        %2790 = vmatprep.subr.bf16.mxu0 0
        %2791 = vmatpush2.bf16.msra.mxu0 %v2710
        %2792 = vmatprep.subr.bf16.mxu0 0
        %2793 = vmatpush2.bf16.msra.mxu0 %v2709
        %2794 = vmatprep.subr.bf16.mxu0 0
        %2795 = vmatpush2.bf16.msra.mxu0 %v2708
        %2796 = vmatprep.mubr.bf16.mxu0 %v2581
        %2797 = vmatmul.mubr.bf16.gmra.mxu0 %v2580
        %v2798 = vpop.f32.mrf.mxu0
        %v2799 = vadd.f32 0.0, %v2798
        %v2800 = vpop.f32.mrf.mxu0
        %v2801 = vpop.f32.mrf.mxu0
        %v2802 = vadd.f32 0.0, %v2801
        %v2803 = vpop.f32.mrf.mxu0
        %2804 = vmatprep.mubr.bf16.mxu0 %v2584
        %2805 = vmatmul.mubr.bf16.gmra.mxu0 %v2583
        %v2806 = vpop.f32.mrf.mxu0
        %v2807 = vadd.f32 0.0, %v2806
        %v2808 = vpop.f32.mrf.mxu0
        %v2809 = vpop.f32.mrf.mxu0
        %v2810 = vadd.f32 0.0, %v2809
        %v2811 = vpop.f32.mrf.mxu0
        %2812 = vmatprep.mubr.bf16.mxu0 %v2587
        %2813 = vmatmul.mubr.bf16.gmra.mxu0 %v2586
        %v2814 = vpop.f32.mrf.mxu0
        %v2815 = vadd.f32 0.0, %v2814
        %v2816 = vpop.f32.mrf.mxu0
        %v2817 = vpop.f32.mrf.mxu0
        %v2818 = vadd.f32 0.0, %v2817
        %v2819 = vpop.f32.mrf.mxu0
        %2820 = vmatprep.mubr.bf16.mxu0 %v2590
        %2821 = vmatmul.mubr.bf16.gmra.mxu0 %v2589
        %v2822 = vpop.f32.mrf.mxu0
        %v2823 = vadd.f32 0.0, %v2822
        %v2824 = vpop.f32.mrf.mxu0
        %v2825 = vpop.f32.mrf.mxu0
        %v2826 = vadd.f32 0.0, %v2825
        %v2827 = vpop.f32.mrf.mxu0
        %2828 = vmatprep.mubr.bf16.mxu0 %v2593
        %2829 = vmatmul.mubr.bf16.gmra.mxu0 %v2592
        %v2830 = vpop.f32.mrf.mxu0
        %v2831 = vadd.f32 0.0, %v2830
        %v2832 = vpop.f32.mrf.mxu0
        %v2833 = vpop.f32.mrf.mxu0
        %v2834 = vadd.f32 0.0, %v2833
        %v2835 = vpop.f32.mrf.mxu0
        %2836 = vmatprep.mubr.bf16.mxu0 %v2596
        %2837 = vmatmul.mubr.bf16.gmra.mxu0 %v2595
        %v2838 = vpop.f32.mrf.mxu0
        %v2839 = vadd.f32 0.0, %v2838
        %v2840 = vpop.f32.mrf.mxu0
        %v2841 = vpop.f32.mrf.mxu0
        %v2842 = vadd.f32 0.0, %v2841
        %v2843 = vpop.f32.mrf.mxu0
        %2844 = vmatprep.mubr.bf16.mxu0 %v2599
        %2845 = vmatmul.mubr.bf16.gmra.mxu0 %v2598
        %v2846 = vpop.f32.mrf.mxu0
        %v2847 = vadd.f32 0.0, %v2846
        %v2848 = vpop.f32.mrf.mxu0
        %v2849 = vpop.f32.mrf.mxu0
        %v2850 = vadd.f32 0.0, %v2849
        %v2851 = vpop.f32.mrf.mxu0
        %2852 = vmatprep.mubr.bf16.mxu0 %v2602
        %2853 = vmatmul.mubr.bf16.gmra.mxu0 %v2601
        %v2854 = vpop.f32.mrf.mxu0
        %v2855 = vadd.f32 0.0, %v2854
        %v2856 = vpop.f32.mrf.mxu0
        %v2857 = vpop.f32.mrf.mxu0
        %v2858 = vadd.f32 0.0, %v2857
        %v2859 = vpop.f32.mrf.mxu0
        %2860 = vdwg.mxu0
        %2861 = vmatprep.subr.bf16.mxu0 0
        %2862 = vmatpush1.bf16.msra.mxu0 0
        %2863 = vmatprep.subr.bf16.mxu0 0
        %2864 = vmatpush1.bf16.msra.mxu0 0
        %2865 = vmatprep.subr.bf16.mxu0 0
        %2866 = vmatpush1.bf16.msra.mxu0 0
        %2867 = vmatprep.subr.bf16.mxu0 0
        %2868 = vmatpush1.bf16.msra.mxu0 0
        %2869 = vmatprep.subr.bf16.mxu0 0
        %2870 = vmatpush1.bf16.msra.mxu0 %v2719
        %2871 = vmatprep.subr.bf16.mxu0 0
        %2872 = vmatpush1.bf16.msra.mxu0 %v2718
        %2873 = vmatprep.subr.bf16.mxu0 0
        %2874 = vmatpush1.bf16.msra.mxu0 %v2717
        %2875 = vmatprep.subr.bf16.mxu0 0
        %2876 = vmatpush1.bf16.msra.mxu0 %v2716
        %2877 = vmatprep.subr.bf16.mxu0 0
        %2878 = vmatpush2.bf16.msra.mxu0 0
        %2879 = vmatprep.subr.bf16.mxu0 0
        %2880 = vmatpush2.bf16.msra.mxu0 0
        %2881 = vmatprep.subr.bf16.mxu0 0
        %2882 = vmatpush2.bf16.msra.mxu0 0
        %2883 = vmatprep.subr.bf16.mxu0 0
        %2884 = vmatpush2.bf16.msra.mxu0 0
        %2885 = vmatprep.subr.bf16.mxu0 0
        %2886 = vmatpush2.bf16.msra.mxu0 0
        %2887 = vmatprep.subr.bf16.mxu0 0
        %2888 = vmatpush2.bf16.msra.mxu0 0
        %2889 = vmatprep.subr.bf16.mxu0 0
        %2890 = vmatpush2.bf16.msra.mxu0 0
        %2891 = vmatprep.subr.bf16.mxu0 0
        %2892 = vmatpush2.bf16.msra.mxu0 0
        %2893 = vmatprep.mubr.bf16.mxu0 0
        %2894 = vmatmul.mubr.bf16.gmra.mxu0 %v2741
        %v2895 = vpop.f32.mrf.mxu0
        %v2896 = vadd.f32 %v2799, %v2895
        %v2897 = vpop.f32.mrf.mxu0
        %v2898 = vpop.f32.mrf.mxu0
        %v2899 = vadd.f32 %v2802, %v2898
        %v2900 = vpop.f32.mrf.mxu0
        %2901 = vmatprep.mubr.bf16.mxu0 0
        %2902 = vmatmul.mubr.bf16.gmra.mxu0 %v2744
        %v2903 = vpop.f32.mrf.mxu0
        %v2904 = vadd.f32 %v2807, %v2903
        %v2905 = vpop.f32.mrf.mxu0
        %v2906 = vpop.f32.mrf.mxu0
        %v2907 = vadd.f32 %v2810, %v2906
        %v2908 = vpop.f32.mrf.mxu0
        %2909 = vmatprep.mubr.bf16.mxu0 0
        %2910 = vmatmul.mubr.bf16.gmra.mxu0 %v2747
        %v2911 = vpop.f32.mrf.mxu0
        %v2912 = vadd.f32 %v2815, %v2911
        %v2913 = vpop.f32.mrf.mxu0
        %v2914 = vpop.f32.mrf.mxu0
        %v2915 = vadd.f32 %v2818, %v2914
        %v2916 = vpop.f32.mrf.mxu0
        %2917 = vmatprep.mubr.bf16.mxu0 0
        %2918 = vmatmul.mubr.bf16.gmra.mxu0 %v2750
        %v2919 = vpop.f32.mrf.mxu0
        %v2920 = vadd.f32 %v2823, %v2919
        %v2921 = vpop.f32.mrf.mxu0
        %v2922 = vpop.f32.mrf.mxu0
        %v2923 = vadd.f32 %v2826, %v2922
        %v2924 = vpop.f32.mrf.mxu0
        %2925 = vmatprep.mubr.bf16.mxu0 0
        %2926 = vmatmul.mubr.bf16.gmra.mxu0 %v2753
        %v2927 = vpop.f32.mrf.mxu0
        %v2928 = vadd.f32 %v2831, %v2927
        %v2929 = vpop.f32.mrf.mxu0
        %v2930 = vpop.f32.mrf.mxu0
        %v2931 = vadd.f32 %v2834, %v2930
        %v2932 = vpop.f32.mrf.mxu0
        %2933 = vmatprep.mubr.bf16.mxu0 0
        %2934 = vmatmul.mubr.bf16.gmra.mxu0 %v2756
        %v2935 = vpop.f32.mrf.mxu0
        %v2936 = vadd.f32 %v2839, %v2935
        %v2937 = vpop.f32.mrf.mxu0
        %v2938 = vpop.f32.mrf.mxu0
        %v2939 = vadd.f32 %v2842, %v2938
        %v2940 = vpop.f32.mrf.mxu0
        %2941 = vmatprep.mubr.bf16.mxu0 0
        %2942 = vmatmul.mubr.bf16.gmra.mxu0 %v2759
        %v2943 = vpop.f32.mrf.mxu0
        %v2944 = vadd.f32 %v2847, %v2943
        %v2945 = vpop.f32.mrf.mxu0
        %v2946 = vpop.f32.mrf.mxu0
        %v2947 = vadd.f32 %v2850, %v2946
        %v2948 = vpop.f32.mrf.mxu0
        %2949 = vmatprep.mubr.bf16.mxu0 0
        %2950 = vmatmul.mubr.bf16.gmra.mxu0 %v2762
        %v2951 = vpop.f32.mrf.mxu0
        %v2952 = vadd.f32 %v2855, %v2951
        %v2953 = vpop.f32.mrf.mxu0
        %v2954 = vpop.f32.mrf.mxu0
        %v2955 = vadd.f32 %v2858, %v2954
        %v2956 = vpop.f32.mrf.mxu0
        %2957 = vdwg.mxu0
        %v2958 = vadd.f32 %v2407, %v2896
        %v2959 = vadd.f32 %v2408, %v2899
        %v2960 = vadd.f32 %v2409, %v2904
        %v2961 = vadd.f32 %v2410, %v2907
        %v2962 = vadd.f32 %v2411, %v2912
        %v2963 = vadd.f32 %v2412, %v2915
        %v2964 = vadd.f32 %v2413, %v2920
        %v2965 = vadd.f32 %v2414, %v2923
        %v2966 = vadd.f32 %v2415, %v2928
        %v2967 = vadd.f32 %v2416, %v2931
        %v2968 = vadd.f32 %v2417, %v2936
        %v2969 = vadd.f32 %v2418, %v2939
        %v2970 = vadd.f32 %v2419, %v2944
        %v2971 = vadd.f32 %v2420, %v2947
        %v2972 = vadd.f32 %v2421, %v2952
        %v2973 = vadd.f32 %v2422, %v2955
        %v2974 = vld [vmem:[%s3] sm:$0x1]
        %v2976 = vlaneseq
        %v2977 = vshrl.u32 %v2976, 7
        %v2978 = vsub.s32 0, %v2977
        %v2979 = vrot.slane %v2974, %v2978
        %v2981 = vadd.f32 %v2958, %v2979
        %v2982 = vadd.f32 %v2959, %v2979
        %v2983 = vadd.f32 %v2960, %v2979
        %v2984 = vadd.f32 %v2961, %v2979
        %v2985 = vadd.f32 %v2962, %v2979
        %v2986 = vadd.f32 %v2963, %v2979
        %v2987 = vadd.f32 %v2964, %v2979
        %v2988 = vadd.f32 %v2965, %v2979
        %v2989 = vadd.f32 %v2966, %v2979
        %v2990 = vadd.f32 %v2967, %v2979
        %v2991 = vadd.f32 %v2968, %v2979
        %v2992 = vadd.f32 %v2969, %v2979
        %v2993 = vadd.f32 %v2970, %v2979
        %v2994 = vadd.f32 %v2971, %v2979
        %v2995 = vadd.f32 %v2972, %v2979
        %v2996 = vadd.f32 %v2973, %v2979
        %v2997 = vld [vmem:[%s247] sm:$0xff]
        %v2998 = vld [vmem:[%s247 + $0x8] sm:$0xff]
        %v2999 = vld [vmem:[%s247 + $0x10] sm:$0xff]
        %v3000 = vld [vmem:[%s247 + $0x18] sm:$0xff]
        %v3001 = vld [vmem:[%s247 + $0x20] sm:$0xff]
        %v3002 = vld [vmem:[%s247 + $0x28] sm:$0xff]
        %v3003 = vld [vmem:[%s247 + $0x30] sm:$0xff]
        %v3004 = vld [vmem:[%s247 + $0x38] sm:$0xff]
        %v3005 = vld [vmem:[%s247 + $0x40] sm:$0xff]
        %v3006 = vld [vmem:[%s247 + $0x48] sm:$0xff]
        %v3007 = vld [vmem:[%s247 + $0x50] sm:$0xff]
        %v3008 = vld [vmem:[%s247 + $0x58] sm:$0xff]
        %v3009 = vld [vmem:[%s247 + $0x60] sm:$0xff]
        %v3010 = vld [vmem:[%s247 + $0x68] sm:$0xff]
        %v3011 = vld [vmem:[%s247 + $0x70] sm:$0xff]
        %v3012 = vld [vmem:[%s247 + $0x78] sm:$0xff]
        %v3013 = vadd.f32 %v2997, %v2981
        %v3014 = vadd.f32 %v2998, %v2982
        %v3015 = vadd.f32 %v2999, %v2983
        %v3016 = vadd.f32 %v3000, %v2984
        %v3017 = vadd.f32 %v3001, %v2985
        %v3018 = vadd.f32 %v3002, %v2986
        %v3019 = vadd.f32 %v3003, %v2987
        %v3020 = vadd.f32 %v3004, %v2988
        %v3021 = vadd.f32 %v3005, %v2989
        %v3022 = vadd.f32 %v3006, %v2990
        %v3023 = vadd.f32 %v3007, %v2991
        %v3024 = vadd.f32 %v3008, %v2992
        %v3025 = vadd.f32 %v3009, %v2993
        %v3026 = vadd.f32 %v3010, %v2994
        %v3027 = vadd.f32 %v3011, %v2995
        %v3028 = vadd.f32 %v3012, %v2996
        %v3029 = vmul.f32 %v3013, 0.5
        %v3030 = vmul.f32 %v3014, 0.5
        %v3031 = vmul.f32 %v3015, 0.5
        %v3032 = vmul.f32 %v3016, 0.5
        %v3033 = vmul.f32 %v3017, 0.5
        %v3034 = vmul.f32 %v3018, 0.5
        %v3035 = vmul.f32 %v3019, 0.5
        %v3036 = vmul.f32 %v3020, 0.5
        %v3037 = vmul.f32 %v3021, 0.5
        %v3038 = vmul.f32 %v3022, 0.5
        %v3039 = vmul.f32 %v3023, 0.5
        %v3040 = vmul.f32 %v3024, 0.5
        %v3041 = vmul.f32 %v3025, 0.5
        %v3042 = vmul.f32 %v3026, 0.5
        %v3043 = vmul.f32 %v3027, 0.5
        %v3044 = vmul.f32 %v3028, 0.5
        %v3045 = vtanh.pop %v3029
        %v3046 = vtanh.pop %v3030
        %v3047 = vtanh.pop %v3031
        %v3048 = vtanh.pop %v3032
        %v3049 = vtanh.pop %v3033
        %v3050 = vtanh.pop %v3034
        %v3051 = vtanh.pop %v3035
        %v3052 = vtanh.pop %v3036
        %v3053 = vtanh.pop %v3037
        %v3054 = vtanh.pop %v3038
        %v3055 = vtanh.pop %v3039
        %v3056 = vtanh.pop %v3040
        %v3057 = vtanh.pop %v3041
        %v3058 = vtanh.pop %v3042
        %v3059 = vtanh.pop %v3043
        %v3060 = vtanh.pop %v3044
        %v3061 = vmul.f32 %v3045, 0.5
        %v3062 = vmul.f32 %v3046, 0.5
        %v3063 = vmul.f32 %v3047, 0.5
        %v3064 = vmul.f32 %v3048, 0.5
        %v3065 = vmul.f32 %v3049, 0.5
        %v3066 = vmul.f32 %v3050, 0.5
        %v3067 = vmul.f32 %v3051, 0.5
        %v3068 = vmul.f32 %v3052, 0.5
        %v3069 = vmul.f32 %v3053, 0.5
        %v3070 = vmul.f32 %v3054, 0.5
        %v3071 = vmul.f32 %v3055, 0.5
        %v3072 = vmul.f32 %v3056, 0.5
        %v3073 = vmul.f32 %v3057, 0.5
        %v3074 = vmul.f32 %v3058, 0.5
        %v3075 = vmul.f32 %v3059, 0.5
        %v3076 = vmul.f32 %v3060, 0.5
        %v3077 = vadd.f32 %v3061, 0.5
        %v3078 = vadd.f32 %v3062, 0.5
        %v3079 = vadd.f32 %v3063, 0.5
        %v3080 = vadd.f32 %v3064, 0.5
        %v3081 = vadd.f32 %v3065, 0.5
        %v3082 = vadd.f32 %v3066, 0.5
        %v3083 = vadd.f32 %v3067, 0.5
        %v3084 = vadd.f32 %v3068, 0.5
        %v3085 = vadd.f32 %v3069, 0.5
        %v3086 = vadd.f32 %v3070, 0.5
        %v3087 = vadd.f32 %v3071, 0.5
        %v3088 = vadd.f32 %v3072, 0.5
        %v3089 = vadd.f32 %v3073, 0.5
        %v3090 = vadd.f32 %v3074, 0.5
        %v3091 = vadd.f32 %v3075, 0.5
        %v3092 = vadd.f32 %v3076, 0.5
        %v3093 = vtanh.pop %v2981
        %v3094 = vtanh.pop %v2982
        %v3095 = vtanh.pop %v2983
        %v3096 = vtanh.pop %v2984
        %v3097 = vtanh.pop %v2985
        %v3098 = vtanh.pop %v2986
        %v3099 = vtanh.pop %v2987
        %v3100 = vtanh.pop %v2988
        %v3101 = vtanh.pop %v2989
        %v3102 = vtanh.pop %v2990
        %v3103 = vtanh.pop %v2991
        %v3104 = vtanh.pop %v2992
        %v3105 = vtanh.pop %v2993
        %v3106 = vtanh.pop %v2994
        %v3107 = vtanh.pop %v2995
        %v3108 = vtanh.pop %v2996
        %3125 = vrot.lane.b32.xlu0 %v3093, 96
        %v3126 = vpop.permute.xlu0 %3125
        %3127 = vrot.lane.b32.xlu0 %v3094, 96
        %v3128 = vpop.permute.xlu0 %3127
        %3129 = vrot.lane.b32.xlu0 %v3095, 96
        %v3130 = vpop.permute.xlu0 %3129
        %3131 = vrot.lane.b32.xlu0 %v3096, 96
        %v3132 = vpop.permute.xlu0 %3131
        %3133 = vrot.lane.b32.xlu0 %v3097, 96
        %v3134 = vpop.permute.xlu0 %3133
        %3135 = vrot.lane.b32.xlu0 %v3098, 96
        %v3136 = vpop.permute.xlu0 %3135
        %3137 = vrot.lane.b32.xlu0 %v3099, 96
        %v3138 = vpop.permute.xlu0 %3137
        %3139 = vrot.lane.b32.xlu0 %v3100, 96
        %v3140 = vpop.permute.xlu0 %3139
        %3141 = vrot.lane.b32.xlu0 %v3101, 96
        %v3142 = vpop.permute.xlu0 %3141
        %3143 = vrot.lane.b32.xlu0 %v3102, 96
        %v3144 = vpop.permute.xlu0 %3143
        %3145 = vrot.lane.b32.xlu0 %v3103, 96
        %v3146 = vpop.permute.xlu0 %3145
        %3147 = vrot.lane.b32.xlu0 %v3104, 96
        %v3148 = vpop.permute.xlu0 %3147
        %3149 = vrot.lane.b32.xlu0 %v3105, 96
        %v3150 = vpop.permute.xlu0 %3149
        %3151 = vrot.lane.b32.xlu0 %v3106, 96
        %v3152 = vpop.permute.xlu0 %3151
        %3153 = vrot.lane.b32.xlu0 %v3107, 96
        %v3154 = vpop.permute.xlu0 %3153
        %3155 = vrot.lane.b32.xlu0 %v3108, 96
        %v3156 = vpop.permute.xlu0 %3155
        %v3173 = vmul.f32 %v3077, %v3126
        %v3174 = vmul.f32 %v3078, %v3128
        %v3175 = vmul.f32 %v3079, %v3130
        %v3176 = vmul.f32 %v3080, %v3132
        %v3177 = vmul.f32 %v3081, %v3134
        %v3178 = vmul.f32 %v3082, %v3136
        %v3179 = vmul.f32 %v3083, %v3138
        %v3180 = vmul.f32 %v3084, %v3140
        %v3181 = vmul.f32 %v3085, %v3142
        %v3182 = vmul.f32 %v3086, %v3144
        %v3183 = vmul.f32 %v3087, %v3146
        %v3184 = vmul.f32 %v3088, %v3148
        %v3185 = vmul.f32 %v3089, %v3150
        %v3186 = vmul.f32 %v3090, %v3152
        %v3187 = vmul.f32 %v3091, %v3154
        %v3188 = vmul.f32 %v3092, %v3156
        %vm3189 = vcmask 261120
        %3190 = vst.msk [vmem:[%s232] sm:$0xff] %vm3189, %v3173
        %3191 = vst.msk [vmem:[%s232 + $0x8] sm:$0xff] %vm3189, %v3174
        %3192 = vst.msk [vmem:[%s232 + $0x10] sm:$0xff] %vm3189, %v3175
        %3193 = vst.msk [vmem:[%s232 + $0x18] sm:$0xff] %vm3189, %v3176
        %3194 = vst.msk [vmem:[%s232 + $0x20] sm:$0xff] %vm3189, %v3177
        %3195 = vst.msk [vmem:[%s232 + $0x28] sm:$0xff] %vm3189, %v3178
        %3196 = vst.msk [vmem:[%s232 + $0x30] sm:$0xff] %vm3189, %v3179
        %3197 = vst.msk [vmem:[%s232 + $0x38] sm:$0xff] %vm3189, %v3180
        %3198 = vst.msk [vmem:[%s232 + $0x40] sm:$0xff] %vm3189, %v3181
        %3199 = vst.msk [vmem:[%s232 + $0x48] sm:$0xff] %vm3189, %v3182
        %3200 = vst.msk [vmem:[%s232 + $0x50] sm:$0xff] %vm3189, %v3183
        %3201 = vst.msk [vmem:[%s232 + $0x58] sm:$0xff] %vm3189, %v3184
        %3202 = vst.msk [vmem:[%s232 + $0x60] sm:$0xff] %vm3189, %v3185
        %3203 = vst.msk [vmem:[%s232 + $0x68] sm:$0xff] %vm3189, %v3186
        %3204 = vst.msk [vmem:[%s232 + $0x70] sm:$0xff] %vm3189, %v3187
        %3205 = vst.msk [vmem:[%s232 + $0x78] sm:$0xff] %vm3189, %v3188
        %s3206 = sand.u32 %s136, 1
        %s3207 = scalar_lea.sflag [#allocation3], %s3206
        %s3208 = sand.u32 %s136, 1
        %s3209 = smul.addr %s3208, 128
        %s3210 = scalar_lea.vmem [#allocation2], %s3209
        // Predicated region
        $region37: #{st_lstm_cell_poly.3} parent=35 // pred_check
          %p3211 = pneg %p146
        $region38: #{st_lstm_cell_poly.3} parent=35 // pred_check_branch
          %3213 = sbr.rel (%p3211) target = $region40
        $region39: #{st_lstm_cell_poly.3} parent=35 // pred_region
          %s3214 = smul.u32 8, %s23
          %s3216 = ssub.s32 2048, 2048
          %3217 = vsyncadd %s3207, %s3216
          %s3218 = smul.addr %s3214, 2
          %s3219 = smul.addr %s22, 32
          %s3220 = sadd.s32 %s3218, %s3219
          %s3221 = smul.addr %s3220, 128
          %s3222 = scalar_lea.hbm %s4, %s3221
          %s3223 = sshll.u32 %s3210, 4
          %s3224 = int_to_ptr.vmem [resolvable:$true] %s3223
          %3229 = dma.vmem_to_hbm [thread:$0]  %s3224, 2048, %s3222, %s3207, 128, 128, 8
        $region40: #{st_lstm_cell_poly.3} parent=35 // pred_fallthru
          _
      $region36: #{st_lstm_cell_poly.3} parent=5 // pred_fallthru
        _
      %p3230 = scmp.le.s32.totalorder 2, %s13
      // Predicated region
      $region41: #{st_lstm_cell_poly.3} parent=5 // pred_check
        %p3231 = pneg %p3230
      $region42: #{st_lstm_cell_poly.3} parent=5 // pred_check_branch
        %3233 = sbr.rel (%p3231) target = $region44
      $region43: #{st_lstm_cell_poly.3} parent=5 // pred_region
        %s3234 = ssub.s32 %s13, 2
        // Predicated region
        $region45: #{st_lstm_cell_poly.3} parent=43 // pred_check
          %p3235 = pneg %p152
        $region46: #{st_lstm_cell_poly.3} parent=43 // pred_check_branch
          %3237 = sbr.rel (%p3235) target = $region48
        $region47: #{st_lstm_cell_poly.3} parent=43 // pred_region
          %s3238 = sand.u32 %s137, 1
          %s3239 = scalar_lea.sflag [#allocation3], %s3238
          %s3240 = sand.u32 %s137, 1
          %s3241 = smul.addr %s3240, 128
          %s3242 = scalar_lea.vmem [#allocation2], %s3241
          %3243 = dma.done %s3239, 2048
        $region48: #{st_lstm_cell_poly.3} parent=43 // pred_fallthru
          _
      $region44: #{st_lstm_cell_poly.3} parent=5 // pred_fallthru
        _
    $region6: #{st_lstm_cell_poly.3} parent=1 // loop_footer
      %s17 = sadd.s32 1, %s13
    $region7: #{st_lstm_cell_poly.3} parent=1 // loop_footer_branch
      %12 = sbr.rel target = $region3
    $region8: #{st_lstm_cell_poly.3} parent=1 // loop_exit
      _
    %3244 = vsyncpa [#allocation3], 1
    %s3245 = scalar_lea.sflag [#allocation3], 1
    %3246 = vsyncpa %s3245, 1

</llo_original>
